<compile_context>
chip_gen: v7x
topology: tpu7x:2x2x1
jax: 0.10.0
libtpu: 0.0.40
codegen_flags: <defaults>
</compile_context>

<pallas_src>
import jax
import jax.numpy as jnp
from jax import lax
from jax.experimental import pallas as pl
from jax.experimental.pallas import tpu as pltpu

KH = KW = 3             # conv kernel size
H = W = 28              # MNIST spatial size (required by view(-1, 20))
C0, C1, C2 = 1, 10, 20  # channels: input, conv1 out, conv2 out
POOL1 = 4
H1 = H // POOL1         # 7 (spatial after first pool; second pool covers all 7x7)
NCLS = 10
NSHIFT = POOL1 + KW - 1  # 6 column-strided/shifted copies of the padded image
B_BLK = 128             # batch tile: batch occupies the 128-wide lane axis


def net_kernel(xs_ref, w1_ref, b1_ref, w2_ref, b2_ref,
               fc1w_ref, fc1b_ref, fc2w_ref, fc2b_ref,
               out_ref, p1_ref, feat_ref):
    f32 = jnp.float32
    blk = out_ref.shape[1]

    # ---- per-step scratch (re)initialisation -------------------------------
    # p1_ref holds 3 dw-shifted conv2-input buffers, stacked on the leading
    # axis: index dw*C1 + ci, each (H1+2, H1, B).
    #   dw=1 buffer gets full aligned row stores -> only its row halo needs
    #   zeroing; dw=0 / dw=2 buffers get partial-width row stores (their zero
    #   column halo is NOT rewritten), so they are fully re-zeroed each step.
    # Scratch persists across grid steps *and* cores -> no program_id gating.
    z_plane = jnp.zeros((H1 + 2, H1, blk), f32)
    z_row = jnp.zeros((H1, blk), f32)
    for k in range(C1):
        p1_ref[0 * C1 + k, :, :, :] = z_plane          # dw = 0 buffer
        p1_ref[2 * C1 + k, :, :, :] = z_plane          # dw = 2 buffer
        p1_ref[1 * C1 + k, 0, :, :] = z_row            # dw = 1 buffer: row halo
        p1_ref[1 * C1 + k, H1 + 1, :, :] = z_row

    # ---- conv1 (1->10, 3x3, pad=1) + max_pool2d(4) + ReLU -------------------
    # Per (channel c, pooled row ho): 4 independent phase accumulators
    # accs[pw][ph, wo, b] = sum_{dh,dw} w1[c,dh,dw] * x_pad[4ho+ph+dh, 4wo+pw+dw, b]
    # built from aligned slab reads of the strided copies xs[s]=x_pad[:,4j+s];
    # the 4x4 max pool is then just element-wise maxes over (pw, ph).
    def conv1_channel(c, carry):
        wts = [[w1_ref[c, dh * KW + dw] for dw in range(KW)] for dh in range(KH)]
        bias = b1_ref[c]
        for ho in range(H1):
            r0 = POOL1 * ho
            accs = [None] * POOL1
            for s in range(NSHIFT):
                rows6 = xs_ref[s, r0: r0 + POOL1 + KH - 1, :, :]     # (6, 7, B), aligned
                for dh in range(KH):
                    rows = rows6[dh: dh + POOL1]                      # (4, 7, B)
                    for dw in range(KW):
                        pw = s - dw
                        if 0 <= pw < POOL1:
                            term = rows * wts[dh][dw]
                            accs[pw] = term if accs[pw] is None else accs[pw] + term
            m = jnp.maximum(jnp.maximum(accs[0], accs[1]),
                            jnp.maximum(accs[2], accs[3]))            # (4, 7, B)
            pooled = jnp.max(m, axis=0)                               # (7, B)
            pooled = jnp.maximum(pooled + bias, 0.0)                  # bias + ReLU
            # Write the pooled row into the three dw-shifted conv2 inputs so
            # every conv2 slab read is aligned; only these 2 small stores per
            # row carry a 1-sublane shift.
            p1_ref[0 * C1 + c, 1 + ho, 1:H1, :] = pooled[0:H1 - 1, :]   # dw=0 view
            p1_ref[1 * C1 + c, 1 + ho, :, :] = pooled                   # dw=1 view
            p1_ref[2 * C1 + c, 1 + ho, 0:H1 - 1, :] = pooled[1:H1, :]   # dw=2 view
        return carry

    lax.fori_loop(0, C1, conv1_channel, 0)

    # ---- conv2 (10->20, 3x3, pad=1); Dropout2d == identity ------------------
    # Per output channel: 90 taps of scalar * (7,7,B) aligned slabs, split into
    # 3 independent partial accumulators (one per dh) to break the serial add
    # chain, then full-spatial max pool (7x7) + bias + ReLU.
    def conv2_channel(co, carry):
        bias = b2_ref[co]
        parts = [None] * KH
        for dw in range(KW):
            base = dw * C1
            for ci in range(C1):
                rows9 = p1_ref[base + ci, :, :, :]                    # (9, 7, B), aligned
                for dh in range(KH):
                    wgt = w2_ref[co, (dh * KW + dw) * C1 + ci]        # SMEM scalar
                    term = rows9[dh: dh + H1] * wgt                   # (7, 7, B)
                    parts[dh] = term if parts[dh] is None else parts[dh] + term
        acc = (parts[0] + parts[1]) + parts[2]                        # (7, 7, B)
        sp = jnp.max(acc, axis=0)                                     # (7, B) max over rows
        fco = jnp.max(sp, axis=0, keepdims=True)                      # (1, B) max over cols
        fco = jnp.maximum(fco + bias, 0.0)                            # bias + ReLU
        feat_ref[pl.ds(co, 1), :] = fco
        return carry

    lax.fori_loop(0, C2, conv2_channel, 0)

    # ---- fc1 + ReLU, (dropout == identity), fc2 (MXU) -----------------------
    feat = feat_ref[...]                                              # (20, B)
    z1 = jnp.dot(fc1w_ref[...], feat, preferred_element_type=f32) + fc1b_ref[...]
    a1 = jnp.maximum(z1, 0.0)
    z2 = jnp.dot(fc2w_ref[...], a1, preferred_element_type=f32) + fc2b_ref[...]

    # ---- log_softmax over classes (sublane axis) ----------------------------
    mx = jnp.max(z2, axis=0, keepdims=True)
    sh = z2 - mx
    lse = jnp.log(jnp.sum(jnp.exp(sh), axis=0, keepdims=True))
    out_ref[...] = sh - lse                                           # (10, B)


def net_forward(x_nchw, params, block_b=B_BLK):
    """x_nchw: (B, 1, 28, 28) float32. Returns (B, 10) log-probs."""
    w1, b1, w2, b2, fc1w, fc1b, fc2w, fc2b = params
    Bn = x_nchw.shape[0]
    Bp = ((Bn + block_b - 1) // block_b) * block_b

    # NCHW (C=1) -> (H, W, B): batch on lanes; pre-pad the conv1 halo (1 px)
    # and pad batch up to a multiple of the block.
    x = jnp.transpose(x_nchw[:, 0, :, :].astype(jnp.float32), (1, 2, 0))
    x = jnp.pad(x, ((1, 1), (1, 1), (0, Bp - Bn)))                    # (30, 30, Bp)
    # Six column-strided / shifted copies: xs[s, h, j, b] = x_pad[h, 4j + s, b].
    # Every conv1 tap load in the kernel is then an aligned full-sublane read,
    # and the 4-wide W pool reduces to a max over the 4 phase accumulators.
    xs = jnp.stack([x[:, s: s + POOL1 * H1: POOL1, :] for s in range(NSHIFT)],
                   axis=0)                                            # (6, 30, 7, Bp)

    # Conv weights -> (Cout, kh*kw*Cin); row index (dh*KW + dw)*Cin + ci.
    w1s = w1.astype(jnp.float32).reshape(C1, KH * KW)                 # Cin == 1
    w2s = jnp.transpose(w2.astype(jnp.float32), (0, 2, 3, 1)).reshape(C2, KH * KW * C1)

    smem = pl.BlockSpec(memory_space=pltpu.MemorySpace.SMEM)
    vmem = pl.BlockSpec(memory_space=pltpu.MemorySpace.VMEM)

    out = pl.pallas_call(
        net_kernel,
        out_shape=jax.ShapeDtypeStruct((NCLS, Bp), jnp.float32),
        grid=(Bp // block_b,),
        in_specs=[
            pl.BlockSpec((NSHIFT, H + 2, H1, block_b), lambda i: (0, 0, 0, i)),
            smem, smem, smem, smem,                                   # conv scalars
            vmem, vmem, vmem, vmem,                                   # fc params
        ],
        out_specs=pl.BlockSpec((NCLS, block_b), lambda i: (0, i)),
        scratch_shapes=[
            pltpu.VMEM((KW * C1, H1 + 2, H1, block_b), jnp.float32),  # 3 shifted conv2 inputs
            pltpu.VMEM((C2, block_b), jnp.float32),                   # pooled conv2 features
        ],
        compiler_params=pltpu.CompilerParams(
            dimension_semantics=("parallel",),
            vmem_limit_bytes=16 * 1024 * 1024),
    )(xs, w1s, b1.astype(jnp.float32), w2s, b2.astype(jnp.float32),
      fc1w.astype(jnp.float32), fc1b.astype(jnp.float32).reshape(C2, 1),
      fc2w.astype(jnp.float32), fc2b.astype(jnp.float32).reshape(NCLS, 1))

    return jnp.transpose(out[:, :Bn])                                 # (B, 10)


def net_reference(x, params):
    """Pure-JAX reference mirroring the PyTorch forward (eval mode)."""
    w1, b1, w2, b2, fc1w, fc1b, fc2w, fc2b = params
    dn = ('NCHW', 'OIHW', 'NCHW')
    y = jax.lax.conv_general_dilated(x, w1, (1, 1), ((1, 1), (1, 1)),
                                     dimension_numbers=dn) + b1[None, :, None, None]
    y = jax.lax.reduce_window(y, -jnp.inf, jax.lax.max,
                              (1, 1, 4, 4), (1, 1, 4, 4), 'VALID')
    y = jnp.maximum(y, 0.0)
    y = jax.lax.conv_general_dilated(y, w2, (1, 1), ((1, 1), (1, 1)),
                                     dimension_numbers=dn) + b2[None, :, None, None]
    y = jax.lax.reduce_window(y, -jnp.inf, jax.lax.max,
                              (1, 1, 7, 7), (1, 1, 7, 7), 'VALID')
    y = jnp.maximum(y, 0.0)
    y = y.reshape(-1, 20)
    y = jnp.maximum(y @ fc1w.T + fc1b, 0.0)
    y = y @ fc2w.T + fc2b
    return jax.nn.log_softmax(y, axis=1)


if __name__ == "__main__":
    key = jax.random.PRNGKey(0)
    ks = jax.random.split(key, 9)
    Bn = 2
    x = jax.random.normal(ks[0], (Bn, C0, H, W), jnp.float32)
    params = (
        0.2 * jax.random.normal(ks[1], (C1, C0, KH, KW), jnp.float32),  # conv1.weight
        0.1 * jax.random.normal(ks[2], (C1,), jnp.float32),             # conv1.bias
        0.2 * jax.random.normal(ks[3], (C2, C1, KH, KW), jnp.float32),  # conv2.weight
        0.1 * jax.random.normal(ks[4], (C2,), jnp.float32),             # conv2.bias
        0.2 * jax.random.normal(ks[5], (20, 20), jnp.float32),          # fc1.weight
        0.1 * jax.random.normal(ks[6], (20,), jnp.float32),             # fc1.bias
        0.2 * jax.random.normal(ks[7], (NCLS, 20), jnp.float32),        # fc2.weight
        0.1 * jax.random.normal(ks[8], (NCLS,), jnp.float32),           # fc2.bias
    )

    out = jax.block_until_ready(net_forward(x, params))
    ref = jax.block_until_ready(net_reference(x, params))
    assert out.shape == (Bn, NCLS)
    assert jnp.allclose(out, ref, atol=1e-4, rtol=1e-4)
    print("KERNEL_OK")
</pallas_src>

<mosaic_0001>
module attributes {stable_mosaic.version = 11 : i64} {
  func.func @net_kernel(%arg0: i32, %arg1: memref<6x30x7x128xf32, #tpu.memory_space<vmem>>, %arg2: memref<10x9xf32, #tpu.memory_space<smem>>, %arg3: memref<10xf32, #tpu.memory_space<smem>>, %arg4: memref<20x90xf32, #tpu.memory_space<smem>>, %arg5: memref<20xf32, #tpu.memory_space<smem>>, %arg6: memref<20x20xf32, #tpu.memory_space<vmem>>, %arg7: memref<20x1xf32, #tpu.memory_space<vmem>>, %arg8: memref<10x20xf32, #tpu.memory_space<vmem>>, %arg9: memref<10x1xf32, #tpu.memory_space<vmem>>, %arg10: memref<10x128xf32, #tpu.memory_space<vmem>>, %arg11: memref<30x9x7x128xf32, #tpu.memory_space<vmem>>, %arg12: memref<20x128xf32, #tpu.memory_space<vmem>>) attributes {dimension_semantics = [#tpu.dimension_semantics<parallel>], iteration_bounds = array<i64: 1>, scalar_prefetch = 0 : i64, scratch_operands = 2 : i64, tpu.core_type = #tpu.core_type<tc>, window_params = [{transform_indices = @transform_0, window_bounds = array<i64: 6, 30, 7, 128>}, {transform_indices = @transform_1, window_bounds = array<i64: 10, 9>}, {transform_indices = @transform_2, window_bounds = array<i64: 10>}, {transform_indices = @transform_3, window_bounds = array<i64: 20, 90>}, {transform_indices = @transform_4, window_bounds = array<i64: 20>}, {pipeline_mode = #tpu.pipeline_mode<synchronous>, transform_indices = @transform_5, window_bounds = array<i64: 20, 20>}, {pipeline_mode = #tpu.pipeline_mode<synchronous>, transform_indices = @transform_6, window_bounds = array<i64: 20, 1>}, {pipeline_mode = #tpu.pipeline_mode<synchronous>, transform_indices = @transform_7, window_bounds = array<i64: 10, 20>}, {pipeline_mode = #tpu.pipeline_mode<synchronous>, transform_indices = @transform_8, window_bounds = array<i64: 10, 1>}, {transform_indices = @transform_9, window_bounds = array<i64: 10, 128>}]} {
    %cst = arith.constant 0.000000e+00 : f32
    %0 = vector.broadcast %cst : f32 to vector<9x7x128xf32>
    %cst_0 = arith.constant 0.000000e+00 : f32
    %1 = vector.broadcast %cst_0 : f32 to vector<7x128xf32>
    %c0 = arith.constant 0 : index
    %c0_1 = arith.constant 0 : index
    %c0_2 = arith.constant 0 : index
    %c0_3 = arith.constant 0 : index
    %2 = vector.load %arg11[%c0, %c0_1, %c0_2, %c0_3] : memref<30x9x7x128xf32, #tpu.memory_space<vmem>>, vector<1x9x7x128xf32>
    %3 = vector.shape_cast %2 : vector<1x9x7x128xf32> to vector<9x7x128xf32>
    %4 = vector.shape_cast %0 : vector<9x7x128xf32> to vector<1x9x7x128xf32>
    tpu.vector_store %arg11[%c0, %c0_1, %c0_2, %c0_3], %4 {strides = array<i32>} : memref<30x9x7x128xf32, #tpu.memory_space<vmem>>, vector<1x9x7x128xf32>,
    %c20 = arith.constant 20 : index
    %c0_4 = arith.constant 0 : index
    %c0_5 = arith.constant 0 : index
    %c0_6 = arith.constant 0 : index
    %5 = vector.load %arg11[%c20, %c0_4, %c0_5, %c0_6] : memref<30x9x7x128xf32, #tpu.memory_space<vmem>>, vector<1x9x7x128xf32>
    %6 = vector.shape_cast %5 : vector<1x9x7x128xf32> to vector<9x7x128xf32>
    %7 = vector.shape_cast %0 : vector<9x7x128xf32> to vector<1x9x7x128xf32>
    tpu.vector_store %arg11[%c20, %c0_4, %c0_5, %c0_6], %7 {strides = array<i32>} : memref<30x9x7x128xf32, #tpu.memory_space<vmem>>, vector<1x9x7x128xf32>,
    %c10 = arith.constant 10 : index
    %c0_7 = arith.constant 0 : index
    %c0_8 = arith.constant 0 : index
    %c0_9 = arith.constant 0 : index
    %8 = vector.load %arg11[%c10, %c0_7, %c0_8, %c0_9] : memref<30x9x7x128xf32, #tpu.memory_space<vmem>>, vector<1x1x7x128xf32>
    %9 = vector.shape_cast %8 : vector<1x1x7x128xf32> to vector<7x128xf32>
    %10 = vector.shape_cast %1 : vector<7x128xf32> to vector<1x1x7x128xf32>
    tpu.vector_store %arg11[%c10, %c0_7, %c0_8, %c0_9], %10 {strides = array<i32>} : memref<30x9x7x128xf32, #tpu.memory_space<vmem>>, vector<1x1x7x128xf32>,
    %c10_10 = arith.constant 10 : index
    %c8 = arith.constant 8 : index
    %c0_11 = arith.constant 0 : index
    %c0_12 = arith.constant 0 : index
    %11 = vector.load %arg11[%c10_10, %c8, %c0_11, %c0_12] : memref<30x9x7x128xf32, #tpu.memory_space<vmem>>, vector<1x1x7x128xf32>
    %12 = vector.shape_cast %11 : vector<1x1x7x128xf32> to vector<7x128xf32>
    %13 = vector.shape_cast %1 : vector<7x128xf32> to vector<1x1x7x128xf32>
    tpu.vector_store %arg11[%c10_10, %c8, %c0_11, %c0_12], %13 {strides = array<i32>} : memref<30x9x7x128xf32, #tpu.memory_space<vmem>>, vector<1x1x7x128xf32>,
    %c1 = arith.constant 1 : index
    %c0_13 = arith.constant 0 : index
    %c0_14 = arith.constant 0 : index
    %c0_15 = arith.constant 0 : index
    %14 = vector.load %arg11[%c1, %c0_13, %c0_14, %c0_15] : memref<30x9x7x128xf32, #tpu.memory_space<vmem>>, vector<1x9x7x128xf32>
    %15 = vector.shape_cast %14 : vector<1x9x7x128xf32> to vector<9x7x128xf32>
    %16 = vector.shape_cast %0 : vector<9x7x128xf32> to vector<1x9x7x128xf32>
    tpu.vector_store %arg11[%c1, %c0_13, %c0_14, %c0_15], %16 {strides = array<i32>} : memref<30x9x7x128xf32, #tpu.memory_space<vmem>>, vector<1x9x7x128xf32>,
    %c21 = arith.constant 21 : index
    %c0_16 = arith.constant 0 : index
    %c0_17 = arith.constant 0 : index
    %c0_18 = arith.constant 0 : index
    %17 = vector.load %arg11[%c21, %c0_16, %c0_17, %c0_18] : memref<30x9x7x128xf32, #tpu.memory_space<vmem>>, vector<1x9x7x128xf32>
    %18 = vector.shape_cast %17 : vector<1x9x7x128xf32> to vector<9x7x128xf32>
    %19 = vector.shape_cast %0 : vector<9x7x128xf32> to vector<1x9x7x128xf32>
    tpu.vector_store %arg11[%c21, %c0_16, %c0_17, %c0_18], %19 {strides = array<i32>} : memref<30x9x7x128xf32, #tpu.memory_space<vmem>>, vector<1x9x7x128xf32>,
    %c11 = arith.constant 11 : index
    %c0_19 = arith.constant 0 : index
    %c0_20 = arith.constant 0 : index
    %c0_21 = arith.constant 0 : index
    %20 = vector.load %arg11[%c11, %c0_19, %c0_20, %c0_21] : memref<30x9x7x128xf32, #tpu.memory_space<vmem>>, vector<1x1x7x128xf32>
    %21 = vector.shape_cast %20 : vector<1x1x7x128xf32> to vector<7x128xf32>
    %22 = vector.shape_cast %1 : vector<7x128xf32> to vector<1x1x7x128xf32>
    tpu.vector_store %arg11[%c11, %c0_19, %c0_20, %c0_21], %22 {strides = array<i32>} : memref<30x9x7x128xf32, #tpu.memory_space<vmem>>, vector<1x1x7x128xf32>,
    %c11_22 = arith.constant 11 : index
    %c8_23 = arith.constant 8 : index
    %c0_24 = arith.constant 0 : index
    %c0_25 = arith.constant 0 : index
    %23 = vector.load %arg11[%c11_22, %c8_23, %c0_24, %c0_25] : memref<30x9x7x128xf32, #tpu.memory_space<vmem>>, vector<1x1x7x128xf32>
    %24 = vector.shape_cast %23 : vector<1x1x7x128xf32> to vector<7x128xf32>
    %25 = vector.shape_cast %1 : vector<7x128xf32> to vector<1x1x7x128xf32>
    tpu.vector_store %arg11[%c11_22, %c8_23, %c0_24, %c0_25], %25 {strides = array<i32>} : memref<30x9x7x128xf32, #tpu.memory_space<vmem>>, vector<1x1x7x128xf32>,
    %c2 = arith.constant 2 : index
    %c0_26 = arith.constant 0 : index
    %c0_27 = arith.constant 0 : index
    %c0_28 = arith.constant 0 : index
    %26 = vector.load %arg11[%c2, %c0_26, %c0_27, %c0_28] : memref<30x9x7x128xf32, #tpu.memory_space<vmem>>, vector<1x9x7x128xf32>
    %27 = vector.shape_cast %26 : vector<1x9x7x128xf32> to vector<9x7x128xf32>
    %28 = vector.shape_cast %0 : vector<9x7x128xf32> to vector<1x9x7x128xf32>
    tpu.vector_store %arg11[%c2, %c0_26, %c0_27, %c0_28], %28 {strides = array<i32>} : memref<30x9x7x128xf32, #tpu.memory_space<vmem>>, vector<1x9x7x128xf32>,
    %c22 = arith.constant 22 : index
    %c0_29 = arith.constant 0 : index
    %c0_30 = arith.constant 0 : index
    %c0_31 = arith.constant 0 : index
    %29 = vector.load %arg11[%c22, %c0_29, %c0_30, %c0_31] : memref<30x9x7x128xf32, #tpu.memory_space<vmem>>, vector<1x9x7x128xf32>
    %30 = vector.shape_cast %29 : vector<1x9x7x128xf32> to vector<9x7x128xf32>
    %31 = vector.shape_cast %0 : vector<9x7x128xf32> to vector<1x9x7x128xf32>
    tpu.vector_store %arg11[%c22, %c0_29, %c0_30, %c0_31], %31 {strides = array<i32>} : memref<30x9x7x128xf32, #tpu.memory_space<vmem>>, vector<1x9x7x128xf32>,
    %c12 = arith.constant 12 : index
    %c0_32 = arith.constant 0 : index
    %c0_33 = arith.constant 0 : index
    %c0_34 = arith.constant 0 : index
    %32 = vector.load %arg11[%c12, %c0_32, %c0_33, %c0_34] : memref<30x9x7x128xf32, #tpu.memory_space<vmem>>, vector<1x1x7x128xf32>
    %33 = vector.shape_cast %32 : vector<1x1x7x128xf32> to vector<7x128xf32>
    %34 = vector.shape_cast %1 : vector<7x128xf32> to vector<1x1x7x128xf32>
    tpu.vector_store %arg11[%c12, %c0_32, %c0_33, %c0_34], %34 {strides = array<i32>} : memref<30x9x7x128xf32, #tpu.memory_space<vmem>>, vector<1x1x7x128xf32>,
    %c12_35 = arith.constant 12 : index
    %c8_36 = arith.constant 8 : index
    %c0_37 = arith.constant 0 : index
    %c0_38 = arith.constant 0 : index
    %35 = vector.load %arg11[%c12_35, %c8_36, %c0_37, %c0_38] : memref<30x9x7x128xf32, #tpu.memory_space<vmem>>, vector<1x1x7x128xf32>
    %36 = vector.shape_cast %35 : vector<1x1x7x128xf32> to vector<7x128xf32>
    %37 = vector.shape_cast %1 : vector<7x128xf32> to vector<1x1x7x128xf32>
    tpu.vector_store %arg11[%c12_35, %c8_36, %c0_37, %c0_38], %37 {strides = array<i32>} : memref<30x9x7x128xf32, #tpu.memory_space<vmem>>, vector<1x1x7x128xf32>,
    %c3 = arith.constant 3 : index
    %c0_39 = arith.constant 0 : index
    %c0_40 = arith.constant 0 : index
    %c0_41 = arith.constant 0 : index
    %38 = vector.load %arg11[%c3, %c0_39, %c0_40, %c0_41] : memref<30x9x7x128xf32, #tpu.memory_space<vmem>>, vector<1x9x7x128xf32>
    %39 = vector.shape_cast %38 : vector<1x9x7x128xf32> to vector<9x7x128xf32>
    %40 = vector.shape_cast %0 : vector<9x7x128xf32> to vector<1x9x7x128xf32>
    tpu.vector_store %arg11[%c3, %c0_39, %c0_40, %c0_41], %40 {strides = array<i32>} : memref<30x9x7x128xf32, #tpu.memory_space<vmem>>, vector<1x9x7x128xf32>,
    %c23 = arith.constant 23 : index
    %c0_42 = arith.constant 0 : index
    %c0_43 = arith.constant 0 : index
    %c0_44 = arith.constant 0 : index
    %41 = vector.load %arg11[%c23, %c0_42, %c0_43, %c0_44] : memref<30x9x7x128xf32, #tpu.memory_space<vmem>>, vector<1x9x7x128xf32>
    %42 = vector.shape_cast %41 : vector<1x9x7x128xf32> to vector<9x7x128xf32>
    %43 = vector.shape_cast %0 : vector<9x7x128xf32> to vector<1x9x7x128xf32>
    tpu.vector_store %arg11[%c23, %c0_42, %c0_43, %c0_44], %43 {strides = array<i32>} : memref<30x9x7x128xf32, #tpu.memory_space<vmem>>, vector<1x9x7x128xf32>,
    %c13 = arith.constant 13 : index
    %c0_45 = arith.constant 0 : index
    %c0_46 = arith.constant 0 : index
    %c0_47 = arith.constant 0 : index
    %44 = vector.load %arg11[%c13, %c0_45, %c0_46, %c0_47] : memref<30x9x7x128xf32, #tpu.memory_space<vmem>>, vector<1x1x7x128xf32>
    %45 = vector.shape_cast %44 : vector<1x1x7x128xf32> to vector<7x128xf32>
    %46 = vector.shape_cast %1 : vector<7x128xf32> to vector<1x1x7x128xf32>
    tpu.vector_store %arg11[%c13, %c0_45, %c0_46, %c0_47], %46 {strides = array<i32>} : memref<30x9x7x128xf32, #tpu.memory_space<vmem>>, vector<1x1x7x128xf32>,
    %c13_48 = arith.constant 13 : index
    %c8_49 = arith.constant 8 : index
    %c0_50 = arith.constant 0 : index
    %c0_51 = arith.constant 0 : index
    %47 = vector.load %arg11[%c13_48, %c8_49, %c0_50, %c0_51] : memref<30x9x7x128xf32, #tpu.memory_space<vmem>>, vector<1x1x7x128xf32>
    %48 = vector.shape_cast %47 : vector<1x1x7x128xf32> to vector<7x128xf32>
    %49 = vector.shape_cast %1 : vector<7x128xf32> to vector<1x1x7x128xf32>
    tpu.vector_store %arg11[%c13_48, %c8_49, %c0_50, %c0_51], %49 {strides = array<i32>} : memref<30x9x7x128xf32, #tpu.memory_space<vmem>>, vector<1x1x7x128xf32>,
    %c4 = arith.constant 4 : index
    %c0_52 = arith.constant 0 : index
    %c0_53 = arith.constant 0 : index
    %c0_54 = arith.constant 0 : index
    %50 = vector.load %arg11[%c4, %c0_52, %c0_53, %c0_54] : memref<30x9x7x128xf32, #tpu.memory_space<vmem>>, vector<1x9x7x128xf32>
    %51 = vector.shape_cast %50 : vector<1x9x7x128xf32> to vector<9x7x128xf32>
    %52 = vector.shape_cast %0 : vector<9x7x128xf32> to vector<1x9x7x128xf32>
    tpu.vector_store %arg11[%c4, %c0_52, %c0_53, %c0_54], %52 {strides = array<i32>} : memref<30x9x7x128xf32, #tpu.memory_space<vmem>>, vector<1x9x7x128xf32>,
    %c24 = arith.constant 24 : index
    %c0_55 = arith.constant 0 : index
    %c0_56 = arith.constant 0 : index
    %c0_57 = arith.constant 0 : index
    %53 = vector.load %arg11[%c24, %c0_55, %c0_56, %c0_57] : memref<30x9x7x128xf32, #tpu.memory_space<vmem>>, vector<1x9x7x128xf32>
    %54 = vector.shape_cast %53 : vector<1x9x7x128xf32> to vector<9x7x128xf32>
    %55 = vector.shape_cast %0 : vector<9x7x128xf32> to vector<1x9x7x128xf32>
    tpu.vector_store %arg11[%c24, %c0_55, %c0_56, %c0_57], %55 {strides = array<i32>} : memref<30x9x7x128xf32, #tpu.memory_space<vmem>>, vector<1x9x7x128xf32>,
    %c14 = arith.constant 14 : index
    %c0_58 = arith.constant 0 : index
    %c0_59 = arith.constant 0 : index
    %c0_60 = arith.constant 0 : index
    %56 = vector.load %arg11[%c14, %c0_58, %c0_59, %c0_60] : memref<30x9x7x128xf32, #tpu.memory_space<vmem>>, vector<1x1x7x128xf32>
    %57 = vector.shape_cast %56 : vector<1x1x7x128xf32> to vector<7x128xf32>
    %58 = vector.shape_cast %1 : vector<7x128xf32> to vector<1x1x7x128xf32>
    tpu.vector_store %arg11[%c14, %c0_58, %c0_59, %c0_60], %58 {strides = array<i32>} : memref<30x9x7x128xf32, #tpu.memory_space<vmem>>, vector<1x1x7x128xf32>,
    %c14_61 = arith.constant 14 : index
    %c8_62 = arith.constant 8 : index
    %c0_63 = arith.constant 0 : index
    %c0_64 = arith.constant 0 : index
    %59 = vector.load %arg11[%c14_61, %c8_62, %c0_63, %c0_64] : memref<30x9x7x128xf32, #tpu.memory_space<vmem>>, vector<1x1x7x128xf32>
    %60 = vector.shape_cast %59 : vector<1x1x7x128xf32> to vector<7x128xf32>
    %61 = vector.shape_cast %1 : vector<7x128xf32> to vector<1x1x7x128xf32>
    tpu.vector_store %arg11[%c14_61, %c8_62, %c0_63, %c0_64], %61 {strides = array<i32>} : memref<30x9x7x128xf32, #tpu.memory_space<vmem>>, vector<1x1x7x128xf32>,
    %c5 = arith.constant 5 : index
    %c0_65 = arith.constant 0 : index
    %c0_66 = arith.constant 0 : index
    %c0_67 = arith.constant 0 : index
    %62 = vector.load %arg11[%c5, %c0_65, %c0_66, %c0_67] : memref<30x9x7x128xf32, #tpu.memory_space<vmem>>, vector<1x9x7x128xf32>
    %63 = vector.shape_cast %62 : vector<1x9x7x128xf32> to vector<9x7x128xf32>
    %64 = vector.shape_cast %0 : vector<9x7x128xf32> to vector<1x9x7x128xf32>
    tpu.vector_store %arg11[%c5, %c0_65, %c0_66, %c0_67], %64 {strides = array<i32>} : memref<30x9x7x128xf32, #tpu.memory_space<vmem>>, vector<1x9x7x128xf32>,
    %c25 = arith.constant 25 : index
    %c0_68 = arith.constant 0 : index
    %c0_69 = arith.constant 0 : index
    %c0_70 = arith.constant 0 : index
    %65 = vector.load %arg11[%c25, %c0_68, %c0_69, %c0_70] : memref<30x9x7x128xf32, #tpu.memory_space<vmem>>, vector<1x9x7x128xf32>
    %66 = vector.shape_cast %65 : vector<1x9x7x128xf32> to vector<9x7x128xf32>
    %67 = vector.shape_cast %0 : vector<9x7x128xf32> to vector<1x9x7x128xf32>
    tpu.vector_store %arg11[%c25, %c0_68, %c0_69, %c0_70], %67 {strides = array<i32>} : memref<30x9x7x128xf32, #tpu.memory_space<vmem>>, vector<1x9x7x128xf32>,
    %c15 = arith.constant 15 : index
    %c0_71 = arith.constant 0 : index
    %c0_72 = arith.constant 0 : index
    %c0_73 = arith.constant 0 : index
    %68 = vector.load %arg11[%c15, %c0_71, %c0_72, %c0_73] : memref<30x9x7x128xf32, #tpu.memory_space<vmem>>, vector<1x1x7x128xf32>
    %69 = vector.shape_cast %68 : vector<1x1x7x128xf32> to vector<7x128xf32>
    %70 = vector.shape_cast %1 : vector<7x128xf32> to vector<1x1x7x128xf32>
    tpu.vector_store %arg11[%c15, %c0_71, %c0_72, %c0_73], %70 {strides = array<i32>} : memref<30x9x7x128xf32, #tpu.memory_space<vmem>>, vector<1x1x7x128xf32>,
    %c15_74 = arith.constant 15 : index
    %c8_75 = arith.constant 8 : index
    %c0_76 = arith.constant 0 : index
    %c0_77 = arith.constant 0 : index
    %71 = vector.load %arg11[%c15_74, %c8_75, %c0_76, %c0_77] : memref<30x9x7x128xf32, #tpu.memory_space<vmem>>, vector<1x1x7x128xf32>
    %72 = vector.shape_cast %71 : vector<1x1x7x128xf32> to vector<7x128xf32>
    %73 = vector.shape_cast %1 : vector<7x128xf32> to vector<1x1x7x128xf32>
    tpu.vector_store %arg11[%c15_74, %c8_75, %c0_76, %c0_77], %73 {strides = array<i32>} : memref<30x9x7x128xf32, #tpu.memory_space<vmem>>, vector<1x1x7x128xf32>,
    %c6 = arith.constant 6 : index
    %c0_78 = arith.constant 0 : index
    %c0_79 = arith.constant 0 : index
    %c0_80 = arith.constant 0 : index
    %74 = vector.load %arg11[%c6, %c0_78, %c0_79, %c0_80] : memref<30x9x7x128xf32, #tpu.memory_space<vmem>>, vector<1x9x7x128xf32>
    %75 = vector.shape_cast %74 : vector<1x9x7x128xf32> to vector<9x7x128xf32>
    %76 = vector.shape_cast %0 : vector<9x7x128xf32> to vector<1x9x7x128xf32>
    tpu.vector_store %arg11[%c6, %c0_78, %c0_79, %c0_80], %76 {strides = array<i32>} : memref<30x9x7x128xf32, #tpu.memory_space<vmem>>, vector<1x9x7x128xf32>,
    %c26 = arith.constant 26 : index
    %c0_81 = arith.constant 0 : index
    %c0_82 = arith.constant 0 : index
    %c0_83 = arith.constant 0 : index
    %77 = vector.load %arg11[%c26, %c0_81, %c0_82, %c0_83] : memref<30x9x7x128xf32, #tpu.memory_space<vmem>>, vector<1x9x7x128xf32>
    %78 = vector.shape_cast %77 : vector<1x9x7x128xf32> to vector<9x7x128xf32>
    %79 = vector.shape_cast %0 : vector<9x7x128xf32> to vector<1x9x7x128xf32>
    tpu.vector_store %arg11[%c26, %c0_81, %c0_82, %c0_83], %79 {strides = array<i32>} : memref<30x9x7x128xf32, #tpu.memory_space<vmem>>, vector<1x9x7x128xf32>,
    %c16 = arith.constant 16 : index
    %c0_84 = arith.constant 0 : index
    %c0_85 = arith.constant 0 : index
    %c0_86 = arith.constant 0 : index
    %80 = vector.load %arg11[%c16, %c0_84, %c0_85, %c0_86] : memref<30x9x7x128xf32, #tpu.memory_space<vmem>>, vector<1x1x7x128xf32>
    %81 = vector.shape_cast %80 : vector<1x1x7x128xf32> to vector<7x128xf32>
    %82 = vector.shape_cast %1 : vector<7x128xf32> to vector<1x1x7x128xf32>
    tpu.vector_store %arg11[%c16, %c0_84, %c0_85, %c0_86], %82 {strides = array<i32>} : memref<30x9x7x128xf32, #tpu.memory_space<vmem>>, vector<1x1x7x128xf32>,
    %c16_87 = arith.constant 16 : index
    %c8_88 = arith.constant 8 : index
    %c0_89 = arith.constant 0 : index
    %c0_90 = arith.constant 0 : index
    %83 = vector.load %arg11[%c16_87, %c8_88, %c0_89, %c0_90] : memref<30x9x7x128xf32, #tpu.memory_space<vmem>>, vector<1x1x7x128xf32>
    %84 = vector.shape_cast %83 : vector<1x1x7x128xf32> to vector<7x128xf32>
    %85 = vector.shape_cast %1 : vector<7x128xf32> to vector<1x1x7x128xf32>
    tpu.vector_store %arg11[%c16_87, %c8_88, %c0_89, %c0_90], %85 {strides = array<i32>} : memref<30x9x7x128xf32, #tpu.memory_space<vmem>>, vector<1x1x7x128xf32>,
    %c7 = arith.constant 7 : index
    %c0_91 = arith.constant 0 : index
    %c0_92 = arith.constant 0 : index
    %c0_93 = arith.constant 0 : index
    %86 = vector.load %arg11[%c7, %c0_91, %c0_92, %c0_93] : memref<30x9x7x128xf32, #tpu.memory_space<vmem>>, vector<1x9x7x128xf32>
    %87 = vector.shape_cast %86 : vector<1x9x7x128xf32> to vector<9x7x128xf32>
    %88 = vector.shape_cast %0 : vector<9x7x128xf32> to vector<1x9x7x128xf32>
    tpu.vector_store %arg11[%c7, %c0_91, %c0_92, %c0_93], %88 {strides = array<i32>} : memref<30x9x7x128xf32, #tpu.memory_space<vmem>>, vector<1x9x7x128xf32>,
    %c27 = arith.constant 27 : index
    %c0_94 = arith.constant 0 : index
    %c0_95 = arith.constant 0 : index
    %c0_96 = arith.constant 0 : index
    %89 = vector.load %arg11[%c27, %c0_94, %c0_95, %c0_96] : memref<30x9x7x128xf32, #tpu.memory_space<vmem>>, vector<1x9x7x128xf32>
    %90 = vector.shape_cast %89 : vector<1x9x7x128xf32> to vector<9x7x128xf32>
    %91 = vector.shape_cast %0 : vector<9x7x128xf32> to vector<1x9x7x128xf32>
    tpu.vector_store %arg11[%c27, %c0_94, %c0_95, %c0_96], %91 {strides = array<i32>} : memref<30x9x7x128xf32, #tpu.memory_space<vmem>>, vector<1x9x7x128xf32>,
    %c17 = arith.constant 17 : index
    %c0_97 = arith.constant 0 : index
    %c0_98 = arith.constant 0 : index
    %c0_99 = arith.constant 0 : index
    %92 = vector.load %arg11[%c17, %c0_97, %c0_98, %c0_99] : memref<30x9x7x128xf32, #tpu.memory_space<vmem>>, vector<1x1x7x128xf32>
    %93 = vector.shape_cast %92 : vector<1x1x7x128xf32> to vector<7x128xf32>
    %94 = vector.shape_cast %1 : vector<7x128xf32> to vector<1x1x7x128xf32>
    tpu.vector_store %arg11[%c17, %c0_97, %c0_98, %c0_99], %94 {strides = array<i32>} : memref<30x9x7x128xf32, #tpu.memory_space<vmem>>, vector<1x1x7x128xf32>,
    %c17_100 = arith.constant 17 : index
    %c8_101 = arith.constant 8 : index
    %c0_102 = arith.constant 0 : index
    %c0_103 = arith.constant 0 : index
    %95 = vector.load %arg11[%c17_100, %c8_101, %c0_102, %c0_103] : memref<30x9x7x128xf32, #tpu.memory_space<vmem>>, vector<1x1x7x128xf32>
    %96 = vector.shape_cast %95 : vector<1x1x7x128xf32> to vector<7x128xf32>
    %97 = vector.shape_cast %1 : vector<7x128xf32> to vector<1x1x7x128xf32>
    tpu.vector_store %arg11[%c17_100, %c8_101, %c0_102, %c0_103], %97 {strides = array<i32>} : memref<30x9x7x128xf32, #tpu.memory_space<vmem>>, vector<1x1x7x128xf32>,
    %c8_104 = arith.constant 8 : index
    %c0_105 = arith.constant 0 : index
    %c0_106 = arith.constant 0 : index
    %c0_107 = arith.constant 0 : index
    %98 = vector.load %arg11[%c8_104, %c0_105, %c0_106, %c0_107] : memref<30x9x7x128xf32, #tpu.memory_space<vmem>>, vector<1x9x7x128xf32>
    %99 = vector.shape_cast %98 : vector<1x9x7x128xf32> to vector<9x7x128xf32>
    %100 = vector.shape_cast %0 : vector<9x7x128xf32> to vector<1x9x7x128xf32>
    tpu.vector_store %arg11[%c8_104, %c0_105, %c0_106, %c0_107], %100 {strides = array<i32>} : memref<30x9x7x128xf32, #tpu.memory_space<vmem>>, vector<1x9x7x128xf32>,
    %c28 = arith.constant 28 : index
    %c0_108 = arith.constant 0 : index
    %c0_109 = arith.constant 0 : index
    %c0_110 = arith.constant 0 : index
    %101 = vector.load %arg11[%c28, %c0_108, %c0_109, %c0_110] : memref<30x9x7x128xf32, #tpu.memory_space<vmem>>, vector<1x9x7x128xf32>
    %102 = vector.shape_cast %101 : vector<1x9x7x128xf32> to vector<9x7x128xf32>
    %103 = vector.shape_cast %0 : vector<9x7x128xf32> to vector<1x9x7x128xf32>
    tpu.vector_store %arg11[%c28, %c0_108, %c0_109, %c0_110], %103 {strides = array<i32>} : memref<30x9x7x128xf32, #tpu.memory_space<vmem>>, vector<1x9x7x128xf32>,
    %c18 = arith.constant 18 : index
    %c0_111 = arith.constant 0 : index
    %c0_112 = arith.constant 0 : index
    %c0_113 = arith.constant 0 : index
    %104 = vector.load %arg11[%c18, %c0_111, %c0_112, %c0_113] : memref<30x9x7x128xf32, #tpu.memory_space<vmem>>, vector<1x1x7x128xf32>
    %105 = vector.shape_cast %104 : vector<1x1x7x128xf32> to vector<7x128xf32>
    %106 = vector.shape_cast %1 : vector<7x128xf32> to vector<1x1x7x128xf32>
    tpu.vector_store %arg11[%c18, %c0_111, %c0_112, %c0_113], %106 {strides = array<i32>} : memref<30x9x7x128xf32, #tpu.memory_space<vmem>>, vector<1x1x7x128xf32>,
    %c18_114 = arith.constant 18 : index
    %c8_115 = arith.constant 8 : index
    %c0_116 = arith.constant 0 : index
    %c0_117 = arith.constant 0 : index
    %107 = vector.load %arg11[%c18_114, %c8_115, %c0_116, %c0_117] : memref<30x9x7x128xf32, #tpu.memory_space<vmem>>, vector<1x1x7x128xf32>
    %108 = vector.shape_cast %107 : vector<1x1x7x128xf32> to vector<7x128xf32>
    %109 = vector.shape_cast %1 : vector<7x128xf32> to vector<1x1x7x128xf32>
    tpu.vector_store %arg11[%c18_114, %c8_115, %c0_116, %c0_117], %109 {strides = array<i32>} : memref<30x9x7x128xf32, #tpu.memory_space<vmem>>, vector<1x1x7x128xf32>,
    %c9 = arith.constant 9 : index
    %c0_118 = arith.constant 0 : index
    %c0_119 = arith.constant 0 : index
    %c0_120 = arith.constant 0 : index
    %110 = vector.load %arg11[%c9, %c0_118, %c0_119, %c0_120] : memref<30x9x7x128xf32, #tpu.memory_space<vmem>>, vector<1x9x7x128xf32>
    %111 = vector.shape_cast %110 : vector<1x9x7x128xf32> to vector<9x7x128xf32>
    %112 = vector.shape_cast %0 : vector<9x7x128xf32> to vector<1x9x7x128xf32>
    tpu.vector_store %arg11[%c9, %c0_118, %c0_119, %c0_120], %112 {strides = array<i32>} : memref<30x9x7x128xf32, #tpu.memory_space<vmem>>, vector<1x9x7x128xf32>,
    %c29 = arith.constant 29 : index
    %c0_121 = arith.constant 0 : index
    %c0_122 = arith.constant 0 : index
    %c0_123 = arith.constant 0 : index
    %113 = vector.load %arg11[%c29, %c0_121, %c0_122, %c0_123] : memref<30x9x7x128xf32, #tpu.memory_space<vmem>>, vector<1x9x7x128xf32>
    %114 = vector.shape_cast %113 : vector<1x9x7x128xf32> to vector<9x7x128xf32>
    %115 = vector.shape_cast %0 : vector<9x7x128xf32> to vector<1x9x7x128xf32>
    tpu.vector_store %arg11[%c29, %c0_121, %c0_122, %c0_123], %115 {strides = array<i32>} : memref<30x9x7x128xf32, #tpu.memory_space<vmem>>, vector<1x9x7x128xf32>,
    %c19 = arith.constant 19 : index
    %c0_124 = arith.constant 0 : index
    %c0_125 = arith.constant 0 : index
    %c0_126 = arith.constant 0 : index
    %116 = vector.load %arg11[%c19, %c0_124, %c0_125, %c0_126] : memref<30x9x7x128xf32, #tpu.memory_space<vmem>>, vector<1x1x7x128xf32>
    %117 = vector.shape_cast %116 : vector<1x1x7x128xf32> to vector<7x128xf32>
    %118 = vector.shape_cast %1 : vector<7x128xf32> to vector<1x1x7x128xf32>
    tpu.vector_store %arg11[%c19, %c0_124, %c0_125, %c0_126], %118 {strides = array<i32>} : memref<30x9x7x128xf32, #tpu.memory_space<vmem>>, vector<1x1x7x128xf32>,
    %c19_127 = arith.constant 19 : index
    %c8_128 = arith.constant 8 : index
    %c0_129 = arith.constant 0 : index
    %c0_130 = arith.constant 0 : index
    %119 = vector.load %arg11[%c19_127, %c8_128, %c0_129, %c0_130] : memref<30x9x7x128xf32, #tpu.memory_space<vmem>>, vector<1x1x7x128xf32>
    %120 = vector.shape_cast %119 : vector<1x1x7x128xf32> to vector<7x128xf32>
    %121 = vector.shape_cast %1 : vector<7x128xf32> to vector<1x1x7x128xf32>
    tpu.vector_store %arg11[%c19_127, %c8_128, %c0_129, %c0_130], %121 {strides = array<i32>} : memref<30x9x7x128xf32, #tpu.memory_space<vmem>>, vector<1x1x7x128xf32>,
    %c0_i32 = arith.constant 0 : i32
    %c10_i32 = arith.constant 10 : i32
    %122 = arith.addi %c0_i32, %c10_i32 : i32
    %c1_i32 = arith.constant 1 : i32
    scf.for %arg13 = %c0_i32 to %122 step %c1_i32  : i32 {
      %148 = arith.index_cast %arg13 : i32 to index
      %c0_152 = arith.constant 0 : index
      %149 = memref.load %arg2[%148, %c0_152] : memref<10x9xf32, #tpu.memory_space<smem>>
      %150 = arith.index_cast %arg13 : i32 to index
      %c1_153 = arith.constant 1 : index
      %151 = memref.load %arg2[%150, %c1_153] : memref<10x9xf32, #tpu.memory_space<smem>>
      %152 = arith.index_cast %arg13 : i32 to index
      %c2_154 = arith.constant 2 : index
      %153 = memref.load %arg2[%152, %c2_154] : memref<10x9xf32, #tpu.memory_space<smem>>
      %154 = arith.index_cast %arg13 : i32 to index
      %c3_155 = arith.constant 3 : index
      %155 = memref.load %arg2[%154, %c3_155] : memref<10x9xf32, #tpu.memory_space<smem>>
      %156 = arith.index_cast %arg13 : i32 to index
      %c4_156 = arith.constant 4 : index
      %157 = memref.load %arg2[%156, %c4_156] : memref<10x9xf32, #tpu.memory_space<smem>>
      %158 = arith.index_cast %arg13 : i32 to index
      %c5_157 = arith.constant 5 : index
      %159 = memref.load %arg2[%158, %c5_157] : memref<10x9xf32, #tpu.memory_space<smem>>
      %160 = arith.index_cast %arg13 : i32 to index
      %c6_158 = arith.constant 6 : index
      %161 = memref.load %arg2[%160, %c6_158] : memref<10x9xf32, #tpu.memory_space<smem>>
      %162 = arith.index_cast %arg13 : i32 to index
      %c7_159 = arith.constant 7 : index
      %163 = memref.load %arg2[%162, %c7_159] : memref<10x9xf32, #tpu.memory_space<smem>>
      %164 = arith.index_cast %arg13 : i32 to index
      %c8_160 = arith.constant 8 : index
      %165 = memref.load %arg2[%164, %c8_160] : memref<10x9xf32, #tpu.memory_space<smem>>
      %166 = arith.index_cast %arg13 : i32 to index
      %167 = memref.load %arg3[%166] : memref<10xf32, #tpu.memory_space<smem>>
      %c0_161 = arith.constant 0 : index
      %c0_162 = arith.constant 0 : index
      %c0_163 = arith.constant 0 : index
      %c0_164 = arith.constant 0 : index
      %168 = vector.load %arg1[%c0_161, %c0_162, %c0_163, %c0_164] : memref<6x30x7x128xf32, #tpu.memory_space<vmem>>, vector<1x6x7x128xf32>
      %169 = vector.shape_cast %168 : vector<1x6x7x128xf32> to vector<6x7x128xf32>
      %170 = vector.extract_strided_slice %169 {offsets = [0, 0, 0], sizes = [4, 7, 128], strides = [1, 1, 1]} : vector<6x7x128xf32> to vector<4x7x128xf32>
      %171 = vector.broadcast %149 : f32 to vector<4x7x128xf32>
      %172 = arith.mulf %170, %171 : vector<4x7x128xf32>
      %173 = vector.extract_strided_slice %169 {offsets = [1, 0, 0], sizes = [4, 7, 128], strides = [1, 1, 1]} : vector<6x7x128xf32> to vector<4x7x128xf32>
      %174 = vector.broadcast %155 : f32 to vector<4x7x128xf32>
      %175 = arith.mulf %173, %174 : vector<4x7x128xf32>
      %176 = arith.addf %172, %175 : vector<4x7x128xf32>
      %177 = vector.extract_strided_slice %169 {offsets = [2, 0, 0], sizes = [4, 7, 128], strides = [1, 1, 1]} : vector<6x7x128xf32> to vector<4x7x128xf32>
      %178 = vector.broadcast %161 : f32 to vector<4x7x128xf32>
      %179 = arith.mulf %177, %178 : vector<4x7x128xf32>
      %180 = arith.addf %176, %179 : vector<4x7x128xf32>
      %c1_165 = arith.constant 1 : index
      %c0_166 = arith.constant 0 : index
      %c0_167 = arith.constant 0 : index
      %c0_168 = arith.constant 0 : index
      %181 = vector.load %arg1[%c1_165, %c0_166, %c0_167, %c0_168] : memref<6x30x7x128xf32, #tpu.memory_space<vmem>>, vector<1x6x7x128xf32>
      %182 = vector.shape_cast %181 : vector<1x6x7x128xf32> to vector<6x7x128xf32>
      %183 = vector.extract_strided_slice %182 {offsets = [0, 0, 0], sizes = [4, 7, 128], strides = [1, 1, 1]} : vector<6x7x128xf32> to vector<4x7x128xf32>
      %184 = vector.broadcast %149 : f32 to vector<4x7x128xf32>
      %185 = arith.mulf %183, %184 : vector<4x7x128xf32>
      %186 = vector.broadcast %151 : f32 to vector<4x7x128xf32>
      %187 = arith.mulf %183, %186 : vector<4x7x128xf32>
      %188 = arith.addf %180, %187 : vector<4x7x128xf32>
      %189 = vector.extract_strided_slice %182 {offsets = [1, 0, 0], sizes = [4, 7, 128], strides = [1, 1, 1]} : vector<6x7x128xf32> to vector<4x7x128xf32>
      %190 = vector.broadcast %155 : f32 to vector<4x7x128xf32>
      %191 = arith.mulf %189, %190 : vector<4x7x128xf32>
      %192 = arith.addf %185, %191 : vector<4x7x128xf32>
      %193 = vector.broadcast %157 : f32 to vector<4x7x128xf32>
      %194 = arith.mulf %189, %193 : vector<4x7x128xf32>
      %195 = arith.addf %188, %194 : vector<4x7x128xf32>
      %196 = vector.extract_strided_slice %182 {offsets = [2, 0, 0], sizes = [4, 7, 128], strides = [1, 1, 1]} : vector<6x7x128xf32> to vector<4x7x128xf32>
      %197 = vector.broadcast %161 : f32 to vector<4x7x128xf32>
      %198 = arith.mulf %196, %197 : vector<4x7x128xf32>
      %199 = arith.addf %192, %198 : vector<4x7x128xf32>
      %200 = vector.broadcast %163 : f32 to vector<4x7x128xf32>
      %201 = arith.mulf %196, %200 : vector<4x7x128xf32>
      %202 = arith.addf %195, %201 : vector<4x7x128xf32>
      %c2_169 = arith.constant 2 : index
      %c0_170 = arith.constant 0 : index
      %c0_171 = arith.constant 0 : index
      %c0_172 = arith.constant 0 : index
      %203 = vector.load %arg1[%c2_169, %c0_170, %c0_171, %c0_172] : memref<6x30x7x128xf32, #tpu.memory_space<vmem>>, vector<1x6x7x128xf32>
      %204 = vector.shape_cast %203 : vector<1x6x7x128xf32> to vector<6x7x128xf32>
      %205 = vector.extract_strided_slice %204 {offsets = [0, 0, 0], sizes = [4, 7, 128], strides = [1, 1, 1]} : vector<6x7x128xf32> to vector<4x7x128xf32>
      %206 = vector.broadcast %149 : f32 to vector<4x7x128xf32>
      %207 = arith.mulf %205, %206 : vector<4x7x128xf32>
      %208 = vector.broadcast %151 : f32 to vector<4x7x128xf32>
      %209 = arith.mulf %205, %208 : vector<4x7x128xf32>
      %210 = arith.addf %199, %209 : vector<4x7x128xf32>
      %211 = vector.broadcast %153 : f32 to vector<4x7x128xf32>
      %212 = arith.mulf %205, %211 : vector<4x7x128xf32>
      %213 = arith.addf %202, %212 : vector<4x7x128xf32>
      %214 = vector.extract_strided_slice %204 {offsets = [1, 0, 0], sizes = [4, 7, 128], strides = [1, 1, 1]} : vector<6x7x128xf32> to vector<4x7x128xf32>
      %215 = vector.broadcast %155 : f32 to vector<4x7x128xf32>
      %216 = arith.mulf %214, %215 : vector<4x7x128xf32>
      %217 = arith.addf %207, %216 : vector<4x7x128xf32>
      %218 = vector.broadcast %157 : f32 to vector<4x7x128xf32>
      %219 = arith.mulf %214, %218 : vector<4x7x128xf32>
      %220 = arith.addf %210, %219 : vector<4x7x128xf32>
      %221 = vector.broadcast %159 : f32 to vector<4x7x128xf32>
      %222 = arith.mulf %214, %221 : vector<4x7x128xf32>
      %223 = arith.addf %213, %222 : vector<4x7x128xf32>
      %224 = vector.extract_strided_slice %204 {offsets = [2, 0, 0], sizes = [4, 7, 128], strides = [1, 1, 1]} : vector<6x7x128xf32> to vector<4x7x128xf32>
      %225 = vector.broadcast %161 : f32 to vector<4x7x128xf32>
      %226 = arith.mulf %224, %225 : vector<4x7x128xf32>
      %227 = arith.addf %217, %226 : vector<4x7x128xf32>
      %228 = vector.broadcast %163 : f32 to vector<4x7x128xf32>
      %229 = arith.mulf %224, %228 : vector<4x7x128xf32>
      %230 = arith.addf %220, %229 : vector<4x7x128xf32>
      %231 = vector.broadcast %165 : f32 to vector<4x7x128xf32>
      %232 = arith.mulf %224, %231 : vector<4x7x128xf32>
      %233 = arith.addf %223, %232 : vector<4x7x128xf32>
      %c3_173 = arith.constant 3 : index
      %c0_174 = arith.constant 0 : index
      %c0_175 = arith.constant 0 : index
      %c0_176 = arith.constant 0 : index
      %234 = vector.load %arg1[%c3_173, %c0_174, %c0_175, %c0_176] : memref<6x30x7x128xf32, #tpu.memory_space<vmem>>, vector<1x6x7x128xf32>
      %235 = vector.shape_cast %234 : vector<1x6x7x128xf32> to vector<6x7x128xf32>
      %236 = vector.extract_strided_slice %235 {offsets = [0, 0, 0], sizes = [4, 7, 128], strides = [1, 1, 1]} : vector<6x7x128xf32> to vector<4x7x128xf32>
      %237 = vector.broadcast %149 : f32 to vector<4x7x128xf32>
      %238 = arith.mulf %236, %237 : vector<4x7x128xf32>
      %239 = vector.broadcast %151 : f32 to vector<4x7x128xf32>
      %240 = arith.mulf %236, %239 : vector<4x7x128xf32>
      %241 = arith.addf %227, %240 : vector<4x7x128xf32>
      %242 = vector.broadcast %153 : f32 to vector<4x7x128xf32>
      %243 = arith.mulf %236, %242 : vector<4x7x128xf32>
      %244 = arith.addf %230, %243 : vector<4x7x128xf32>
      %245 = vector.extract_strided_slice %235 {offsets = [1, 0, 0], sizes = [4, 7, 128], strides = [1, 1, 1]} : vector<6x7x128xf32> to vector<4x7x128xf32>
      %246 = vector.broadcast %155 : f32 to vector<4x7x128xf32>
      %247 = arith.mulf %245, %246 : vector<4x7x128xf32>
      %248 = arith.addf %238, %247 : vector<4x7x128xf32>
      %249 = vector.broadcast %157 : f32 to vector<4x7x128xf32>
      %250 = arith.mulf %245, %249 : vector<4x7x128xf32>
      %251 = arith.addf %241, %250 : vector<4x7x128xf32>
      %252 = vector.broadcast %159 : f32 to vector<4x7x128xf32>
      %253 = arith.mulf %245, %252 : vector<4x7x128xf32>
      %254 = arith.addf %244, %253 : vector<4x7x128xf32>
      %255 = vector.extract_strided_slice %235 {offsets = [2, 0, 0], sizes = [4, 7, 128], strides = [1, 1, 1]} : vector<6x7x128xf32> to vector<4x7x128xf32>
      %256 = vector.broadcast %161 : f32 to vector<4x7x128xf32>
      %257 = arith.mulf %255, %256 : vector<4x7x128xf32>
      %258 = arith.addf %248, %257 : vector<4x7x128xf32>
      %259 = vector.broadcast %163 : f32 to vector<4x7x128xf32>
      %260 = arith.mulf %255, %259 : vector<4x7x128xf32>
      %261 = arith.addf %251, %260 : vector<4x7x128xf32>
      %262 = vector.broadcast %165 : f32 to vector<4x7x128xf32>
      %263 = arith.mulf %255, %262 : vector<4x7x128xf32>
      %264 = arith.addf %254, %263 : vector<4x7x128xf32>
      %c4_177 = arith.constant 4 : index
      %c0_178 = arith.constant 0 : index
      %c0_179 = arith.constant 0 : index
      %c0_180 = arith.constant 0 : index
      %265 = vector.load %arg1[%c4_177, %c0_178, %c0_179, %c0_180] : memref<6x30x7x128xf32, #tpu.memory_space<vmem>>, vector<1x6x7x128xf32>
      %266 = vector.shape_cast %265 : vector<1x6x7x128xf32> to vector<6x7x128xf32>
      %267 = vector.extract_strided_slice %266 {offsets = [0, 0, 0], sizes = [4, 7, 128], strides = [1, 1, 1]} : vector<6x7x128xf32> to vector<4x7x128xf32>
      %268 = vector.broadcast %151 : f32 to vector<4x7x128xf32>
      %269 = arith.mulf %267, %268 : vector<4x7x128xf32>
      %270 = arith.addf %258, %269 : vector<4x7x128xf32>
      %271 = vector.broadcast %153 : f32 to vector<4x7x128xf32>
      %272 = arith.mulf %267, %271 : vector<4x7x128xf32>
      %273 = arith.addf %261, %272 : vector<4x7x128xf32>
      %274 = vector.extract_strided_slice %266 {offsets = [1, 0, 0], sizes = [4, 7, 128], strides = [1, 1, 1]} : vector<6x7x128xf32> to vector<4x7x128xf32>
      %275 = vector.broadcast %157 : f32 to vector<4x7x128xf32>
      %276 = arith.mulf %274, %275 : vector<4x7x128xf32>
      %277 = arith.addf %270, %276 : vector<4x7x128xf32>
      %278 = vector.broadcast %159 : f32 to vector<4x7x128xf32>
      %279 = arith.mulf %274, %278 : vector<4x7x128xf32>
      %280 = arith.addf %273, %279 : vector<4x7x128xf32>
      %281 = vector.extract_strided_slice %266 {offsets = [2, 0, 0], sizes = [4, 7, 128], strides = [1, 1, 1]} : vector<6x7x128xf32> to vector<4x7x128xf32>
      %282 = vector.broadcast %163 : f32 to vector<4x7x128xf32>
      %283 = arith.mulf %281, %282 : vector<4x7x128xf32>
      %284 = arith.addf %277, %283 : vector<4x7x128xf32>
      %285 = vector.broadcast %165 : f32 to vector<4x7x128xf32>
      %286 = arith.mulf %281, %285 : vector<4x7x128xf32>
      %287 = arith.addf %280, %286 : vector<4x7x128xf32>
      %c5_181 = arith.constant 5 : index
      %c0_182 = arith.constant 0 : index
      %c0_183 = arith.constant 0 : index
      %c0_184 = arith.constant 0 : index
      %288 = vector.load %arg1[%c5_181, %c0_182, %c0_183, %c0_184] : memref<6x30x7x128xf32, #tpu.memory_space<vmem>>, vector<1x6x7x128xf32>
      %289 = vector.shape_cast %288 : vector<1x6x7x128xf32> to vector<6x7x128xf32>
      %290 = vector.extract_strided_slice %289 {offsets = [0, 0, 0], sizes = [4, 7, 128], strides = [1, 1, 1]} : vector<6x7x128xf32> to vector<4x7x128xf32>
      %291 = vector.broadcast %153 : f32 to vector<4x7x128xf32>
      %292 = arith.mulf %290, %291 : vector<4x7x128xf32>
      %293 = arith.addf %284, %292 : vector<4x7x128xf32>
      %294 = vector.extract_strided_slice %289 {offsets = [1, 0, 0], sizes = [4, 7, 128], strides = [1, 1, 1]} : vector<6x7x128xf32> to vector<4x7x128xf32>
      %295 = vector.broadcast %159 : f32 to vector<4x7x128xf32>
      %296 = arith.mulf %294, %295 : vector<4x7x128xf32>
      %297 = arith.addf %293, %296 : vector<4x7x128xf32>
      %298 = vector.extract_strided_slice %289 {offsets = [2, 0, 0], sizes = [4, 7, 128], strides = [1, 1, 1]} : vector<6x7x128xf32> to vector<4x7x128xf32>
      %299 = vector.broadcast %165 : f32 to vector<4x7x128xf32>
      %300 = arith.mulf %298, %299 : vector<4x7x128xf32>
      %301 = arith.addf %297, %300 : vector<4x7x128xf32>
      %302 = arith.maximumf %233, %264 : vector<4x7x128xf32>
      %303 = arith.maximumf %287, %301 : vector<4x7x128xf32>
      %304 = arith.maximumf %302, %303 : vector<4x7x128xf32>
      %cst_185 = arith.constant dense<0xFF800000> : vector<7x128xf32>
      %305 = vector.multi_reduction <maximumf>, %304, %cst_185 [0] : vector<4x7x128xf32> to vector<7x128xf32>
      %306 = vector.broadcast %167 : f32 to vector<7x128xf32>
      %307 = arith.addf %305, %306 : vector<7x128xf32>
      %cst_186 = arith.constant 0.000000e+00 : f32
      %308 = vector.broadcast %cst_186 : f32 to vector<7x128xf32>
      %309 = arith.maximumf %307, %308 : vector<7x128xf32>
      %310 = vector.extract_strided_slice %309 {offsets = [0, 0], sizes = [6, 128], strides = [1, 1]} : vector<7x128xf32> to vector<6x128xf32>
      %c0_i32_187 = arith.constant 0 : i32
      %311 = arith.addi %c0_i32_187, %arg13 : i32
      %312 = arith.index_cast %311 : i32 to index
      %c1_188 = arith.constant 1 : index
      %c1_189 = arith.constant 1 : index
      %c0_190 = arith.constant 0 : index
      %313 = vector.load %arg11[%312, %c1_188, %c1_189, %c0_190] : memref<30x9x7x128xf32, #tpu.memory_space<vmem>>, vector<1x1x6x128xf32>
      %314 = vector.shape_cast %313 : vector<1x1x6x128xf32> to vector<6x128xf32>
      %315 = vector.shape_cast %310 : vector<6x128xf32> to vector<1x1x6x128xf32>
      tpu.vector_store %arg11[%312, %c1_188, %c1_189, %c0_190], %315 {strides = array<i32>} : memref<30x9x7x128xf32, #tpu.memory_space<vmem>>, vector<1x1x6x128xf32>,
      %c10_i32_191 = arith.constant 10 : i32
      %316 = arith.addi %c10_i32_191, %arg13 : i32
      %317 = arith.index_cast %316 : i32 to index
      %c1_192 = arith.constant 1 : index
      %c0_193 = arith.constant 0 : index
      %c0_194 = arith.constant 0 : index
      %318 = vector.load %arg11[%317, %c1_192, %c0_193, %c0_194] : memref<30x9x7x128xf32, #tpu.memory_space<vmem>>, vector<1x1x7x128xf32>
      %319 = vector.shape_cast %318 : vector<1x1x7x128xf32> to vector<7x128xf32>
      %320 = vector.shape_cast %309 : vector<7x128xf32> to vector<1x1x7x128xf32>
      tpu.vector_store %arg11[%317, %c1_192, %c0_193, %c0_194], %320 {strides = array<i32>} : memref<30x9x7x128xf32, #tpu.memory_space<vmem>>, vector<1x1x7x128xf32>,
      %321 = vector.extract_strided_slice %309 {offsets = [1, 0], sizes = [6, 128], strides = [1, 1]} : vector<7x128xf32> to vector<6x128xf32>
      %c20_i32_195 = arith.constant 20 : i32
      %322 = arith.addi %c20_i32_195, %arg13 : i32
      %323 = arith.index_cast %322 : i32 to index
      %c1_196 = arith.constant 1 : index
      %c0_197 = arith.constant 0 : index
      %c0_198 = arith.constant 0 : index
      %324 = vector.load %arg11[%323, %c1_196, %c0_197, %c0_198] : memref<30x9x7x128xf32, #tpu.memory_space<vmem>>, vector<1x1x6x128xf32>
      %325 = vector.shape_cast %324 : vector<1x1x6x128xf32> to vector<6x128xf32>
      %326 = vector.shape_cast %321 : vector<6x128xf32> to vector<1x1x6x128xf32>
      tpu.vector_store %arg11[%323, %c1_196, %c0_197, %c0_198], %326 {strides = array<i32>} : memref<30x9x7x128xf32, #tpu.memory_space<vmem>>, vector<1x1x6x128xf32>,
      %c0_199 = arith.constant 0 : index
      %c4_200 = arith.constant 4 : index
      %c0_201 = arith.constant 0 : index
      %c0_202 = arith.constant 0 : index
      %327 = vector.load %arg1[%c0_199, %c4_200, %c0_201, %c0_202] : memref<6x30x7x128xf32, #tpu.memory_space<vmem>>, vector<1x6x7x128xf32>
      %328 = vector.shape_cast %327 : vector<1x6x7x128xf32> to vector<6x7x128xf32>
      %329 = vector.extract_strided_slice %328 {offsets = [0, 0, 0], sizes = [4, 7, 128], strides = [1, 1, 1]} : vector<6x7x128xf32> to vector<4x7x128xf32>
      %330 = vector.broadcast %149 : f32 to vector<4x7x128xf32>
      %331 = arith.mulf %329, %330 : vector<4x7x128xf32>
      %332 = vector.extract_strided_slice %328 {offsets = [1, 0, 0], sizes = [4, 7, 128], strides = [1, 1, 1]} : vector<6x7x128xf32> to vector<4x7x128xf32>
      %333 = vector.broadcast %155 : f32 to vector<4x7x128xf32>
      %334 = arith.mulf %332, %333 : vector<4x7x128xf32>
      %335 = arith.addf %331, %334 : vector<4x7x128xf32>
      %336 = vector.extract_strided_slice %328 {offsets = [2, 0, 0], sizes = [4, 7, 128], strides = [1, 1, 1]} : vector<6x7x128xf32> to vector<4x7x128xf32>
      %337 = vector.broadcast %161 : f32 to vector<4x7x128xf32>
      %338 = arith.mulf %336, %337 : vector<4x7x128xf32>
      %339 = arith.addf %335, %338 : vector<4x7x128xf32>
      %c1_203 = arith.constant 1 : index
      %c4_204 = arith.constant 4 : index
      %c0_205 = arith.constant 0 : index
      %c0_206 = arith.constant 0 : index
      %340 = vector.load %arg1[%c1_203, %c4_204, %c0_205, %c0_206] : memref<6x30x7x128xf32, #tpu.memory_space<vmem>>, vector<1x6x7x128xf32>
      %341 = vector.shape_cast %340 : vector<1x6x7x128xf32> to vector<6x7x128xf32>
      %342 = vector.extract_strided_slice %341 {offsets = [0, 0, 0], sizes = [4, 7, 128], strides = [1, 1, 1]} : vector<6x7x128xf32> to vector<4x7x128xf32>
      %343 = vector.broadcast %149 : f32 to vector<4x7x128xf32>
      %344 = arith.mulf %342, %343 : vector<4x7x128xf32>
      %345 = vector.broadcast %151 : f32 to vector<4x7x128xf32>
      %346 = arith.mulf %342, %345 : vector<4x7x128xf32>
      %347 = arith.addf %339, %346 : vector<4x7x128xf32>
      %348 = vector.extract_strided_slice %341 {offsets = [1, 0, 0], sizes = [4, 7, 128], strides = [1, 1, 1]} : vector<6x7x128xf32> to vector<4x7x128xf32>
      %349 = vector.broadcast %155 : f32 to vector<4x7x128xf32>
      %350 = arith.mulf %348, %349 : vector<4x7x128xf32>
      %351 = arith.addf %344, %350 : vector<4x7x128xf32>
      %352 = vector.broadcast %157 : f32 to vector<4x7x128xf32>
      %353 = arith.mulf %348, %352 : vector<4x7x128xf32>
      %354 = arith.addf %347, %353 : vector<4x7x128xf32>
      %355 = vector.extract_strided_slice %341 {offsets = [2, 0, 0], sizes = [4, 7, 128], strides = [1, 1, 1]} : vector<6x7x128xf32> to vector<4x7x128xf32>
      %356 = vector.broadcast %161 : f32 to vector<4x7x128xf32>
      %357 = arith.mulf %355, %356 : vector<4x7x128xf32>
      %358 = arith.addf %351, %357 : vector<4x7x128xf32>
      %359 = vector.broadcast %163 : f32 to vector<4x7x128xf32>
      %360 = arith.mulf %355, %359 : vector<4x7x128xf32>
      %361 = arith.addf %354, %360 : vector<4x7x128xf32>
      %c2_207 = arith.constant 2 : index
      %c4_208 = arith.constant 4 : index
      %c0_209 = arith.constant 0 : index
      %c0_210 = arith.constant 0 : index
      %362 = vector.load %arg1[%c2_207, %c4_208, %c0_209, %c0_210] : memref<6x30x7x128xf32, #tpu.memory_space<vmem>>, vector<1x6x7x128xf32>
      %363 = vector.shape_cast %362 : vector<1x6x7x128xf32> to vector<6x7x128xf32>
      %364 = vector.extract_strided_slice %363 {offsets = [0, 0, 0], sizes = [4, 7, 128], strides = [1, 1, 1]} : vector<6x7x128xf32> to vector<4x7x128xf32>
      %365 = vector.broadcast %149 : f32 to vector<4x7x128xf32>
      %366 = arith.mulf %364, %365 : vector<4x7x128xf32>
      %367 = vector.broadcast %151 : f32 to vector<4x7x128xf32>
      %368 = arith.mulf %364, %367 : vector<4x7x128xf32>
      %369 = arith.addf %358, %368 : vector<4x7x128xf32>
      %370 = vector.broadcast %153 : f32 to vector<4x7x128xf32>
      %371 = arith.mulf %364, %370 : vector<4x7x128xf32>
      %372 = arith.addf %361, %371 : vector<4x7x128xf32>
      %373 = vector.extract_strided_slice %363 {offsets = [1, 0, 0], sizes = [4, 7, 128], strides = [1, 1, 1]} : vector<6x7x128xf32> to vector<4x7x128xf32>
      %374 = vector.broadcast %155 : f32 to vector<4x7x128xf32>
      %375 = arith.mulf %373, %374 : vector<4x7x128xf32>
      %376 = arith.addf %366, %375 : vector<4x7x128xf32>
      %377 = vector.broadcast %157 : f32 to vector<4x7x128xf32>
      %378 = arith.mulf %373, %377 : vector<4x7x128xf32>
      %379 = arith.addf %369, %378 : vector<4x7x128xf32>
      %380 = vector.broadcast %159 : f32 to vector<4x7x128xf32>
      %381 = arith.mulf %373, %380 : vector<4x7x128xf32>
      %382 = arith.addf %372, %381 : vector<4x7x128xf32>
      %383 = vector.extract_strided_slice %363 {offsets = [2, 0, 0], sizes = [4, 7, 128], strides = [1, 1, 1]} : vector<6x7x128xf32> to vector<4x7x128xf32>
      %384 = vector.broadcast %161 : f32 to vector<4x7x128xf32>
      %385 = arith.mulf %383, %384 : vector<4x7x128xf32>
      %386 = arith.addf %376, %385 : vector<4x7x128xf32>
      %387 = vector.broadcast %163 : f32 to vector<4x7x128xf32>
      %388 = arith.mulf %383, %387 : vector<4x7x128xf32>
      %389 = arith.addf %379, %388 : vector<4x7x128xf32>
      %390 = vector.broadcast %165 : f32 to vector<4x7x128xf32>
      %391 = arith.mulf %383, %390 : vector<4x7x128xf32>
      %392 = arith.addf %382, %391 : vector<4x7x128xf32>
      %c3_211 = arith.constant 3 : index
      %c4_212 = arith.constant 4 : index
      %c0_213 = arith.constant 0 : index
      %c0_214 = arith.constant 0 : index
      %393 = vector.load %arg1[%c3_211, %c4_212, %c0_213, %c0_214] : memref<6x30x7x128xf32, #tpu.memory_space<vmem>>, vector<1x6x7x128xf32>
      %394 = vector.shape_cast %393 : vector<1x6x7x128xf32> to vector<6x7x128xf32>
      %395 = vector.extract_strided_slice %394 {offsets = [0, 0, 0], sizes = [4, 7, 128], strides = [1, 1, 1]} : vector<6x7x128xf32> to vector<4x7x128xf32>
      %396 = vector.broadcast %149 : f32 to vector<4x7x128xf32>
      %397 = arith.mulf %395, %396 : vector<4x7x128xf32>
      %398 = vector.broadcast %151 : f32 to vector<4x7x128xf32>
      %399 = arith.mulf %395, %398 : vector<4x7x128xf32>
      %400 = arith.addf %386, %399 : vector<4x7x128xf32>
      %401 = vector.broadcast %153 : f32 to vector<4x7x128xf32>
      %402 = arith.mulf %395, %401 : vector<4x7x128xf32>
      %403 = arith.addf %389, %402 : vector<4x7x128xf32>
      %404 = vector.extract_strided_slice %394 {offsets = [1, 0, 0], sizes = [4, 7, 128], strides = [1, 1, 1]} : vector<6x7x128xf32> to vector<4x7x128xf32>
      %405 = vector.broadcast %155 : f32 to vector<4x7x128xf32>
      %406 = arith.mulf %404, %405 : vector<4x7x128xf32>
      %407 = arith.addf %397, %406 : vector<4x7x128xf32>
      %408 = vector.broadcast %157 : f32 to vector<4x7x128xf32>
      %409 = arith.mulf %404, %408 : vector<4x7x128xf32>
      %410 = arith.addf %400, %409 : vector<4x7x128xf32>
      %411 = vector.broadcast %159 : f32 to vector<4x7x128xf32>
      %412 = arith.mulf %404, %411 : vector<4x7x128xf32>
      %413 = arith.addf %403, %412 : vector<4x7x128xf32>
      %414 = vector.extract_strided_slice %394 {offsets = [2, 0, 0], sizes = [4, 7, 128], strides = [1, 1, 1]} : vector<6x7x128xf32> to vector<4x7x128xf32>
      %415 = vector.broadcast %161 : f32 to vector<4x7x128xf32>
      %416 = arith.mulf %414, %415 : vector<4x7x128xf32>
      %417 = arith.addf %407, %416 : vector<4x7x128xf32>
      %418 = vector.broadcast %163 : f32 to vector<4x7x128xf32>
      %419 = arith.mulf %414, %418 : vector<4x7x128xf32>
      %420 = arith.addf %410, %419 : vector<4x7x128xf32>
      %421 = vector.broadcast %165 : f32 to vector<4x7x128xf32>
      %422 = arith.mulf %414, %421 : vector<4x7x128xf32>
      %423 = arith.addf %413, %422 : vector<4x7x128xf32>
      %c4_215 = arith.constant 4 : index
      %c4_216 = arith.constant 4 : index
      %c0_217 = arith.constant 0 : index
      %c0_218 = arith.constant 0 : index
      %424 = vector.load %arg1[%c4_215, %c4_216, %c0_217, %c0_218] : memref<6x30x7x128xf32, #tpu.memory_space<vmem>>, vector<1x6x7x128xf32>
      %425 = vector.shape_cast %424 : vector<1x6x7x128xf32> to vector<6x7x128xf32>
      %426 = vector.extract_strided_slice %425 {offsets = [0, 0, 0], sizes = [4, 7, 128], strides = [1, 1, 1]} : vector<6x7x128xf32> to vector<4x7x128xf32>
      %427 = vector.broadcast %151 : f32 to vector<4x7x128xf32>
      %428 = arith.mulf %426, %427 : vector<4x7x128xf32>
      %429 = arith.addf %417, %428 : vector<4x7x128xf32>
      %430 = vector.broadcast %153 : f32 to vector<4x7x128xf32>
      %431 = arith.mulf %426, %430 : vector<4x7x128xf32>
      %432 = arith.addf %420, %431 : vector<4x7x128xf32>
      %433 = vector.extract_strided_slice %425 {offsets = [1, 0, 0], sizes = [4, 7, 128], strides = [1, 1, 1]} : vector<6x7x128xf32> to vector<4x7x128xf32>
      %434 = vector.broadcast %157 : f32 to vector<4x7x128xf32>
      %435 = arith.mulf %433, %434 : vector<4x7x128xf32>
      %436 = arith.addf %429, %435 : vector<4x7x128xf32>
      %437 = vector.broadcast %159 : f32 to vector<4x7x128xf32>
      %438 = arith.mulf %433, %437 : vector<4x7x128xf32>
      %439 = arith.addf %432, %438 : vector<4x7x128xf32>
      %440 = vector.extract_strided_slice %425 {offsets = [2, 0, 0], sizes = [4, 7, 128], strides = [1, 1, 1]} : vector<6x7x128xf32> to vector<4x7x128xf32>
      %441 = vector.broadcast %163 : f32 to vector<4x7x128xf32>
      %442 = arith.mulf %440, %441 : vector<4x7x128xf32>
      %443 = arith.addf %436, %442 : vector<4x7x128xf32>
      %444 = vector.broadcast %165 : f32 to vector<4x7x128xf32>
      %445 = arith.mulf %440, %444 : vector<4x7x128xf32>
      %446 = arith.addf %439, %445 : vector<4x7x128xf32>
      %c5_219 = arith.constant 5 : index
      %c4_220 = arith.constant 4 : index
      %c0_221 = arith.constant 0 : index
      %c0_222 = arith.constant 0 : index
      %447 = vector.load %arg1[%c5_219, %c4_220, %c0_221, %c0_222] : memref<6x30x7x128xf32, #tpu.memory_space<vmem>>, vector<1x6x7x128xf32>
      %448 = vector.shape_cast %447 : vector<1x6x7x128xf32> to vector<6x7x128xf32>
      %449 = vector.extract_strided_slice %448 {offsets = [0, 0, 0], sizes = [4, 7, 128], strides = [1, 1, 1]} : vector<6x7x128xf32> to vector<4x7x128xf32>
      %450 = vector.broadcast %153 : f32 to vector<4x7x128xf32>
      %451 = arith.mulf %449, %450 : vector<4x7x128xf32>
      %452 = arith.addf %443, %451 : vector<4x7x128xf32>
      %453 = vector.extract_strided_slice %448 {offsets = [1, 0, 0], sizes = [4, 7, 128], strides = [1, 1, 1]} : vector<6x7x128xf32> to vector<4x7x128xf32>
      %454 = vector.broadcast %159 : f32 to vector<4x7x128xf32>
      %455 = arith.mulf %453, %454 : vector<4x7x128xf32>
      %456 = arith.addf %452, %455 : vector<4x7x128xf32>
      %457 = vector.extract_strided_slice %448 {offsets = [2, 0, 0], sizes = [4, 7, 128], strides = [1, 1, 1]} : vector<6x7x128xf32> to vector<4x7x128xf32>
      %458 = vector.broadcast %165 : f32 to vector<4x7x128xf32>
      %459 = arith.mulf %457, %458 : vector<4x7x128xf32>
      %460 = arith.addf %456, %459 : vector<4x7x128xf32>
      %461 = arith.maximumf %392, %423 : vector<4x7x128xf32>
      %462 = arith.maximumf %446, %460 : vector<4x7x128xf32>
      %463 = arith.maximumf %461, %462 : vector<4x7x128xf32>
      %cst_223 = arith.constant dense<0xFF800000> : vector<7x128xf32>
      %464 = vector.multi_reduction <maximumf>, %463, %cst_223 [0] : vector<4x7x128xf32> to vector<7x128xf32>
      %465 = vector.broadcast %167 : f32 to vector<7x128xf32>
      %466 = arith.addf %464, %465 : vector<7x128xf32>
      %cst_224 = arith.constant 0.000000e+00 : f32
      %467 = vector.broadcast %cst_224 : f32 to vector<7x128xf32>
      %468 = arith.maximumf %466, %467 : vector<7x128xf32>
      %469 = vector.extract_strided_slice %468 {offsets = [0, 0], sizes = [6, 128], strides = [1, 1]} : vector<7x128xf32> to vector<6x128xf32>
      %c0_i32_225 = arith.constant 0 : i32
      %470 = arith.addi %c0_i32_225, %arg13 : i32
      %471 = arith.index_cast %470 : i32 to index
      %c2_226 = arith.constant 2 : index
      %c1_227 = arith.constant 1 : index
      %c0_228 = arith.constant 0 : index
      %472 = vector.load %arg11[%471, %c2_226, %c1_227, %c0_228] : memref<30x9x7x128xf32, #tpu.memory_space<vmem>>, vector<1x1x6x128xf32>
      %473 = vector.shape_cast %472 : vector<1x1x6x128xf32> to vector<6x128xf32>
      %474 = vector.shape_cast %469 : vector<6x128xf32> to vector<1x1x6x128xf32>
      tpu.vector_store %arg11[%471, %c2_226, %c1_227, %c0_228], %474 {strides = array<i32>} : memref<30x9x7x128xf32, #tpu.memory_space<vmem>>, vector<1x1x6x128xf32>,
      %c10_i32_229 = arith.constant 10 : i32
      %475 = arith.addi %c10_i32_229, %arg13 : i32
      %476 = arith.index_cast %475 : i32 to index
      %c2_230 = arith.constant 2 : index
      %c0_231 = arith.constant 0 : index
      %c0_232 = arith.constant 0 : index
      %477 = vector.load %arg11[%476, %c2_230, %c0_231, %c0_232] : memref<30x9x7x128xf32, #tpu.memory_space<vmem>>, vector<1x1x7x128xf32>
      %478 = vector.shape_cast %477 : vector<1x1x7x128xf32> to vector<7x128xf32>
      %479 = vector.shape_cast %468 : vector<7x128xf32> to vector<1x1x7x128xf32>
      tpu.vector_store %arg11[%476, %c2_230, %c0_231, %c0_232], %479 {strides = array<i32>} : memref<30x9x7x128xf32, #tpu.memory_space<vmem>>, vector<1x1x7x128xf32>,
      %480 = vector.extract_strided_slice %468 {offsets = [1, 0], sizes = [6, 128], strides = [1, 1]} : vector<7x128xf32> to vector<6x128xf32>
      %c20_i32_233 = arith.constant 20 : i32
      %481 = arith.addi %c20_i32_233, %arg13 : i32
      %482 = arith.index_cast %481 : i32 to index
      %c2_234 = arith.constant 2 : index
      %c0_235 = arith.constant 0 : index
      %c0_236 = arith.constant 0 : index
      %483 = vector.load %arg11[%482, %c2_234, %c0_235, %c0_236] : memref<30x9x7x128xf32, #tpu.memory_space<vmem>>, vector<1x1x6x128xf32>
      %484 = vector.shape_cast %483 : vector<1x1x6x128xf32> to vector<6x128xf32>
      %485 = vector.shape_cast %480 : vector<6x128xf32> to vector<1x1x6x128xf32>
      tpu.vector_store %arg11[%482, %c2_234, %c0_235, %c0_236], %485 {strides = array<i32>} : memref<30x9x7x128xf32, #tpu.memory_space<vmem>>, vector<1x1x6x128xf32>,
      %c0_237 = arith.constant 0 : index
      %c8_238 = arith.constant 8 : index
      %c0_239 = arith.constant 0 : index
      %c0_240 = arith.constant 0 : index
      %486 = vector.load %arg1[%c0_237, %c8_238, %c0_239, %c0_240] : memref<6x30x7x128xf32, #tpu.memory_space<vmem>>, vector<1x6x7x128xf32>
      %487 = vector.shape_cast %486 : vector<1x6x7x128xf32> to vector<6x7x128xf32>
      %488 = vector.extract_strided_slice %487 {offsets = [0, 0, 0], sizes = [4, 7, 128], strides = [1, 1, 1]} : vector<6x7x128xf32> to vector<4x7x128xf32>
      %489 = vector.broadcast %149 : f32 to vector<4x7x128xf32>
      %490 = arith.mulf %488, %489 : vector<4x7x128xf32>
      %491 = vector.extract_strided_slice %487 {offsets = [1, 0, 0], sizes = [4, 7, 128], strides = [1, 1, 1]} : vector<6x7x128xf32> to vector<4x7x128xf32>
      %492 = vector.broadcast %155 : f32 to vector<4x7x128xf32>
      %493 = arith.mulf %491, %492 : vector<4x7x128xf32>
      %494 = arith.addf %490, %493 : vector<4x7x128xf32>
      %495 = vector.extract_strided_slice %487 {offsets = [2, 0, 0], sizes = [4, 7, 128], strides = [1, 1, 1]} : vector<6x7x128xf32> to vector<4x7x128xf32>
      %496 = vector.broadcast %161 : f32 to vector<4x7x128xf32>
      %497 = arith.mulf %495, %496 : vector<4x7x128xf32>
      %498 = arith.addf %494, %497 : vector<4x7x128xf32>
      %c1_241 = arith.constant 1 : index
      %c8_242 = arith.constant 8 : index
      %c0_243 = arith.constant 0 : index
      %c0_244 = arith.constant 0 : index
      %499 = vector.load %arg1[%c1_241, %c8_242, %c0_243, %c0_244] : memref<6x30x7x128xf32, #tpu.memory_space<vmem>>, vector<1x6x7x128xf32>
      %500 = vector.shape_cast %499 : vector<1x6x7x128xf32> to vector<6x7x128xf32>
      %501 = vector.extract_strided_slice %500 {offsets = [0, 0, 0], sizes = [4, 7, 128], strides = [1, 1, 1]} : vector<6x7x128xf32> to vector<4x7x128xf32>
      %502 = vector.broadcast %149 : f32 to vector<4x7x128xf32>
      %503 = arith.mulf %501, %502 : vector<4x7x128xf32>
      %504 = vector.broadcast %151 : f32 to vector<4x7x128xf32>
      %505 = arith.mulf %501, %504 : vector<4x7x128xf32>
      %506 = arith.addf %498, %505 : vector<4x7x128xf32>
      %507 = vector.extract_strided_slice %500 {offsets = [1, 0, 0], sizes = [4, 7, 128], strides = [1, 1, 1]} : vector<6x7x128xf32> to vector<4x7x128xf32>
      %508 = vector.broadcast %155 : f32 to vector<4x7x128xf32>
      %509 = arith.mulf %507, %508 : vector<4x7x128xf32>
      %510 = arith.addf %503, %509 : vector<4x7x128xf32>
      %511 = vector.broadcast %157 : f32 to vector<4x7x128xf32>
      %512 = arith.mulf %507, %511 : vector<4x7x128xf32>
      %513 = arith.addf %506, %512 : vector<4x7x128xf32>
      %514 = vector.extract_strided_slice %500 {offsets = [2, 0, 0], sizes = [4, 7, 128], strides = [1, 1, 1]} : vector<6x7x128xf32> to vector<4x7x128xf32>
      %515 = vector.broadcast %161 : f32 to vector<4x7x128xf32>
      %516 = arith.mulf %514, %515 : vector<4x7x128xf32>
      %517 = arith.addf %510, %516 : vector<4x7x128xf32>
      %518 = vector.broadcast %163 : f32 to vector<4x7x128xf32>
      %519 = arith.mulf %514, %518 : vector<4x7x128xf32>
      %520 = arith.addf %513, %519 : vector<4x7x128xf32>
      %c2_245 = arith.constant 2 : index
      %c8_246 = arith.constant 8 : index
      %c0_247 = arith.constant 0 : index
      %c0_248 = arith.constant 0 : index
      %521 = vector.load %arg1[%c2_245, %c8_246, %c0_247, %c0_248] : memref<6x30x7x128xf32, #tpu.memory_space<vmem>>, vector<1x6x7x128xf32>
      %522 = vector.shape_cast %521 : vector<1x6x7x128xf32> to vector<6x7x128xf32>
      %523 = vector.extract_strided_slice %522 {offsets = [0, 0, 0], sizes = [4, 7, 128], strides = [1, 1, 1]} : vector<6x7x128xf32> to vector<4x7x128xf32>
      %524 = vector.broadcast %149 : f32 to vector<4x7x128xf32>
      %525 = arith.mulf %523, %524 : vector<4x7x128xf32>
      %526 = vector.broadcast %151 : f32 to vector<4x7x128xf32>
      %527 = arith.mulf %523, %526 : vector<4x7x128xf32>
      %528 = arith.addf %517, %527 : vector<4x7x128xf32>
      %529 = vector.broadcast %153 : f32 to vector<4x7x128xf32>
      %530 = arith.mulf %523, %529 : vector<4x7x128xf32>
      %531 = arith.addf %520, %530 : vector<4x7x128xf32>
      %532 = vector.extract_strided_slice %522 {offsets = [1, 0, 0], sizes = [4, 7, 128], strides = [1, 1, 1]} : vector<6x7x128xf32> to vector<4x7x128xf32>
      %533 = vector.broadcast %155 : f32 to vector<4x7x128xf32>
      %534 = arith.mulf %532, %533 : vector<4x7x128xf32>
      %535 = arith.addf %525, %534 : vector<4x7x128xf32>
      %536 = vector.broadcast %157 : f32 to vector<4x7x128xf32>
      %537 = arith.mulf %532, %536 : vector<4x7x128xf32>
      %538 = arith.addf %528, %537 : vector<4x7x128xf32>
      %539 = vector.broadcast %159 : f32 to vector<4x7x128xf32>
      %540 = arith.mulf %532, %539 : vector<4x7x128xf32>
      %541 = arith.addf %531, %540 : vector<4x7x128xf32>
      %542 = vector.extract_strided_slice %522 {offsets = [2, 0, 0], sizes = [4, 7, 128], strides = [1, 1, 1]} : vector<6x7x128xf32> to vector<4x7x128xf32>
      %543 = vector.broadcast %161 : f32 to vector<4x7x128xf32>
      %544 = arith.mulf %542, %543 : vector<4x7x128xf32>
      %545 = arith.addf %535, %544 : vector<4x7x128xf32>
      %546 = vector.broadcast %163 : f32 to vector<4x7x128xf32>
      %547 = arith.mulf %542, %546 : vector<4x7x128xf32>
      %548 = arith.addf %538, %547 : vector<4x7x128xf32>
      %549 = vector.broadcast %165 : f32 to vector<4x7x128xf32>
      %550 = arith.mulf %542, %549 : vector<4x7x128xf32>
      %551 = arith.addf %541, %550 : vector<4x7x128xf32>
      %c3_249 = arith.constant 3 : index
      %c8_250 = arith.constant 8 : index
      %c0_251 = arith.constant 0 : index
      %c0_252 = arith.constant 0 : index
      %552 = vector.load %arg1[%c3_249, %c8_250, %c0_251, %c0_252] : memref<6x30x7x128xf32, #tpu.memory_space<vmem>>, vector<1x6x7x128xf32>
      %553 = vector.shape_cast %552 : vector<1x6x7x128xf32> to vector<6x7x128xf32>
      %554 = vector.extract_strided_slice %553 {offsets = [0, 0, 0], sizes = [4, 7, 128], strides = [1, 1, 1]} : vector<6x7x128xf32> to vector<4x7x128xf32>
      %555 = vector.broadcast %149 : f32 to vector<4x7x128xf32>
      %556 = arith.mulf %554, %555 : vector<4x7x128xf32>
      %557 = vector.broadcast %151 : f32 to vector<4x7x128xf32>
      %558 = arith.mulf %554, %557 : vector<4x7x128xf32>
      %559 = arith.addf %545, %558 : vector<4x7x128xf32>
      %560 = vector.broadcast %153 : f32 to vector<4x7x128xf32>
      %561 = arith.mulf %554, %560 : vector<4x7x128xf32>
      %562 = arith.addf %548, %561 : vector<4x7x128xf32>
      %563 = vector.extract_strided_slice %553 {offsets = [1, 0, 0], sizes = [4, 7, 128], strides = [1, 1, 1]} : vector<6x7x128xf32> to vector<4x7x128xf32>
      %564 = vector.broadcast %155 : f32 to vector<4x7x128xf32>
      %565 = arith.mulf %563, %564 : vector<4x7x128xf32>
      %566 = arith.addf %556, %565 : vector<4x7x128xf32>
      %567 = vector.broadcast %157 : f32 to vector<4x7x128xf32>
      %568 = arith.mulf %563, %567 : vector<4x7x128xf32>
      %569 = arith.addf %559, %568 : vector<4x7x128xf32>
      %570 = vector.broadcast %159 : f32 to vector<4x7x128xf32>
      %571 = arith.mulf %563, %570 : vector<4x7x128xf32>
      %572 = arith.addf %562, %571 : vector<4x7x128xf32>
      %573 = vector.extract_strided_slice %553 {offsets = [2, 0, 0], sizes = [4, 7, 128], strides = [1, 1, 1]} : vector<6x7x128xf32> to vector<4x7x128xf32>
      %574 = vector.broadcast %161 : f32 to vector<4x7x128xf32>
      %575 = arith.mulf %573, %574 : vector<4x7x128xf32>
      %576 = arith.addf %566, %575 : vector<4x7x128xf32>
      %577 = vector.broadcast %163 : f32 to vector<4x7x128xf32>
      %578 = arith.mulf %573, %577 : vector<4x7x128xf32>
      %579 = arith.addf %569, %578 : vector<4x7x128xf32>
      %580 = vector.broadcast %165 : f32 to vector<4x7x128xf32>
      %581 = arith.mulf %573, %580 : vector<4x7x128xf32>
      %582 = arith.addf %572, %581 : vector<4x7x128xf32>
      %c4_253 = arith.constant 4 : index
      %c8_254 = arith.constant 8 : index
      %c0_255 = arith.constant 0 : index
      %c0_256 = arith.constant 0 : index
      %583 = vector.load %arg1[%c4_253, %c8_254, %c0_255, %c0_256] : memref<6x30x7x128xf32, #tpu.memory_space<vmem>>, vector<1x6x7x128xf32>
      %584 = vector.shape_cast %583 : vector<1x6x7x128xf32> to vector<6x7x128xf32>
      %585 = vector.extract_strided_slice %584 {offsets = [0, 0, 0], sizes = [4, 7, 128], strides = [1, 1, 1]} : vector<6x7x128xf32> to vector<4x7x128xf32>
      %586 = vector.broadcast %151 : f32 to vector<4x7x128xf32>
      %587 = arith.mulf %585, %586 : vector<4x7x128xf32>
      %588 = arith.addf %576, %587 : vector<4x7x128xf32>
      %589 = vector.broadcast %153 : f32 to vector<4x7x128xf32>
      %590 = arith.mulf %585, %589 : vector<4x7x128xf32>
      %591 = arith.addf %579, %590 : vector<4x7x128xf32>
      %592 = vector.extract_strided_slice %584 {offsets = [1, 0, 0], sizes = [4, 7, 128], strides = [1, 1, 1]} : vector<6x7x128xf32> to vector<4x7x128xf32>
      %593 = vector.broadcast %157 : f32 to vector<4x7x128xf32>
      %594 = arith.mulf %592, %593 : vector<4x7x128xf32>
      %595 = arith.addf %588, %594 : vector<4x7x128xf32>
      %596 = vector.broadcast %159 : f32 to vector<4x7x128xf32>
      %597 = arith.mulf %592, %596 : vector<4x7x128xf32>
      %598 = arith.addf %591, %597 : vector<4x7x128xf32>
      %599 = vector.extract_strided_slice %584 {offsets = [2, 0, 0], sizes = [4, 7, 128], strides = [1, 1, 1]} : vector<6x7x128xf32> to vector<4x7x128xf32>
      %600 = vector.broadcast %163 : f32 to vector<4x7x128xf32>
      %601 = arith.mulf %599, %600 : vector<4x7x128xf32>
      %602 = arith.addf %595, %601 : vector<4x7x128xf32>
      %603 = vector.broadcast %165 : f32 to vector<4x7x128xf32>
      %604 = arith.mulf %599, %603 : vector<4x7x128xf32>
      %605 = arith.addf %598, %604 : vector<4x7x128xf32>
      %c5_257 = arith.constant 5 : index
      %c8_258 = arith.constant 8 : index
      %c0_259 = arith.constant 0 : index
      %c0_260 = arith.constant 0 : index
      %606 = vector.load %arg1[%c5_257, %c8_258, %c0_259, %c0_260] : memref<6x30x7x128xf32, #tpu.memory_space<vmem>>, vector<1x6x7x128xf32>
      %607 = vector.shape_cast %606 : vector<1x6x7x128xf32> to vector<6x7x128xf32>
      %608 = vector.extract_strided_slice %607 {offsets = [0, 0, 0], sizes = [4, 7, 128], strides = [1, 1, 1]} : vector<6x7x128xf32> to vector<4x7x128xf32>
      %609 = vector.broadcast %153 : f32 to vector<4x7x128xf32>
      %610 = arith.mulf %608, %609 : vector<4x7x128xf32>
      %611 = arith.addf %602, %610 : vector<4x7x128xf32>
      %612 = vector.extract_strided_slice %607 {offsets = [1, 0, 0], sizes = [4, 7, 128], strides = [1, 1, 1]} : vector<6x7x128xf32> to vector<4x7x128xf32>
      %613 = vector.broadcast %159 : f32 to vector<4x7x128xf32>
      %614 = arith.mulf %612, %613 : vector<4x7x128xf32>
      %615 = arith.addf %611, %614 : vector<4x7x128xf32>
      %616 = vector.extract_strided_slice %607 {offsets = [2, 0, 0], sizes = [4, 7, 128], strides = [1, 1, 1]} : vector<6x7x128xf32> to vector<4x7x128xf32>
      %617 = vector.broadcast %165 : f32 to vector<4x7x128xf32>
      %618 = arith.mulf %616, %617 : vector<4x7x128xf32>
      %619 = arith.addf %615, %618 : vector<4x7x128xf32>
      %620 = arith.maximumf %551, %582 : vector<4x7x128xf32>
      %621 = arith.maximumf %605, %619 : vector<4x7x128xf32>
      %622 = arith.maximumf %620, %621 : vector<4x7x128xf32>
      %cst_261 = arith.constant dense<0xFF800000> : vector<7x128xf32>
      %623 = vector.multi_reduction <maximumf>, %622, %cst_261 [0] : vector<4x7x128xf32> to vector<7x128xf32>
      %624 = vector.broadcast %167 : f32 to vector<7x128xf32>
      %625 = arith.addf %623, %624 : vector<7x128xf32>
      %cst_262 = arith.constant 0.000000e+00 : f32
      %626 = vector.broadcast %cst_262 : f32 to vector<7x128xf32>
      %627 = arith.maximumf %625, %626 : vector<7x128xf32>
      %628 = vector.extract_strided_slice %627 {offsets = [0, 0], sizes = [6, 128], strides = [1, 1]} : vector<7x128xf32> to vector<6x128xf32>
      %c0_i32_263 = arith.constant 0 : i32
      %629 = arith.addi %c0_i32_263, %arg13 : i32
      %630 = arith.index_cast %629 : i32 to index
      %c3_264 = arith.constant 3 : index
      %c1_265 = arith.constant 1 : index
      %c0_266 = arith.constant 0 : index
      %631 = vector.load %arg11[%630, %c3_264, %c1_265, %c0_266] : memref<30x9x7x128xf32, #tpu.memory_space<vmem>>, vector<1x1x6x128xf32>
      %632 = vector.shape_cast %631 : vector<1x1x6x128xf32> to vector<6x128xf32>
      %633 = vector.shape_cast %628 : vector<6x128xf32> to vector<1x1x6x128xf32>
      tpu.vector_store %arg11[%630, %c3_264, %c1_265, %c0_266], %633 {strides = array<i32>} : memref<30x9x7x128xf32, #tpu.memory_space<vmem>>, vector<1x1x6x128xf32>,
      %c10_i32_267 = arith.constant 10 : i32
      %634 = arith.addi %c10_i32_267, %arg13 : i32
      %635 = arith.index_cast %634 : i32 to index
      %c3_268 = arith.constant 3 : index
      %c0_269 = arith.constant 0 : index
      %c0_270 = arith.constant 0 : index
      %636 = vector.load %arg11[%635, %c3_268, %c0_269, %c0_270] : memref<30x9x7x128xf32, #tpu.memory_space<vmem>>, vector<1x1x7x128xf32>
      %637 = vector.shape_cast %636 : vector<1x1x7x128xf32> to vector<7x128xf32>
      %638 = vector.shape_cast %627 : vector<7x128xf32> to vector<1x1x7x128xf32>
      tpu.vector_store %arg11[%635, %c3_268, %c0_269, %c0_270], %638 {strides = array<i32>} : memref<30x9x7x128xf32, #tpu.memory_space<vmem>>, vector<1x1x7x128xf32>,
      %639 = vector.extract_strided_slice %627 {offsets = [1, 0], sizes = [6, 128], strides = [1, 1]} : vector<7x128xf32> to vector<6x128xf32>
      %c20_i32_271 = arith.constant 20 : i32
      %640 = arith.addi %c20_i32_271, %arg13 : i32
      %641 = arith.index_cast %640 : i32 to index
      %c3_272 = arith.constant 3 : index
      %c0_273 = arith.constant 0 : index
      %c0_274 = arith.constant 0 : index
      %642 = vector.load %arg11[%641, %c3_272, %c0_273, %c0_274] : memref<30x9x7x128xf32, #tpu.memory_space<vmem>>, vector<1x1x6x128xf32>
      %643 = vector.shape_cast %642 : vector<1x1x6x128xf32> to vector<6x128xf32>
      %644 = vector.shape_cast %639 : vector<6x128xf32> to vector<1x1x6x128xf32>
      tpu.vector_store %arg11[%641, %c3_272, %c0_273, %c0_274], %644 {strides = array<i32>} : memref<30x9x7x128xf32, #tpu.memory_space<vmem>>, vector<1x1x6x128xf32>,
      %c0_275 = arith.constant 0 : index
      %c12_276 = arith.constant 12 : index
      %c0_277 = arith.constant 0 : index
      %c0_278 = arith.constant 0 : index
      %645 = vector.load %arg1[%c0_275, %c12_276, %c0_277, %c0_278] : memref<6x30x7x128xf32, #tpu.memory_space<vmem>>, vector<1x6x7x128xf32>
      %646 = vector.shape_cast %645 : vector<1x6x7x128xf32> to vector<6x7x128xf32>
      %647 = vector.extract_strided_slice %646 {offsets = [0, 0, 0], sizes = [4, 7, 128], strides = [1, 1, 1]} : vector<6x7x128xf32> to vector<4x7x128xf32>
      %648 = vector.broadcast %149 : f32 to vector<4x7x128xf32>
      %649 = arith.mulf %647, %648 : vector<4x7x128xf32>
      %650 = vector.extract_strided_slice %646 {offsets = [1, 0, 0], sizes = [4, 7, 128], strides = [1, 1, 1]} : vector<6x7x128xf32> to vector<4x7x128xf32>
      %651 = vector.broadcast %155 : f32 to vector<4x7x128xf32>
      %652 = arith.mulf %650, %651 : vector<4x7x128xf32>
      %653 = arith.addf %649, %652 : vector<4x7x128xf32>
      %654 = vector.extract_strided_slice %646 {offsets = [2, 0, 0], sizes = [4, 7, 128], strides = [1, 1, 1]} : vector<6x7x128xf32> to vector<4x7x128xf32>
      %655 = vector.broadcast %161 : f32 to vector<4x7x128xf32>
      %656 = arith.mulf %654, %655 : vector<4x7x128xf32>
      %657 = arith.addf %653, %656 : vector<4x7x128xf32>
      %c1_279 = arith.constant 1 : index
      %c12_280 = arith.constant 12 : index
      %c0_281 = arith.constant 0 : index
      %c0_282 = arith.constant 0 : index
      %658 = vector.load %arg1[%c1_279, %c12_280, %c0_281, %c0_282] : memref<6x30x7x128xf32, #tpu.memory_space<vmem>>, vector<1x6x7x128xf32>
      %659 = vector.shape_cast %658 : vector<1x6x7x128xf32> to vector<6x7x128xf32>
      %660 = vector.extract_strided_slice %659 {offsets = [0, 0, 0], sizes = [4, 7, 128], strides = [1, 1, 1]} : vector<6x7x128xf32> to vector<4x7x128xf32>
      %661 = vector.broadcast %149 : f32 to vector<4x7x128xf32>
      %662 = arith.mulf %660, %661 : vector<4x7x128xf32>
      %663 = vector.broadcast %151 : f32 to vector<4x7x128xf32>
      %664 = arith.mulf %660, %663 : vector<4x7x128xf32>
      %665 = arith.addf %657, %664 : vector<4x7x128xf32>
      %666 = vector.extract_strided_slice %659 {offsets = [1, 0, 0], sizes = [4, 7, 128], strides = [1, 1, 1]} : vector<6x7x128xf32> to vector<4x7x128xf32>
      %667 = vector.broadcast %155 : f32 to vector<4x7x128xf32>
      %668 = arith.mulf %666, %667 : vector<4x7x128xf32>
      %669 = arith.addf %662, %668 : vector<4x7x128xf32>
      %670 = vector.broadcast %157 : f32 to vector<4x7x128xf32>
      %671 = arith.mulf %666, %670 : vector<4x7x128xf32>
      %672 = arith.addf %665, %671 : vector<4x7x128xf32>
      %673 = vector.extract_strided_slice %659 {offsets = [2, 0, 0], sizes = [4, 7, 128], strides = [1, 1, 1]} : vector<6x7x128xf32> to vector<4x7x128xf32>
      %674 = vector.broadcast %161 : f32 to vector<4x7x128xf32>
      %675 = arith.mulf %673, %674 : vector<4x7x128xf32>
      %676 = arith.addf %669, %675 : vector<4x7x128xf32>
      %677 = vector.broadcast %163 : f32 to vector<4x7x128xf32>
      %678 = arith.mulf %673, %677 : vector<4x7x128xf32>
      %679 = arith.addf %672, %678 : vector<4x7x128xf32>
      %c2_283 = arith.constant 2 : index
      %c12_284 = arith.constant 12 : index
      %c0_285 = arith.constant 0 : index
      %c0_286 = arith.constant 0 : index
      %680 = vector.load %arg1[%c2_283, %c12_284, %c0_285, %c0_286] : memref<6x30x7x128xf32, #tpu.memory_space<vmem>>, vector<1x6x7x128xf32>
      %681 = vector.shape_cast %680 : vector<1x6x7x128xf32> to vector<6x7x128xf32>
      %682 = vector.extract_strided_slice %681 {offsets = [0, 0, 0], sizes = [4, 7, 128], strides = [1, 1, 1]} : vector<6x7x128xf32> to vector<4x7x128xf32>
      %683 = vector.broadcast %149 : f32 to vector<4x7x128xf32>
      %684 = arith.mulf %682, %683 : vector<4x7x128xf32>
      %685 = vector.broadcast %151 : f32 to vector<4x7x128xf32>
      %686 = arith.mulf %682, %685 : vector<4x7x128xf32>
      %687 = arith.addf %676, %686 : vector<4x7x128xf32>
      %688 = vector.broadcast %153 : f32 to vector<4x7x128xf32>
      %689 = arith.mulf %682, %688 : vector<4x7x128xf32>
      %690 = arith.addf %679, %689 : vector<4x7x128xf32>
      %691 = vector.extract_strided_slice %681 {offsets = [1, 0, 0], sizes = [4, 7, 128], strides = [1, 1, 1]} : vector<6x7x128xf32> to vector<4x7x128xf32>
      %692 = vector.broadcast %155 : f32 to vector<4x7x128xf32>
      %693 = arith.mulf %691, %692 : vector<4x7x128xf32>
      %694 = arith.addf %684, %693 : vector<4x7x128xf32>
      %695 = vector.broadcast %157 : f32 to vector<4x7x128xf32>
      %696 = arith.mulf %691, %695 : vector<4x7x128xf32>
      %697 = arith.addf %687, %696 : vector<4x7x128xf32>
      %698 = vector.broadcast %159 : f32 to vector<4x7x128xf32>
      %699 = arith.mulf %691, %698 : vector<4x7x128xf32>
      %700 = arith.addf %690, %699 : vector<4x7x128xf32>
      %701 = vector.extract_strided_slice %681 {offsets = [2, 0, 0], sizes = [4, 7, 128], strides = [1, 1, 1]} : vector<6x7x128xf32> to vector<4x7x128xf32>
      %702 = vector.broadcast %161 : f32 to vector<4x7x128xf32>
      %703 = arith.mulf %701, %702 : vector<4x7x128xf32>
      %704 = arith.addf %694, %703 : vector<4x7x128xf32>
      %705 = vector.broadcast %163 : f32 to vector<4x7x128xf32>
      %706 = arith.mulf %701, %705 : vector<4x7x128xf32>
      %707 = arith.addf %697, %706 : vector<4x7x128xf32>
      %708 = vector.broadcast %165 : f32 to vector<4x7x128xf32>
      %709 = arith.mulf %701, %708 : vector<4x7x128xf32>
      %710 = arith.addf %700, %709 : vector<4x7x128xf32>
      %c3_287 = arith.constant 3 : index
      %c12_288 = arith.constant 12 : index
      %c0_289 = arith.constant 0 : index
      %c0_290 = arith.constant 0 : index
      %711 = vector.load %arg1[%c3_287, %c12_288, %c0_289, %c0_290] : memref<6x30x7x128xf32, #tpu.memory_space<vmem>>, vector<1x6x7x128xf32>
      %712 = vector.shape_cast %711 : vector<1x6x7x128xf32> to vector<6x7x128xf32>
      %713 = vector.extract_strided_slice %712 {offsets = [0, 0, 0], sizes = [4, 7, 128], strides = [1, 1, 1]} : vector<6x7x128xf32> to vector<4x7x128xf32>
      %714 = vector.broadcast %149 : f32 to vector<4x7x128xf32>
      %715 = arith.mulf %713, %714 : vector<4x7x128xf32>
      %716 = vector.broadcast %151 : f32 to vector<4x7x128xf32>
      %717 = arith.mulf %713, %716 : vector<4x7x128xf32>
      %718 = arith.addf %704, %717 : vector<4x7x128xf32>
      %719 = vector.broadcast %153 : f32 to vector<4x7x128xf32>
      %720 = arith.mulf %713, %719 : vector<4x7x128xf32>
      %721 = arith.addf %707, %720 : vector<4x7x128xf32>
      %722 = vector.extract_strided_slice %712 {offsets = [1, 0, 0], sizes = [4, 7, 128], strides = [1, 1, 1]} : vector<6x7x128xf32> to vector<4x7x128xf32>
      %723 = vector.broadcast %155 : f32 to vector<4x7x128xf32>
      %724 = arith.mulf %722, %723 : vector<4x7x128xf32>
      %725 = arith.addf %715, %724 : vector<4x7x128xf32>
      %726 = vector.broadcast %157 : f32 to vector<4x7x128xf32>
      %727 = arith.mulf %722, %726 : vector<4x7x128xf32>
      %728 = arith.addf %718, %727 : vector<4x7x128xf32>
      %729 = vector.broadcast %159 : f32 to vector<4x7x128xf32>
      %730 = arith.mulf %722, %729 : vector<4x7x128xf32>
      %731 = arith.addf %721, %730 : vector<4x7x128xf32>
      %732 = vector.extract_strided_slice %712 {offsets = [2, 0, 0], sizes = [4, 7, 128], strides = [1, 1, 1]} : vector<6x7x128xf32> to vector<4x7x128xf32>
      %733 = vector.broadcast %161 : f32 to vector<4x7x128xf32>
      %734 = arith.mulf %732, %733 : vector<4x7x128xf32>
      %735 = arith.addf %725, %734 : vector<4x7x128xf32>
      %736 = vector.broadcast %163 : f32 to vector<4x7x128xf32>
      %737 = arith.mulf %732, %736 : vector<4x7x128xf32>
      %738 = arith.addf %728, %737 : vector<4x7x128xf32>
      %739 = vector.broadcast %165 : f32 to vector<4x7x128xf32>
      %740 = arith.mulf %732, %739 : vector<4x7x128xf32>
      %741 = arith.addf %731, %740 : vector<4x7x128xf32>
      %c4_291 = arith.constant 4 : index
      %c12_292 = arith.constant 12 : index
      %c0_293 = arith.constant 0 : index
      %c0_294 = arith.constant 0 : index
      %742 = vector.load %arg1[%c4_291, %c12_292, %c0_293, %c0_294] : memref<6x30x7x128xf32, #tpu.memory_space<vmem>>, vector<1x6x7x128xf32>
      %743 = vector.shape_cast %742 : vector<1x6x7x128xf32> to vector<6x7x128xf32>
      %744 = vector.extract_strided_slice %743 {offsets = [0, 0, 0], sizes = [4, 7, 128], strides = [1, 1, 1]} : vector<6x7x128xf32> to vector<4x7x128xf32>
      %745 = vector.broadcast %151 : f32 to vector<4x7x128xf32>
      %746 = arith.mulf %744, %745 : vector<4x7x128xf32>
      %747 = arith.addf %735, %746 : vector<4x7x128xf32>
      %748 = vector.broadcast %153 : f32 to vector<4x7x128xf32>
      %749 = arith.mulf %744, %748 : vector<4x7x128xf32>
      %750 = arith.addf %738, %749 : vector<4x7x128xf32>
      %751 = vector.extract_strided_slice %743 {offsets = [1, 0, 0], sizes = [4, 7, 128], strides = [1, 1, 1]} : vector<6x7x128xf32> to vector<4x7x128xf32>
      %752 = vector.broadcast %157 : f32 to vector<4x7x128xf32>
      %753 = arith.mulf %751, %752 : vector<4x7x128xf32>
      %754 = arith.addf %747, %753 : vector<4x7x128xf32>
      %755 = vector.broadcast %159 : f32 to vector<4x7x128xf32>
      %756 = arith.mulf %751, %755 : vector<4x7x128xf32>
      %757 = arith.addf %750, %756 : vector<4x7x128xf32>
      %758 = vector.extract_strided_slice %743 {offsets = [2, 0, 0], sizes = [4, 7, 128], strides = [1, 1, 1]} : vector<6x7x128xf32> to vector<4x7x128xf32>
      %759 = vector.broadcast %163 : f32 to vector<4x7x128xf32>
      %760 = arith.mulf %758, %759 : vector<4x7x128xf32>
      %761 = arith.addf %754, %760 : vector<4x7x128xf32>
      %762 = vector.broadcast %165 : f32 to vector<4x7x128xf32>
      %763 = arith.mulf %758, %762 : vector<4x7x128xf32>
      %764 = arith.addf %757, %763 : vector<4x7x128xf32>
      %c5_295 = arith.constant 5 : index
      %c12_296 = arith.constant 12 : index
      %c0_297 = arith.constant 0 : index
      %c0_298 = arith.constant 0 : index
      %765 = vector.load %arg1[%c5_295, %c12_296, %c0_297, %c0_298] : memref<6x30x7x128xf32, #tpu.memory_space<vmem>>, vector<1x6x7x128xf32>
      %766 = vector.shape_cast %765 : vector<1x6x7x128xf32> to vector<6x7x128xf32>
      %767 = vector.extract_strided_slice %766 {offsets = [0, 0, 0], sizes = [4, 7, 128], strides = [1, 1, 1]} : vector<6x7x128xf32> to vector<4x7x128xf32>
      %768 = vector.broadcast %153 : f32 to vector<4x7x128xf32>
      %769 = arith.mulf %767, %768 : vector<4x7x128xf32>
      %770 = arith.addf %761, %769 : vector<4x7x128xf32>
      %771 = vector.extract_strided_slice %766 {offsets = [1, 0, 0], sizes = [4, 7, 128], strides = [1, 1, 1]} : vector<6x7x128xf32> to vector<4x7x128xf32>
      %772 = vector.broadcast %159 : f32 to vector<4x7x128xf32>
      %773 = arith.mulf %771, %772 : vector<4x7x128xf32>
      %774 = arith.addf %770, %773 : vector<4x7x128xf32>
      %775 = vector.extract_strided_slice %766 {offsets = [2, 0, 0], sizes = [4, 7, 128], strides = [1, 1, 1]} : vector<6x7x128xf32> to vector<4x7x128xf32>
      %776 = vector.broadcast %165 : f32 to vector<4x7x128xf32>
      %777 = arith.mulf %775, %776 : vector<4x7x128xf32>
      %778 = arith.addf %774, %777 : vector<4x7x128xf32>
      %779 = arith.maximumf %710, %741 : vector<4x7x128xf32>
      %780 = arith.maximumf %764, %778 : vector<4x7x128xf32>
      %781 = arith.maximumf %779, %780 : vector<4x7x128xf32>
      %cst_299 = arith.constant dense<0xFF800000> : vector<7x128xf32>
      %782 = vector.multi_reduction <maximumf>, %781, %cst_299 [0] : vector<4x7x128xf32> to vector<7x128xf32>
      %783 = vector.broadcast %167 : f32 to vector<7x128xf32>
      %784 = arith.addf %782, %783 : vector<7x128xf32>
      %cst_300 = arith.constant 0.000000e+00 : f32
      %785 = vector.broadcast %cst_300 : f32 to vector<7x128xf32>
      %786 = arith.maximumf %784, %785 : vector<7x128xf32>
      %787 = vector.extract_strided_slice %786 {offsets = [0, 0], sizes = [6, 128], strides = [1, 1]} : vector<7x128xf32> to vector<6x128xf32>
      %c0_i32_301 = arith.constant 0 : i32
      %788 = arith.addi %c0_i32_301, %arg13 : i32
      %789 = arith.index_cast %788 : i32 to index
      %c4_302 = arith.constant 4 : index
      %c1_303 = arith.constant 1 : index
      %c0_304 = arith.constant 0 : index
      %790 = vector.load %arg11[%789, %c4_302, %c1_303, %c0_304] : memref<30x9x7x128xf32, #tpu.memory_space<vmem>>, vector<1x1x6x128xf32>
      %791 = vector.shape_cast %790 : vector<1x1x6x128xf32> to vector<6x128xf32>
      %792 = vector.shape_cast %787 : vector<6x128xf32> to vector<1x1x6x128xf32>
      tpu.vector_store %arg11[%789, %c4_302, %c1_303, %c0_304], %792 {strides = array<i32>} : memref<30x9x7x128xf32, #tpu.memory_space<vmem>>, vector<1x1x6x128xf32>,
      %c10_i32_305 = arith.constant 10 : i32
      %793 = arith.addi %c10_i32_305, %arg13 : i32
      %794 = arith.index_cast %793 : i32 to index
      %c4_306 = arith.constant 4 : index
      %c0_307 = arith.constant 0 : index
      %c0_308 = arith.constant 0 : index
      %795 = vector.load %arg11[%794, %c4_306, %c0_307, %c0_308] : memref<30x9x7x128xf32, #tpu.memory_space<vmem>>, vector<1x1x7x128xf32>
      %796 = vector.shape_cast %795 : vector<1x1x7x128xf32> to vector<7x128xf32>
      %797 = vector.shape_cast %786 : vector<7x128xf32> to vector<1x1x7x128xf32>
      tpu.vector_store %arg11[%794, %c4_306, %c0_307, %c0_308], %797 {strides = array<i32>} : memref<30x9x7x128xf32, #tpu.memory_space<vmem>>, vector<1x1x7x128xf32>,
      %798 = vector.extract_strided_slice %786 {offsets = [1, 0], sizes = [6, 128], strides = [1, 1]} : vector<7x128xf32> to vector<6x128xf32>
      %c20_i32_309 = arith.constant 20 : i32
      %799 = arith.addi %c20_i32_309, %arg13 : i32
      %800 = arith.index_cast %799 : i32 to index
      %c4_310 = arith.constant 4 : index
      %c0_311 = arith.constant 0 : index
      %c0_312 = arith.constant 0 : index
      %801 = vector.load %arg11[%800, %c4_310, %c0_311, %c0_312] : memref<30x9x7x128xf32, #tpu.memory_space<vmem>>, vector<1x1x6x128xf32>
      %802 = vector.shape_cast %801 : vector<1x1x6x128xf32> to vector<6x128xf32>
      %803 = vector.shape_cast %798 : vector<6x128xf32> to vector<1x1x6x128xf32>
      tpu.vector_store %arg11[%800, %c4_310, %c0_311, %c0_312], %803 {strides = array<i32>} : memref<30x9x7x128xf32, #tpu.memory_space<vmem>>, vector<1x1x6x128xf32>,
      %c0_313 = arith.constant 0 : index
      %c16_314 = arith.constant 16 : index
      %c0_315 = arith.constant 0 : index
      %c0_316 = arith.constant 0 : index
      %804 = vector.load %arg1[%c0_313, %c16_314, %c0_315, %c0_316] : memref<6x30x7x128xf32, #tpu.memory_space<vmem>>, vector<1x6x7x128xf32>
      %805 = vector.shape_cast %804 : vector<1x6x7x128xf32> to vector<6x7x128xf32>
      %806 = vector.extract_strided_slice %805 {offsets = [0, 0, 0], sizes = [4, 7, 128], strides = [1, 1, 1]} : vector<6x7x128xf32> to vector<4x7x128xf32>
      %807 = vector.broadcast %149 : f32 to vector<4x7x128xf32>
      %808 = arith.mulf %806, %807 : vector<4x7x128xf32>
      %809 = vector.extract_strided_slice %805 {offsets = [1, 0, 0], sizes = [4, 7, 128], strides = [1, 1, 1]} : vector<6x7x128xf32> to vector<4x7x128xf32>
      %810 = vector.broadcast %155 : f32 to vector<4x7x128xf32>
      %811 = arith.mulf %809, %810 : vector<4x7x128xf32>
      %812 = arith.addf %808, %811 : vector<4x7x128xf32>
      %813 = vector.extract_strided_slice %805 {offsets = [2, 0, 0], sizes = [4, 7, 128], strides = [1, 1, 1]} : vector<6x7x128xf32> to vector<4x7x128xf32>
      %814 = vector.broadcast %161 : f32 to vector<4x7x128xf32>
      %815 = arith.mulf %813, %814 : vector<4x7x128xf32>
      %816 = arith.addf %812, %815 : vector<4x7x128xf32>
      %c1_317 = arith.constant 1 : index
      %c16_318 = arith.constant 16 : index
      %c0_319 = arith.constant 0 : index
      %c0_320 = arith.constant 0 : index
      %817 = vector.load %arg1[%c1_317, %c16_318, %c0_319, %c0_320] : memref<6x30x7x128xf32, #tpu.memory_space<vmem>>, vector<1x6x7x128xf32>
      %818 = vector.shape_cast %817 : vector<1x6x7x128xf32> to vector<6x7x128xf32>
      %819 = vector.extract_strided_slice %818 {offsets = [0, 0, 0], sizes = [4, 7, 128], strides = [1, 1, 1]} : vector<6x7x128xf32> to vector<4x7x128xf32>
      %820 = vector.broadcast %149 : f32 to vector<4x7x128xf32>
      %821 = arith.mulf %819, %820 : vector<4x7x128xf32>
      %822 = vector.broadcast %151 : f32 to vector<4x7x128xf32>
      %823 = arith.mulf %819, %822 : vector<4x7x128xf32>
      %824 = arith.addf %816, %823 : vector<4x7x128xf32>
      %825 = vector.extract_strided_slice %818 {offsets = [1, 0, 0], sizes = [4, 7, 128], strides = [1, 1, 1]} : vector<6x7x128xf32> to vector<4x7x128xf32>
      %826 = vector.broadcast %155 : f32 to vector<4x7x128xf32>
      %827 = arith.mulf %825, %826 : vector<4x7x128xf32>
      %828 = arith.addf %821, %827 : vector<4x7x128xf32>
      %829 = vector.broadcast %157 : f32 to vector<4x7x128xf32>
      %830 = arith.mulf %825, %829 : vector<4x7x128xf32>
      %831 = arith.addf %824, %830 : vector<4x7x128xf32>
      %832 = vector.extract_strided_slice %818 {offsets = [2, 0, 0], sizes = [4, 7, 128], strides = [1, 1, 1]} : vector<6x7x128xf32> to vector<4x7x128xf32>
      %833 = vector.broadcast %161 : f32 to vector<4x7x128xf32>
      %834 = arith.mulf %832, %833 : vector<4x7x128xf32>
      %835 = arith.addf %828, %834 : vector<4x7x128xf32>
      %836 = vector.broadcast %163 : f32 to vector<4x7x128xf32>
      %837 = arith.mulf %832, %836 : vector<4x7x128xf32>
      %838 = arith.addf %831, %837 : vector<4x7x128xf32>
      %c2_321 = arith.constant 2 : index
      %c16_322 = arith.constant 16 : index
      %c0_323 = arith.constant 0 : index
      %c0_324 = arith.constant 0 : index
      %839 = vector.load %arg1[%c2_321, %c16_322, %c0_323, %c0_324] : memref<6x30x7x128xf32, #tpu.memory_space<vmem>>, vector<1x6x7x128xf32>
      %840 = vector.shape_cast %839 : vector<1x6x7x128xf32> to vector<6x7x128xf32>
      %841 = vector.extract_strided_slice %840 {offsets = [0, 0, 0], sizes = [4, 7, 128], strides = [1, 1, 1]} : vector<6x7x128xf32> to vector<4x7x128xf32>
      %842 = vector.broadcast %149 : f32 to vector<4x7x128xf32>
      %843 = arith.mulf %841, %842 : vector<4x7x128xf32>
      %844 = vector.broadcast %151 : f32 to vector<4x7x128xf32>
      %845 = arith.mulf %841, %844 : vector<4x7x128xf32>
      %846 = arith.addf %835, %845 : vector<4x7x128xf32>
      %847 = vector.broadcast %153 : f32 to vector<4x7x128xf32>
      %848 = arith.mulf %841, %847 : vector<4x7x128xf32>
      %849 = arith.addf %838, %848 : vector<4x7x128xf32>
      %850 = vector.extract_strided_slice %840 {offsets = [1, 0, 0], sizes = [4, 7, 128], strides = [1, 1, 1]} : vector<6x7x128xf32> to vector<4x7x128xf32>
      %851 = vector.broadcast %155 : f32 to vector<4x7x128xf32>
      %852 = arith.mulf %850, %851 : vector<4x7x128xf32>
      %853 = arith.addf %843, %852 : vector<4x7x128xf32>
      %854 = vector.broadcast %157 : f32 to vector<4x7x128xf32>
      %855 = arith.mulf %850, %854 : vector<4x7x128xf32>
      %856 = arith.addf %846, %855 : vector<4x7x128xf32>
      %857 = vector.broadcast %159 : f32 to vector<4x7x128xf32>
      %858 = arith.mulf %850, %857 : vector<4x7x128xf32>
      %859 = arith.addf %849, %858 : vector<4x7x128xf32>
      %860 = vector.extract_strided_slice %840 {offsets = [2, 0, 0], sizes = [4, 7, 128], strides = [1, 1, 1]} : vector<6x7x128xf32> to vector<4x7x128xf32>
      %861 = vector.broadcast %161 : f32 to vector<4x7x128xf32>
      %862 = arith.mulf %860, %861 : vector<4x7x128xf32>
      %863 = arith.addf %853, %862 : vector<4x7x128xf32>
      %864 = vector.broadcast %163 : f32 to vector<4x7x128xf32>
      %865 = arith.mulf %860, %864 : vector<4x7x128xf32>
      %866 = arith.addf %856, %865 : vector<4x7x128xf32>
      %867 = vector.broadcast %165 : f32 to vector<4x7x128xf32>
      %868 = arith.mulf %860, %867 : vector<4x7x128xf32>
      %869 = arith.addf %859, %868 : vector<4x7x128xf32>
      %c3_325 = arith.constant 3 : index
      %c16_326 = arith.constant 16 : index
      %c0_327 = arith.constant 0 : index
      %c0_328 = arith.constant 0 : index
      %870 = vector.load %arg1[%c3_325, %c16_326, %c0_327, %c0_328] : memref<6x30x7x128xf32, #tpu.memory_space<vmem>>, vector<1x6x7x128xf32>
      %871 = vector.shape_cast %870 : vector<1x6x7x128xf32> to vector<6x7x128xf32>
      %872 = vector.extract_strided_slice %871 {offsets = [0, 0, 0], sizes = [4, 7, 128], strides = [1, 1, 1]} : vector<6x7x128xf32> to vector<4x7x128xf32>
      %873 = vector.broadcast %149 : f32 to vector<4x7x128xf32>
      %874 = arith.mulf %872, %873 : vector<4x7x128xf32>
      %875 = vector.broadcast %151 : f32 to vector<4x7x128xf32>
      %876 = arith.mulf %872, %875 : vector<4x7x128xf32>
      %877 = arith.addf %863, %876 : vector<4x7x128xf32>
      %878 = vector.broadcast %153 : f32 to vector<4x7x128xf32>
      %879 = arith.mulf %872, %878 : vector<4x7x128xf32>
      %880 = arith.addf %866, %879 : vector<4x7x128xf32>
      %881 = vector.extract_strided_slice %871 {offsets = [1, 0, 0], sizes = [4, 7, 128], strides = [1, 1, 1]} : vector<6x7x128xf32> to vector<4x7x128xf32>
      %882 = vector.broadcast %155 : f32 to vector<4x7x128xf32>
      %883 = arith.mulf %881, %882 : vector<4x7x128xf32>
      %884 = arith.addf %874, %883 : vector<4x7x128xf32>
      %885 = vector.broadcast %157 : f32 to vector<4x7x128xf32>
      %886 = arith.mulf %881, %885 : vector<4x7x128xf32>
      %887 = arith.addf %877, %886 : vector<4x7x128xf32>
      %888 = vector.broadcast %159 : f32 to vector<4x7x128xf32>
      %889 = arith.mulf %881, %888 : vector<4x7x128xf32>
      %890 = arith.addf %880, %889 : vector<4x7x128xf32>
      %891 = vector.extract_strided_slice %871 {offsets = [2, 0, 0], sizes = [4, 7, 128], strides = [1, 1, 1]} : vector<6x7x128xf32> to vector<4x7x128xf32>
      %892 = vector.broadcast %161 : f32 to vector<4x7x128xf32>
      %893 = arith.mulf %891, %892 : vector<4x7x128xf32>
      %894 = arith.addf %884, %893 : vector<4x7x128xf32>
      %895 = vector.broadcast %163 : f32 to vector<4x7x128xf32>
      %896 = arith.mulf %891, %895 : vector<4x7x128xf32>
      %897 = arith.addf %887, %896 : vector<4x7x128xf32>
      %898 = vector.broadcast %165 : f32 to vector<4x7x128xf32>
      %899 = arith.mulf %891, %898 : vector<4x7x128xf32>
      %900 = arith.addf %890, %899 : vector<4x7x128xf32>
      %c4_329 = arith.constant 4 : index
      %c16_330 = arith.constant 16 : index
      %c0_331 = arith.constant 0 : index
      %c0_332 = arith.constant 0 : index
      %901 = vector.load %arg1[%c4_329, %c16_330, %c0_331, %c0_332] : memref<6x30x7x128xf32, #tpu.memory_space<vmem>>, vector<1x6x7x128xf32>
      %902 = vector.shape_cast %901 : vector<1x6x7x128xf32> to vector<6x7x128xf32>
      %903 = vector.extract_strided_slice %902 {offsets = [0, 0, 0], sizes = [4, 7, 128], strides = [1, 1, 1]} : vector<6x7x128xf32> to vector<4x7x128xf32>
      %904 = vector.broadcast %151 : f32 to vector<4x7x128xf32>
      %905 = arith.mulf %903, %904 : vector<4x7x128xf32>
      %906 = arith.addf %894, %905 : vector<4x7x128xf32>
      %907 = vector.broadcast %153 : f32 to vector<4x7x128xf32>
      %908 = arith.mulf %903, %907 : vector<4x7x128xf32>
      %909 = arith.addf %897, %908 : vector<4x7x128xf32>
      %910 = vector.extract_strided_slice %902 {offsets = [1, 0, 0], sizes = [4, 7, 128], strides = [1, 1, 1]} : vector<6x7x128xf32> to vector<4x7x128xf32>
      %911 = vector.broadcast %157 : f32 to vector<4x7x128xf32>
      %912 = arith.mulf %910, %911 : vector<4x7x128xf32>
      %913 = arith.addf %906, %912 : vector<4x7x128xf32>
      %914 = vector.broadcast %159 : f32 to vector<4x7x128xf32>
      %915 = arith.mulf %910, %914 : vector<4x7x128xf32>
      %916 = arith.addf %909, %915 : vector<4x7x128xf32>
      %917 = vector.extract_strided_slice %902 {offsets = [2, 0, 0], sizes = [4, 7, 128], strides = [1, 1, 1]} : vector<6x7x128xf32> to vector<4x7x128xf32>
      %918 = vector.broadcast %163 : f32 to vector<4x7x128xf32>
      %919 = arith.mulf %917, %918 : vector<4x7x128xf32>
      %920 = arith.addf %913, %919 : vector<4x7x128xf32>
      %921 = vector.broadcast %165 : f32 to vector<4x7x128xf32>
      %922 = arith.mulf %917, %921 : vector<4x7x128xf32>
      %923 = arith.addf %916, %922 : vector<4x7x128xf32>
      %c5_333 = arith.constant 5 : index
      %c16_334 = arith.constant 16 : index
      %c0_335 = arith.constant 0 : index
      %c0_336 = arith.constant 0 : index
      %924 = vector.load %arg1[%c5_333, %c16_334, %c0_335, %c0_336] : memref<6x30x7x128xf32, #tpu.memory_space<vmem>>, vector<1x6x7x128xf32>
      %925 = vector.shape_cast %924 : vector<1x6x7x128xf32> to vector<6x7x128xf32>
      %926 = vector.extract_strided_slice %925 {offsets = [0, 0, 0], sizes = [4, 7, 128], strides = [1, 1, 1]} : vector<6x7x128xf32> to vector<4x7x128xf32>
      %927 = vector.broadcast %153 : f32 to vector<4x7x128xf32>
      %928 = arith.mulf %926, %927 : vector<4x7x128xf32>
      %929 = arith.addf %920, %928 : vector<4x7x128xf32>
      %930 = vector.extract_strided_slice %925 {offsets = [1, 0, 0], sizes = [4, 7, 128], strides = [1, 1, 1]} : vector<6x7x128xf32> to vector<4x7x128xf32>
      %931 = vector.broadcast %159 : f32 to vector<4x7x128xf32>
      %932 = arith.mulf %930, %931 : vector<4x7x128xf32>
      %933 = arith.addf %929, %932 : vector<4x7x128xf32>
      %934 = vector.extract_strided_slice %925 {offsets = [2, 0, 0], sizes = [4, 7, 128], strides = [1, 1, 1]} : vector<6x7x128xf32> to vector<4x7x128xf32>
      %935 = vector.broadcast %165 : f32 to vector<4x7x128xf32>
      %936 = arith.mulf %934, %935 : vector<4x7x128xf32>
      %937 = arith.addf %933, %936 : vector<4x7x128xf32>
      %938 = arith.maximumf %869, %900 : vector<4x7x128xf32>
      %939 = arith.maximumf %923, %937 : vector<4x7x128xf32>
      %940 = arith.maximumf %938, %939 : vector<4x7x128xf32>
      %cst_337 = arith.constant dense<0xFF800000> : vector<7x128xf32>
      %941 = vector.multi_reduction <maximumf>, %940, %cst_337 [0] : vector<4x7x128xf32> to vector<7x128xf32>
      %942 = vector.broadcast %167 : f32 to vector<7x128xf32>
      %943 = arith.addf %941, %942 : vector<7x128xf32>
      %cst_338 = arith.constant 0.000000e+00 : f32
      %944 = vector.broadcast %cst_338 : f32 to vector<7x128xf32>
      %945 = arith.maximumf %943, %944 : vector<7x128xf32>
      %946 = vector.extract_strided_slice %945 {offsets = [0, 0], sizes = [6, 128], strides = [1, 1]} : vector<7x128xf32> to vector<6x128xf32>
      %c0_i32_339 = arith.constant 0 : i32
      %947 = arith.addi %c0_i32_339, %arg13 : i32
      %948 = arith.index_cast %947 : i32 to index
      %c5_340 = arith.constant 5 : index
      %c1_341 = arith.constant 1 : index
      %c0_342 = arith.constant 0 : index
      %949 = vector.load %arg11[%948, %c5_340, %c1_341, %c0_342] : memref<30x9x7x128xf32, #tpu.memory_space<vmem>>, vector<1x1x6x128xf32>
      %950 = vector.shape_cast %949 : vector<1x1x6x128xf32> to vector<6x128xf32>
      %951 = vector.shape_cast %946 : vector<6x128xf32> to vector<1x1x6x128xf32>
      tpu.vector_store %arg11[%948, %c5_340, %c1_341, %c0_342], %951 {strides = array<i32>} : memref<30x9x7x128xf32, #tpu.memory_space<vmem>>, vector<1x1x6x128xf32>,
      %c10_i32_343 = arith.constant 10 : i32
      %952 = arith.addi %c10_i32_343, %arg13 : i32
      %953 = arith.index_cast %952 : i32 to index
      %c5_344 = arith.constant 5 : index
      %c0_345 = arith.constant 0 : index
      %c0_346 = arith.constant 0 : index
      %954 = vector.load %arg11[%953, %c5_344, %c0_345, %c0_346] : memref<30x9x7x128xf32, #tpu.memory_space<vmem>>, vector<1x1x7x128xf32>
      %955 = vector.shape_cast %954 : vector<1x1x7x128xf32> to vector<7x128xf32>
      %956 = vector.shape_cast %945 : vector<7x128xf32> to vector<1x1x7x128xf32>
      tpu.vector_store %arg11[%953, %c5_344, %c0_345, %c0_346], %956 {strides = array<i32>} : memref<30x9x7x128xf32, #tpu.memory_space<vmem>>, vector<1x1x7x128xf32>,
      %957 = vector.extract_strided_slice %945 {offsets = [1, 0], sizes = [6, 128], strides = [1, 1]} : vector<7x128xf32> to vector<6x128xf32>
      %c20_i32_347 = arith.constant 20 : i32
      %958 = arith.addi %c20_i32_347, %arg13 : i32
      %959 = arith.index_cast %958 : i32 to index
      %c5_348 = arith.constant 5 : index
      %c0_349 = arith.constant 0 : index
      %c0_350 = arith.constant 0 : index
      %960 = vector.load %arg11[%959, %c5_348, %c0_349, %c0_350] : memref<30x9x7x128xf32, #tpu.memory_space<vmem>>, vector<1x1x6x128xf32>
      %961 = vector.shape_cast %960 : vector<1x1x6x128xf32> to vector<6x128xf32>
      %962 = vector.shape_cast %957 : vector<6x128xf32> to vector<1x1x6x128xf32>
      tpu.vector_store %arg11[%959, %c5_348, %c0_349, %c0_350], %962 {strides = array<i32>} : memref<30x9x7x128xf32, #tpu.memory_space<vmem>>, vector<1x1x6x128xf32>,
      %c0_351 = arith.constant 0 : index
      %c20_352 = arith.constant 20 : index
      %c0_353 = arith.constant 0 : index
      %c0_354 = arith.constant 0 : index
      %963 = vector.load %arg1[%c0_351, %c20_352, %c0_353, %c0_354] : memref<6x30x7x128xf32, #tpu.memory_space<vmem>>, vector<1x6x7x128xf32>
      %964 = vector.shape_cast %963 : vector<1x6x7x128xf32> to vector<6x7x128xf32>
      %965 = vector.extract_strided_slice %964 {offsets = [0, 0, 0], sizes = [4, 7, 128], strides = [1, 1, 1]} : vector<6x7x128xf32> to vector<4x7x128xf32>
      %966 = vector.broadcast %149 : f32 to vector<4x7x128xf32>
      %967 = arith.mulf %965, %966 : vector<4x7x128xf32>
      %968 = vector.extract_strided_slice %964 {offsets = [1, 0, 0], sizes = [4, 7, 128], strides = [1, 1, 1]} : vector<6x7x128xf32> to vector<4x7x128xf32>
      %969 = vector.broadcast %155 : f32 to vector<4x7x128xf32>
      %970 = arith.mulf %968, %969 : vector<4x7x128xf32>
      %971 = arith.addf %967, %970 : vector<4x7x128xf32>
      %972 = vector.extract_strided_slice %964 {offsets = [2, 0, 0], sizes = [4, 7, 128], strides = [1, 1, 1]} : vector<6x7x128xf32> to vector<4x7x128xf32>
      %973 = vector.broadcast %161 : f32 to vector<4x7x128xf32>
      %974 = arith.mulf %972, %973 : vector<4x7x128xf32>
      %975 = arith.addf %971, %974 : vector<4x7x128xf32>
      %c1_355 = arith.constant 1 : index
      %c20_356 = arith.constant 20 : index
      %c0_357 = arith.constant 0 : index
      %c0_358 = arith.constant 0 : index
      %976 = vector.load %arg1[%c1_355, %c20_356, %c0_357, %c0_358] : memref<6x30x7x128xf32, #tpu.memory_space<vmem>>, vector<1x6x7x128xf32>
      %977 = vector.shape_cast %976 : vector<1x6x7x128xf32> to vector<6x7x128xf32>
      %978 = vector.extract_strided_slice %977 {offsets = [0, 0, 0], sizes = [4, 7, 128], strides = [1, 1, 1]} : vector<6x7x128xf32> to vector<4x7x128xf32>
      %979 = vector.broadcast %149 : f32 to vector<4x7x128xf32>
      %980 = arith.mulf %978, %979 : vector<4x7x128xf32>
      %981 = vector.broadcast %151 : f32 to vector<4x7x128xf32>
      %982 = arith.mulf %978, %981 : vector<4x7x128xf32>
      %983 = arith.addf %975, %982 : vector<4x7x128xf32>
      %984 = vector.extract_strided_slice %977 {offsets = [1, 0, 0], sizes = [4, 7, 128], strides = [1, 1, 1]} : vector<6x7x128xf32> to vector<4x7x128xf32>
      %985 = vector.broadcast %155 : f32 to vector<4x7x128xf32>
      %986 = arith.mulf %984, %985 : vector<4x7x128xf32>
      %987 = arith.addf %980, %986 : vector<4x7x128xf32>
      %988 = vector.broadcast %157 : f32 to vector<4x7x128xf32>
      %989 = arith.mulf %984, %988 : vector<4x7x128xf32>
      %990 = arith.addf %983, %989 : vector<4x7x128xf32>
      %991 = vector.extract_strided_slice %977 {offsets = [2, 0, 0], sizes = [4, 7, 128], strides = [1, 1, 1]} : vector<6x7x128xf32> to vector<4x7x128xf32>
      %992 = vector.broadcast %161 : f32 to vector<4x7x128xf32>
      %993 = arith.mulf %991, %992 : vector<4x7x128xf32>
      %994 = arith.addf %987, %993 : vector<4x7x128xf32>
      %995 = vector.broadcast %163 : f32 to vector<4x7x128xf32>
      %996 = arith.mulf %991, %995 : vector<4x7x128xf32>
      %997 = arith.addf %990, %996 : vector<4x7x128xf32>
      %c2_359 = arith.constant 2 : index
      %c20_360 = arith.constant 20 : index
      %c0_361 = arith.constant 0 : index
      %c0_362 = arith.constant 0 : index
      %998 = vector.load %arg1[%c2_359, %c20_360, %c0_361, %c0_362] : memref<6x30x7x128xf32, #tpu.memory_space<vmem>>, vector<1x6x7x128xf32>
      %999 = vector.shape_cast %998 : vector<1x6x7x128xf32> to vector<6x7x128xf32>
      %1000 = vector.extract_strided_slice %999 {offsets = [0, 0, 0], sizes = [4, 7, 128], strides = [1, 1, 1]} : vector<6x7x128xf32> to vector<4x7x128xf32>
      %1001 = vector.broadcast %149 : f32 to vector<4x7x128xf32>
      %1002 = arith.mulf %1000, %1001 : vector<4x7x128xf32>
      %1003 = vector.broadcast %151 : f32 to vector<4x7x128xf32>
      %1004 = arith.mulf %1000, %1003 : vector<4x7x128xf32>
      %1005 = arith.addf %994, %1004 : vector<4x7x128xf32>
      %1006 = vector.broadcast %153 : f32 to vector<4x7x128xf32>
      %1007 = arith.mulf %1000, %1006 : vector<4x7x128xf32>
      %1008 = arith.addf %997, %1007 : vector<4x7x128xf32>
      %1009 = vector.extract_strided_slice %999 {offsets = [1, 0, 0], sizes = [4, 7, 128], strides = [1, 1, 1]} : vector<6x7x128xf32> to vector<4x7x128xf32>
      %1010 = vector.broadcast %155 : f32 to vector<4x7x128xf32>
      %1011 = arith.mulf %1009, %1010 : vector<4x7x128xf32>
      %1012 = arith.addf %1002, %1011 : vector<4x7x128xf32>
      %1013 = vector.broadcast %157 : f32 to vector<4x7x128xf32>
      %1014 = arith.mulf %1009, %1013 : vector<4x7x128xf32>
      %1015 = arith.addf %1005, %1014 : vector<4x7x128xf32>
      %1016 = vector.broadcast %159 : f32 to vector<4x7x128xf32>
      %1017 = arith.mulf %1009, %1016 : vector<4x7x128xf32>
      %1018 = arith.addf %1008, %1017 : vector<4x7x128xf32>
      %1019 = vector.extract_strided_slice %999 {offsets = [2, 0, 0], sizes = [4, 7, 128], strides = [1, 1, 1]} : vector<6x7x128xf32> to vector<4x7x128xf32>
      %1020 = vector.broadcast %161 : f32 to vector<4x7x128xf32>
      %1021 = arith.mulf %1019, %1020 : vector<4x7x128xf32>
      %1022 = arith.addf %1012, %1021 : vector<4x7x128xf32>
      %1023 = vector.broadcast %163 : f32 to vector<4x7x128xf32>
      %1024 = arith.mulf %1019, %1023 : vector<4x7x128xf32>
      %1025 = arith.addf %1015, %1024 : vector<4x7x128xf32>
      %1026 = vector.broadcast %165 : f32 to vector<4x7x128xf32>
      %1027 = arith.mulf %1019, %1026 : vector<4x7x128xf32>
      %1028 = arith.addf %1018, %1027 : vector<4x7x128xf32>
      %c3_363 = arith.constant 3 : index
      %c20_364 = arith.constant 20 : index
      %c0_365 = arith.constant 0 : index
      %c0_366 = arith.constant 0 : index
      %1029 = vector.load %arg1[%c3_363, %c20_364, %c0_365, %c0_366] : memref<6x30x7x128xf32, #tpu.memory_space<vmem>>, vector<1x6x7x128xf32>
      %1030 = vector.shape_cast %1029 : vector<1x6x7x128xf32> to vector<6x7x128xf32>
      %1031 = vector.extract_strided_slice %1030 {offsets = [0, 0, 0], sizes = [4, 7, 128], strides = [1, 1, 1]} : vector<6x7x128xf32> to vector<4x7x128xf32>
      %1032 = vector.broadcast %149 : f32 to vector<4x7x128xf32>
      %1033 = arith.mulf %1031, %1032 : vector<4x7x128xf32>
      %1034 = vector.broadcast %151 : f32 to vector<4x7x128xf32>
      %1035 = arith.mulf %1031, %1034 : vector<4x7x128xf32>
      %1036 = arith.addf %1022, %1035 : vector<4x7x128xf32>
      %1037 = vector.broadcast %153 : f32 to vector<4x7x128xf32>
      %1038 = arith.mulf %1031, %1037 : vector<4x7x128xf32>
      %1039 = arith.addf %1025, %1038 : vector<4x7x128xf32>
      %1040 = vector.extract_strided_slice %1030 {offsets = [1, 0, 0], sizes = [4, 7, 128], strides = [1, 1, 1]} : vector<6x7x128xf32> to vector<4x7x128xf32>
      %1041 = vector.broadcast %155 : f32 to vector<4x7x128xf32>
      %1042 = arith.mulf %1040, %1041 : vector<4x7x128xf32>
      %1043 = arith.addf %1033, %1042 : vector<4x7x128xf32>
      %1044 = vector.broadcast %157 : f32 to vector<4x7x128xf32>
      %1045 = arith.mulf %1040, %1044 : vector<4x7x128xf32>
      %1046 = arith.addf %1036, %1045 : vector<4x7x128xf32>
      %1047 = vector.broadcast %159 : f32 to vector<4x7x128xf32>
      %1048 = arith.mulf %1040, %1047 : vector<4x7x128xf32>
      %1049 = arith.addf %1039, %1048 : vector<4x7x128xf32>
      %1050 = vector.extract_strided_slice %1030 {offsets = [2, 0, 0], sizes = [4, 7, 128], strides = [1, 1, 1]} : vector<6x7x128xf32> to vector<4x7x128xf32>
      %1051 = vector.broadcast %161 : f32 to vector<4x7x128xf32>
      %1052 = arith.mulf %1050, %1051 : vector<4x7x128xf32>
      %1053 = arith.addf %1043, %1052 : vector<4x7x128xf32>
      %1054 = vector.broadcast %163 : f32 to vector<4x7x128xf32>
      %1055 = arith.mulf %1050, %1054 : vector<4x7x128xf32>
      %1056 = arith.addf %1046, %1055 : vector<4x7x128xf32>
      %1057 = vector.broadcast %165 : f32 to vector<4x7x128xf32>
      %1058 = arith.mulf %1050, %1057 : vector<4x7x128xf32>
      %1059 = arith.addf %1049, %1058 : vector<4x7x128xf32>
      %c4_367 = arith.constant 4 : index
      %c20_368 = arith.constant 20 : index
      %c0_369 = arith.constant 0 : index
      %c0_370 = arith.constant 0 : index
      %1060 = vector.load %arg1[%c4_367, %c20_368, %c0_369, %c0_370] : memref<6x30x7x128xf32, #tpu.memory_space<vmem>>, vector<1x6x7x128xf32>
      %1061 = vector.shape_cast %1060 : vector<1x6x7x128xf32> to vector<6x7x128xf32>
      %1062 = vector.extract_strided_slice %1061 {offsets = [0, 0, 0], sizes = [4, 7, 128], strides = [1, 1, 1]} : vector<6x7x128xf32> to vector<4x7x128xf32>
      %1063 = vector.broadcast %151 : f32 to vector<4x7x128xf32>
      %1064 = arith.mulf %1062, %1063 : vector<4x7x128xf32>
      %1065 = arith.addf %1053, %1064 : vector<4x7x128xf32>
      %1066 = vector.broadcast %153 : f32 to vector<4x7x128xf32>
      %1067 = arith.mulf %1062, %1066 : vector<4x7x128xf32>
      %1068 = arith.addf %1056, %1067 : vector<4x7x128xf32>
      %1069 = vector.extract_strided_slice %1061 {offsets = [1, 0, 0], sizes = [4, 7, 128], strides = [1, 1, 1]} : vector<6x7x128xf32> to vector<4x7x128xf32>
      %1070 = vector.broadcast %157 : f32 to vector<4x7x128xf32>
      %1071 = arith.mulf %1069, %1070 : vector<4x7x128xf32>
      %1072 = arith.addf %1065, %1071 : vector<4x7x128xf32>
      %1073 = vector.broadcast %159 : f32 to vector<4x7x128xf32>
      %1074 = arith.mulf %1069, %1073 : vector<4x7x128xf32>
      %1075 = arith.addf %1068, %1074 : vector<4x7x128xf32>
      %1076 = vector.extract_strided_slice %1061 {offsets = [2, 0, 0], sizes = [4, 7, 128], strides = [1, 1, 1]} : vector<6x7x128xf32> to vector<4x7x128xf32>
      %1077 = vector.broadcast %163 : f32 to vector<4x7x128xf32>
      %1078 = arith.mulf %1076, %1077 : vector<4x7x128xf32>
      %1079 = arith.addf %1072, %1078 : vector<4x7x128xf32>
      %1080 = vector.broadcast %165 : f32 to vector<4x7x128xf32>
      %1081 = arith.mulf %1076, %1080 : vector<4x7x128xf32>
      %1082 = arith.addf %1075, %1081 : vector<4x7x128xf32>
      %c5_371 = arith.constant 5 : index
      %c20_372 = arith.constant 20 : index
      %c0_373 = arith.constant 0 : index
      %c0_374 = arith.constant 0 : index
      %1083 = vector.load %arg1[%c5_371, %c20_372, %c0_373, %c0_374] : memref<6x30x7x128xf32, #tpu.memory_space<vmem>>, vector<1x6x7x128xf32>
      %1084 = vector.shape_cast %1083 : vector<1x6x7x128xf32> to vector<6x7x128xf32>
      %1085 = vector.extract_strided_slice %1084 {offsets = [0, 0, 0], sizes = [4, 7, 128], strides = [1, 1, 1]} : vector<6x7x128xf32> to vector<4x7x128xf32>
      %1086 = vector.broadcast %153 : f32 to vector<4x7x128xf32>
      %1087 = arith.mulf %1085, %1086 : vector<4x7x128xf32>
      %1088 = arith.addf %1079, %1087 : vector<4x7x128xf32>
      %1089 = vector.extract_strided_slice %1084 {offsets = [1, 0, 0], sizes = [4, 7, 128], strides = [1, 1, 1]} : vector<6x7x128xf32> to vector<4x7x128xf32>
      %1090 = vector.broadcast %159 : f32 to vector<4x7x128xf32>
      %1091 = arith.mulf %1089, %1090 : vector<4x7x128xf32>
      %1092 = arith.addf %1088, %1091 : vector<4x7x128xf32>
      %1093 = vector.extract_strided_slice %1084 {offsets = [2, 0, 0], sizes = [4, 7, 128], strides = [1, 1, 1]} : vector<6x7x128xf32> to vector<4x7x128xf32>
      %1094 = vector.broadcast %165 : f32 to vector<4x7x128xf32>
      %1095 = arith.mulf %1093, %1094 : vector<4x7x128xf32>
      %1096 = arith.addf %1092, %1095 : vector<4x7x128xf32>
      %1097 = arith.maximumf %1028, %1059 : vector<4x7x128xf32>
      %1098 = arith.maximumf %1082, %1096 : vector<4x7x128xf32>
      %1099 = arith.maximumf %1097, %1098 : vector<4x7x128xf32>
      %cst_375 = arith.constant dense<0xFF800000> : vector<7x128xf32>
      %1100 = vector.multi_reduction <maximumf>, %1099, %cst_375 [0] : vector<4x7x128xf32> to vector<7x128xf32>
      %1101 = vector.broadcast %167 : f32 to vector<7x128xf32>
      %1102 = arith.addf %1100, %1101 : vector<7x128xf32>
      %cst_376 = arith.constant 0.000000e+00 : f32
      %1103 = vector.broadcast %cst_376 : f32 to vector<7x128xf32>
      %1104 = arith.maximumf %1102, %1103 : vector<7x128xf32>
      %1105 = vector.extract_strided_slice %1104 {offsets = [0, 0], sizes = [6, 128], strides = [1, 1]} : vector<7x128xf32> to vector<6x128xf32>
      %c0_i32_377 = arith.constant 0 : i32
      %1106 = arith.addi %c0_i32_377, %arg13 : i32
      %1107 = arith.index_cast %1106 : i32 to index
      %c6_378 = arith.constant 6 : index
      %c1_379 = arith.constant 1 : index
      %c0_380 = arith.constant 0 : index
      %1108 = vector.load %arg11[%1107, %c6_378, %c1_379, %c0_380] : memref<30x9x7x128xf32, #tpu.memory_space<vmem>>, vector<1x1x6x128xf32>
      %1109 = vector.shape_cast %1108 : vector<1x1x6x128xf32> to vector<6x128xf32>
      %1110 = vector.shape_cast %1105 : vector<6x128xf32> to vector<1x1x6x128xf32>
      tpu.vector_store %arg11[%1107, %c6_378, %c1_379, %c0_380], %1110 {strides = array<i32>} : memref<30x9x7x128xf32, #tpu.memory_space<vmem>>, vector<1x1x6x128xf32>,
      %c10_i32_381 = arith.constant 10 : i32
      %1111 = arith.addi %c10_i32_381, %arg13 : i32
      %1112 = arith.index_cast %1111 : i32 to index
      %c6_382 = arith.constant 6 : index
      %c0_383 = arith.constant 0 : index
      %c0_384 = arith.constant 0 : index
      %1113 = vector.load %arg11[%1112, %c6_382, %c0_383, %c0_384] : memref<30x9x7x128xf32, #tpu.memory_space<vmem>>, vector<1x1x7x128xf32>
      %1114 = vector.shape_cast %1113 : vector<1x1x7x128xf32> to vector<7x128xf32>
      %1115 = vector.shape_cast %1104 : vector<7x128xf32> to vector<1x1x7x128xf32>
      tpu.vector_store %arg11[%1112, %c6_382, %c0_383, %c0_384], %1115 {strides = array<i32>} : memref<30x9x7x128xf32, #tpu.memory_space<vmem>>, vector<1x1x7x128xf32>,
      %1116 = vector.extract_strided_slice %1104 {offsets = [1, 0], sizes = [6, 128], strides = [1, 1]} : vector<7x128xf32> to vector<6x128xf32>
      %c20_i32_385 = arith.constant 20 : i32
      %1117 = arith.addi %c20_i32_385, %arg13 : i32
      %1118 = arith.index_cast %1117 : i32 to index
      %c6_386 = arith.constant 6 : index
      %c0_387 = arith.constant 0 : index
      %c0_388 = arith.constant 0 : index
      %1119 = vector.load %arg11[%1118, %c6_386, %c0_387, %c0_388] : memref<30x9x7x128xf32, #tpu.memory_space<vmem>>, vector<1x1x6x128xf32>
      %1120 = vector.shape_cast %1119 : vector<1x1x6x128xf32> to vector<6x128xf32>
      %1121 = vector.shape_cast %1116 : vector<6x128xf32> to vector<1x1x6x128xf32>
      tpu.vector_store %arg11[%1118, %c6_386, %c0_387, %c0_388], %1121 {strides = array<i32>} : memref<30x9x7x128xf32, #tpu.memory_space<vmem>>, vector<1x1x6x128xf32>,
      %c0_389 = arith.constant 0 : index
      %c24_390 = arith.constant 24 : index
      %c0_391 = arith.constant 0 : index
      %c0_392 = arith.constant 0 : index
      %1122 = vector.load %arg1[%c0_389, %c24_390, %c0_391, %c0_392] : memref<6x30x7x128xf32, #tpu.memory_space<vmem>>, vector<1x6x7x128xf32>
      %1123 = vector.shape_cast %1122 : vector<1x6x7x128xf32> to vector<6x7x128xf32>
      %1124 = vector.extract_strided_slice %1123 {offsets = [0, 0, 0], sizes = [4, 7, 128], strides = [1, 1, 1]} : vector<6x7x128xf32> to vector<4x7x128xf32>
      %1125 = vector.broadcast %149 : f32 to vector<4x7x128xf32>
      %1126 = arith.mulf %1124, %1125 : vector<4x7x128xf32>
      %1127 = vector.extract_strided_slice %1123 {offsets = [1, 0, 0], sizes = [4, 7, 128], strides = [1, 1, 1]} : vector<6x7x128xf32> to vector<4x7x128xf32>
      %1128 = vector.broadcast %155 : f32 to vector<4x7x128xf32>
      %1129 = arith.mulf %1127, %1128 : vector<4x7x128xf32>
      %1130 = arith.addf %1126, %1129 : vector<4x7x128xf32>
      %1131 = vector.extract_strided_slice %1123 {offsets = [2, 0, 0], sizes = [4, 7, 128], strides = [1, 1, 1]} : vector<6x7x128xf32> to vector<4x7x128xf32>
      %1132 = vector.broadcast %161 : f32 to vector<4x7x128xf32>
      %1133 = arith.mulf %1131, %1132 : vector<4x7x128xf32>
      %1134 = arith.addf %1130, %1133 : vector<4x7x128xf32>
      %c1_393 = arith.constant 1 : index
      %c24_394 = arith.constant 24 : index
      %c0_395 = arith.constant 0 : index
      %c0_396 = arith.constant 0 : index
      %1135 = vector.load %arg1[%c1_393, %c24_394, %c0_395, %c0_396] : memref<6x30x7x128xf32, #tpu.memory_space<vmem>>, vector<1x6x7x128xf32>
      %1136 = vector.shape_cast %1135 : vector<1x6x7x128xf32> to vector<6x7x128xf32>
      %1137 = vector.extract_strided_slice %1136 {offsets = [0, 0, 0], sizes = [4, 7, 128], strides = [1, 1, 1]} : vector<6x7x128xf32> to vector<4x7x128xf32>
      %1138 = vector.broadcast %149 : f32 to vector<4x7x128xf32>
      %1139 = arith.mulf %1137, %1138 : vector<4x7x128xf32>
      %1140 = vector.broadcast %151 : f32 to vector<4x7x128xf32>
      %1141 = arith.mulf %1137, %1140 : vector<4x7x128xf32>
      %1142 = arith.addf %1134, %1141 : vector<4x7x128xf32>
      %1143 = vector.extract_strided_slice %1136 {offsets = [1, 0, 0], sizes = [4, 7, 128], strides = [1, 1, 1]} : vector<6x7x128xf32> to vector<4x7x128xf32>
      %1144 = vector.broadcast %155 : f32 to vector<4x7x128xf32>
      %1145 = arith.mulf %1143, %1144 : vector<4x7x128xf32>
      %1146 = arith.addf %1139, %1145 : vector<4x7x128xf32>
      %1147 = vector.broadcast %157 : f32 to vector<4x7x128xf32>
      %1148 = arith.mulf %1143, %1147 : vector<4x7x128xf32>
      %1149 = arith.addf %1142, %1148 : vector<4x7x128xf32>
      %1150 = vector.extract_strided_slice %1136 {offsets = [2, 0, 0], sizes = [4, 7, 128], strides = [1, 1, 1]} : vector<6x7x128xf32> to vector<4x7x128xf32>
      %1151 = vector.broadcast %161 : f32 to vector<4x7x128xf32>
      %1152 = arith.mulf %1150, %1151 : vector<4x7x128xf32>
      %1153 = arith.addf %1146, %1152 : vector<4x7x128xf32>
      %1154 = vector.broadcast %163 : f32 to vector<4x7x128xf32>
      %1155 = arith.mulf %1150, %1154 : vector<4x7x128xf32>
      %1156 = arith.addf %1149, %1155 : vector<4x7x128xf32>
      %c2_397 = arith.constant 2 : index
      %c24_398 = arith.constant 24 : index
      %c0_399 = arith.constant 0 : index
      %c0_400 = arith.constant 0 : index
      %1157 = vector.load %arg1[%c2_397, %c24_398, %c0_399, %c0_400] : memref<6x30x7x128xf32, #tpu.memory_space<vmem>>, vector<1x6x7x128xf32>
      %1158 = vector.shape_cast %1157 : vector<1x6x7x128xf32> to vector<6x7x128xf32>
      %1159 = vector.extract_strided_slice %1158 {offsets = [0, 0, 0], sizes = [4, 7, 128], strides = [1, 1, 1]} : vector<6x7x128xf32> to vector<4x7x128xf32>
      %1160 = vector.broadcast %149 : f32 to vector<4x7x128xf32>
      %1161 = arith.mulf %1159, %1160 : vector<4x7x128xf32>
      %1162 = vector.broadcast %151 : f32 to vector<4x7x128xf32>
      %1163 = arith.mulf %1159, %1162 : vector<4x7x128xf32>
      %1164 = arith.addf %1153, %1163 : vector<4x7x128xf32>
      %1165 = vector.broadcast %153 : f32 to vector<4x7x128xf32>
      %1166 = arith.mulf %1159, %1165 : vector<4x7x128xf32>
      %1167 = arith.addf %1156, %1166 : vector<4x7x128xf32>
      %1168 = vector.extract_strided_slice %1158 {offsets = [1, 0, 0], sizes = [4, 7, 128], strides = [1, 1, 1]} : vector<6x7x128xf32> to vector<4x7x128xf32>
      %1169 = vector.broadcast %155 : f32 to vector<4x7x128xf32>
      %1170 = arith.mulf %1168, %1169 : vector<4x7x128xf32>
      %1171 = arith.addf %1161, %1170 : vector<4x7x128xf32>
      %1172 = vector.broadcast %157 : f32 to vector<4x7x128xf32>
      %1173 = arith.mulf %1168, %1172 : vector<4x7x128xf32>
      %1174 = arith.addf %1164, %1173 : vector<4x7x128xf32>
      %1175 = vector.broadcast %159 : f32 to vector<4x7x128xf32>
      %1176 = arith.mulf %1168, %1175 : vector<4x7x128xf32>
      %1177 = arith.addf %1167, %1176 : vector<4x7x128xf32>
      %1178 = vector.extract_strided_slice %1158 {offsets = [2, 0, 0], sizes = [4, 7, 128], strides = [1, 1, 1]} : vector<6x7x128xf32> to vector<4x7x128xf32>
      %1179 = vector.broadcast %161 : f32 to vector<4x7x128xf32>
      %1180 = arith.mulf %1178, %1179 : vector<4x7x128xf32>
      %1181 = arith.addf %1171, %1180 : vector<4x7x128xf32>
      %1182 = vector.broadcast %163 : f32 to vector<4x7x128xf32>
      %1183 = arith.mulf %1178, %1182 : vector<4x7x128xf32>
      %1184 = arith.addf %1174, %1183 : vector<4x7x128xf32>
      %1185 = vector.broadcast %165 : f32 to vector<4x7x128xf32>
      %1186 = arith.mulf %1178, %1185 : vector<4x7x128xf32>
      %1187 = arith.addf %1177, %1186 : vector<4x7x128xf32>
      %c3_401 = arith.constant 3 : index
      %c24_402 = arith.constant 24 : index
      %c0_403 = arith.constant 0 : index
      %c0_404 = arith.constant 0 : index
      %1188 = vector.load %arg1[%c3_401, %c24_402, %c0_403, %c0_404] : memref<6x30x7x128xf32, #tpu.memory_space<vmem>>, vector<1x6x7x128xf32>
      %1189 = vector.shape_cast %1188 : vector<1x6x7x128xf32> to vector<6x7x128xf32>
      %1190 = vector.extract_strided_slice %1189 {offsets = [0, 0, 0], sizes = [4, 7, 128], strides = [1, 1, 1]} : vector<6x7x128xf32> to vector<4x7x128xf32>
      %1191 = vector.broadcast %149 : f32 to vector<4x7x128xf32>
      %1192 = arith.mulf %1190, %1191 : vector<4x7x128xf32>
      %1193 = vector.broadcast %151 : f32 to vector<4x7x128xf32>
      %1194 = arith.mulf %1190, %1193 : vector<4x7x128xf32>
      %1195 = arith.addf %1181, %1194 : vector<4x7x128xf32>
      %1196 = vector.broadcast %153 : f32 to vector<4x7x128xf32>
      %1197 = arith.mulf %1190, %1196 : vector<4x7x128xf32>
      %1198 = arith.addf %1184, %1197 : vector<4x7x128xf32>
      %1199 = vector.extract_strided_slice %1189 {offsets = [1, 0, 0], sizes = [4, 7, 128], strides = [1, 1, 1]} : vector<6x7x128xf32> to vector<4x7x128xf32>
      %1200 = vector.broadcast %155 : f32 to vector<4x7x128xf32>
      %1201 = arith.mulf %1199, %1200 : vector<4x7x128xf32>
      %1202 = arith.addf %1192, %1201 : vector<4x7x128xf32>
      %1203 = vector.broadcast %157 : f32 to vector<4x7x128xf32>
      %1204 = arith.mulf %1199, %1203 : vector<4x7x128xf32>
      %1205 = arith.addf %1195, %1204 : vector<4x7x128xf32>
      %1206 = vector.broadcast %159 : f32 to vector<4x7x128xf32>
      %1207 = arith.mulf %1199, %1206 : vector<4x7x128xf32>
      %1208 = arith.addf %1198, %1207 : vector<4x7x128xf32>
      %1209 = vector.extract_strided_slice %1189 {offsets = [2, 0, 0], sizes = [4, 7, 128], strides = [1, 1, 1]} : vector<6x7x128xf32> to vector<4x7x128xf32>
      %1210 = vector.broadcast %161 : f32 to vector<4x7x128xf32>
      %1211 = arith.mulf %1209, %1210 : vector<4x7x128xf32>
      %1212 = arith.addf %1202, %1211 : vector<4x7x128xf32>
      %1213 = vector.broadcast %163 : f32 to vector<4x7x128xf32>
      %1214 = arith.mulf %1209, %1213 : vector<4x7x128xf32>
      %1215 = arith.addf %1205, %1214 : vector<4x7x128xf32>
      %1216 = vector.broadcast %165 : f32 to vector<4x7x128xf32>
      %1217 = arith.mulf %1209, %1216 : vector<4x7x128xf32>
      %1218 = arith.addf %1208, %1217 : vector<4x7x128xf32>
      %c4_405 = arith.constant 4 : index
      %c24_406 = arith.constant 24 : index
      %c0_407 = arith.constant 0 : index
      %c0_408 = arith.constant 0 : index
      %1219 = vector.load %arg1[%c4_405, %c24_406, %c0_407, %c0_408] : memref<6x30x7x128xf32, #tpu.memory_space<vmem>>, vector<1x6x7x128xf32>
      %1220 = vector.shape_cast %1219 : vector<1x6x7x128xf32> to vector<6x7x128xf32>
      %1221 = vector.extract_strided_slice %1220 {offsets = [0, 0, 0], sizes = [4, 7, 128], strides = [1, 1, 1]} : vector<6x7x128xf32> to vector<4x7x128xf32>
      %1222 = vector.broadcast %151 : f32 to vector<4x7x128xf32>
      %1223 = arith.mulf %1221, %1222 : vector<4x7x128xf32>
      %1224 = arith.addf %1212, %1223 : vector<4x7x128xf32>
      %1225 = vector.broadcast %153 : f32 to vector<4x7x128xf32>
      %1226 = arith.mulf %1221, %1225 : vector<4x7x128xf32>
      %1227 = arith.addf %1215, %1226 : vector<4x7x128xf32>
      %1228 = vector.extract_strided_slice %1220 {offsets = [1, 0, 0], sizes = [4, 7, 128], strides = [1, 1, 1]} : vector<6x7x128xf32> to vector<4x7x128xf32>
      %1229 = vector.broadcast %157 : f32 to vector<4x7x128xf32>
      %1230 = arith.mulf %1228, %1229 : vector<4x7x128xf32>
      %1231 = arith.addf %1224, %1230 : vector<4x7x128xf32>
      %1232 = vector.broadcast %159 : f32 to vector<4x7x128xf32>
      %1233 = arith.mulf %1228, %1232 : vector<4x7x128xf32>
      %1234 = arith.addf %1227, %1233 : vector<4x7x128xf32>
      %1235 = vector.extract_strided_slice %1220 {offsets = [2, 0, 0], sizes = [4, 7, 128], strides = [1, 1, 1]} : vector<6x7x128xf32> to vector<4x7x128xf32>
      %1236 = vector.broadcast %163 : f32 to vector<4x7x128xf32>
      %1237 = arith.mulf %1235, %1236 : vector<4x7x128xf32>
      %1238 = arith.addf %1231, %1237 : vector<4x7x128xf32>
      %1239 = vector.broadcast %165 : f32 to vector<4x7x128xf32>
      %1240 = arith.mulf %1235, %1239 : vector<4x7x128xf32>
      %1241 = arith.addf %1234, %1240 : vector<4x7x128xf32>
      %c5_409 = arith.constant 5 : index
      %c24_410 = arith.constant 24 : index
      %c0_411 = arith.constant 0 : index
      %c0_412 = arith.constant 0 : index
      %1242 = vector.load %arg1[%c5_409, %c24_410, %c0_411, %c0_412] : memref<6x30x7x128xf32, #tpu.memory_space<vmem>>, vector<1x6x7x128xf32>
      %1243 = vector.shape_cast %1242 : vector<1x6x7x128xf32> to vector<6x7x128xf32>
      %1244 = vector.extract_strided_slice %1243 {offsets = [0, 0, 0], sizes = [4, 7, 128], strides = [1, 1, 1]} : vector<6x7x128xf32> to vector<4x7x128xf32>
      %1245 = vector.broadcast %153 : f32 to vector<4x7x128xf32>
      %1246 = arith.mulf %1244, %1245 : vector<4x7x128xf32>
      %1247 = arith.addf %1238, %1246 : vector<4x7x128xf32>
      %1248 = vector.extract_strided_slice %1243 {offsets = [1, 0, 0], sizes = [4, 7, 128], strides = [1, 1, 1]} : vector<6x7x128xf32> to vector<4x7x128xf32>
      %1249 = vector.broadcast %159 : f32 to vector<4x7x128xf32>
      %1250 = arith.mulf %1248, %1249 : vector<4x7x128xf32>
      %1251 = arith.addf %1247, %1250 : vector<4x7x128xf32>
      %1252 = vector.extract_strided_slice %1243 {offsets = [2, 0, 0], sizes = [4, 7, 128], strides = [1, 1, 1]} : vector<6x7x128xf32> to vector<4x7x128xf32>
      %1253 = vector.broadcast %165 : f32 to vector<4x7x128xf32>
      %1254 = arith.mulf %1252, %1253 : vector<4x7x128xf32>
      %1255 = arith.addf %1251, %1254 : vector<4x7x128xf32>
      %1256 = arith.maximumf %1187, %1218 : vector<4x7x128xf32>
      %1257 = arith.maximumf %1241, %1255 : vector<4x7x128xf32>
      %1258 = arith.maximumf %1256, %1257 : vector<4x7x128xf32>
      %cst_413 = arith.constant dense<0xFF800000> : vector<7x128xf32>
      %1259 = vector.multi_reduction <maximumf>, %1258, %cst_413 [0] : vector<4x7x128xf32> to vector<7x128xf32>
      %1260 = vector.broadcast %167 : f32 to vector<7x128xf32>
      %1261 = arith.addf %1259, %1260 : vector<7x128xf32>
      %cst_414 = arith.constant 0.000000e+00 : f32
      %1262 = vector.broadcast %cst_414 : f32 to vector<7x128xf32>
      %1263 = arith.maximumf %1261, %1262 : vector<7x128xf32>
      %1264 = vector.extract_strided_slice %1263 {offsets = [0, 0], sizes = [6, 128], strides = [1, 1]} : vector<7x128xf32> to vector<6x128xf32>
      %c0_i32_415 = arith.constant 0 : i32
      %1265 = arith.addi %c0_i32_415, %arg13 : i32
      %1266 = arith.index_cast %1265 : i32 to index
      %c7_416 = arith.constant 7 : index
      %c1_417 = arith.constant 1 : index
      %c0_418 = arith.constant 0 : index
      %1267 = vector.load %arg11[%1266, %c7_416, %c1_417, %c0_418] : memref<30x9x7x128xf32, #tpu.memory_space<vmem>>, vector<1x1x6x128xf32>
      %1268 = vector.shape_cast %1267 : vector<1x1x6x128xf32> to vector<6x128xf32>
      %1269 = vector.shape_cast %1264 : vector<6x128xf32> to vector<1x1x6x128xf32>
      tpu.vector_store %arg11[%1266, %c7_416, %c1_417, %c0_418], %1269 {strides = array<i32>} : memref<30x9x7x128xf32, #tpu.memory_space<vmem>>, vector<1x1x6x128xf32>,
      %c10_i32_419 = arith.constant 10 : i32
      %1270 = arith.addi %c10_i32_419, %arg13 : i32
      %1271 = arith.index_cast %1270 : i32 to index
      %c7_420 = arith.constant 7 : index
      %c0_421 = arith.constant 0 : index
      %c0_422 = arith.constant 0 : index
      %1272 = vector.load %arg11[%1271, %c7_420, %c0_421, %c0_422] : memref<30x9x7x128xf32, #tpu.memory_space<vmem>>, vector<1x1x7x128xf32>
      %1273 = vector.shape_cast %1272 : vector<1x1x7x128xf32> to vector<7x128xf32>
      %1274 = vector.shape_cast %1263 : vector<7x128xf32> to vector<1x1x7x128xf32>
      tpu.vector_store %arg11[%1271, %c7_420, %c0_421, %c0_422], %1274 {strides = array<i32>} : memref<30x9x7x128xf32, #tpu.memory_space<vmem>>, vector<1x1x7x128xf32>,
      %1275 = vector.extract_strided_slice %1263 {offsets = [1, 0], sizes = [6, 128], strides = [1, 1]} : vector<7x128xf32> to vector<6x128xf32>
      %c20_i32_423 = arith.constant 20 : i32
      %1276 = arith.addi %c20_i32_423, %arg13 : i32
      %1277 = arith.index_cast %1276 : i32 to index
      %c7_424 = arith.constant 7 : index
      %c0_425 = arith.constant 0 : index
      %c0_426 = arith.constant 0 : index
      %1278 = vector.load %arg11[%1277, %c7_424, %c0_425, %c0_426] : memref<30x9x7x128xf32, #tpu.memory_space<vmem>>, vector<1x1x6x128xf32>
      %1279 = vector.shape_cast %1278 : vector<1x1x6x128xf32> to vector<6x128xf32>
      %1280 = vector.shape_cast %1275 : vector<6x128xf32> to vector<1x1x6x128xf32>
      tpu.vector_store %arg11[%1277, %c7_424, %c0_425, %c0_426], %1280 {strides = array<i32>} : memref<30x9x7x128xf32, #tpu.memory_space<vmem>>, vector<1x1x6x128xf32>,
    }
    %c10_i32_131 = arith.constant 10 : i32
    %c0_i32_132 = arith.constant 0 : i32
    %c20_i32 = arith.constant 20 : i32
    %123 = arith.addi %c0_i32_132, %c20_i32 : i32
    %c1_i32_133 = arith.constant 1 : i32
    scf.for %arg13 = %c0_i32_132 to %123 step %c1_i32_133  : i32 {
      %148 = arith.index_cast %arg13 : i32 to index
      %149 = memref.load %arg5[%148] : memref<20xf32, #tpu.memory_space<smem>>
      %c0_152 = arith.constant 0 : index
      %c0_153 = arith.constant 0 : index
      %c0_154 = arith.constant 0 : index
      %c0_155 = arith.constant 0 : index
      %150 = vector.load %arg11[%c0_152, %c0_153, %c0_154, %c0_155] : memref<30x9x7x128xf32, #tpu.memory_space<vmem>>, vector<1x9x7x128xf32>
      %151 = vector.shape_cast %150 : vector<1x9x7x128xf32> to vector<9x7x128xf32>
      %152 = arith.index_cast %arg13 : i32 to index
      %c0_156 = arith.constant 0 : index
      %153 = memref.load %arg4[%152, %c0_156] : memref<20x90xf32, #tpu.memory_space<smem>>
      %154 = vector.extract_strided_slice %151 {offsets = [0, 0, 0], sizes = [7, 7, 128], strides = [1, 1, 1]} : vector<9x7x128xf32> to vector<7x7x128xf32>
      %155 = vector.broadcast %153 : f32 to vector<7x7x128xf32>
      %156 = arith.mulf %154, %155 : vector<7x7x128xf32>
      %157 = arith.index_cast %arg13 : i32 to index
      %c30 = arith.constant 30 : index
      %158 = memref.load %arg4[%157, %c30] : memref<20x90xf32, #tpu.memory_space<smem>>
      %159 = vector.extract_strided_slice %151 {offsets = [1, 0, 0], sizes = [7, 7, 128], strides = [1, 1, 1]} : vector<9x7x128xf32> to vector<7x7x128xf32>
      %160 = vector.broadcast %158 : f32 to vector<7x7x128xf32>
      %161 = arith.mulf %159, %160 : vector<7x7x128xf32>
      %162 = arith.index_cast %arg13 : i32 to index
      %c60 = arith.constant 60 : index
      %163 = memref.load %arg4[%162, %c60] : memref<20x90xf32, #tpu.memory_space<smem>>
      %164 = vector.extract_strided_slice %151 {offsets = [2, 0, 0], sizes = [7, 7, 128], strides = [1, 1, 1]} : vector<9x7x128xf32> to vector<7x7x128xf32>
      %165 = vector.broadcast %163 : f32 to vector<7x7x128xf32>
      %166 = arith.mulf %164, %165 : vector<7x7x128xf32>
      %c1_157 = arith.constant 1 : index
      %c0_158 = arith.constant 0 : index
      %c0_159 = arith.constant 0 : index
      %c0_160 = arith.constant 0 : index
      %167 = vector.load %arg11[%c1_157, %c0_158, %c0_159, %c0_160] : memref<30x9x7x128xf32, #tpu.memory_space<vmem>>, vector<1x9x7x128xf32>
      %168 = vector.shape_cast %167 : vector<1x9x7x128xf32> to vector<9x7x128xf32>
      %169 = arith.index_cast %arg13 : i32 to index
      %c1_161 = arith.constant 1 : index
      %170 = memref.load %arg4[%169, %c1_161] : memref<20x90xf32, #tpu.memory_space<smem>>
      %171 = vector.extract_strided_slice %168 {offsets = [0, 0, 0], sizes = [7, 7, 128], strides = [1, 1, 1]} : vector<9x7x128xf32> to vector<7x7x128xf32>
      %172 = vector.broadcast %170 : f32 to vector<7x7x128xf32>
      %173 = arith.mulf %171, %172 : vector<7x7x128xf32>
      %174 = arith.addf %156, %173 : vector<7x7x128xf32>
      %175 = arith.index_cast %arg13 : i32 to index
      %c31 = arith.constant 31 : index
      %176 = memref.load %arg4[%175, %c31] : memref<20x90xf32, #tpu.memory_space<smem>>
      %177 = vector.extract_strided_slice %168 {offsets = [1, 0, 0], sizes = [7, 7, 128], strides = [1, 1, 1]} : vector<9x7x128xf32> to vector<7x7x128xf32>
      %178 = vector.broadcast %176 : f32 to vector<7x7x128xf32>
      %179 = arith.mulf %177, %178 : vector<7x7x128xf32>
      %180 = arith.addf %161, %179 : vector<7x7x128xf32>
      %181 = arith.index_cast %arg13 : i32 to index
      %c61 = arith.constant 61 : index
      %182 = memref.load %arg4[%181, %c61] : memref<20x90xf32, #tpu.memory_space<smem>>
      %183 = vector.extract_strided_slice %168 {offsets = [2, 0, 0], sizes = [7, 7, 128], strides = [1, 1, 1]} : vector<9x7x128xf32> to vector<7x7x128xf32>
      %184 = vector.broadcast %182 : f32 to vector<7x7x128xf32>
      %185 = arith.mulf %183, %184 : vector<7x7x128xf32>
      %186 = arith.addf %166, %185 : vector<7x7x128xf32>
      %c2_162 = arith.constant 2 : index
      %c0_163 = arith.constant 0 : index
      %c0_164 = arith.constant 0 : index
      %c0_165 = arith.constant 0 : index
      %187 = vector.load %arg11[%c2_162, %c0_163, %c0_164, %c0_165] : memref<30x9x7x128xf32, #tpu.memory_space<vmem>>, vector<1x9x7x128xf32>
      %188 = vector.shape_cast %187 : vector<1x9x7x128xf32> to vector<9x7x128xf32>
      %189 = arith.index_cast %arg13 : i32 to index
      %c2_166 = arith.constant 2 : index
      %190 = memref.load %arg4[%189, %c2_166] : memref<20x90xf32, #tpu.memory_space<smem>>
      %191 = vector.extract_strided_slice %188 {offsets = [0, 0, 0], sizes = [7, 7, 128], strides = [1, 1, 1]} : vector<9x7x128xf32> to vector<7x7x128xf32>
      %192 = vector.broadcast %190 : f32 to vector<7x7x128xf32>
      %193 = arith.mulf %191, %192 : vector<7x7x128xf32>
      %194 = arith.addf %174, %193 : vector<7x7x128xf32>
      %195 = arith.index_cast %arg13 : i32 to index
      %c32 = arith.constant 32 : index
      %196 = memref.load %arg4[%195, %c32] : memref<20x90xf32, #tpu.memory_space<smem>>
      %197 = vector.extract_strided_slice %188 {offsets = [1, 0, 0], sizes = [7, 7, 128], strides = [1, 1, 1]} : vector<9x7x128xf32> to vector<7x7x128xf32>
      %198 = vector.broadcast %196 : f32 to vector<7x7x128xf32>
      %199 = arith.mulf %197, %198 : vector<7x7x128xf32>
      %200 = arith.addf %180, %199 : vector<7x7x128xf32>
      %201 = arith.index_cast %arg13 : i32 to index
      %c62 = arith.constant 62 : index
      %202 = memref.load %arg4[%201, %c62] : memref<20x90xf32, #tpu.memory_space<smem>>
      %203 = vector.extract_strided_slice %188 {offsets = [2, 0, 0], sizes = [7, 7, 128], strides = [1, 1, 1]} : vector<9x7x128xf32> to vector<7x7x128xf32>
      %204 = vector.broadcast %202 : f32 to vector<7x7x128xf32>
      %205 = arith.mulf %203, %204 : vector<7x7x128xf32>
      %206 = arith.addf %186, %205 : vector<7x7x128xf32>
      %c3_167 = arith.constant 3 : index
      %c0_168 = arith.constant 0 : index
      %c0_169 = arith.constant 0 : index
      %c0_170 = arith.constant 0 : index
      %207 = vector.load %arg11[%c3_167, %c0_168, %c0_169, %c0_170] : memref<30x9x7x128xf32, #tpu.memory_space<vmem>>, vector<1x9x7x128xf32>
      %208 = vector.shape_cast %207 : vector<1x9x7x128xf32> to vector<9x7x128xf32>
      %209 = arith.index_cast %arg13 : i32 to index
      %c3_171 = arith.constant 3 : index
      %210 = memref.load %arg4[%209, %c3_171] : memref<20x90xf32, #tpu.memory_space<smem>>
      %211 = vector.extract_strided_slice %208 {offsets = [0, 0, 0], sizes = [7, 7, 128], strides = [1, 1, 1]} : vector<9x7x128xf32> to vector<7x7x128xf32>
      %212 = vector.broadcast %210 : f32 to vector<7x7x128xf32>
      %213 = arith.mulf %211, %212 : vector<7x7x128xf32>
      %214 = arith.addf %194, %213 : vector<7x7x128xf32>
      %215 = arith.index_cast %arg13 : i32 to index
      %c33 = arith.constant 33 : index
      %216 = memref.load %arg4[%215, %c33] : memref<20x90xf32, #tpu.memory_space<smem>>
      %217 = vector.extract_strided_slice %208 {offsets = [1, 0, 0], sizes = [7, 7, 128], strides = [1, 1, 1]} : vector<9x7x128xf32> to vector<7x7x128xf32>
      %218 = vector.broadcast %216 : f32 to vector<7x7x128xf32>
      %219 = arith.mulf %217, %218 : vector<7x7x128xf32>
      %220 = arith.addf %200, %219 : vector<7x7x128xf32>
      %221 = arith.index_cast %arg13 : i32 to index
      %c63 = arith.constant 63 : index
      %222 = memref.load %arg4[%221, %c63] : memref<20x90xf32, #tpu.memory_space<smem>>
      %223 = vector.extract_strided_slice %208 {offsets = [2, 0, 0], sizes = [7, 7, 128], strides = [1, 1, 1]} : vector<9x7x128xf32> to vector<7x7x128xf32>
      %224 = vector.broadcast %222 : f32 to vector<7x7x128xf32>
      %225 = arith.mulf %223, %224 : vector<7x7x128xf32>
      %226 = arith.addf %206, %225 : vector<7x7x128xf32>
      %c4_172 = arith.constant 4 : index
      %c0_173 = arith.constant 0 : index
      %c0_174 = arith.constant 0 : index
      %c0_175 = arith.constant 0 : index
      %227 = vector.load %arg11[%c4_172, %c0_173, %c0_174, %c0_175] : memref<30x9x7x128xf32, #tpu.memory_space<vmem>>, vector<1x9x7x128xf32>
      %228 = vector.shape_cast %227 : vector<1x9x7x128xf32> to vector<9x7x128xf32>
      %229 = arith.index_cast %arg13 : i32 to index
      %c4_176 = arith.constant 4 : index
      %230 = memref.load %arg4[%229, %c4_176] : memref<20x90xf32, #tpu.memory_space<smem>>
      %231 = vector.extract_strided_slice %228 {offsets = [0, 0, 0], sizes = [7, 7, 128], strides = [1, 1, 1]} : vector<9x7x128xf32> to vector<7x7x128xf32>
      %232 = vector.broadcast %230 : f32 to vector<7x7x128xf32>
      %233 = arith.mulf %231, %232 : vector<7x7x128xf32>
      %234 = arith.addf %214, %233 : vector<7x7x128xf32>
      %235 = arith.index_cast %arg13 : i32 to index
      %c34 = arith.constant 34 : index
      %236 = memref.load %arg4[%235, %c34] : memref<20x90xf32, #tpu.memory_space<smem>>
      %237 = vector.extract_strided_slice %228 {offsets = [1, 0, 0], sizes = [7, 7, 128], strides = [1, 1, 1]} : vector<9x7x128xf32> to vector<7x7x128xf32>
      %238 = vector.broadcast %236 : f32 to vector<7x7x128xf32>
      %239 = arith.mulf %237, %238 : vector<7x7x128xf32>
      %240 = arith.addf %220, %239 : vector<7x7x128xf32>
      %241 = arith.index_cast %arg13 : i32 to index
      %c64 = arith.constant 64 : index
      %242 = memref.load %arg4[%241, %c64] : memref<20x90xf32, #tpu.memory_space<smem>>
      %243 = vector.extract_strided_slice %228 {offsets = [2, 0, 0], sizes = [7, 7, 128], strides = [1, 1, 1]} : vector<9x7x128xf32> to vector<7x7x128xf32>
      %244 = vector.broadcast %242 : f32 to vector<7x7x128xf32>
      %245 = arith.mulf %243, %244 : vector<7x7x128xf32>
      %246 = arith.addf %226, %245 : vector<7x7x128xf32>
      %c5_177 = arith.constant 5 : index
      %c0_178 = arith.constant 0 : index
      %c0_179 = arith.constant 0 : index
      %c0_180 = arith.constant 0 : index
      %247 = vector.load %arg11[%c5_177, %c0_178, %c0_179, %c0_180] : memref<30x9x7x128xf32, #tpu.memory_space<vmem>>, vector<1x9x7x128xf32>
      %248 = vector.shape_cast %247 : vector<1x9x7x128xf32> to vector<9x7x128xf32>
      %249 = arith.index_cast %arg13 : i32 to index
      %c5_181 = arith.constant 5 : index
      %250 = memref.load %arg4[%249, %c5_181] : memref<20x90xf32, #tpu.memory_space<smem>>
      %251 = vector.extract_strided_slice %248 {offsets = [0, 0, 0], sizes = [7, 7, 128], strides = [1, 1, 1]} : vector<9x7x128xf32> to vector<7x7x128xf32>
      %252 = vector.broadcast %250 : f32 to vector<7x7x128xf32>
      %253 = arith.mulf %251, %252 : vector<7x7x128xf32>
      %254 = arith.addf %234, %253 : vector<7x7x128xf32>
      %255 = arith.index_cast %arg13 : i32 to index
      %c35 = arith.constant 35 : index
      %256 = memref.load %arg4[%255, %c35] : memref<20x90xf32, #tpu.memory_space<smem>>
      %257 = vector.extract_strided_slice %248 {offsets = [1, 0, 0], sizes = [7, 7, 128], strides = [1, 1, 1]} : vector<9x7x128xf32> to vector<7x7x128xf32>
      %258 = vector.broadcast %256 : f32 to vector<7x7x128xf32>
      %259 = arith.mulf %257, %258 : vector<7x7x128xf32>
      %260 = arith.addf %240, %259 : vector<7x7x128xf32>
      %261 = arith.index_cast %arg13 : i32 to index
      %c65 = arith.constant 65 : index
      %262 = memref.load %arg4[%261, %c65] : memref<20x90xf32, #tpu.memory_space<smem>>
      %263 = vector.extract_strided_slice %248 {offsets = [2, 0, 0], sizes = [7, 7, 128], strides = [1, 1, 1]} : vector<9x7x128xf32> to vector<7x7x128xf32>
      %264 = vector.broadcast %262 : f32 to vector<7x7x128xf32>
      %265 = arith.mulf %263, %264 : vector<7x7x128xf32>
      %266 = arith.addf %246, %265 : vector<7x7x128xf32>
      %c6_182 = arith.constant 6 : index
      %c0_183 = arith.constant 0 : index
      %c0_184 = arith.constant 0 : index
      %c0_185 = arith.constant 0 : index
      %267 = vector.load %arg11[%c6_182, %c0_183, %c0_184, %c0_185] : memref<30x9x7x128xf32, #tpu.memory_space<vmem>>, vector<1x9x7x128xf32>
      %268 = vector.shape_cast %267 : vector<1x9x7x128xf32> to vector<9x7x128xf32>
      %269 = arith.index_cast %arg13 : i32 to index
      %c6_186 = arith.constant 6 : index
      %270 = memref.load %arg4[%269, %c6_186] : memref<20x90xf32, #tpu.memory_space<smem>>
      %271 = vector.extract_strided_slice %268 {offsets = [0, 0, 0], sizes = [7, 7, 128], strides = [1, 1, 1]} : vector<9x7x128xf32> to vector<7x7x128xf32>
      %272 = vector.broadcast %270 : f32 to vector<7x7x128xf32>
      %273 = arith.mulf %271, %272 : vector<7x7x128xf32>
      %274 = arith.addf %254, %273 : vector<7x7x128xf32>
      %275 = arith.index_cast %arg13 : i32 to index
      %c36 = arith.constant 36 : index
      %276 = memref.load %arg4[%275, %c36] : memref<20x90xf32, #tpu.memory_space<smem>>
      %277 = vector.extract_strided_slice %268 {offsets = [1, 0, 0], sizes = [7, 7, 128], strides = [1, 1, 1]} : vector<9x7x128xf32> to vector<7x7x128xf32>
      %278 = vector.broadcast %276 : f32 to vector<7x7x128xf32>
      %279 = arith.mulf %277, %278 : vector<7x7x128xf32>
      %280 = arith.addf %260, %279 : vector<7x7x128xf32>
      %281 = arith.index_cast %arg13 : i32 to index
      %c66 = arith.constant 66 : index
      %282 = memref.load %arg4[%281, %c66] : memref<20x90xf32, #tpu.memory_space<smem>>
      %283 = vector.extract_strided_slice %268 {offsets = [2, 0, 0], sizes = [7, 7, 128], strides = [1, 1, 1]} : vector<9x7x128xf32> to vector<7x7x128xf32>
      %284 = vector.broadcast %282 : f32 to vector<7x7x128xf32>
      %285 = arith.mulf %283, %284 : vector<7x7x128xf32>
      %286 = arith.addf %266, %285 : vector<7x7x128xf32>
      %c7_187 = arith.constant 7 : index
      %c0_188 = arith.constant 0 : index
      %c0_189 = arith.constant 0 : index
      %c0_190 = arith.constant 0 : index
      %287 = vector.load %arg11[%c7_187, %c0_188, %c0_189, %c0_190] : memref<30x9x7x128xf32, #tpu.memory_space<vmem>>, vector<1x9x7x128xf32>
      %288 = vector.shape_cast %287 : vector<1x9x7x128xf32> to vector<9x7x128xf32>
      %289 = arith.index_cast %arg13 : i32 to index
      %c7_191 = arith.constant 7 : index
      %290 = memref.load %arg4[%289, %c7_191] : memref<20x90xf32, #tpu.memory_space<smem>>
      %291 = vector.extract_strided_slice %288 {offsets = [0, 0, 0], sizes = [7, 7, 128], strides = [1, 1, 1]} : vector<9x7x128xf32> to vector<7x7x128xf32>
      %292 = vector.broadcast %290 : f32 to vector<7x7x128xf32>
      %293 = arith.mulf %291, %292 : vector<7x7x128xf32>
      %294 = arith.addf %274, %293 : vector<7x7x128xf32>
      %295 = arith.index_cast %arg13 : i32 to index
      %c37 = arith.constant 37 : index
      %296 = memref.load %arg4[%295, %c37] : memref<20x90xf32, #tpu.memory_space<smem>>
      %297 = vector.extract_strided_slice %288 {offsets = [1, 0, 0], sizes = [7, 7, 128], strides = [1, 1, 1]} : vector<9x7x128xf32> to vector<7x7x128xf32>
      %298 = vector.broadcast %296 : f32 to vector<7x7x128xf32>
      %299 = arith.mulf %297, %298 : vector<7x7x128xf32>
      %300 = arith.addf %280, %299 : vector<7x7x128xf32>
      %301 = arith.index_cast %arg13 : i32 to index
      %c67 = arith.constant 67 : index
      %302 = memref.load %arg4[%301, %c67] : memref<20x90xf32, #tpu.memory_space<smem>>
      %303 = vector.extract_strided_slice %288 {offsets = [2, 0, 0], sizes = [7, 7, 128], strides = [1, 1, 1]} : vector<9x7x128xf32> to vector<7x7x128xf32>
      %304 = vector.broadcast %302 : f32 to vector<7x7x128xf32>
      %305 = arith.mulf %303, %304 : vector<7x7x128xf32>
      %306 = arith.addf %286, %305 : vector<7x7x128xf32>
      %c8_192 = arith.constant 8 : index
      %c0_193 = arith.constant 0 : index
      %c0_194 = arith.constant 0 : index
      %c0_195 = arith.constant 0 : index
      %307 = vector.load %arg11[%c8_192, %c0_193, %c0_194, %c0_195] : memref<30x9x7x128xf32, #tpu.memory_space<vmem>>, vector<1x9x7x128xf32>
      %308 = vector.shape_cast %307 : vector<1x9x7x128xf32> to vector<9x7x128xf32>
      %309 = arith.index_cast %arg13 : i32 to index
      %c8_196 = arith.constant 8 : index
      %310 = memref.load %arg4[%309, %c8_196] : memref<20x90xf32, #tpu.memory_space<smem>>
      %311 = vector.extract_strided_slice %308 {offsets = [0, 0, 0], sizes = [7, 7, 128], strides = [1, 1, 1]} : vector<9x7x128xf32> to vector<7x7x128xf32>
      %312 = vector.broadcast %310 : f32 to vector<7x7x128xf32>
      %313 = arith.mulf %311, %312 : vector<7x7x128xf32>
      %314 = arith.addf %294, %313 : vector<7x7x128xf32>
      %315 = arith.index_cast %arg13 : i32 to index
      %c38 = arith.constant 38 : index
      %316 = memref.load %arg4[%315, %c38] : memref<20x90xf32, #tpu.memory_space<smem>>
      %317 = vector.extract_strided_slice %308 {offsets = [1, 0, 0], sizes = [7, 7, 128], strides = [1, 1, 1]} : vector<9x7x128xf32> to vector<7x7x128xf32>
      %318 = vector.broadcast %316 : f32 to vector<7x7x128xf32>
      %319 = arith.mulf %317, %318 : vector<7x7x128xf32>
      %320 = arith.addf %300, %319 : vector<7x7x128xf32>
      %321 = arith.index_cast %arg13 : i32 to index
      %c68 = arith.constant 68 : index
      %322 = memref.load %arg4[%321, %c68] : memref<20x90xf32, #tpu.memory_space<smem>>
      %323 = vector.extract_strided_slice %308 {offsets = [2, 0, 0], sizes = [7, 7, 128], strides = [1, 1, 1]} : vector<9x7x128xf32> to vector<7x7x128xf32>
      %324 = vector.broadcast %322 : f32 to vector<7x7x128xf32>
      %325 = arith.mulf %323, %324 : vector<7x7x128xf32>
      %326 = arith.addf %306, %325 : vector<7x7x128xf32>
      %c9_197 = arith.constant 9 : index
      %c0_198 = arith.constant 0 : index
      %c0_199 = arith.constant 0 : index
      %c0_200 = arith.constant 0 : index
      %327 = vector.load %arg11[%c9_197, %c0_198, %c0_199, %c0_200] : memref<30x9x7x128xf32, #tpu.memory_space<vmem>>, vector<1x9x7x128xf32>
      %328 = vector.shape_cast %327 : vector<1x9x7x128xf32> to vector<9x7x128xf32>
      %329 = arith.index_cast %arg13 : i32 to index
      %c9_201 = arith.constant 9 : index
      %330 = memref.load %arg4[%329, %c9_201] : memref<20x90xf32, #tpu.memory_space<smem>>
      %331 = vector.extract_strided_slice %328 {offsets = [0, 0, 0], sizes = [7, 7, 128], strides = [1, 1, 1]} : vector<9x7x128xf32> to vector<7x7x128xf32>
      %332 = vector.broadcast %330 : f32 to vector<7x7x128xf32>
      %333 = arith.mulf %331, %332 : vector<7x7x128xf32>
      %334 = arith.addf %314, %333 : vector<7x7x128xf32>
      %335 = arith.index_cast %arg13 : i32 to index
      %c39 = arith.constant 39 : index
      %336 = memref.load %arg4[%335, %c39] : memref<20x90xf32, #tpu.memory_space<smem>>
      %337 = vector.extract_strided_slice %328 {offsets = [1, 0, 0], sizes = [7, 7, 128], strides = [1, 1, 1]} : vector<9x7x128xf32> to vector<7x7x128xf32>
      %338 = vector.broadcast %336 : f32 to vector<7x7x128xf32>
      %339 = arith.mulf %337, %338 : vector<7x7x128xf32>
      %340 = arith.addf %320, %339 : vector<7x7x128xf32>
      %341 = arith.index_cast %arg13 : i32 to index
      %c69 = arith.constant 69 : index
      %342 = memref.load %arg4[%341, %c69] : memref<20x90xf32, #tpu.memory_space<smem>>
      %343 = vector.extract_strided_slice %328 {offsets = [2, 0, 0], sizes = [7, 7, 128], strides = [1, 1, 1]} : vector<9x7x128xf32> to vector<7x7x128xf32>
      %344 = vector.broadcast %342 : f32 to vector<7x7x128xf32>
      %345 = arith.mulf %343, %344 : vector<7x7x128xf32>
      %346 = arith.addf %326, %345 : vector<7x7x128xf32>
      %c10_202 = arith.constant 10 : index
      %c0_203 = arith.constant 0 : index
      %c0_204 = arith.constant 0 : index
      %c0_205 = arith.constant 0 : index
      %347 = vector.load %arg11[%c10_202, %c0_203, %c0_204, %c0_205] : memref<30x9x7x128xf32, #tpu.memory_space<vmem>>, vector<1x9x7x128xf32>
      %348 = vector.shape_cast %347 : vector<1x9x7x128xf32> to vector<9x7x128xf32>
      %349 = arith.index_cast %arg13 : i32 to index
      %c10_206 = arith.constant 10 : index
      %350 = memref.load %arg4[%349, %c10_206] : memref<20x90xf32, #tpu.memory_space<smem>>
      %351 = vector.extract_strided_slice %348 {offsets = [0, 0, 0], sizes = [7, 7, 128], strides = [1, 1, 1]} : vector<9x7x128xf32> to vector<7x7x128xf32>
      %352 = vector.broadcast %350 : f32 to vector<7x7x128xf32>
      %353 = arith.mulf %351, %352 : vector<7x7x128xf32>
      %354 = arith.addf %334, %353 : vector<7x7x128xf32>
      %355 = arith.index_cast %arg13 : i32 to index
      %c40 = arith.constant 40 : index
      %356 = memref.load %arg4[%355, %c40] : memref<20x90xf32, #tpu.memory_space<smem>>
      %357 = vector.extract_strided_slice %348 {offsets = [1, 0, 0], sizes = [7, 7, 128], strides = [1, 1, 1]} : vector<9x7x128xf32> to vector<7x7x128xf32>
      %358 = vector.broadcast %356 : f32 to vector<7x7x128xf32>
      %359 = arith.mulf %357, %358 : vector<7x7x128xf32>
      %360 = arith.addf %340, %359 : vector<7x7x128xf32>
      %361 = arith.index_cast %arg13 : i32 to index
      %c70 = arith.constant 70 : index
      %362 = memref.load %arg4[%361, %c70] : memref<20x90xf32, #tpu.memory_space<smem>>
      %363 = vector.extract_strided_slice %348 {offsets = [2, 0, 0], sizes = [7, 7, 128], strides = [1, 1, 1]} : vector<9x7x128xf32> to vector<7x7x128xf32>
      %364 = vector.broadcast %362 : f32 to vector<7x7x128xf32>
      %365 = arith.mulf %363, %364 : vector<7x7x128xf32>
      %366 = arith.addf %346, %365 : vector<7x7x128xf32>
      %c11_207 = arith.constant 11 : index
      %c0_208 = arith.constant 0 : index
      %c0_209 = arith.constant 0 : index
      %c0_210 = arith.constant 0 : index
      %367 = vector.load %arg11[%c11_207, %c0_208, %c0_209, %c0_210] : memref<30x9x7x128xf32, #tpu.memory_space<vmem>>, vector<1x9x7x128xf32>
      %368 = vector.shape_cast %367 : vector<1x9x7x128xf32> to vector<9x7x128xf32>
      %369 = arith.index_cast %arg13 : i32 to index
      %c11_211 = arith.constant 11 : index
      %370 = memref.load %arg4[%369, %c11_211] : memref<20x90xf32, #tpu.memory_space<smem>>
      %371 = vector.extract_strided_slice %368 {offsets = [0, 0, 0], sizes = [7, 7, 128], strides = [1, 1, 1]} : vector<9x7x128xf32> to vector<7x7x128xf32>
      %372 = vector.broadcast %370 : f32 to vector<7x7x128xf32>
      %373 = arith.mulf %371, %372 : vector<7x7x128xf32>
      %374 = arith.addf %354, %373 : vector<7x7x128xf32>
      %375 = arith.index_cast %arg13 : i32 to index
      %c41 = arith.constant 41 : index
      %376 = memref.load %arg4[%375, %c41] : memref<20x90xf32, #tpu.memory_space<smem>>
      %377 = vector.extract_strided_slice %368 {offsets = [1, 0, 0], sizes = [7, 7, 128], strides = [1, 1, 1]} : vector<9x7x128xf32> to vector<7x7x128xf32>
      %378 = vector.broadcast %376 : f32 to vector<7x7x128xf32>
      %379 = arith.mulf %377, %378 : vector<7x7x128xf32>
      %380 = arith.addf %360, %379 : vector<7x7x128xf32>
      %381 = arith.index_cast %arg13 : i32 to index
      %c71 = arith.constant 71 : index
      %382 = memref.load %arg4[%381, %c71] : memref<20x90xf32, #tpu.memory_space<smem>>
      %383 = vector.extract_strided_slice %368 {offsets = [2, 0, 0], sizes = [7, 7, 128], strides = [1, 1, 1]} : vector<9x7x128xf32> to vector<7x7x128xf32>
      %384 = vector.broadcast %382 : f32 to vector<7x7x128xf32>
      %385 = arith.mulf %383, %384 : vector<7x7x128xf32>
      %386 = arith.addf %366, %385 : vector<7x7x128xf32>
      %c12_212 = arith.constant 12 : index
      %c0_213 = arith.constant 0 : index
      %c0_214 = arith.constant 0 : index
      %c0_215 = arith.constant 0 : index
      %387 = vector.load %arg11[%c12_212, %c0_213, %c0_214, %c0_215] : memref<30x9x7x128xf32, #tpu.memory_space<vmem>>, vector<1x9x7x128xf32>
      %388 = vector.shape_cast %387 : vector<1x9x7x128xf32> to vector<9x7x128xf32>
      %389 = arith.index_cast %arg13 : i32 to index
      %c12_216 = arith.constant 12 : index
      %390 = memref.load %arg4[%389, %c12_216] : memref<20x90xf32, #tpu.memory_space<smem>>
      %391 = vector.extract_strided_slice %388 {offsets = [0, 0, 0], sizes = [7, 7, 128], strides = [1, 1, 1]} : vector<9x7x128xf32> to vector<7x7x128xf32>
      %392 = vector.broadcast %390 : f32 to vector<7x7x128xf32>
      %393 = arith.mulf %391, %392 : vector<7x7x128xf32>
      %394 = arith.addf %374, %393 : vector<7x7x128xf32>
      %395 = arith.index_cast %arg13 : i32 to index
      %c42 = arith.constant 42 : index
      %396 = memref.load %arg4[%395, %c42] : memref<20x90xf32, #tpu.memory_space<smem>>
      %397 = vector.extract_strided_slice %388 {offsets = [1, 0, 0], sizes = [7, 7, 128], strides = [1, 1, 1]} : vector<9x7x128xf32> to vector<7x7x128xf32>
      %398 = vector.broadcast %396 : f32 to vector<7x7x128xf32>
      %399 = arith.mulf %397, %398 : vector<7x7x128xf32>
      %400 = arith.addf %380, %399 : vector<7x7x128xf32>
      %401 = arith.index_cast %arg13 : i32 to index
      %c72 = arith.constant 72 : index
      %402 = memref.load %arg4[%401, %c72] : memref<20x90xf32, #tpu.memory_space<smem>>
      %403 = vector.extract_strided_slice %388 {offsets = [2, 0, 0], sizes = [7, 7, 128], strides = [1, 1, 1]} : vector<9x7x128xf32> to vector<7x7x128xf32>
      %404 = vector.broadcast %402 : f32 to vector<7x7x128xf32>
      %405 = arith.mulf %403, %404 : vector<7x7x128xf32>
      %406 = arith.addf %386, %405 : vector<7x7x128xf32>
      %c13_217 = arith.constant 13 : index
      %c0_218 = arith.constant 0 : index
      %c0_219 = arith.constant 0 : index
      %c0_220 = arith.constant 0 : index
      %407 = vector.load %arg11[%c13_217, %c0_218, %c0_219, %c0_220] : memref<30x9x7x128xf32, #tpu.memory_space<vmem>>, vector<1x9x7x128xf32>
      %408 = vector.shape_cast %407 : vector<1x9x7x128xf32> to vector<9x7x128xf32>
      %409 = arith.index_cast %arg13 : i32 to index
      %c13_221 = arith.constant 13 : index
      %410 = memref.load %arg4[%409, %c13_221] : memref<20x90xf32, #tpu.memory_space<smem>>
      %411 = vector.extract_strided_slice %408 {offsets = [0, 0, 0], sizes = [7, 7, 128], strides = [1, 1, 1]} : vector<9x7x128xf32> to vector<7x7x128xf32>
      %412 = vector.broadcast %410 : f32 to vector<7x7x128xf32>
      %413 = arith.mulf %411, %412 : vector<7x7x128xf32>
      %414 = arith.addf %394, %413 : vector<7x7x128xf32>
      %415 = arith.index_cast %arg13 : i32 to index
      %c43 = arith.constant 43 : index
      %416 = memref.load %arg4[%415, %c43] : memref<20x90xf32, #tpu.memory_space<smem>>
      %417 = vector.extract_strided_slice %408 {offsets = [1, 0, 0], sizes = [7, 7, 128], strides = [1, 1, 1]} : vector<9x7x128xf32> to vector<7x7x128xf32>
      %418 = vector.broadcast %416 : f32 to vector<7x7x128xf32>
      %419 = arith.mulf %417, %418 : vector<7x7x128xf32>
      %420 = arith.addf %400, %419 : vector<7x7x128xf32>
      %421 = arith.index_cast %arg13 : i32 to index
      %c73 = arith.constant 73 : index
      %422 = memref.load %arg4[%421, %c73] : memref<20x90xf32, #tpu.memory_space<smem>>
      %423 = vector.extract_strided_slice %408 {offsets = [2, 0, 0], sizes = [7, 7, 128], strides = [1, 1, 1]} : vector<9x7x128xf32> to vector<7x7x128xf32>
      %424 = vector.broadcast %422 : f32 to vector<7x7x128xf32>
      %425 = arith.mulf %423, %424 : vector<7x7x128xf32>
      %426 = arith.addf %406, %425 : vector<7x7x128xf32>
      %c14_222 = arith.constant 14 : index
      %c0_223 = arith.constant 0 : index
      %c0_224 = arith.constant 0 : index
      %c0_225 = arith.constant 0 : index
      %427 = vector.load %arg11[%c14_222, %c0_223, %c0_224, %c0_225] : memref<30x9x7x128xf32, #tpu.memory_space<vmem>>, vector<1x9x7x128xf32>
      %428 = vector.shape_cast %427 : vector<1x9x7x128xf32> to vector<9x7x128xf32>
      %429 = arith.index_cast %arg13 : i32 to index
      %c14_226 = arith.constant 14 : index
      %430 = memref.load %arg4[%429, %c14_226] : memref<20x90xf32, #tpu.memory_space<smem>>
      %431 = vector.extract_strided_slice %428 {offsets = [0, 0, 0], sizes = [7, 7, 128], strides = [1, 1, 1]} : vector<9x7x128xf32> to vector<7x7x128xf32>
      %432 = vector.broadcast %430 : f32 to vector<7x7x128xf32>
      %433 = arith.mulf %431, %432 : vector<7x7x128xf32>
      %434 = arith.addf %414, %433 : vector<7x7x128xf32>
      %435 = arith.index_cast %arg13 : i32 to index
      %c44 = arith.constant 44 : index
      %436 = memref.load %arg4[%435, %c44] : memref<20x90xf32, #tpu.memory_space<smem>>
      %437 = vector.extract_strided_slice %428 {offsets = [1, 0, 0], sizes = [7, 7, 128], strides = [1, 1, 1]} : vector<9x7x128xf32> to vector<7x7x128xf32>
      %438 = vector.broadcast %436 : f32 to vector<7x7x128xf32>
      %439 = arith.mulf %437, %438 : vector<7x7x128xf32>
      %440 = arith.addf %420, %439 : vector<7x7x128xf32>
      %441 = arith.index_cast %arg13 : i32 to index
      %c74 = arith.constant 74 : index
      %442 = memref.load %arg4[%441, %c74] : memref<20x90xf32, #tpu.memory_space<smem>>
      %443 = vector.extract_strided_slice %428 {offsets = [2, 0, 0], sizes = [7, 7, 128], strides = [1, 1, 1]} : vector<9x7x128xf32> to vector<7x7x128xf32>
      %444 = vector.broadcast %442 : f32 to vector<7x7x128xf32>
      %445 = arith.mulf %443, %444 : vector<7x7x128xf32>
      %446 = arith.addf %426, %445 : vector<7x7x128xf32>
      %c15_227 = arith.constant 15 : index
      %c0_228 = arith.constant 0 : index
      %c0_229 = arith.constant 0 : index
      %c0_230 = arith.constant 0 : index
      %447 = vector.load %arg11[%c15_227, %c0_228, %c0_229, %c0_230] : memref<30x9x7x128xf32, #tpu.memory_space<vmem>>, vector<1x9x7x128xf32>
      %448 = vector.shape_cast %447 : vector<1x9x7x128xf32> to vector<9x7x128xf32>
      %449 = arith.index_cast %arg13 : i32 to index
      %c15_231 = arith.constant 15 : index
      %450 = memref.load %arg4[%449, %c15_231] : memref<20x90xf32, #tpu.memory_space<smem>>
      %451 = vector.extract_strided_slice %448 {offsets = [0, 0, 0], sizes = [7, 7, 128], strides = [1, 1, 1]} : vector<9x7x128xf32> to vector<7x7x128xf32>
      %452 = vector.broadcast %450 : f32 to vector<7x7x128xf32>
      %453 = arith.mulf %451, %452 : vector<7x7x128xf32>
      %454 = arith.addf %434, %453 : vector<7x7x128xf32>
      %455 = arith.index_cast %arg13 : i32 to index
      %c45 = arith.constant 45 : index
      %456 = memref.load %arg4[%455, %c45] : memref<20x90xf32, #tpu.memory_space<smem>>
      %457 = vector.extract_strided_slice %448 {offsets = [1, 0, 0], sizes = [7, 7, 128], strides = [1, 1, 1]} : vector<9x7x128xf32> to vector<7x7x128xf32>
      %458 = vector.broadcast %456 : f32 to vector<7x7x128xf32>
      %459 = arith.mulf %457, %458 : vector<7x7x128xf32>
      %460 = arith.addf %440, %459 : vector<7x7x128xf32>
      %461 = arith.index_cast %arg13 : i32 to index
      %c75 = arith.constant 75 : index
      %462 = memref.load %arg4[%461, %c75] : memref<20x90xf32, #tpu.memory_space<smem>>
      %463 = vector.extract_strided_slice %448 {offsets = [2, 0, 0], sizes = [7, 7, 128], strides = [1, 1, 1]} : vector<9x7x128xf32> to vector<7x7x128xf32>
      %464 = vector.broadcast %462 : f32 to vector<7x7x128xf32>
      %465 = arith.mulf %463, %464 : vector<7x7x128xf32>
      %466 = arith.addf %446, %465 : vector<7x7x128xf32>
      %c16_232 = arith.constant 16 : index
      %c0_233 = arith.constant 0 : index
      %c0_234 = arith.constant 0 : index
      %c0_235 = arith.constant 0 : index
      %467 = vector.load %arg11[%c16_232, %c0_233, %c0_234, %c0_235] : memref<30x9x7x128xf32, #tpu.memory_space<vmem>>, vector<1x9x7x128xf32>
      %468 = vector.shape_cast %467 : vector<1x9x7x128xf32> to vector<9x7x128xf32>
      %469 = arith.index_cast %arg13 : i32 to index
      %c16_236 = arith.constant 16 : index
      %470 = memref.load %arg4[%469, %c16_236] : memref<20x90xf32, #tpu.memory_space<smem>>
      %471 = vector.extract_strided_slice %468 {offsets = [0, 0, 0], sizes = [7, 7, 128], strides = [1, 1, 1]} : vector<9x7x128xf32> to vector<7x7x128xf32>
      %472 = vector.broadcast %470 : f32 to vector<7x7x128xf32>
      %473 = arith.mulf %471, %472 : vector<7x7x128xf32>
      %474 = arith.addf %454, %473 : vector<7x7x128xf32>
      %475 = arith.index_cast %arg13 : i32 to index
      %c46 = arith.constant 46 : index
      %476 = memref.load %arg4[%475, %c46] : memref<20x90xf32, #tpu.memory_space<smem>>
      %477 = vector.extract_strided_slice %468 {offsets = [1, 0, 0], sizes = [7, 7, 128], strides = [1, 1, 1]} : vector<9x7x128xf32> to vector<7x7x128xf32>
      %478 = vector.broadcast %476 : f32 to vector<7x7x128xf32>
      %479 = arith.mulf %477, %478 : vector<7x7x128xf32>
      %480 = arith.addf %460, %479 : vector<7x7x128xf32>
      %481 = arith.index_cast %arg13 : i32 to index
      %c76 = arith.constant 76 : index
      %482 = memref.load %arg4[%481, %c76] : memref<20x90xf32, #tpu.memory_space<smem>>
      %483 = vector.extract_strided_slice %468 {offsets = [2, 0, 0], sizes = [7, 7, 128], strides = [1, 1, 1]} : vector<9x7x128xf32> to vector<7x7x128xf32>
      %484 = vector.broadcast %482 : f32 to vector<7x7x128xf32>
      %485 = arith.mulf %483, %484 : vector<7x7x128xf32>
      %486 = arith.addf %466, %485 : vector<7x7x128xf32>
      %c17_237 = arith.constant 17 : index
      %c0_238 = arith.constant 0 : index
      %c0_239 = arith.constant 0 : index
      %c0_240 = arith.constant 0 : index
      %487 = vector.load %arg11[%c17_237, %c0_238, %c0_239, %c0_240] : memref<30x9x7x128xf32, #tpu.memory_space<vmem>>, vector<1x9x7x128xf32>
      %488 = vector.shape_cast %487 : vector<1x9x7x128xf32> to vector<9x7x128xf32>
      %489 = arith.index_cast %arg13 : i32 to index
      %c17_241 = arith.constant 17 : index
      %490 = memref.load %arg4[%489, %c17_241] : memref<20x90xf32, #tpu.memory_space<smem>>
      %491 = vector.extract_strided_slice %488 {offsets = [0, 0, 0], sizes = [7, 7, 128], strides = [1, 1, 1]} : vector<9x7x128xf32> to vector<7x7x128xf32>
      %492 = vector.broadcast %490 : f32 to vector<7x7x128xf32>
      %493 = arith.mulf %491, %492 : vector<7x7x128xf32>
      %494 = arith.addf %474, %493 : vector<7x7x128xf32>
      %495 = arith.index_cast %arg13 : i32 to index
      %c47 = arith.constant 47 : index
      %496 = memref.load %arg4[%495, %c47] : memref<20x90xf32, #tpu.memory_space<smem>>
      %497 = vector.extract_strided_slice %488 {offsets = [1, 0, 0], sizes = [7, 7, 128], strides = [1, 1, 1]} : vector<9x7x128xf32> to vector<7x7x128xf32>
      %498 = vector.broadcast %496 : f32 to vector<7x7x128xf32>
      %499 = arith.mulf %497, %498 : vector<7x7x128xf32>
      %500 = arith.addf %480, %499 : vector<7x7x128xf32>
      %501 = arith.index_cast %arg13 : i32 to index
      %c77 = arith.constant 77 : index
      %502 = memref.load %arg4[%501, %c77] : memref<20x90xf32, #tpu.memory_space<smem>>
      %503 = vector.extract_strided_slice %488 {offsets = [2, 0, 0], sizes = [7, 7, 128], strides = [1, 1, 1]} : vector<9x7x128xf32> to vector<7x7x128xf32>
      %504 = vector.broadcast %502 : f32 to vector<7x7x128xf32>
      %505 = arith.mulf %503, %504 : vector<7x7x128xf32>
      %506 = arith.addf %486, %505 : vector<7x7x128xf32>
      %c18_242 = arith.constant 18 : index
      %c0_243 = arith.constant 0 : index
      %c0_244 = arith.constant 0 : index
      %c0_245 = arith.constant 0 : index
      %507 = vector.load %arg11[%c18_242, %c0_243, %c0_244, %c0_245] : memref<30x9x7x128xf32, #tpu.memory_space<vmem>>, vector<1x9x7x128xf32>
      %508 = vector.shape_cast %507 : vector<1x9x7x128xf32> to vector<9x7x128xf32>
      %509 = arith.index_cast %arg13 : i32 to index
      %c18_246 = arith.constant 18 : index
      %510 = memref.load %arg4[%509, %c18_246] : memref<20x90xf32, #tpu.memory_space<smem>>
      %511 = vector.extract_strided_slice %508 {offsets = [0, 0, 0], sizes = [7, 7, 128], strides = [1, 1, 1]} : vector<9x7x128xf32> to vector<7x7x128xf32>
      %512 = vector.broadcast %510 : f32 to vector<7x7x128xf32>
      %513 = arith.mulf %511, %512 : vector<7x7x128xf32>
      %514 = arith.addf %494, %513 : vector<7x7x128xf32>
      %515 = arith.index_cast %arg13 : i32 to index
      %c48 = arith.constant 48 : index
      %516 = memref.load %arg4[%515, %c48] : memref<20x90xf32, #tpu.memory_space<smem>>
      %517 = vector.extract_strided_slice %508 {offsets = [1, 0, 0], sizes = [7, 7, 128], strides = [1, 1, 1]} : vector<9x7x128xf32> to vector<7x7x128xf32>
      %518 = vector.broadcast %516 : f32 to vector<7x7x128xf32>
      %519 = arith.mulf %517, %518 : vector<7x7x128xf32>
      %520 = arith.addf %500, %519 : vector<7x7x128xf32>
      %521 = arith.index_cast %arg13 : i32 to index
      %c78 = arith.constant 78 : index
      %522 = memref.load %arg4[%521, %c78] : memref<20x90xf32, #tpu.memory_space<smem>>
      %523 = vector.extract_strided_slice %508 {offsets = [2, 0, 0], sizes = [7, 7, 128], strides = [1, 1, 1]} : vector<9x7x128xf32> to vector<7x7x128xf32>
      %524 = vector.broadcast %522 : f32 to vector<7x7x128xf32>
      %525 = arith.mulf %523, %524 : vector<7x7x128xf32>
      %526 = arith.addf %506, %525 : vector<7x7x128xf32>
      %c19_247 = arith.constant 19 : index
      %c0_248 = arith.constant 0 : index
      %c0_249 = arith.constant 0 : index
      %c0_250 = arith.constant 0 : index
      %527 = vector.load %arg11[%c19_247, %c0_248, %c0_249, %c0_250] : memref<30x9x7x128xf32, #tpu.memory_space<vmem>>, vector<1x9x7x128xf32>
      %528 = vector.shape_cast %527 : vector<1x9x7x128xf32> to vector<9x7x128xf32>
      %529 = arith.index_cast %arg13 : i32 to index
      %c19_251 = arith.constant 19 : index
      %530 = memref.load %arg4[%529, %c19_251] : memref<20x90xf32, #tpu.memory_space<smem>>
      %531 = vector.extract_strided_slice %528 {offsets = [0, 0, 0], sizes = [7, 7, 128], strides = [1, 1, 1]} : vector<9x7x128xf32> to vector<7x7x128xf32>
      %532 = vector.broadcast %530 : f32 to vector<7x7x128xf32>
      %533 = arith.mulf %531, %532 : vector<7x7x128xf32>
      %534 = arith.addf %514, %533 : vector<7x7x128xf32>
      %535 = arith.index_cast %arg13 : i32 to index
      %c49 = arith.constant 49 : index
      %536 = memref.load %arg4[%535, %c49] : memref<20x90xf32, #tpu.memory_space<smem>>
      %537 = vector.extract_strided_slice %528 {offsets = [1, 0, 0], sizes = [7, 7, 128], strides = [1, 1, 1]} : vector<9x7x128xf32> to vector<7x7x128xf32>
      %538 = vector.broadcast %536 : f32 to vector<7x7x128xf32>
      %539 = arith.mulf %537, %538 : vector<7x7x128xf32>
      %540 = arith.addf %520, %539 : vector<7x7x128xf32>
      %541 = arith.index_cast %arg13 : i32 to index
      %c79 = arith.constant 79 : index
      %542 = memref.load %arg4[%541, %c79] : memref<20x90xf32, #tpu.memory_space<smem>>
      %543 = vector.extract_strided_slice %528 {offsets = [2, 0, 0], sizes = [7, 7, 128], strides = [1, 1, 1]} : vector<9x7x128xf32> to vector<7x7x128xf32>
      %544 = vector.broadcast %542 : f32 to vector<7x7x128xf32>
      %545 = arith.mulf %543, %544 : vector<7x7x128xf32>
      %546 = arith.addf %526, %545 : vector<7x7x128xf32>
      %c20_252 = arith.constant 20 : index
      %c0_253 = arith.constant 0 : index
      %c0_254 = arith.constant 0 : index
      %c0_255 = arith.constant 0 : index
      %547 = vector.load %arg11[%c20_252, %c0_253, %c0_254, %c0_255] : memref<30x9x7x128xf32, #tpu.memory_space<vmem>>, vector<1x9x7x128xf32>
      %548 = vector.shape_cast %547 : vector<1x9x7x128xf32> to vector<9x7x128xf32>
      %549 = arith.index_cast %arg13 : i32 to index
      %c20_256 = arith.constant 20 : index
      %550 = memref.load %arg4[%549, %c20_256] : memref<20x90xf32, #tpu.memory_space<smem>>
      %551 = vector.extract_strided_slice %548 {offsets = [0, 0, 0], sizes = [7, 7, 128], strides = [1, 1, 1]} : vector<9x7x128xf32> to vector<7x7x128xf32>
      %552 = vector.broadcast %550 : f32 to vector<7x7x128xf32>
      %553 = arith.mulf %551, %552 : vector<7x7x128xf32>
      %554 = arith.addf %534, %553 : vector<7x7x128xf32>
      %555 = arith.index_cast %arg13 : i32 to index
      %c50 = arith.constant 50 : index
      %556 = memref.load %arg4[%555, %c50] : memref<20x90xf32, #tpu.memory_space<smem>>
      %557 = vector.extract_strided_slice %548 {offsets = [1, 0, 0], sizes = [7, 7, 128], strides = [1, 1, 1]} : vector<9x7x128xf32> to vector<7x7x128xf32>
      %558 = vector.broadcast %556 : f32 to vector<7x7x128xf32>
      %559 = arith.mulf %557, %558 : vector<7x7x128xf32>
      %560 = arith.addf %540, %559 : vector<7x7x128xf32>
      %561 = arith.index_cast %arg13 : i32 to index
      %c80 = arith.constant 80 : index
      %562 = memref.load %arg4[%561, %c80] : memref<20x90xf32, #tpu.memory_space<smem>>
      %563 = vector.extract_strided_slice %548 {offsets = [2, 0, 0], sizes = [7, 7, 128], strides = [1, 1, 1]} : vector<9x7x128xf32> to vector<7x7x128xf32>
      %564 = vector.broadcast %562 : f32 to vector<7x7x128xf32>
      %565 = arith.mulf %563, %564 : vector<7x7x128xf32>
      %566 = arith.addf %546, %565 : vector<7x7x128xf32>
      %c21_257 = arith.constant 21 : index
      %c0_258 = arith.constant 0 : index
      %c0_259 = arith.constant 0 : index
      %c0_260 = arith.constant 0 : index
      %567 = vector.load %arg11[%c21_257, %c0_258, %c0_259, %c0_260] : memref<30x9x7x128xf32, #tpu.memory_space<vmem>>, vector<1x9x7x128xf32>
      %568 = vector.shape_cast %567 : vector<1x9x7x128xf32> to vector<9x7x128xf32>
      %569 = arith.index_cast %arg13 : i32 to index
      %c21_261 = arith.constant 21 : index
      %570 = memref.load %arg4[%569, %c21_261] : memref<20x90xf32, #tpu.memory_space<smem>>
      %571 = vector.extract_strided_slice %568 {offsets = [0, 0, 0], sizes = [7, 7, 128], strides = [1, 1, 1]} : vector<9x7x128xf32> to vector<7x7x128xf32>
      %572 = vector.broadcast %570 : f32 to vector<7x7x128xf32>
      %573 = arith.mulf %571, %572 : vector<7x7x128xf32>
      %574 = arith.addf %554, %573 : vector<7x7x128xf32>
      %575 = arith.index_cast %arg13 : i32 to index
      %c51 = arith.constant 51 : index
      %576 = memref.load %arg4[%575, %c51] : memref<20x90xf32, #tpu.memory_space<smem>>
      %577 = vector.extract_strided_slice %568 {offsets = [1, 0, 0], sizes = [7, 7, 128], strides = [1, 1, 1]} : vector<9x7x128xf32> to vector<7x7x128xf32>
      %578 = vector.broadcast %576 : f32 to vector<7x7x128xf32>
      %579 = arith.mulf %577, %578 : vector<7x7x128xf32>
      %580 = arith.addf %560, %579 : vector<7x7x128xf32>
      %581 = arith.index_cast %arg13 : i32 to index
      %c81 = arith.constant 81 : index
      %582 = memref.load %arg4[%581, %c81] : memref<20x90xf32, #tpu.memory_space<smem>>
      %583 = vector.extract_strided_slice %568 {offsets = [2, 0, 0], sizes = [7, 7, 128], strides = [1, 1, 1]} : vector<9x7x128xf32> to vector<7x7x128xf32>
      %584 = vector.broadcast %582 : f32 to vector<7x7x128xf32>
      %585 = arith.mulf %583, %584 : vector<7x7x128xf32>
      %586 = arith.addf %566, %585 : vector<7x7x128xf32>
      %c22_262 = arith.constant 22 : index
      %c0_263 = arith.constant 0 : index
      %c0_264 = arith.constant 0 : index
      %c0_265 = arith.constant 0 : index
      %587 = vector.load %arg11[%c22_262, %c0_263, %c0_264, %c0_265] : memref<30x9x7x128xf32, #tpu.memory_space<vmem>>, vector<1x9x7x128xf32>
      %588 = vector.shape_cast %587 : vector<1x9x7x128xf32> to vector<9x7x128xf32>
      %589 = arith.index_cast %arg13 : i32 to index
      %c22_266 = arith.constant 22 : index
      %590 = memref.load %arg4[%589, %c22_266] : memref<20x90xf32, #tpu.memory_space<smem>>
      %591 = vector.extract_strided_slice %588 {offsets = [0, 0, 0], sizes = [7, 7, 128], strides = [1, 1, 1]} : vector<9x7x128xf32> to vector<7x7x128xf32>
      %592 = vector.broadcast %590 : f32 to vector<7x7x128xf32>
      %593 = arith.mulf %591, %592 : vector<7x7x128xf32>
      %594 = arith.addf %574, %593 : vector<7x7x128xf32>
      %595 = arith.index_cast %arg13 : i32 to index
      %c52 = arith.constant 52 : index
      %596 = memref.load %arg4[%595, %c52] : memref<20x90xf32, #tpu.memory_space<smem>>
      %597 = vector.extract_strided_slice %588 {offsets = [1, 0, 0], sizes = [7, 7, 128], strides = [1, 1, 1]} : vector<9x7x128xf32> to vector<7x7x128xf32>
      %598 = vector.broadcast %596 : f32 to vector<7x7x128xf32>
      %599 = arith.mulf %597, %598 : vector<7x7x128xf32>
      %600 = arith.addf %580, %599 : vector<7x7x128xf32>
      %601 = arith.index_cast %arg13 : i32 to index
      %c82 = arith.constant 82 : index
      %602 = memref.load %arg4[%601, %c82] : memref<20x90xf32, #tpu.memory_space<smem>>
      %603 = vector.extract_strided_slice %588 {offsets = [2, 0, 0], sizes = [7, 7, 128], strides = [1, 1, 1]} : vector<9x7x128xf32> to vector<7x7x128xf32>
      %604 = vector.broadcast %602 : f32 to vector<7x7x128xf32>
      %605 = arith.mulf %603, %604 : vector<7x7x128xf32>
      %606 = arith.addf %586, %605 : vector<7x7x128xf32>
      %c23_267 = arith.constant 23 : index
      %c0_268 = arith.constant 0 : index
      %c0_269 = arith.constant 0 : index
      %c0_270 = arith.constant 0 : index
      %607 = vector.load %arg11[%c23_267, %c0_268, %c0_269, %c0_270] : memref<30x9x7x128xf32, #tpu.memory_space<vmem>>, vector<1x9x7x128xf32>
      %608 = vector.shape_cast %607 : vector<1x9x7x128xf32> to vector<9x7x128xf32>
      %609 = arith.index_cast %arg13 : i32 to index
      %c23_271 = arith.constant 23 : index
      %610 = memref.load %arg4[%609, %c23_271] : memref<20x90xf32, #tpu.memory_space<smem>>
      %611 = vector.extract_strided_slice %608 {offsets = [0, 0, 0], sizes = [7, 7, 128], strides = [1, 1, 1]} : vector<9x7x128xf32> to vector<7x7x128xf32>
      %612 = vector.broadcast %610 : f32 to vector<7x7x128xf32>
      %613 = arith.mulf %611, %612 : vector<7x7x128xf32>
      %614 = arith.addf %594, %613 : vector<7x7x128xf32>
      %615 = arith.index_cast %arg13 : i32 to index
      %c53 = arith.constant 53 : index
      %616 = memref.load %arg4[%615, %c53] : memref<20x90xf32, #tpu.memory_space<smem>>
      %617 = vector.extract_strided_slice %608 {offsets = [1, 0, 0], sizes = [7, 7, 128], strides = [1, 1, 1]} : vector<9x7x128xf32> to vector<7x7x128xf32>
      %618 = vector.broadcast %616 : f32 to vector<7x7x128xf32>
      %619 = arith.mulf %617, %618 : vector<7x7x128xf32>
      %620 = arith.addf %600, %619 : vector<7x7x128xf32>
      %621 = arith.index_cast %arg13 : i32 to index
      %c83 = arith.constant 83 : index
      %622 = memref.load %arg4[%621, %c83] : memref<20x90xf32, #tpu.memory_space<smem>>
      %623 = vector.extract_strided_slice %608 {offsets = [2, 0, 0], sizes = [7, 7, 128], strides = [1, 1, 1]} : vector<9x7x128xf32> to vector<7x7x128xf32>
      %624 = vector.broadcast %622 : f32 to vector<7x7x128xf32>
      %625 = arith.mulf %623, %624 : vector<7x7x128xf32>
      %626 = arith.addf %606, %625 : vector<7x7x128xf32>
      %c24_272 = arith.constant 24 : index
      %c0_273 = arith.constant 0 : index
      %c0_274 = arith.constant 0 : index
      %c0_275 = arith.constant 0 : index
      %627 = vector.load %arg11[%c24_272, %c0_273, %c0_274, %c0_275] : memref<30x9x7x128xf32, #tpu.memory_space<vmem>>, vector<1x9x7x128xf32>
      %628 = vector.shape_cast %627 : vector<1x9x7x128xf32> to vector<9x7x128xf32>
      %629 = arith.index_cast %arg13 : i32 to index
      %c24_276 = arith.constant 24 : index
      %630 = memref.load %arg4[%629, %c24_276] : memref<20x90xf32, #tpu.memory_space<smem>>
      %631 = vector.extract_strided_slice %628 {offsets = [0, 0, 0], sizes = [7, 7, 128], strides = [1, 1, 1]} : vector<9x7x128xf32> to vector<7x7x128xf32>
      %632 = vector.broadcast %630 : f32 to vector<7x7x128xf32>
      %633 = arith.mulf %631, %632 : vector<7x7x128xf32>
      %634 = arith.addf %614, %633 : vector<7x7x128xf32>
      %635 = arith.index_cast %arg13 : i32 to index
      %c54 = arith.constant 54 : index
      %636 = memref.load %arg4[%635, %c54] : memref<20x90xf32, #tpu.memory_space<smem>>
      %637 = vector.extract_strided_slice %628 {offsets = [1, 0, 0], sizes = [7, 7, 128], strides = [1, 1, 1]} : vector<9x7x128xf32> to vector<7x7x128xf32>
      %638 = vector.broadcast %636 : f32 to vector<7x7x128xf32>
      %639 = arith.mulf %637, %638 : vector<7x7x128xf32>
      %640 = arith.addf %620, %639 : vector<7x7x128xf32>
      %641 = arith.index_cast %arg13 : i32 to index
      %c84 = arith.constant 84 : index
      %642 = memref.load %arg4[%641, %c84] : memref<20x90xf32, #tpu.memory_space<smem>>
      %643 = vector.extract_strided_slice %628 {offsets = [2, 0, 0], sizes = [7, 7, 128], strides = [1, 1, 1]} : vector<9x7x128xf32> to vector<7x7x128xf32>
      %644 = vector.broadcast %642 : f32 to vector<7x7x128xf32>
      %645 = arith.mulf %643, %644 : vector<7x7x128xf32>
      %646 = arith.addf %626, %645 : vector<7x7x128xf32>
      %c25_277 = arith.constant 25 : index
      %c0_278 = arith.constant 0 : index
      %c0_279 = arith.constant 0 : index
      %c0_280 = arith.constant 0 : index
      %647 = vector.load %arg11[%c25_277, %c0_278, %c0_279, %c0_280] : memref<30x9x7x128xf32, #tpu.memory_space<vmem>>, vector<1x9x7x128xf32>
      %648 = vector.shape_cast %647 : vector<1x9x7x128xf32> to vector<9x7x128xf32>
      %649 = arith.index_cast %arg13 : i32 to index
      %c25_281 = arith.constant 25 : index
      %650 = memref.load %arg4[%649, %c25_281] : memref<20x90xf32, #tpu.memory_space<smem>>
      %651 = vector.extract_strided_slice %648 {offsets = [0, 0, 0], sizes = [7, 7, 128], strides = [1, 1, 1]} : vector<9x7x128xf32> to vector<7x7x128xf32>
      %652 = vector.broadcast %650 : f32 to vector<7x7x128xf32>
      %653 = arith.mulf %651, %652 : vector<7x7x128xf32>
      %654 = arith.addf %634, %653 : vector<7x7x128xf32>
      %655 = arith.index_cast %arg13 : i32 to index
      %c55 = arith.constant 55 : index
      %656 = memref.load %arg4[%655, %c55] : memref<20x90xf32, #tpu.memory_space<smem>>
      %657 = vector.extract_strided_slice %648 {offsets = [1, 0, 0], sizes = [7, 7, 128], strides = [1, 1, 1]} : vector<9x7x128xf32> to vector<7x7x128xf32>
      %658 = vector.broadcast %656 : f32 to vector<7x7x128xf32>
      %659 = arith.mulf %657, %658 : vector<7x7x128xf32>
      %660 = arith.addf %640, %659 : vector<7x7x128xf32>
      %661 = arith.index_cast %arg13 : i32 to index
      %c85 = arith.constant 85 : index
      %662 = memref.load %arg4[%661, %c85] : memref<20x90xf32, #tpu.memory_space<smem>>
      %663 = vector.extract_strided_slice %648 {offsets = [2, 0, 0], sizes = [7, 7, 128], strides = [1, 1, 1]} : vector<9x7x128xf32> to vector<7x7x128xf32>
      %664 = vector.broadcast %662 : f32 to vector<7x7x128xf32>
      %665 = arith.mulf %663, %664 : vector<7x7x128xf32>
      %666 = arith.addf %646, %665 : vector<7x7x128xf32>
      %c26_282 = arith.constant 26 : index
      %c0_283 = arith.constant 0 : index
      %c0_284 = arith.constant 0 : index
      %c0_285 = arith.constant 0 : index
      %667 = vector.load %arg11[%c26_282, %c0_283, %c0_284, %c0_285] : memref<30x9x7x128xf32, #tpu.memory_space<vmem>>, vector<1x9x7x128xf32>
      %668 = vector.shape_cast %667 : vector<1x9x7x128xf32> to vector<9x7x128xf32>
      %669 = arith.index_cast %arg13 : i32 to index
      %c26_286 = arith.constant 26 : index
      %670 = memref.load %arg4[%669, %c26_286] : memref<20x90xf32, #tpu.memory_space<smem>>
      %671 = vector.extract_strided_slice %668 {offsets = [0, 0, 0], sizes = [7, 7, 128], strides = [1, 1, 1]} : vector<9x7x128xf32> to vector<7x7x128xf32>
      %672 = vector.broadcast %670 : f32 to vector<7x7x128xf32>
      %673 = arith.mulf %671, %672 : vector<7x7x128xf32>
      %674 = arith.addf %654, %673 : vector<7x7x128xf32>
      %675 = arith.index_cast %arg13 : i32 to index
      %c56 = arith.constant 56 : index
      %676 = memref.load %arg4[%675, %c56] : memref<20x90xf32, #tpu.memory_space<smem>>
      %677 = vector.extract_strided_slice %668 {offsets = [1, 0, 0], sizes = [7, 7, 128], strides = [1, 1, 1]} : vector<9x7x128xf32> to vector<7x7x128xf32>
      %678 = vector.broadcast %676 : f32 to vector<7x7x128xf32>
      %679 = arith.mulf %677, %678 : vector<7x7x128xf32>
      %680 = arith.addf %660, %679 : vector<7x7x128xf32>
      %681 = arith.index_cast %arg13 : i32 to index
      %c86 = arith.constant 86 : index
      %682 = memref.load %arg4[%681, %c86] : memref<20x90xf32, #tpu.memory_space<smem>>
      %683 = vector.extract_strided_slice %668 {offsets = [2, 0, 0], sizes = [7, 7, 128], strides = [1, 1, 1]} : vector<9x7x128xf32> to vector<7x7x128xf32>
      %684 = vector.broadcast %682 : f32 to vector<7x7x128xf32>
      %685 = arith.mulf %683, %684 : vector<7x7x128xf32>
      %686 = arith.addf %666, %685 : vector<7x7x128xf32>
      %c27_287 = arith.constant 27 : index
      %c0_288 = arith.constant 0 : index
      %c0_289 = arith.constant 0 : index
      %c0_290 = arith.constant 0 : index
      %687 = vector.load %arg11[%c27_287, %c0_288, %c0_289, %c0_290] : memref<30x9x7x128xf32, #tpu.memory_space<vmem>>, vector<1x9x7x128xf32>
      %688 = vector.shape_cast %687 : vector<1x9x7x128xf32> to vector<9x7x128xf32>
      %689 = arith.index_cast %arg13 : i32 to index
      %c27_291 = arith.constant 27 : index
      %690 = memref.load %arg4[%689, %c27_291] : memref<20x90xf32, #tpu.memory_space<smem>>
      %691 = vector.extract_strided_slice %688 {offsets = [0, 0, 0], sizes = [7, 7, 128], strides = [1, 1, 1]} : vector<9x7x128xf32> to vector<7x7x128xf32>
      %692 = vector.broadcast %690 : f32 to vector<7x7x128xf32>
      %693 = arith.mulf %691, %692 : vector<7x7x128xf32>
      %694 = arith.addf %674, %693 : vector<7x7x128xf32>
      %695 = arith.index_cast %arg13 : i32 to index
      %c57 = arith.constant 57 : index
      %696 = memref.load %arg4[%695, %c57] : memref<20x90xf32, #tpu.memory_space<smem>>
      %697 = vector.extract_strided_slice %688 {offsets = [1, 0, 0], sizes = [7, 7, 128], strides = [1, 1, 1]} : vector<9x7x128xf32> to vector<7x7x128xf32>
      %698 = vector.broadcast %696 : f32 to vector<7x7x128xf32>
      %699 = arith.mulf %697, %698 : vector<7x7x128xf32>
      %700 = arith.addf %680, %699 : vector<7x7x128xf32>
      %701 = arith.index_cast %arg13 : i32 to index
      %c87 = arith.constant 87 : index
      %702 = memref.load %arg4[%701, %c87] : memref<20x90xf32, #tpu.memory_space<smem>>
      %703 = vector.extract_strided_slice %688 {offsets = [2, 0, 0], sizes = [7, 7, 128], strides = [1, 1, 1]} : vector<9x7x128xf32> to vector<7x7x128xf32>
      %704 = vector.broadcast %702 : f32 to vector<7x7x128xf32>
      %705 = arith.mulf %703, %704 : vector<7x7x128xf32>
      %706 = arith.addf %686, %705 : vector<7x7x128xf32>
      %c28_292 = arith.constant 28 : index
      %c0_293 = arith.constant 0 : index
      %c0_294 = arith.constant 0 : index
      %c0_295 = arith.constant 0 : index
      %707 = vector.load %arg11[%c28_292, %c0_293, %c0_294, %c0_295] : memref<30x9x7x128xf32, #tpu.memory_space<vmem>>, vector<1x9x7x128xf32>
      %708 = vector.shape_cast %707 : vector<1x9x7x128xf32> to vector<9x7x128xf32>
      %709 = arith.index_cast %arg13 : i32 to index
      %c28_296 = arith.constant 28 : index
      %710 = memref.load %arg4[%709, %c28_296] : memref<20x90xf32, #tpu.memory_space<smem>>
      %711 = vector.extract_strided_slice %708 {offsets = [0, 0, 0], sizes = [7, 7, 128], strides = [1, 1, 1]} : vector<9x7x128xf32> to vector<7x7x128xf32>
      %712 = vector.broadcast %710 : f32 to vector<7x7x128xf32>
      %713 = arith.mulf %711, %712 : vector<7x7x128xf32>
      %714 = arith.addf %694, %713 : vector<7x7x128xf32>
      %715 = arith.index_cast %arg13 : i32 to index
      %c58 = arith.constant 58 : index
      %716 = memref.load %arg4[%715, %c58] : memref<20x90xf32, #tpu.memory_space<smem>>
      %717 = vector.extract_strided_slice %708 {offsets = [1, 0, 0], sizes = [7, 7, 128], strides = [1, 1, 1]} : vector<9x7x128xf32> to vector<7x7x128xf32>
      %718 = vector.broadcast %716 : f32 to vector<7x7x128xf32>
      %719 = arith.mulf %717, %718 : vector<7x7x128xf32>
      %720 = arith.addf %700, %719 : vector<7x7x128xf32>
      %721 = arith.index_cast %arg13 : i32 to index
      %c88 = arith.constant 88 : index
      %722 = memref.load %arg4[%721, %c88] : memref<20x90xf32, #tpu.memory_space<smem>>
      %723 = vector.extract_strided_slice %708 {offsets = [2, 0, 0], sizes = [7, 7, 128], strides = [1, 1, 1]} : vector<9x7x128xf32> to vector<7x7x128xf32>
      %724 = vector.broadcast %722 : f32 to vector<7x7x128xf32>
      %725 = arith.mulf %723, %724 : vector<7x7x128xf32>
      %726 = arith.addf %706, %725 : vector<7x7x128xf32>
      %c29_297 = arith.constant 29 : index
      %c0_298 = arith.constant 0 : index
      %c0_299 = arith.constant 0 : index
      %c0_300 = arith.constant 0 : index
      %727 = vector.load %arg11[%c29_297, %c0_298, %c0_299, %c0_300] : memref<30x9x7x128xf32, #tpu.memory_space<vmem>>, vector<1x9x7x128xf32>
      %728 = vector.shape_cast %727 : vector<1x9x7x128xf32> to vector<9x7x128xf32>
      %729 = arith.index_cast %arg13 : i32 to index
      %c29_301 = arith.constant 29 : index
      %730 = memref.load %arg4[%729, %c29_301] : memref<20x90xf32, #tpu.memory_space<smem>>
      %731 = vector.extract_strided_slice %728 {offsets = [0, 0, 0], sizes = [7, 7, 128], strides = [1, 1, 1]} : vector<9x7x128xf32> to vector<7x7x128xf32>
      %732 = vector.broadcast %730 : f32 to vector<7x7x128xf32>
      %733 = arith.mulf %731, %732 : vector<7x7x128xf32>
      %734 = arith.addf %714, %733 : vector<7x7x128xf32>
      %735 = arith.index_cast %arg13 : i32 to index
      %c59 = arith.constant 59 : index
      %736 = memref.load %arg4[%735, %c59] : memref<20x90xf32, #tpu.memory_space<smem>>
      %737 = vector.extract_strided_slice %728 {offsets = [1, 0, 0], sizes = [7, 7, 128], strides = [1, 1, 1]} : vector<9x7x128xf32> to vector<7x7x128xf32>
      %738 = vector.broadcast %736 : f32 to vector<7x7x128xf32>
      %739 = arith.mulf %737, %738 : vector<7x7x128xf32>
      %740 = arith.addf %720, %739 : vector<7x7x128xf32>
      %741 = arith.index_cast %arg13 : i32 to index
      %c89 = arith.constant 89 : index
      %742 = memref.load %arg4[%741, %c89] : memref<20x90xf32, #tpu.memory_space<smem>>
      %743 = vector.extract_strided_slice %728 {offsets = [2, 0, 0], sizes = [7, 7, 128], strides = [1, 1, 1]} : vector<9x7x128xf32> to vector<7x7x128xf32>
      %744 = vector.broadcast %742 : f32 to vector<7x7x128xf32>
      %745 = arith.mulf %743, %744 : vector<7x7x128xf32>
      %746 = arith.addf %726, %745 : vector<7x7x128xf32>
      %747 = arith.addf %734, %740 : vector<7x7x128xf32>
      %748 = arith.addf %747, %746 : vector<7x7x128xf32>
      %cst_302 = arith.constant dense<0xFF800000> : vector<7x128xf32>
      %749 = vector.multi_reduction <maximumf>, %748, %cst_302 [0] : vector<7x7x128xf32> to vector<7x128xf32>
      %cst_303 = arith.constant dense<0xFF800000> : vector<128xf32>
      %750 = vector.multi_reduction <maximumf>, %749, %cst_303 [0] : vector<7x128xf32> to vector<128xf32>
      %751 = vector.shape_cast %750 : vector<128xf32> to vector<1x128xf32>
      %752 = vector.broadcast %149 : f32 to vector<1x128xf32>
      %753 = arith.addf %751, %752 : vector<1x128xf32>
      %cst_304 = arith.constant 0.000000e+00 : f32
      %754 = vector.broadcast %cst_304 : f32 to vector<1x128xf32>
      %755 = arith.maximumf %753, %754 : vector<1x128xf32>
      %756 = arith.index_cast %arg13 : i32 to index
      %c0_305 = arith.constant 0 : index
      %757 = vector.load %arg12[%756, %c0_305] : memref<20x128xf32, #tpu.memory_space<vmem>>, vector<1x128xf32>
      tpu.vector_store %arg12[%756, %c0_305], %755 {strides = array<i32>} : memref<20x128xf32, #tpu.memory_space<vmem>>, vector<1x128xf32>,
    }
    %c20_i32_134 = arith.constant 20 : i32
    %c0_135 = arith.constant 0 : index
    %c0_136 = arith.constant 0 : index
    %124 = vector.load %arg12[%c0_135, %c0_136] : memref<20x128xf32, #tpu.memory_space<vmem>>, vector<20x128xf32>
    %c0_137 = arith.constant 0 : index
    %c0_138 = arith.constant 0 : index
    %125 = vector.load %arg6[%c0_137, %c0_138] : memref<20x20xf32, #tpu.memory_space<vmem>>, vector<20x20xf32>
    %cst_139 = arith.constant dense<0.000000e+00> : vector<20x128xf32>
    %126 = tpu.matmul %125, %124, %cst_139 {dimension_numbers = #tpu.dot_dimension_numbers<[1], [0], [0], [1], [0, 0, 1, 1], [], []>} : vector<20x20xf32>, vector<20x128xf32>, vector<20x128xf32> -> vector<20x128xf32>
    %c0_140 = arith.constant 0 : index
    %c0_141 = arith.constant 0 : index
    %127 = vector.load %arg7[%c0_140, %c0_141] : memref<20x1xf32, #tpu.memory_space<vmem>>, vector<20x1xf32>
    %128 = vector.broadcast %127 : vector<20x1xf32> to vector<20x128xf32>
    %129 = arith.addf %126, %128 : vector<20x128xf32>
    %cst_142 = arith.constant 0.000000e+00 : f32
    %130 = vector.broadcast %cst_142 : f32 to vector<20x128xf32>
    %131 = arith.maximumf %129, %130 : vector<20x128xf32>
    %c0_143 = arith.constant 0 : index
    %c0_144 = arith.constant 0 : index
    %132 = vector.load %arg8[%c0_143, %c0_144] : memref<10x20xf32, #tpu.memory_space<vmem>>, vector<10x20xf32>
    %cst_145 = arith.constant dense<0.000000e+00> : vector<10x128xf32>
    %133 = tpu.matmul %132, %131, %cst_145 {dimension_numbers = #tpu.dot_dimension_numbers<[1], [0], [0], [1], [0, 0, 1, 1], [], []>} : vector<10x20xf32>, vector<20x128xf32>, vector<10x128xf32> -> vector<10x128xf32>
    %c0_146 = arith.constant 0 : index
    %c0_147 = arith.constant 0 : index
    %134 = vector.load %arg9[%c0_146, %c0_147] : memref<10x1xf32, #tpu.memory_space<vmem>>, vector<10x1xf32>
    %135 = vector.broadcast %134 : vector<10x1xf32> to vector<10x128xf32>
    %136 = arith.addf %133, %135 : vector<10x128xf32>
    %cst_148 = arith.constant dense<0xFF800000> : vector<128xf32>
    %137 = vector.multi_reduction <maximumf>, %136, %cst_148 [0] : vector<10x128xf32> to vector<128xf32>
    %138 = vector.shape_cast %137 : vector<128xf32> to vector<1x128xf32>
    %139 = vector.broadcast %138 : vector<1x128xf32> to vector<10x128xf32>
    %140 = arith.subf %136, %139 : vector<10x128xf32>
    %141 = math.exp %140 : vector<10x128xf32>
    %cst_149 = arith.constant dense<0.000000e+00> : vector<128xf32>
    %142 = vector.multi_reduction <add>, %141, %cst_149 [0] : vector<10x128xf32> to vector<128xf32>
    %143 = vector.shape_cast %142 : vector<128xf32> to vector<1x128xf32>
    %144 = math.log %143 : vector<1x128xf32>
    %145 = vector.broadcast %144 : vector<1x128xf32> to vector<10x128xf32>
    %146 = arith.subf %140, %145 : vector<10x128xf32>
    %c0_150 = arith.constant 0 : index
    %c0_151 = arith.constant 0 : index
    %147 = vector.load %arg10[%c0_150, %c0_151] : memref<10x128xf32, #tpu.memory_space<vmem>>, vector<10x128xf32>
    tpu.vector_store %arg10[%c0_150, %c0_151], %146 {strides = array<i32>} : memref<10x128xf32, #tpu.memory_space<vmem>>, vector<10x128xf32>,
    return
  }
  func.func @transform_0(%arg0: i32) -> (i32, i32, i32, i32) {
    %c0_i32 = arith.constant 0 : i32
    %c0_i32_0 = arith.constant 0 : i32
    %c0_i32_1 = arith.constant 0 : i32
    %c0_i32_2 = arith.constant 0 : i32
    return %c0_i32, %c0_i32_0, %c0_i32_1, %arg0 : i32, i32, i32, i32
  }
  func.func @transform_1(%arg0: i32) -> (i32, i32) {
    %c0_i32 = arith.constant 0 : i32
    %c0_i32_0 = arith.constant 0 : i32
    %c0_i32_1 = arith.constant 0 : i32
    return %c0_i32, %c0_i32_0 : i32, i32
  }
  func.func @transform_2(%arg0: i32) -> i32 {
    %c0_i32 = arith.constant 0 : i32
    %c0_i32_0 = arith.constant 0 : i32
    return %c0_i32 : i32
  }
  func.func @transform_3(%arg0: i32) -> (i32, i32) {
    %c0_i32 = arith.constant 0 : i32
    %c0_i32_0 = arith.constant 0 : i32
    %c0_i32_1 = arith.constant 0 : i32
    return %c0_i32, %c0_i32_0 : i32, i32
  }
  func.func @transform_4(%arg0: i32) -> i32 {
    %c0_i32 = arith.constant 0 : i32
    %c0_i32_0 = arith.constant 0 : i32
    return %c0_i32 : i32
  }
  func.func @transform_5(%arg0: i32) -> (i32, i32) {
    %c0_i32 = arith.constant 0 : i32
    %c0_i32_0 = arith.constant 0 : i32
    %c0_i32_1 = arith.constant 0 : i32
    return %c0_i32, %c0_i32_0 : i32, i32
  }
  func.func @transform_6(%arg0: i32) -> (i32, i32) {
    %c0_i32 = arith.constant 0 : i32
    %c0_i32_0 = arith.constant 0 : i32
    %c0_i32_1 = arith.constant 0 : i32
    return %c0_i32, %c0_i32_0 : i32, i32
  }
  func.func @transform_7(%arg0: i32) -> (i32, i32) {
    %c0_i32 = arith.constant 0 : i32
    %c0_i32_0 = arith.constant 0 : i32
    %c0_i32_1 = arith.constant 0 : i32
    return %c0_i32, %c0_i32_0 : i32, i32
  }
  func.func @transform_8(%arg0: i32) -> (i32, i32) {
    %c0_i32 = arith.constant 0 : i32
    %c0_i32_0 = arith.constant 0 : i32
    %c0_i32_1 = arith.constant 0 : i32
    return %c0_i32, %c0_i32_0 : i32, i32
  }
  func.func @transform_9(%arg0: i32) -> (i32, i32) {
    %c0_i32 = arith.constant 0 : i32
    %c0_i32_0 = arith.constant 0 : i32
    return %c0_i32, %arg0 : i32, i32
  }
}

</mosaic_0001>

<llo_original>
// kernel: tpu_custom_call.1
$region0: #{tpu_custom_call.1}
  #allocation0 [shape = 'u32[]', space=smem, size = 0x4, offset = 0x4, fixed_abs, tag = 'smem constant byte address 0x4 - core index']
  #allocation1 [shape = 'u32[144,128]{1,0:T(1,128)}', space=vmem, size = 0x12000, scoped, tag = 'internal scratch']
  #allocation2 [shape = 'f32[30,9,7,128]{3,2,1,0:T(8,128)}', space=vmem, size = 0x10e000, scoped, tag = 'scratch operand']
  #allocation3 [shape = 'f32[20,128]{1,0:T(8,128)}', space=vmem, size = 0x3000, scoped, tag = 'scratch operand']
  %s0 = inlined_call_operand.vmem [shape: f32[6,30,7,128], index: 0, kind: input, shape index: {}]
  %s1 = inlined_call_operand.vmem [shape: f32[10,9], index: 1, kind: input, shape index: {}]
  %s2 = inlined_call_operand.vmem [shape: f32[10], index: 2, kind: input, shape index: {}]
  %s3 = inlined_call_operand.vmem [shape: f32[20,90], index: 3, kind: input, shape index: {}]
  %s4 = inlined_call_operand.vmem [shape: f32[20], index: 4, kind: input, shape index: {}]
  %s5 = inlined_call_operand.vmem [shape: f32[20,20], index: 5, kind: input, shape index: {}]
  %s6 = inlined_call_operand.vmem [shape: f32[20,1], index: 6, kind: input, shape index: {}]
  %s7 = inlined_call_operand.vmem [shape: f32[10,20], index: 7, kind: input, shape index: {}]
  %s8 = inlined_call_operand.vmem [shape: f32[10,1], index: 8, kind: input, shape index: {}]
  %s9 = inlined_call_operand.hbm [shape: f32[10,128], index: 9, kind: output, shape index: {}]
  %s10 = sld [smem:[#allocation0]]
  $region76: #{tpu_custom_call.1} parent=0
    _
  %s12 = ssub.s32 1, %s10
  %s13 = scalar_select 0, %s12, %s10
  $region1: #{tpu_custom_call.1} parent=0
    #allocation4 [shape = 'u8[8192]{0}', space=smem, size = 0x2000, scoped, tag = 'input window, operand 1, single buffered']
    #allocation5 [shape = 's32[1]{0}', space=sflag, size = 0x4, scoped, tag = 'scoped memory for tpu_custom_call.1']
    #allocation6 [shape = 's32[1]{0}', space=sflag, size = 0x4, scoped, tag = 'scoped memory for tpu_custom_call.1']
    #allocation7 [shape = 'u8[512]{0}', space=smem, size = 0x200, scoped, tag = 'input window, operand 2, single buffered']
    #allocation8 [shape = 's32[1]{0}', space=sflag, size = 0x4, scoped, tag = 'scoped memory for tpu_custom_call.1']
    #allocation9 [shape = 'u8[12288]{0}', space=smem, size = 0x3000, scoped, tag = 'input window, operand 3, single buffered']
    #allocation10 [shape = 'u8[512]{0}', space=smem, size = 0x200, scoped, tag = 'input window, operand 4, single buffered']
    #allocation11 [shape = 's32[1]{0}', space=sflag, size = 0x4, scoped, tag = 'scoped memory for tpu_custom_call.1']
    #allocation12 [shape = 'u8[8192]{0}', space=vmem, size = 0x2000, scoped, tag = 'output window, operand 0, single buffered']
    %14 = vsyncpa [#allocation6], 0
    %15 = vsyncpa [#allocation8], 0
    %16 = vsyncpa [#allocation11], 0
    %17 = vsyncpa [#allocation5], 0
    // Predicated region
    $region2: #{tpu_custom_call.1} parent=1 // pred_check
      _
    $region3: #{tpu_custom_call.1} parent=1 // pred_check_branch
      %19 = sbr.rel (0) target = $region5
    $region4: #{tpu_custom_call.1} parent=1 // pred_region
      _
    $region5: #{tpu_custom_call.1} parent=1 // pred_fallthru
      _
    // Predicated region
    $region6: #{tpu_custom_call.1} parent=1 // pred_check
      _
    $region7: #{tpu_custom_call.1} parent=1 // pred_check_branch
      %21 = sbr.rel (0) target = $region9
    $region8: #{tpu_custom_call.1} parent=1 // pred_region
      %s23 = ssub.s32 256, 256
      %24 = vsyncadd [#allocation6], %s23
      %s25 = sshll.u32 %s1, 4
      %s26 = int_to_ptr.vmem [resolvable:$true] %s25
      %31 = dma.vmem_to_smem %s26, 256, [#allocation4], [#allocation6], 128, 128, 8
    $region9: #{tpu_custom_call.1} parent=1 // pred_fallthru
      _
    // Predicated region
    $region10: #{tpu_custom_call.1} parent=1 // pred_check
      _
    $region11: #{tpu_custom_call.1} parent=1 // pred_check_branch
      %33 = sbr.rel (0) target = $region13
    $region12: #{tpu_custom_call.1} parent=1 // pred_region
      %s35 = ssub.s32 16, 16
      %36 = vsyncadd [#allocation8], %s35
      %s38 = sshll.u32 %s2, 4
      %s39 = int_to_ptr.vmem [resolvable:$true] %s38
      %41 = dma.vmem_to_smem %s39, 16, [#allocation7], [#allocation8]
    $region13: #{tpu_custom_call.1} parent=1 // pred_fallthru
      _
    // Predicated region
    $region14: #{tpu_custom_call.1} parent=1 // pred_check
      _
    $region15: #{tpu_custom_call.1} parent=1 // pred_check_branch
      %43 = sbr.rel (0) target = $region17
    $region16: #{tpu_custom_call.1} parent=1 // pred_region
      %s45 = ssub.s32 384, 384
      %46 = vsyncadd [#allocation8], %s45
      %s47 = sshll.u32 %s3, 4
      %s48 = int_to_ptr.vmem [resolvable:$true] %s47
      %53 = dma.vmem_to_smem %s48, 384, [#allocation9], [#allocation8], 128, 128, 8
    $region17: #{tpu_custom_call.1} parent=1 // pred_fallthru
      _
    // Predicated region
    $region18: #{tpu_custom_call.1} parent=1 // pred_check
      _
    $region19: #{tpu_custom_call.1} parent=1 // pred_check_branch
      %55 = sbr.rel (0) target = $region21
    $region20: #{tpu_custom_call.1} parent=1 // pred_region
      %s57 = ssub.s32 16, 16
      %58 = vsyncadd [#allocation11], %s57
      %s60 = sshll.u32 %s4, 4
      %s61 = int_to_ptr.vmem [resolvable:$true] %s60
      %63 = dma.vmem_to_smem %s61, 16, [#allocation10], [#allocation11]
    $region21: #{tpu_custom_call.1} parent=1 // pred_fallthru
      _
    // Predicated region
    $region22: #{tpu_custom_call.1} parent=1 // pred_check
      _
    $region23: #{tpu_custom_call.1} parent=1 // pred_check_branch
      %65 = sbr.rel (0) target = $region25
    $region24: #{tpu_custom_call.1} parent=1 // pred_region
      _
    $region25: #{tpu_custom_call.1} parent=1 // pred_fallthru
      _
    // Predicated region
    $region26: #{tpu_custom_call.1} parent=1 // pred_check
      _
    $region27: #{tpu_custom_call.1} parent=1 // pred_check_branch
      %67 = sbr.rel (0) target = $region29
    $region28: #{tpu_custom_call.1} parent=1 // pred_region
      _
    $region29: #{tpu_custom_call.1} parent=1 // pred_fallthru
      _
    // Predicated region
    $region30: #{tpu_custom_call.1} parent=1 // pred_check
      _
    $region31: #{tpu_custom_call.1} parent=1 // pred_check_branch
      %69 = sbr.rel (0) target = $region33
    $region32: #{tpu_custom_call.1} parent=1 // pred_region
      _
    $region33: #{tpu_custom_call.1} parent=1 // pred_fallthru
      _
    // Predicated region
    $region34: #{tpu_custom_call.1} parent=1 // pred_check
      _
    $region35: #{tpu_custom_call.1} parent=1 // pred_check_branch
      %71 = sbr.rel (0) target = $region37
    $region36: #{tpu_custom_call.1} parent=1 // pred_region
      _
    $region37: #{tpu_custom_call.1} parent=1 // pred_fallthru
      _
    // Predicated region
    $region38: #{tpu_custom_call.1} parent=1 // pred_check
      _
    $region39: #{tpu_custom_call.1} parent=1 // pred_check_branch
      %73 = sbr.rel (0) target = $region41
    $region40: #{tpu_custom_call.1} parent=1 // pred_region
      %74 = dma.done [#allocation6], 256
    $region41: #{tpu_custom_call.1} parent=1 // pred_fallthru
      _
    // Predicated region
    $region42: #{tpu_custom_call.1} parent=1 // pred_check
      _
    $region43: #{tpu_custom_call.1} parent=1 // pred_check_branch
      %76 = sbr.rel (0) target = $region45
    $region44: #{tpu_custom_call.1} parent=1 // pred_region
      %77 = dma.done [#allocation8], 16
    $region45: #{tpu_custom_call.1} parent=1 // pred_fallthru
      _
    // Predicated region
    $region46: #{tpu_custom_call.1} parent=1 // pred_check
      _
    $region47: #{tpu_custom_call.1} parent=1 // pred_check_branch
      %79 = sbr.rel (0) target = $region49
    $region48: #{tpu_custom_call.1} parent=1 // pred_region
      %80 = dma.done [#allocation8], 384
    $region49: #{tpu_custom_call.1} parent=1 // pred_fallthru
      _
    // Predicated region
    $region50: #{tpu_custom_call.1} parent=1 // pred_check
      _
    $region51: #{tpu_custom_call.1} parent=1 // pred_check_branch
      %82 = sbr.rel (0) target = $region53
    $region52: #{tpu_custom_call.1} parent=1 // pred_region
      %83 = dma.done [#allocation11], 16
    $region53: #{tpu_custom_call.1} parent=1 // pred_fallthru
      _
    %84 = sfence
    %85 = vst [vmem:[#allocation2] sm:$0x7f] 0.0
    %86 = vst [vmem:[#allocation2 + $0x8] sm:$0x7f] 0.0
    %87 = vst [vmem:[#allocation2 + $0x10] sm:$0x7f] 0.0
    %88 = vst [vmem:[#allocation2 + $0x18] sm:$0x7f] 0.0
    %89 = vst [vmem:[#allocation2 + $0x20] sm:$0x7f] 0.0
    %90 = vst [vmem:[#allocation2 + $0x28] sm:$0x7f] 0.0
    %91 = vst [vmem:[#allocation2 + $0x30] sm:$0x7f] 0.0
    %92 = vst [vmem:[#allocation2 + $0x38] sm:$0x7f] 0.0
    %93 = vst [vmem:[#allocation2 + $0x40] sm:$0x7f] 0.0
    %s94 = scalar_lea.vmem [#allocation2], 1440
    %95 = vst [vmem:[%s94] sm:$0x7f] 0.0
    %96 = vst [vmem:[%s94 + $0x8] sm:$0x7f] 0.0
    %97 = vst [vmem:[%s94 + $0x10] sm:$0x7f] 0.0
    %98 = vst [vmem:[%s94 + $0x18] sm:$0x7f] 0.0
    %99 = vst [vmem:[%s94 + $0x20] sm:$0x7f] 0.0
    %100 = vst [vmem:[%s94 + $0x28] sm:$0x7f] 0.0
    %101 = vst [vmem:[%s94 + $0x30] sm:$0x7f] 0.0
    %102 = vst [vmem:[%s94 + $0x38] sm:$0x7f] 0.0
    %103 = vst [vmem:[%s94 + $0x40] sm:$0x7f] 0.0
    %s104 = scalar_lea.vmem [#allocation2], 720
    %105 = vst [vmem:[%s104] sm:$0x7f] 0.0
    %s106 = scalar_lea.vmem [#allocation2], 784
    %107 = vst [vmem:[%s106] sm:$0x7f] 0.0
    %s108 = scalar_lea.vmem [#allocation2], 72
    %109 = vst [vmem:[%s108] sm:$0x7f] 0.0
    %110 = vst [vmem:[%s108 + $0x8] sm:$0x7f] 0.0
    %111 = vst [vmem:[%s108 + $0x10] sm:$0x7f] 0.0
    %112 = vst [vmem:[%s108 + $0x18] sm:$0x7f] 0.0
    %113 = vst [vmem:[%s108 + $0x20] sm:$0x7f] 0.0
    %114 = vst [vmem:[%s108 + $0x28] sm:$0x7f] 0.0
    %115 = vst [vmem:[%s108 + $0x30] sm:$0x7f] 0.0
    %116 = vst [vmem:[%s108 + $0x38] sm:$0x7f] 0.0
    %117 = vst [vmem:[%s108 + $0x40] sm:$0x7f] 0.0
    %s118 = scalar_lea.vmem [#allocation2], 1512
    %119 = vst [vmem:[%s118] sm:$0x7f] 0.0
    %120 = vst [vmem:[%s118 + $0x8] sm:$0x7f] 0.0
    %121 = vst [vmem:[%s118 + $0x10] sm:$0x7f] 0.0
    %122 = vst [vmem:[%s118 + $0x18] sm:$0x7f] 0.0
    %123 = vst [vmem:[%s118 + $0x20] sm:$0x7f] 0.0
    %124 = vst [vmem:[%s118 + $0x28] sm:$0x7f] 0.0
    %125 = vst [vmem:[%s118 + $0x30] sm:$0x7f] 0.0
    %126 = vst [vmem:[%s118 + $0x38] sm:$0x7f] 0.0
    %127 = vst [vmem:[%s118 + $0x40] sm:$0x7f] 0.0
    %s128 = scalar_lea.vmem [#allocation2], 792
    %129 = vst [vmem:[%s128] sm:$0x7f] 0.0
    %s130 = scalar_lea.vmem [#allocation2], 856
    %131 = vst [vmem:[%s130] sm:$0x7f] 0.0
    %s132 = scalar_lea.vmem [#allocation2], 144
    %133 = vst [vmem:[%s132] sm:$0x7f] 0.0
    %134 = vst [vmem:[%s132 + $0x8] sm:$0x7f] 0.0
    %135 = vst [vmem:[%s132 + $0x10] sm:$0x7f] 0.0
    %136 = vst [vmem:[%s132 + $0x18] sm:$0x7f] 0.0
    %137 = vst [vmem:[%s132 + $0x20] sm:$0x7f] 0.0
    %138 = vst [vmem:[%s132 + $0x28] sm:$0x7f] 0.0
    %139 = vst [vmem:[%s132 + $0x30] sm:$0x7f] 0.0
    %140 = vst [vmem:[%s132 + $0x38] sm:$0x7f] 0.0
    %141 = vst [vmem:[%s132 + $0x40] sm:$0x7f] 0.0
    %s142 = scalar_lea.vmem [#allocation2], 1584
    %143 = vst [vmem:[%s142] sm:$0x7f] 0.0
    %144 = vst [vmem:[%s142 + $0x8] sm:$0x7f] 0.0
    %145 = vst [vmem:[%s142 + $0x10] sm:$0x7f] 0.0
    %146 = vst [vmem:[%s142 + $0x18] sm:$0x7f] 0.0
    %147 = vst [vmem:[%s142 + $0x20] sm:$0x7f] 0.0
    %148 = vst [vmem:[%s142 + $0x28] sm:$0x7f] 0.0
    %149 = vst [vmem:[%s142 + $0x30] sm:$0x7f] 0.0
    %150 = vst [vmem:[%s142 + $0x38] sm:$0x7f] 0.0
    %151 = vst [vmem:[%s142 + $0x40] sm:$0x7f] 0.0
    %s152 = scalar_lea.vmem [#allocation2], 864
    %153 = vst [vmem:[%s152] sm:$0x7f] 0.0
    %s154 = scalar_lea.vmem [#allocation2], 928
    %155 = vst [vmem:[%s154] sm:$0x7f] 0.0
    %s156 = scalar_lea.vmem [#allocation2], 216
    %157 = vst [vmem:[%s156] sm:$0x7f] 0.0
    %158 = vst [vmem:[%s156 + $0x8] sm:$0x7f] 0.0
    %159 = vst [vmem:[%s156 + $0x10] sm:$0x7f] 0.0
    %160 = vst [vmem:[%s156 + $0x18] sm:$0x7f] 0.0
    %161 = vst [vmem:[%s156 + $0x20] sm:$0x7f] 0.0
    %162 = vst [vmem:[%s156 + $0x28] sm:$0x7f] 0.0
    %163 = vst [vmem:[%s156 + $0x30] sm:$0x7f] 0.0
    %164 = vst [vmem:[%s156 + $0x38] sm:$0x7f] 0.0
    %165 = vst [vmem:[%s156 + $0x40] sm:$0x7f] 0.0
    %s166 = scalar_lea.vmem [#allocation2], 1656
    %167 = vst [vmem:[%s166] sm:$0x7f] 0.0
    %168 = vst [vmem:[%s166 + $0x8] sm:$0x7f] 0.0
    %169 = vst [vmem:[%s166 + $0x10] sm:$0x7f] 0.0
    %170 = vst [vmem:[%s166 + $0x18] sm:$0x7f] 0.0
    %171 = vst [vmem:[%s166 + $0x20] sm:$0x7f] 0.0
    %172 = vst [vmem:[%s166 + $0x28] sm:$0x7f] 0.0
    %173 = vst [vmem:[%s166 + $0x30] sm:$0x7f] 0.0
    %174 = vst [vmem:[%s166 + $0x38] sm:$0x7f] 0.0
    %175 = vst [vmem:[%s166 + $0x40] sm:$0x7f] 0.0
    %s176 = scalar_lea.vmem [#allocation2], 936
    %177 = vst [vmem:[%s176] sm:$0x7f] 0.0
    %s178 = scalar_lea.vmem [#allocation2], 1000
    %179 = vst [vmem:[%s178] sm:$0x7f] 0.0
    %s180 = scalar_lea.vmem [#allocation2], 288
    %181 = vst [vmem:[%s180] sm:$0x7f] 0.0
    %182 = vst [vmem:[%s180 + $0x8] sm:$0x7f] 0.0
    %183 = vst [vmem:[%s180 + $0x10] sm:$0x7f] 0.0
    %184 = vst [vmem:[%s180 + $0x18] sm:$0x7f] 0.0
    %185 = vst [vmem:[%s180 + $0x20] sm:$0x7f] 0.0
    %186 = vst [vmem:[%s180 + $0x28] sm:$0x7f] 0.0
    %187 = vst [vmem:[%s180 + $0x30] sm:$0x7f] 0.0
    %188 = vst [vmem:[%s180 + $0x38] sm:$0x7f] 0.0
    %189 = vst [vmem:[%s180 + $0x40] sm:$0x7f] 0.0
    %s190 = scalar_lea.vmem [#allocation2], 1728
    %191 = vst [vmem:[%s190] sm:$0x7f] 0.0
    %192 = vst [vmem:[%s190 + $0x8] sm:$0x7f] 0.0
    %193 = vst [vmem:[%s190 + $0x10] sm:$0x7f] 0.0
    %194 = vst [vmem:[%s190 + $0x18] sm:$0x7f] 0.0
    %195 = vst [vmem:[%s190 + $0x20] sm:$0x7f] 0.0
    %196 = vst [vmem:[%s190 + $0x28] sm:$0x7f] 0.0
    %197 = vst [vmem:[%s190 + $0x30] sm:$0x7f] 0.0
    %198 = vst [vmem:[%s190 + $0x38] sm:$0x7f] 0.0
    %199 = vst [vmem:[%s190 + $0x40] sm:$0x7f] 0.0
    %s200 = scalar_lea.vmem [#allocation2], 1008
    %201 = vst [vmem:[%s200] sm:$0x7f] 0.0
    %s202 = scalar_lea.vmem [#allocation2], 1072
    %203 = vst [vmem:[%s202] sm:$0x7f] 0.0
    %s204 = scalar_lea.vmem [#allocation2], 360
    %205 = vst [vmem:[%s204] sm:$0x7f] 0.0
    %206 = vst [vmem:[%s204 + $0x8] sm:$0x7f] 0.0
    %207 = vst [vmem:[%s204 + $0x10] sm:$0x7f] 0.0
    %208 = vst [vmem:[%s204 + $0x18] sm:$0x7f] 0.0
    %209 = vst [vmem:[%s204 + $0x20] sm:$0x7f] 0.0
    %210 = vst [vmem:[%s204 + $0x28] sm:$0x7f] 0.0
    %211 = vst [vmem:[%s204 + $0x30] sm:$0x7f] 0.0
    %212 = vst [vmem:[%s204 + $0x38] sm:$0x7f] 0.0
    %213 = vst [vmem:[%s204 + $0x40] sm:$0x7f] 0.0
    %s214 = scalar_lea.vmem [#allocation2], 1800
    %215 = vst [vmem:[%s214] sm:$0x7f] 0.0
    %216 = vst [vmem:[%s214 + $0x8] sm:$0x7f] 0.0
    %217 = vst [vmem:[%s214 + $0x10] sm:$0x7f] 0.0
    %218 = vst [vmem:[%s214 + $0x18] sm:$0x7f] 0.0
    %219 = vst [vmem:[%s214 + $0x20] sm:$0x7f] 0.0
    %220 = vst [vmem:[%s214 + $0x28] sm:$0x7f] 0.0
    %221 = vst [vmem:[%s214 + $0x30] sm:$0x7f] 0.0
    %222 = vst [vmem:[%s214 + $0x38] sm:$0x7f] 0.0
    %223 = vst [vmem:[%s214 + $0x40] sm:$0x7f] 0.0
    %s224 = scalar_lea.vmem [#allocation2], 1080
    %225 = vst [vmem:[%s224] sm:$0x7f] 0.0
    %s226 = scalar_lea.vmem [#allocation2], 1144
    %227 = vst [vmem:[%s226] sm:$0x7f] 0.0
    %s228 = scalar_lea.vmem [#allocation2], 432
    %229 = vst [vmem:[%s228] sm:$0x7f] 0.0
    %230 = vst [vmem:[%s228 + $0x8] sm:$0x7f] 0.0
    %231 = vst [vmem:[%s228 + $0x10] sm:$0x7f] 0.0
    %232 = vst [vmem:[%s228 + $0x18] sm:$0x7f] 0.0
    %233 = vst [vmem:[%s228 + $0x20] sm:$0x7f] 0.0
    %234 = vst [vmem:[%s228 + $0x28] sm:$0x7f] 0.0
    %235 = vst [vmem:[%s228 + $0x30] sm:$0x7f] 0.0
    %236 = vst [vmem:[%s228 + $0x38] sm:$0x7f] 0.0
    %237 = vst [vmem:[%s228 + $0x40] sm:$0x7f] 0.0
    %s238 = scalar_lea.vmem [#allocation2], 1872
    %239 = vst [vmem:[%s238] sm:$0x7f] 0.0
    %240 = vst [vmem:[%s238 + $0x8] sm:$0x7f] 0.0
    %241 = vst [vmem:[%s238 + $0x10] sm:$0x7f] 0.0
    %242 = vst [vmem:[%s238 + $0x18] sm:$0x7f] 0.0
    %243 = vst [vmem:[%s238 + $0x20] sm:$0x7f] 0.0
    %244 = vst [vmem:[%s238 + $0x28] sm:$0x7f] 0.0
    %245 = vst [vmem:[%s238 + $0x30] sm:$0x7f] 0.0
    %246 = vst [vmem:[%s238 + $0x38] sm:$0x7f] 0.0
    %247 = vst [vmem:[%s238 + $0x40] sm:$0x7f] 0.0
    %s248 = scalar_lea.vmem [#allocation2], 1152
    %249 = vst [vmem:[%s248] sm:$0x7f] 0.0
    %s250 = scalar_lea.vmem [#allocation2], 1216
    %251 = vst [vmem:[%s250] sm:$0x7f] 0.0
    %s252 = scalar_lea.vmem [#allocation2], 504
    %253 = vst [vmem:[%s252] sm:$0x7f] 0.0
    %254 = vst [vmem:[%s252 + $0x8] sm:$0x7f] 0.0
    %255 = vst [vmem:[%s252 + $0x10] sm:$0x7f] 0.0
    %256 = vst [vmem:[%s252 + $0x18] sm:$0x7f] 0.0
    %257 = vst [vmem:[%s252 + $0x20] sm:$0x7f] 0.0
    %258 = vst [vmem:[%s252 + $0x28] sm:$0x7f] 0.0
    %259 = vst [vmem:[%s252 + $0x30] sm:$0x7f] 0.0
    %260 = vst [vmem:[%s252 + $0x38] sm:$0x7f] 0.0
    %261 = vst [vmem:[%s252 + $0x40] sm:$0x7f] 0.0
    %s262 = scalar_lea.vmem [#allocation2], 1944
    %263 = vst [vmem:[%s262] sm:$0x7f] 0.0
    %264 = vst [vmem:[%s262 + $0x8] sm:$0x7f] 0.0
    %265 = vst [vmem:[%s262 + $0x10] sm:$0x7f] 0.0
    %266 = vst [vmem:[%s262 + $0x18] sm:$0x7f] 0.0
    %267 = vst [vmem:[%s262 + $0x20] sm:$0x7f] 0.0
    %268 = vst [vmem:[%s262 + $0x28] sm:$0x7f] 0.0
    %269 = vst [vmem:[%s262 + $0x30] sm:$0x7f] 0.0
    %270 = vst [vmem:[%s262 + $0x38] sm:$0x7f] 0.0
    %271 = vst [vmem:[%s262 + $0x40] sm:$0x7f] 0.0
    %s272 = scalar_lea.vmem [#allocation2], 1224
    %273 = vst [vmem:[%s272] sm:$0x7f] 0.0
    %s274 = scalar_lea.vmem [#allocation2], 1288
    %275 = vst [vmem:[%s274] sm:$0x7f] 0.0
    %s276 = scalar_lea.vmem [#allocation2], 576
    %277 = vst [vmem:[%s276] sm:$0x7f] 0.0
    %278 = vst [vmem:[%s276 + $0x8] sm:$0x7f] 0.0
    %279 = vst [vmem:[%s276 + $0x10] sm:$0x7f] 0.0
    %280 = vst [vmem:[%s276 + $0x18] sm:$0x7f] 0.0
    %281 = vst [vmem:[%s276 + $0x20] sm:$0x7f] 0.0
    %282 = vst [vmem:[%s276 + $0x28] sm:$0x7f] 0.0
    %283 = vst [vmem:[%s276 + $0x30] sm:$0x7f] 0.0
    %284 = vst [vmem:[%s276 + $0x38] sm:$0x7f] 0.0
    %285 = vst [vmem:[%s276 + $0x40] sm:$0x7f] 0.0
    %s286 = scalar_lea.vmem [#allocation2], 2016
    %287 = vst [vmem:[%s286] sm:$0x7f] 0.0
    %288 = vst [vmem:[%s286 + $0x8] sm:$0x7f] 0.0
    %289 = vst [vmem:[%s286 + $0x10] sm:$0x7f] 0.0
    %290 = vst [vmem:[%s286 + $0x18] sm:$0x7f] 0.0
    %291 = vst [vmem:[%s286 + $0x20] sm:$0x7f] 0.0
    %292 = vst [vmem:[%s286 + $0x28] sm:$0x7f] 0.0
    %293 = vst [vmem:[%s286 + $0x30] sm:$0x7f] 0.0
    %294 = vst [vmem:[%s286 + $0x38] sm:$0x7f] 0.0
    %295 = vst [vmem:[%s286 + $0x40] sm:$0x7f] 0.0
    %s296 = scalar_lea.vmem [#allocation2], 1296
    %297 = vst [vmem:[%s296] sm:$0x7f] 0.0
    %s298 = scalar_lea.vmem [#allocation2], 1360
    %299 = vst [vmem:[%s298] sm:$0x7f] 0.0
    %s300 = scalar_lea.vmem [#allocation2], 648
    %301 = vst [vmem:[%s300] sm:$0x7f] 0.0
    %302 = vst [vmem:[%s300 + $0x8] sm:$0x7f] 0.0
    %303 = vst [vmem:[%s300 + $0x10] sm:$0x7f] 0.0
    %304 = vst [vmem:[%s300 + $0x18] sm:$0x7f] 0.0
    %305 = vst [vmem:[%s300 + $0x20] sm:$0x7f] 0.0
    %306 = vst [vmem:[%s300 + $0x28] sm:$0x7f] 0.0
    %307 = vst [vmem:[%s300 + $0x30] sm:$0x7f] 0.0
    %308 = vst [vmem:[%s300 + $0x38] sm:$0x7f] 0.0
    %309 = vst [vmem:[%s300 + $0x40] sm:$0x7f] 0.0
    %s310 = scalar_lea.vmem [#allocation2], 2088
    %311 = vst [vmem:[%s310] sm:$0x7f] 0.0
    %312 = vst [vmem:[%s310 + $0x8] sm:$0x7f] 0.0
    %313 = vst [vmem:[%s310 + $0x10] sm:$0x7f] 0.0
    %314 = vst [vmem:[%s310 + $0x18] sm:$0x7f] 0.0
    %315 = vst [vmem:[%s310 + $0x20] sm:$0x7f] 0.0
    %316 = vst [vmem:[%s310 + $0x28] sm:$0x7f] 0.0
    %317 = vst [vmem:[%s310 + $0x30] sm:$0x7f] 0.0
    %318 = vst [vmem:[%s310 + $0x38] sm:$0x7f] 0.0
    %319 = vst [vmem:[%s310 + $0x40] sm:$0x7f] 0.0
    %s320 = scalar_lea.vmem [#allocation2], 1368
    %321 = vst [vmem:[%s320] sm:$0x7f] 0.0
    %s322 = scalar_lea.vmem [#allocation2], 1432
    %323 = vst [vmem:[%s322] sm:$0x7f] 0.0
    loop: start=0, step=1, limit=10
    $region54: #{tpu_custom_call.1} parent=1 // loop_pre_header
      _
    $region55: #{tpu_custom_call.1} parent=1 // loop_header
      %s325 = sphi 0, %s329
      %p326 = scmp.ge.s32.totalorder %s325, 10
    $region56: #{tpu_custom_call.1} parent=1 // loop_header_branch
      %328 = sbr.rel (%p326) target = $region60
    $region57: #{tpu_custom_call.1} parent=1 // loop_body
      %s330 = smul.u32 %s325, 128
      %s331 = sld [smem:[#allocation4 + %s330]]
      %s332 = sadd.s32 %s330, 1
      %s333 = sld [smem:[#allocation4 + %s332]]
      %s334 = sadd.s32 %s330, 2
      %s335 = sld [smem:[#allocation4 + %s334]]
      %s336 = sadd.s32 %s330, 3
      %s337 = sld [smem:[#allocation4 + %s336]]
      %s338 = sadd.s32 %s330, 4
      %s339 = sld [smem:[#allocation4 + %s338]]
      %s340 = sadd.s32 %s330, 5
      %s341 = sld [smem:[#allocation4 + %s340]]
      %s342 = sadd.s32 %s330, 6
      %s343 = sld [smem:[#allocation4 + %s342]]
      %s344 = sadd.s32 %s330, 7
      %s345 = sld [smem:[#allocation4 + %s344]]
      %s346 = sadd.s32 %s330, 8
      %s347 = sld [smem:[#allocation4 + %s346]]
      %s348 = sld [smem:[#allocation7 + %s325]]
      %v349 = vld [vmem:[%s0] sm:$0x7f]
      %v350 = vld [vmem:[%s0 + $0x8] sm:$0x7f]
      %v351 = vld [vmem:[%s0 + $0x10] sm:$0x7f]
      %v352 = vld [vmem:[%s0 + $0x18] sm:$0x7f]
      %v353 = vld [vmem:[%s0 + $0x20] sm:$0x7f]
      %v354 = vld [vmem:[%s0 + $0x28] sm:$0x7f]
      %v355 = vstv %s331
      %v356 = vmul.f32 %v349, %v355
      %v357 = vmul.f32 %v350, %v355
      %v358 = vmul.f32 %v351, %v355
      %v359 = vmul.f32 %v352, %v355
      %v360 = vstv %s337
      %v361 = vmul.f32 %v350, %v360
      %v362 = vmul.f32 %v351, %v360
      %v363 = vmul.f32 %v352, %v360
      %v364 = vmul.f32 %v353, %v360
      %v365 = vadd.f32 %v356, %v361
      %v366 = vadd.f32 %v357, %v362
      %v367 = vadd.f32 %v358, %v363
      %v368 = vadd.f32 %v359, %v364
      %v369 = vstv %s343
      %v370 = vmul.f32 %v351, %v369
      %v371 = vmul.f32 %v352, %v369
      %v372 = vmul.f32 %v353, %v369
      %v373 = vmul.f32 %v354, %v369
      %v374 = vadd.f32 %v365, %v370
      %v375 = vadd.f32 %v366, %v371
      %v376 = vadd.f32 %v367, %v372
      %v377 = vadd.f32 %v368, %v373
      %s378 = scalar_lea.vmem %s0, 240
      %v379 = vld [vmem:[%s378] sm:$0x7f]
      %v380 = vld [vmem:[%s378 + $0x8] sm:$0x7f]
      %v381 = vld [vmem:[%s378 + $0x10] sm:$0x7f]
      %v382 = vld [vmem:[%s378 + $0x18] sm:$0x7f]
      %v383 = vld [vmem:[%s378 + $0x20] sm:$0x7f]
      %v384 = vld [vmem:[%s378 + $0x28] sm:$0x7f]
      %v385 = vmul.f32 %v379, %v355
      %v386 = vmul.f32 %v380, %v355
      %v387 = vmul.f32 %v381, %v355
      %v388 = vmul.f32 %v382, %v355
      %v389 = vstv %s333
      %v390 = vmul.f32 %v379, %v389
      %v391 = vmul.f32 %v380, %v389
      %v392 = vmul.f32 %v381, %v389
      %v393 = vmul.f32 %v382, %v389
      %v394 = vadd.f32 %v374, %v390
      %v395 = vadd.f32 %v375, %v391
      %v396 = vadd.f32 %v376, %v392
      %v397 = vadd.f32 %v377, %v393
      %v398 = vmul.f32 %v380, %v360
      %v399 = vmul.f32 %v381, %v360
      %v400 = vmul.f32 %v382, %v360
      %v401 = vmul.f32 %v383, %v360
      %v402 = vadd.f32 %v385, %v398
      %v403 = vadd.f32 %v386, %v399
      %v404 = vadd.f32 %v387, %v400
      %v405 = vadd.f32 %v388, %v401
      %v406 = vstv %s339
      %v407 = vmul.f32 %v380, %v406
      %v408 = vmul.f32 %v381, %v406
      %v409 = vmul.f32 %v382, %v406
      %v410 = vmul.f32 %v383, %v406
      %v411 = vadd.f32 %v394, %v407
      %v412 = vadd.f32 %v395, %v408
      %v413 = vadd.f32 %v396, %v409
      %v414 = vadd.f32 %v397, %v410
      %v415 = vmul.f32 %v381, %v369
      %v416 = vmul.f32 %v382, %v369
      %v417 = vmul.f32 %v383, %v369
      %v418 = vmul.f32 %v384, %v369
      %v419 = vadd.f32 %v402, %v415
      %v420 = vadd.f32 %v403, %v416
      %v421 = vadd.f32 %v404, %v417
      %v422 = vadd.f32 %v405, %v418
      %v423 = vstv %s345
      %v424 = vmul.f32 %v381, %v423
      %v425 = vmul.f32 %v382, %v423
      %v426 = vmul.f32 %v383, %v423
      %v427 = vmul.f32 %v384, %v423
      %v428 = vadd.f32 %v411, %v424
      %v429 = vadd.f32 %v412, %v425
      %v430 = vadd.f32 %v413, %v426
      %v431 = vadd.f32 %v414, %v427
      %s432 = scalar_lea.vmem %s0, 480
      %v433 = vld [vmem:[%s432] sm:$0x7f]
      %v434 = vld [vmem:[%s432 + $0x8] sm:$0x7f]
      %v435 = vld [vmem:[%s432 + $0x10] sm:$0x7f]
      %v436 = vld [vmem:[%s432 + $0x18] sm:$0x7f]
      %v437 = vld [vmem:[%s432 + $0x20] sm:$0x7f]
      %v438 = vld [vmem:[%s432 + $0x28] sm:$0x7f]
      %v439 = vmul.f32 %v433, %v355
      %v440 = vmul.f32 %v434, %v355
      %v441 = vmul.f32 %v435, %v355
      %v442 = vmul.f32 %v436, %v355
      %v443 = vmul.f32 %v433, %v389
      %v444 = vmul.f32 %v434, %v389
      %v445 = vmul.f32 %v435, %v389
      %v446 = vmul.f32 %v436, %v389
      %v447 = vadd.f32 %v419, %v443
      %v448 = vadd.f32 %v420, %v444
      %v449 = vadd.f32 %v421, %v445
      %v450 = vadd.f32 %v422, %v446
      %v451 = vstv %s335
      %v452 = vmul.f32 %v433, %v451
      %v453 = vmul.f32 %v434, %v451
      %v454 = vmul.f32 %v435, %v451
      %v455 = vmul.f32 %v436, %v451
      %v456 = vadd.f32 %v428, %v452
      %v457 = vadd.f32 %v429, %v453
      %v458 = vadd.f32 %v430, %v454
      %v459 = vadd.f32 %v431, %v455
      %v460 = vmul.f32 %v434, %v360
      %v461 = vmul.f32 %v435, %v360
      %v462 = vmul.f32 %v436, %v360
      %v463 = vmul.f32 %v437, %v360
      %v464 = vadd.f32 %v439, %v460
      %v465 = vadd.f32 %v440, %v461
      %v466 = vadd.f32 %v441, %v462
      %v467 = vadd.f32 %v442, %v463
      %v468 = vmul.f32 %v434, %v406
      %v469 = vmul.f32 %v435, %v406
      %v470 = vmul.f32 %v436, %v406
      %v471 = vmul.f32 %v437, %v406
      %v472 = vadd.f32 %v447, %v468
      %v473 = vadd.f32 %v448, %v469
      %v474 = vadd.f32 %v449, %v470
      %v475 = vadd.f32 %v450, %v471
      %v476 = vstv %s341
      %v477 = vmul.f32 %v434, %v476
      %v478 = vmul.f32 %v435, %v476
      %v479 = vmul.f32 %v436, %v476
      %v480 = vmul.f32 %v437, %v476
      %v481 = vadd.f32 %v456, %v477
      %v482 = vadd.f32 %v457, %v478
      %v483 = vadd.f32 %v458, %v479
      %v484 = vadd.f32 %v459, %v480
      %v485 = vmul.f32 %v435, %v369
      %v486 = vmul.f32 %v436, %v369
      %v487 = vmul.f32 %v437, %v369
      %v488 = vmul.f32 %v438, %v369
      %v489 = vadd.f32 %v464, %v485
      %v490 = vadd.f32 %v465, %v486
      %v491 = vadd.f32 %v466, %v487
      %v492 = vadd.f32 %v467, %v488
      %v493 = vmul.f32 %v435, %v423
      %v494 = vmul.f32 %v436, %v423
      %v495 = vmul.f32 %v437, %v423
      %v496 = vmul.f32 %v438, %v423
      %v497 = vadd.f32 %v472, %v493
      %v498 = vadd.f32 %v473, %v494
      %v499 = vadd.f32 %v474, %v495
      %v500 = vadd.f32 %v475, %v496
      %v501 = vstv %s347
      %v502 = vmul.f32 %v435, %v501
      %v503 = vmul.f32 %v436, %v501
      %v504 = vmul.f32 %v437, %v501
      %v505 = vmul.f32 %v438, %v501
      %v506 = vadd.f32 %v481, %v502
      %v507 = vadd.f32 %v482, %v503
      %v508 = vadd.f32 %v483, %v504
      %v509 = vadd.f32 %v484, %v505
      %s510 = scalar_lea.vmem %s0, 720
      %v511 = vld [vmem:[%s510] sm:$0x7f]
      %v512 = vld [vmem:[%s510 + $0x8] sm:$0x7f]
      %v513 = vld [vmem:[%s510 + $0x10] sm:$0x7f]
      %v514 = vld [vmem:[%s510 + $0x18] sm:$0x7f]
      %v515 = vld [vmem:[%s510 + $0x20] sm:$0x7f]
      %v516 = vld [vmem:[%s510 + $0x28] sm:$0x7f]
      %v517 = vmul.f32 %v511, %v355
      %v518 = vmul.f32 %v512, %v355
      %v519 = vmul.f32 %v513, %v355
      %v520 = vmul.f32 %v514, %v355
      %v521 = vmul.f32 %v511, %v389
      %v522 = vmul.f32 %v512, %v389
      %v523 = vmul.f32 %v513, %v389
      %v524 = vmul.f32 %v514, %v389
      %v525 = vadd.f32 %v489, %v521
      %v526 = vadd.f32 %v490, %v522
      %v527 = vadd.f32 %v491, %v523
      %v528 = vadd.f32 %v492, %v524
      %v529 = vmul.f32 %v511, %v451
      %v530 = vmul.f32 %v512, %v451
      %v531 = vmul.f32 %v513, %v451
      %v532 = vmul.f32 %v514, %v451
      %v533 = vadd.f32 %v497, %v529
      %v534 = vadd.f32 %v498, %v530
      %v535 = vadd.f32 %v499, %v531
      %v536 = vadd.f32 %v500, %v532
      %v537 = vmul.f32 %v512, %v360
      %v538 = vmul.f32 %v513, %v360
      %v539 = vmul.f32 %v514, %v360
      %v540 = vmul.f32 %v515, %v360
      %v541 = vadd.f32 %v517, %v537
      %v542 = vadd.f32 %v518, %v538
      %v543 = vadd.f32 %v519, %v539
      %v544 = vadd.f32 %v520, %v540
      %v545 = vmul.f32 %v512, %v406
      %v546 = vmul.f32 %v513, %v406
      %v547 = vmul.f32 %v514, %v406
      %v548 = vmul.f32 %v515, %v406
      %v549 = vadd.f32 %v525, %v545
      %v550 = vadd.f32 %v526, %v546
      %v551 = vadd.f32 %v527, %v547
      %v552 = vadd.f32 %v528, %v548
      %v553 = vmul.f32 %v512, %v476
      %v554 = vmul.f32 %v513, %v476
      %v555 = vmul.f32 %v514, %v476
      %v556 = vmul.f32 %v515, %v476
      %v557 = vadd.f32 %v533, %v553
      %v558 = vadd.f32 %v534, %v554
      %v559 = vadd.f32 %v535, %v555
      %v560 = vadd.f32 %v536, %v556
      %v561 = vmul.f32 %v513, %v369
      %v562 = vmul.f32 %v514, %v369
      %v563 = vmul.f32 %v515, %v369
      %v564 = vmul.f32 %v516, %v369
      %v565 = vadd.f32 %v541, %v561
      %v566 = vadd.f32 %v542, %v562
      %v567 = vadd.f32 %v543, %v563
      %v568 = vadd.f32 %v544, %v564
      %v569 = vmul.f32 %v513, %v423
      %v570 = vmul.f32 %v514, %v423
      %v571 = vmul.f32 %v515, %v423
      %v572 = vmul.f32 %v516, %v423
      %v573 = vadd.f32 %v549, %v569
      %v574 = vadd.f32 %v550, %v570
      %v575 = vadd.f32 %v551, %v571
      %v576 = vadd.f32 %v552, %v572
      %v577 = vmul.f32 %v513, %v501
      %v578 = vmul.f32 %v514, %v501
      %v579 = vmul.f32 %v515, %v501
      %v580 = vmul.f32 %v516, %v501
      %v581 = vadd.f32 %v557, %v577
      %v582 = vadd.f32 %v558, %v578
      %v583 = vadd.f32 %v559, %v579
      %v584 = vadd.f32 %v560, %v580
      %s585 = scalar_lea.vmem %s0, 960
      %v586 = vld [vmem:[%s585] sm:$0x7f]
      %v587 = vld [vmem:[%s585 + $0x8] sm:$0x7f]
      %v588 = vld [vmem:[%s585 + $0x10] sm:$0x7f]
      %v589 = vld [vmem:[%s585 + $0x18] sm:$0x7f]
      %v590 = vld [vmem:[%s585 + $0x20] sm:$0x7f]
      %v591 = vld [vmem:[%s585 + $0x28] sm:$0x7f]
      %v592 = vmul.f32 %v586, %v389
      %v593 = vmul.f32 %v587, %v389
      %v594 = vmul.f32 %v588, %v389
      %v595 = vmul.f32 %v589, %v389
      %v596 = vadd.f32 %v565, %v592
      %v597 = vadd.f32 %v566, %v593
      %v598 = vadd.f32 %v567, %v594
      %v599 = vadd.f32 %v568, %v595
      %v600 = vmul.f32 %v586, %v451
      %v601 = vmul.f32 %v587, %v451
      %v602 = vmul.f32 %v588, %v451
      %v603 = vmul.f32 %v589, %v451
      %v604 = vadd.f32 %v573, %v600
      %v605 = vadd.f32 %v574, %v601
      %v606 = vadd.f32 %v575, %v602
      %v607 = vadd.f32 %v576, %v603
      %v608 = vmul.f32 %v587, %v406
      %v609 = vmul.f32 %v588, %v406
      %v610 = vmul.f32 %v589, %v406
      %v611 = vmul.f32 %v590, %v406
      %v612 = vadd.f32 %v596, %v608
      %v613 = vadd.f32 %v597, %v609
      %v614 = vadd.f32 %v598, %v610
      %v615 = vadd.f32 %v599, %v611
      %v616 = vmul.f32 %v587, %v476
      %v617 = vmul.f32 %v588, %v476
      %v618 = vmul.f32 %v589, %v476
      %v619 = vmul.f32 %v590, %v476
      %v620 = vadd.f32 %v604, %v616
      %v621 = vadd.f32 %v605, %v617
      %v622 = vadd.f32 %v606, %v618
      %v623 = vadd.f32 %v607, %v619
      %v624 = vmul.f32 %v588, %v423
      %v625 = vmul.f32 %v589, %v423
      %v626 = vmul.f32 %v590, %v423
      %v627 = vmul.f32 %v591, %v423
      %v628 = vadd.f32 %v612, %v624
      %v629 = vadd.f32 %v613, %v625
      %v630 = vadd.f32 %v614, %v626
      %v631 = vadd.f32 %v615, %v627
      %v632 = vmul.f32 %v588, %v501
      %v633 = vmul.f32 %v589, %v501
      %v634 = vmul.f32 %v590, %v501
      %v635 = vmul.f32 %v591, %v501
      %v636 = vadd.f32 %v620, %v632
      %v637 = vadd.f32 %v621, %v633
      %v638 = vadd.f32 %v622, %v634
      %v639 = vadd.f32 %v623, %v635
      %s640 = scalar_lea.vmem %s0, 1200
      %v641 = vld [vmem:[%s640] sm:$0x7f]
      %v642 = vld [vmem:[%s640 + $0x8] sm:$0x7f]
      %v643 = vld [vmem:[%s640 + $0x10] sm:$0x7f]
      %v644 = vld [vmem:[%s640 + $0x18] sm:$0x7f]
      %v645 = vld [vmem:[%s640 + $0x20] sm:$0x7f]
      %v646 = vld [vmem:[%s640 + $0x28] sm:$0x7f]
      %v647 = vmul.f32 %v641, %v451
      %v648 = vmul.f32 %v642, %v451
      %v649 = vmul.f32 %v643, %v451
      %v650 = vmul.f32 %v644, %v451
      %v651 = vadd.f32 %v628, %v647
      %v652 = vadd.f32 %v629, %v648
      %v653 = vadd.f32 %v630, %v649
      %v654 = vadd.f32 %v631, %v650
      %v655 = vmul.f32 %v642, %v476
      %v656 = vmul.f32 %v643, %v476
      %v657 = vmul.f32 %v644, %v476
      %v658 = vmul.f32 %v645, %v476
      %v659 = vadd.f32 %v651, %v655
      %v660 = vadd.f32 %v652, %v656
      %v661 = vadd.f32 %v653, %v657
      %v662 = vadd.f32 %v654, %v658
      %v663 = vmul.f32 %v643, %v501
      %v664 = vmul.f32 %v644, %v501
      %v665 = vmul.f32 %v645, %v501
      %v666 = vmul.f32 %v646, %v501
      %v667 = vadd.f32 %v659, %v663
      %v668 = vadd.f32 %v660, %v664
      %v669 = vadd.f32 %v661, %v665
      %v670 = vadd.f32 %v662, %v666
      %v671 = vmax.f32 %v506, %v581
      %v672 = vmax.f32 %v507, %v582
      %v673 = vmax.f32 %v508, %v583
      %v674 = vmax.f32 %v509, %v584
      %v675 = vmax.f32 %v636, %v667
      %v676 = vmax.f32 %v637, %v668
      %v677 = vmax.f32 %v638, %v669
      %v678 = vmax.f32 %v639, %v670
      %v679 = vmax.f32 %v671, %v675
      %v680 = vmax.f32 %v672, %v676
      %v681 = vmax.f32 %v673, %v677
      %v682 = vmax.f32 %v674, %v678
      %vm683 = vcmask 1046528
      %v684 = vsel %vm683, %v679, -inf
      %v685 = vsel %vm683, %v680, -inf
      %v686 = vsel %vm683, %v681, -inf
      %v687 = vsel %vm683, %v682, -inf
      %v688 = vmax.f32 %v684, %v685
      %v689 = vmax.f32 %v686, %v687
      %v690 = vmax.f32 %v688, %v689
      %v691 = vstv %s348
      %v692 = vadd.f32 %v690, %v691
      %v693 = vmax.f32 %v692, 0.0
      %s694 = smul.u32 %s325, 72
      %s695 = sadd.s32 8, %s694
      %s696 = scalar_lea.vmem [#allocation2], %s695
      %697 = vst [vmem:[%s696 + $0x1] sm:$0x3f] %v693
      %s698 = sadd.s32 %s325, 10
      %s699 = smul.u32 %s698, 72
      %s700 = sadd.s32 8, %s699
      %s701 = scalar_lea.vmem [#allocation2], %s700
      %702 = vst [vmem:[%s701] sm:$0x7f] %v693
      %s703 = sadd.s32 %s325, 20
      %s704 = smul.u32 %s703, 72
      %s705 = sadd.s32 8, %s704
      %s706 = scalar_lea.vmem [#allocation2], %s705
      %707 = vst [vmem:[%s706 - $0x1] sm:$0x7e] %v693
      %s708 = scalar_lea.vmem %s0, 32
      %v709 = vld [vmem:[%s708] sm:$0x7f]
      %v710 = vld [vmem:[%s708 + $0x8] sm:$0x7f]
      %v711 = vld [vmem:[%s708 + $0x10] sm:$0x7f]
      %v712 = vld [vmem:[%s708 + $0x18] sm:$0x7f]
      %v713 = vld [vmem:[%s708 + $0x20] sm:$0x7f]
      %v714 = vld [vmem:[%s708 + $0x28] sm:$0x7f]
      %v715 = vmul.f32 %v709, %v355
      %v716 = vmul.f32 %v710, %v355
      %v717 = vmul.f32 %v711, %v355
      %v718 = vmul.f32 %v712, %v355
      %v719 = vmul.f32 %v710, %v360
      %v720 = vmul.f32 %v711, %v360
      %v721 = vmul.f32 %v712, %v360
      %v722 = vmul.f32 %v713, %v360
      %v723 = vadd.f32 %v715, %v719
      %v724 = vadd.f32 %v716, %v720
      %v725 = vadd.f32 %v717, %v721
      %v726 = vadd.f32 %v718, %v722
      %v727 = vmul.f32 %v711, %v369
      %v728 = vmul.f32 %v712, %v369
      %v729 = vmul.f32 %v713, %v369
      %v730 = vmul.f32 %v714, %v369
      %v731 = vadd.f32 %v723, %v727
      %v732 = vadd.f32 %v724, %v728
      %v733 = vadd.f32 %v725, %v729
      %v734 = vadd.f32 %v726, %v730
      %s735 = scalar_lea.vmem %s0, 272
      %v736 = vld [vmem:[%s735] sm:$0x7f]
      %v737 = vld [vmem:[%s735 + $0x8] sm:$0x7f]
      %v738 = vld [vmem:[%s735 + $0x10] sm:$0x7f]
      %v739 = vld [vmem:[%s735 + $0x18] sm:$0x7f]
      %v740 = vld [vmem:[%s735 + $0x20] sm:$0x7f]
      %v741 = vld [vmem:[%s735 + $0x28] sm:$0x7f]
      %v742 = vmul.f32 %v736, %v355
      %v743 = vmul.f32 %v737, %v355
      %v744 = vmul.f32 %v738, %v355
      %v745 = vmul.f32 %v739, %v355
      %v746 = vmul.f32 %v736, %v389
      %v747 = vmul.f32 %v737, %v389
      %v748 = vmul.f32 %v738, %v389
      %v749 = vmul.f32 %v739, %v389
      %v750 = vadd.f32 %v731, %v746
      %v751 = vadd.f32 %v732, %v747
      %v752 = vadd.f32 %v733, %v748
      %v753 = vadd.f32 %v734, %v749
      %v754 = vmul.f32 %v737, %v360
      %v755 = vmul.f32 %v738, %v360
      %v756 = vmul.f32 %v739, %v360
      %v757 = vmul.f32 %v740, %v360
      %v758 = vadd.f32 %v742, %v754
      %v759 = vadd.f32 %v743, %v755
      %v760 = vadd.f32 %v744, %v756
      %v761 = vadd.f32 %v745, %v757
      %v762 = vmul.f32 %v737, %v406
      %v763 = vmul.f32 %v738, %v406
      %v764 = vmul.f32 %v739, %v406
      %v765 = vmul.f32 %v740, %v406
      %v766 = vadd.f32 %v750, %v762
      %v767 = vadd.f32 %v751, %v763
      %v768 = vadd.f32 %v752, %v764
      %v769 = vadd.f32 %v753, %v765
      %v770 = vmul.f32 %v738, %v369
      %v771 = vmul.f32 %v739, %v369
      %v772 = vmul.f32 %v740, %v369
      %v773 = vmul.f32 %v741, %v369
      %v774 = vadd.f32 %v758, %v770
      %v775 = vadd.f32 %v759, %v771
      %v776 = vadd.f32 %v760, %v772
      %v777 = vadd.f32 %v761, %v773
      %v778 = vmul.f32 %v738, %v423
      %v779 = vmul.f32 %v739, %v423
      %v780 = vmul.f32 %v740, %v423
      %v781 = vmul.f32 %v741, %v423
      %v782 = vadd.f32 %v766, %v778
      %v783 = vadd.f32 %v767, %v779
      %v784 = vadd.f32 %v768, %v780
      %v785 = vadd.f32 %v769, %v781
      %s786 = scalar_lea.vmem %s0, 512
      %v787 = vld [vmem:[%s786] sm:$0x7f]
      %v788 = vld [vmem:[%s786 + $0x8] sm:$0x7f]
      %v789 = vld [vmem:[%s786 + $0x10] sm:$0x7f]
      %v790 = vld [vmem:[%s786 + $0x18] sm:$0x7f]
      %v791 = vld [vmem:[%s786 + $0x20] sm:$0x7f]
      %v792 = vld [vmem:[%s786 + $0x28] sm:$0x7f]
      %v793 = vmul.f32 %v787, %v355
      %v794 = vmul.f32 %v788, %v355
      %v795 = vmul.f32 %v789, %v355
      %v796 = vmul.f32 %v790, %v355
      %v797 = vmul.f32 %v787, %v389
      %v798 = vmul.f32 %v788, %v389
      %v799 = vmul.f32 %v789, %v389
      %v800 = vmul.f32 %v790, %v389
      %v801 = vadd.f32 %v774, %v797
      %v802 = vadd.f32 %v775, %v798
      %v803 = vadd.f32 %v776, %v799
      %v804 = vadd.f32 %v777, %v800
      %v805 = vmul.f32 %v787, %v451
      %v806 = vmul.f32 %v788, %v451
      %v807 = vmul.f32 %v789, %v451
      %v808 = vmul.f32 %v790, %v451
      %v809 = vadd.f32 %v782, %v805
      %v810 = vadd.f32 %v783, %v806
      %v811 = vadd.f32 %v784, %v807
      %v812 = vadd.f32 %v785, %v808
      %v813 = vmul.f32 %v788, %v360
      %v814 = vmul.f32 %v789, %v360
      %v815 = vmul.f32 %v790, %v360
      %v816 = vmul.f32 %v791, %v360
      %v817 = vadd.f32 %v793, %v813
      %v818 = vadd.f32 %v794, %v814
      %v819 = vadd.f32 %v795, %v815
      %v820 = vadd.f32 %v796, %v816
      %v821 = vmul.f32 %v788, %v406
      %v822 = vmul.f32 %v789, %v406
      %v823 = vmul.f32 %v790, %v406
      %v824 = vmul.f32 %v791, %v406
      %v825 = vadd.f32 %v801, %v821
      %v826 = vadd.f32 %v802, %v822
      %v827 = vadd.f32 %v803, %v823
      %v828 = vadd.f32 %v804, %v824
      %v829 = vmul.f32 %v788, %v476
      %v830 = vmul.f32 %v789, %v476
      %v831 = vmul.f32 %v790, %v476
      %v832 = vmul.f32 %v791, %v476
      %v833 = vadd.f32 %v809, %v829
      %v834 = vadd.f32 %v810, %v830
      %v835 = vadd.f32 %v811, %v831
      %v836 = vadd.f32 %v812, %v832
      %v837 = vmul.f32 %v789, %v369
      %v838 = vmul.f32 %v790, %v369
      %v839 = vmul.f32 %v791, %v369
      %v840 = vmul.f32 %v792, %v369
      %v841 = vadd.f32 %v817, %v837
      %v842 = vadd.f32 %v818, %v838
      %v843 = vadd.f32 %v819, %v839
      %v844 = vadd.f32 %v820, %v840
      %v845 = vmul.f32 %v789, %v423
      %v846 = vmul.f32 %v790, %v423
      %v847 = vmul.f32 %v791, %v423
      %v848 = vmul.f32 %v792, %v423
      %v849 = vadd.f32 %v825, %v845
      %v850 = vadd.f32 %v826, %v846
      %v851 = vadd.f32 %v827, %v847
      %v852 = vadd.f32 %v828, %v848
      %v853 = vmul.f32 %v789, %v501
      %v854 = vmul.f32 %v790, %v501
      %v855 = vmul.f32 %v791, %v501
      %v856 = vmul.f32 %v792, %v501
      %v857 = vadd.f32 %v833, %v853
      %v858 = vadd.f32 %v834, %v854
      %v859 = vadd.f32 %v835, %v855
      %v860 = vadd.f32 %v836, %v856
      %s861 = scalar_lea.vmem %s0, 752
      %v862 = vld [vmem:[%s861] sm:$0x7f]
      %v863 = vld [vmem:[%s861 + $0x8] sm:$0x7f]
      %v864 = vld [vmem:[%s861 + $0x10] sm:$0x7f]
      %v865 = vld [vmem:[%s861 + $0x18] sm:$0x7f]
      %v866 = vld [vmem:[%s861 + $0x20] sm:$0x7f]
      %v867 = vld [vmem:[%s861 + $0x28] sm:$0x7f]
      %v868 = vmul.f32 %v862, %v355
      %v869 = vmul.f32 %v863, %v355
      %v870 = vmul.f32 %v864, %v355
      %v871 = vmul.f32 %v865, %v355
      %v872 = vmul.f32 %v862, %v389
      %v873 = vmul.f32 %v863, %v389
      %v874 = vmul.f32 %v864, %v389
      %v875 = vmul.f32 %v865, %v389
      %v876 = vadd.f32 %v841, %v872
      %v877 = vadd.f32 %v842, %v873
      %v878 = vadd.f32 %v843, %v874
      %v879 = vadd.f32 %v844, %v875
      %v880 = vmul.f32 %v862, %v451
      %v881 = vmul.f32 %v863, %v451
      %v882 = vmul.f32 %v864, %v451
      %v883 = vmul.f32 %v865, %v451
      %v884 = vadd.f32 %v849, %v880
      %v885 = vadd.f32 %v850, %v881
      %v886 = vadd.f32 %v851, %v882
      %v887 = vadd.f32 %v852, %v883
      %v888 = vmul.f32 %v863, %v360
      %v889 = vmul.f32 %v864, %v360
      %v890 = vmul.f32 %v865, %v360
      %v891 = vmul.f32 %v866, %v360
      %v892 = vadd.f32 %v868, %v888
      %v893 = vadd.f32 %v869, %v889
      %v894 = vadd.f32 %v870, %v890
      %v895 = vadd.f32 %v871, %v891
      %v896 = vmul.f32 %v863, %v406
      %v897 = vmul.f32 %v864, %v406
      %v898 = vmul.f32 %v865, %v406
      %v899 = vmul.f32 %v866, %v406
      %v900 = vadd.f32 %v876, %v896
      %v901 = vadd.f32 %v877, %v897
      %v902 = vadd.f32 %v878, %v898
      %v903 = vadd.f32 %v879, %v899
      %v904 = vmul.f32 %v863, %v476
      %v905 = vmul.f32 %v864, %v476
      %v906 = vmul.f32 %v865, %v476
      %v907 = vmul.f32 %v866, %v476
      %v908 = vadd.f32 %v884, %v904
      %v909 = vadd.f32 %v885, %v905
      %v910 = vadd.f32 %v886, %v906
      %v911 = vadd.f32 %v887, %v907
      %v912 = vmul.f32 %v864, %v369
      %v913 = vmul.f32 %v865, %v369
      %v914 = vmul.f32 %v866, %v369
      %v915 = vmul.f32 %v867, %v369
      %v916 = vadd.f32 %v892, %v912
      %v917 = vadd.f32 %v893, %v913
      %v918 = vadd.f32 %v894, %v914
      %v919 = vadd.f32 %v895, %v915
      %v920 = vmul.f32 %v864, %v423
      %v921 = vmul.f32 %v865, %v423
      %v922 = vmul.f32 %v866, %v423
      %v923 = vmul.f32 %v867, %v423
      %v924 = vadd.f32 %v900, %v920
      %v925 = vadd.f32 %v901, %v921
      %v926 = vadd.f32 %v902, %v922
      %v927 = vadd.f32 %v903, %v923
      %v928 = vmul.f32 %v864, %v501
      %v929 = vmul.f32 %v865, %v501
      %v930 = vmul.f32 %v866, %v501
      %v931 = vmul.f32 %v867, %v501
      %v932 = vadd.f32 %v908, %v928
      %v933 = vadd.f32 %v909, %v929
      %v934 = vadd.f32 %v910, %v930
      %v935 = vadd.f32 %v911, %v931
      %s936 = scalar_lea.vmem %s0, 992
      %v937 = vld [vmem:[%s936] sm:$0x7f]
      %v938 = vld [vmem:[%s936 + $0x8] sm:$0x7f]
      %v939 = vld [vmem:[%s936 + $0x10] sm:$0x7f]
      %v940 = vld [vmem:[%s936 + $0x18] sm:$0x7f]
      %v941 = vld [vmem:[%s936 + $0x20] sm:$0x7f]
      %v942 = vld [vmem:[%s936 + $0x28] sm:$0x7f]
      %v943 = vmul.f32 %v937, %v389
      %v944 = vmul.f32 %v938, %v389
      %v945 = vmul.f32 %v939, %v389
      %v946 = vmul.f32 %v940, %v389
      %v947 = vadd.f32 %v916, %v943
      %v948 = vadd.f32 %v917, %v944
      %v949 = vadd.f32 %v918, %v945
      %v950 = vadd.f32 %v919, %v946
      %v951 = vmul.f32 %v937, %v451
      %v952 = vmul.f32 %v938, %v451
      %v953 = vmul.f32 %v939, %v451
      %v954 = vmul.f32 %v940, %v451
      %v955 = vadd.f32 %v924, %v951
      %v956 = vadd.f32 %v925, %v952
      %v957 = vadd.f32 %v926, %v953
      %v958 = vadd.f32 %v927, %v954
      %v959 = vmul.f32 %v938, %v406
      %v960 = vmul.f32 %v939, %v406
      %v961 = vmul.f32 %v940, %v406
      %v962 = vmul.f32 %v941, %v406
      %v963 = vadd.f32 %v947, %v959
      %v964 = vadd.f32 %v948, %v960
      %v965 = vadd.f32 %v949, %v961
      %v966 = vadd.f32 %v950, %v962
      %v967 = vmul.f32 %v938, %v476
      %v968 = vmul.f32 %v939, %v476
      %v969 = vmul.f32 %v940, %v476
      %v970 = vmul.f32 %v941, %v476
      %v971 = vadd.f32 %v955, %v967
      %v972 = vadd.f32 %v956, %v968
      %v973 = vadd.f32 %v957, %v969
      %v974 = vadd.f32 %v958, %v970
      %v975 = vmul.f32 %v939, %v423
      %v976 = vmul.f32 %v940, %v423
      %v977 = vmul.f32 %v941, %v423
      %v978 = vmul.f32 %v942, %v423
      %v979 = vadd.f32 %v963, %v975
      %v980 = vadd.f32 %v964, %v976
      %v981 = vadd.f32 %v965, %v977
      %v982 = vadd.f32 %v966, %v978
      %v983 = vmul.f32 %v939, %v501
      %v984 = vmul.f32 %v940, %v501
      %v985 = vmul.f32 %v941, %v501
      %v986 = vmul.f32 %v942, %v501
      %v987 = vadd.f32 %v971, %v983
      %v988 = vadd.f32 %v972, %v984
      %v989 = vadd.f32 %v973, %v985
      %v990 = vadd.f32 %v974, %v986
      %s991 = scalar_lea.vmem %s0, 1232
      %v992 = vld [vmem:[%s991] sm:$0x7f]
      %v993 = vld [vmem:[%s991 + $0x8] sm:$0x7f]
      %v994 = vld [vmem:[%s991 + $0x10] sm:$0x7f]
      %v995 = vld [vmem:[%s991 + $0x18] sm:$0x7f]
      %v996 = vld [vmem:[%s991 + $0x20] sm:$0x7f]
      %v997 = vld [vmem:[%s991 + $0x28] sm:$0x7f]
      %v998 = vmul.f32 %v992, %v451
      %v999 = vmul.f32 %v993, %v451
      %v1000 = vmul.f32 %v994, %v451
      %v1001 = vmul.f32 %v995, %v451
      %v1002 = vadd.f32 %v979, %v998
      %v1003 = vadd.f32 %v980, %v999
      %v1004 = vadd.f32 %v981, %v1000
      %v1005 = vadd.f32 %v982, %v1001
      %v1006 = vmul.f32 %v993, %v476
      %v1007 = vmul.f32 %v994, %v476
      %v1008 = vmul.f32 %v995, %v476
      %v1009 = vmul.f32 %v996, %v476
      %v1010 = vadd.f32 %v1002, %v1006
      %v1011 = vadd.f32 %v1003, %v1007
      %v1012 = vadd.f32 %v1004, %v1008
      %v1013 = vadd.f32 %v1005, %v1009
      %v1014 = vmul.f32 %v994, %v501
      %v1015 = vmul.f32 %v995, %v501
      %v1016 = vmul.f32 %v996, %v501
      %v1017 = vmul.f32 %v997, %v501
      %v1018 = vadd.f32 %v1010, %v1014
      %v1019 = vadd.f32 %v1011, %v1015
      %v1020 = vadd.f32 %v1012, %v1016
      %v1021 = vadd.f32 %v1013, %v1017
      %v1022 = vmax.f32 %v857, %v932
      %v1023 = vmax.f32 %v858, %v933
      %v1024 = vmax.f32 %v859, %v934
      %v1025 = vmax.f32 %v860, %v935
      %v1026 = vmax.f32 %v987, %v1018
      %v1027 = vmax.f32 %v988, %v1019
      %v1028 = vmax.f32 %v989, %v1020
      %v1029 = vmax.f32 %v990, %v1021
      %v1030 = vmax.f32 %v1022, %v1026
      %v1031 = vmax.f32 %v1023, %v1027
      %v1032 = vmax.f32 %v1024, %v1028
      %v1033 = vmax.f32 %v1025, %v1029
      %v1034 = vsel %vm683, %v1030, -inf
      %v1035 = vsel %vm683, %v1031, -inf
      %v1036 = vsel %vm683, %v1032, -inf
      %v1037 = vsel %vm683, %v1033, -inf
      %v1038 = vmax.f32 %v1034, %v1035
      %v1039 = vmax.f32 %v1036, %v1037
      %v1040 = vmax.f32 %v1038, %v1039
      %v1041 = vadd.f32 %v1040, %v691
      %v1042 = vmax.f32 %v1041, 0.0
      %s1043 = sadd.s32 16, %s694
      %s1044 = scalar_lea.vmem [#allocation2], %s1043
      %1045 = vst [vmem:[%s1044 + $0x1] sm:$0x3f] %v1042
      %s1046 = sadd.s32 16, %s699
      %s1047 = scalar_lea.vmem [#allocation2], %s1046
      %1048 = vst [vmem:[%s1047] sm:$0x7f] %v1042
      %s1049 = sadd.s32 16, %s704
      %s1050 = scalar_lea.vmem [#allocation2], %s1049
      %1051 = vst [vmem:[%s1050 - $0x1] sm:$0x7e] %v1042
      %s1052 = scalar_lea.vmem %s0, 64
      %v1053 = vld [vmem:[%s1052] sm:$0x7f]
      %v1054 = vld [vmem:[%s1052 + $0x8] sm:$0x7f]
      %v1055 = vld [vmem:[%s1052 + $0x10] sm:$0x7f]
      %v1056 = vld [vmem:[%s1052 + $0x18] sm:$0x7f]
      %v1057 = vld [vmem:[%s1052 + $0x20] sm:$0x7f]
      %v1058 = vld [vmem:[%s1052 + $0x28] sm:$0x7f]
      %v1059 = vmul.f32 %v1053, %v355
      %v1060 = vmul.f32 %v1054, %v355
      %v1061 = vmul.f32 %v1055, %v355
      %v1062 = vmul.f32 %v1056, %v355
      %v1063 = vmul.f32 %v1054, %v360
      %v1064 = vmul.f32 %v1055, %v360
      %v1065 = vmul.f32 %v1056, %v360
      %v1066 = vmul.f32 %v1057, %v360
      %v1067 = vadd.f32 %v1059, %v1063
      %v1068 = vadd.f32 %v1060, %v1064
      %v1069 = vadd.f32 %v1061, %v1065
      %v1070 = vadd.f32 %v1062, %v1066
      %v1071 = vmul.f32 %v1055, %v369
      %v1072 = vmul.f32 %v1056, %v369
      %v1073 = vmul.f32 %v1057, %v369
      %v1074 = vmul.f32 %v1058, %v369
      %v1075 = vadd.f32 %v1067, %v1071
      %v1076 = vadd.f32 %v1068, %v1072
      %v1077 = vadd.f32 %v1069, %v1073
      %v1078 = vadd.f32 %v1070, %v1074
      %s1079 = scalar_lea.vmem %s0, 304
      %v1080 = vld [vmem:[%s1079] sm:$0x7f]
      %v1081 = vld [vmem:[%s1079 + $0x8] sm:$0x7f]
      %v1082 = vld [vmem:[%s1079 + $0x10] sm:$0x7f]
      %v1083 = vld [vmem:[%s1079 + $0x18] sm:$0x7f]
      %v1084 = vld [vmem:[%s1079 + $0x20] sm:$0x7f]
      %v1085 = vld [vmem:[%s1079 + $0x28] sm:$0x7f]
      %v1086 = vmul.f32 %v1080, %v355
      %v1087 = vmul.f32 %v1081, %v355
      %v1088 = vmul.f32 %v1082, %v355
      %v1089 = vmul.f32 %v1083, %v355
      %v1090 = vmul.f32 %v1080, %v389
      %v1091 = vmul.f32 %v1081, %v389
      %v1092 = vmul.f32 %v1082, %v389
      %v1093 = vmul.f32 %v1083, %v389
      %v1094 = vadd.f32 %v1075, %v1090
      %v1095 = vadd.f32 %v1076, %v1091
      %v1096 = vadd.f32 %v1077, %v1092
      %v1097 = vadd.f32 %v1078, %v1093
      %v1098 = vmul.f32 %v1081, %v360
      %v1099 = vmul.f32 %v1082, %v360
      %v1100 = vmul.f32 %v1083, %v360
      %v1101 = vmul.f32 %v1084, %v360
      %v1102 = vadd.f32 %v1086, %v1098
      %v1103 = vadd.f32 %v1087, %v1099
      %v1104 = vadd.f32 %v1088, %v1100
      %v1105 = vadd.f32 %v1089, %v1101
      %v1106 = vmul.f32 %v1081, %v406
      %v1107 = vmul.f32 %v1082, %v406
      %v1108 = vmul.f32 %v1083, %v406
      %v1109 = vmul.f32 %v1084, %v406
      %v1110 = vadd.f32 %v1094, %v1106
      %v1111 = vadd.f32 %v1095, %v1107
      %v1112 = vadd.f32 %v1096, %v1108
      %v1113 = vadd.f32 %v1097, %v1109
      %v1114 = vmul.f32 %v1082, %v369
      %v1115 = vmul.f32 %v1083, %v369
      %v1116 = vmul.f32 %v1084, %v369
      %v1117 = vmul.f32 %v1085, %v369
      %v1118 = vadd.f32 %v1102, %v1114
      %v1119 = vadd.f32 %v1103, %v1115
      %v1120 = vadd.f32 %v1104, %v1116
      %v1121 = vadd.f32 %v1105, %v1117
      %v1122 = vmul.f32 %v1082, %v423
      %v1123 = vmul.f32 %v1083, %v423
      %v1124 = vmul.f32 %v1084, %v423
      %v1125 = vmul.f32 %v1085, %v423
      %v1126 = vadd.f32 %v1110, %v1122
      %v1127 = vadd.f32 %v1111, %v1123
      %v1128 = vadd.f32 %v1112, %v1124
      %v1129 = vadd.f32 %v1113, %v1125
      %s1130 = scalar_lea.vmem %s0, 544
      %v1131 = vld [vmem:[%s1130] sm:$0x7f]
      %v1132 = vld [vmem:[%s1130 + $0x8] sm:$0x7f]
      %v1133 = vld [vmem:[%s1130 + $0x10] sm:$0x7f]
      %v1134 = vld [vmem:[%s1130 + $0x18] sm:$0x7f]
      %v1135 = vld [vmem:[%s1130 + $0x20] sm:$0x7f]
      %v1136 = vld [vmem:[%s1130 + $0x28] sm:$0x7f]
      %v1137 = vmul.f32 %v1131, %v355
      %v1138 = vmul.f32 %v1132, %v355
      %v1139 = vmul.f32 %v1133, %v355
      %v1140 = vmul.f32 %v1134, %v355
      %v1141 = vmul.f32 %v1131, %v389
      %v1142 = vmul.f32 %v1132, %v389
      %v1143 = vmul.f32 %v1133, %v389
      %v1144 = vmul.f32 %v1134, %v389
      %v1145 = vadd.f32 %v1118, %v1141
      %v1146 = vadd.f32 %v1119, %v1142
      %v1147 = vadd.f32 %v1120, %v1143
      %v1148 = vadd.f32 %v1121, %v1144
      %v1149 = vmul.f32 %v1131, %v451
      %v1150 = vmul.f32 %v1132, %v451
      %v1151 = vmul.f32 %v1133, %v451
      %v1152 = vmul.f32 %v1134, %v451
      %v1153 = vadd.f32 %v1126, %v1149
      %v1154 = vadd.f32 %v1127, %v1150
      %v1155 = vadd.f32 %v1128, %v1151
      %v1156 = vadd.f32 %v1129, %v1152
      %v1157 = vmul.f32 %v1132, %v360
      %v1158 = vmul.f32 %v1133, %v360
      %v1159 = vmul.f32 %v1134, %v360
      %v1160 = vmul.f32 %v1135, %v360
      %v1161 = vadd.f32 %v1137, %v1157
      %v1162 = vadd.f32 %v1138, %v1158
      %v1163 = vadd.f32 %v1139, %v1159
      %v1164 = vadd.f32 %v1140, %v1160
      %v1165 = vmul.f32 %v1132, %v406
      %v1166 = vmul.f32 %v1133, %v406
      %v1167 = vmul.f32 %v1134, %v406
      %v1168 = vmul.f32 %v1135, %v406
      %v1169 = vadd.f32 %v1145, %v1165
      %v1170 = vadd.f32 %v1146, %v1166
      %v1171 = vadd.f32 %v1147, %v1167
      %v1172 = vadd.f32 %v1148, %v1168
      %v1173 = vmul.f32 %v1132, %v476
      %v1174 = vmul.f32 %v1133, %v476
      %v1175 = vmul.f32 %v1134, %v476
      %v1176 = vmul.f32 %v1135, %v476
      %v1177 = vadd.f32 %v1153, %v1173
      %v1178 = vadd.f32 %v1154, %v1174
      %v1179 = vadd.f32 %v1155, %v1175
      %v1180 = vadd.f32 %v1156, %v1176
      %v1181 = vmul.f32 %v1133, %v369
      %v1182 = vmul.f32 %v1134, %v369
      %v1183 = vmul.f32 %v1135, %v369
      %v1184 = vmul.f32 %v1136, %v369
      %v1185 = vadd.f32 %v1161, %v1181
      %v1186 = vadd.f32 %v1162, %v1182
      %v1187 = vadd.f32 %v1163, %v1183
      %v1188 = vadd.f32 %v1164, %v1184
      %v1189 = vmul.f32 %v1133, %v423
      %v1190 = vmul.f32 %v1134, %v423
      %v1191 = vmul.f32 %v1135, %v423
      %v1192 = vmul.f32 %v1136, %v423
      %v1193 = vadd.f32 %v1169, %v1189
      %v1194 = vadd.f32 %v1170, %v1190
      %v1195 = vadd.f32 %v1171, %v1191
      %v1196 = vadd.f32 %v1172, %v1192
      %v1197 = vmul.f32 %v1133, %v501
      %v1198 = vmul.f32 %v1134, %v501
      %v1199 = vmul.f32 %v1135, %v501
      %v1200 = vmul.f32 %v1136, %v501
      %v1201 = vadd.f32 %v1177, %v1197
      %v1202 = vadd.f32 %v1178, %v1198
      %v1203 = vadd.f32 %v1179, %v1199
      %v1204 = vadd.f32 %v1180, %v1200
      %s1205 = scalar_lea.vmem %s0, 784
      %v1206 = vld [vmem:[%s1205] sm:$0x7f]
      %v1207 = vld [vmem:[%s1205 + $0x8] sm:$0x7f]
      %v1208 = vld [vmem:[%s1205 + $0x10] sm:$0x7f]
      %v1209 = vld [vmem:[%s1205 + $0x18] sm:$0x7f]
      %v1210 = vld [vmem:[%s1205 + $0x20] sm:$0x7f]
      %v1211 = vld [vmem:[%s1205 + $0x28] sm:$0x7f]
      %v1212 = vmul.f32 %v1206, %v355
      %v1213 = vmul.f32 %v1207, %v355
      %v1214 = vmul.f32 %v1208, %v355
      %v1215 = vmul.f32 %v1209, %v355
      %v1216 = vmul.f32 %v1206, %v389
      %v1217 = vmul.f32 %v1207, %v389
      %v1218 = vmul.f32 %v1208, %v389
      %v1219 = vmul.f32 %v1209, %v389
      %v1220 = vadd.f32 %v1185, %v1216
      %v1221 = vadd.f32 %v1186, %v1217
      %v1222 = vadd.f32 %v1187, %v1218
      %v1223 = vadd.f32 %v1188, %v1219
      %v1224 = vmul.f32 %v1206, %v451
      %v1225 = vmul.f32 %v1207, %v451
      %v1226 = vmul.f32 %v1208, %v451
      %v1227 = vmul.f32 %v1209, %v451
      %v1228 = vadd.f32 %v1193, %v1224
      %v1229 = vadd.f32 %v1194, %v1225
      %v1230 = vadd.f32 %v1195, %v1226
      %v1231 = vadd.f32 %v1196, %v1227
      %v1232 = vmul.f32 %v1207, %v360
      %v1233 = vmul.f32 %v1208, %v360
      %v1234 = vmul.f32 %v1209, %v360
      %v1235 = vmul.f32 %v1210, %v360
      %v1236 = vadd.f32 %v1212, %v1232
      %v1237 = vadd.f32 %v1213, %v1233
      %v1238 = vadd.f32 %v1214, %v1234
      %v1239 = vadd.f32 %v1215, %v1235
      %v1240 = vmul.f32 %v1207, %v406
      %v1241 = vmul.f32 %v1208, %v406
      %v1242 = vmul.f32 %v1209, %v406
      %v1243 = vmul.f32 %v1210, %v406
      %v1244 = vadd.f32 %v1220, %v1240
      %v1245 = vadd.f32 %v1221, %v1241
      %v1246 = vadd.f32 %v1222, %v1242
      %v1247 = vadd.f32 %v1223, %v1243
      %v1248 = vmul.f32 %v1207, %v476
      %v1249 = vmul.f32 %v1208, %v476
      %v1250 = vmul.f32 %v1209, %v476
      %v1251 = vmul.f32 %v1210, %v476
      %v1252 = vadd.f32 %v1228, %v1248
      %v1253 = vadd.f32 %v1229, %v1249
      %v1254 = vadd.f32 %v1230, %v1250
      %v1255 = vadd.f32 %v1231, %v1251
      %v1256 = vmul.f32 %v1208, %v369
      %v1257 = vmul.f32 %v1209, %v369
      %v1258 = vmul.f32 %v1210, %v369
      %v1259 = vmul.f32 %v1211, %v369
      %v1260 = vadd.f32 %v1236, %v1256
      %v1261 = vadd.f32 %v1237, %v1257
      %v1262 = vadd.f32 %v1238, %v1258
      %v1263 = vadd.f32 %v1239, %v1259
      %v1264 = vmul.f32 %v1208, %v423
      %v1265 = vmul.f32 %v1209, %v423
      %v1266 = vmul.f32 %v1210, %v423
      %v1267 = vmul.f32 %v1211, %v423
      %v1268 = vadd.f32 %v1244, %v1264
      %v1269 = vadd.f32 %v1245, %v1265
      %v1270 = vadd.f32 %v1246, %v1266
      %v1271 = vadd.f32 %v1247, %v1267
      %v1272 = vmul.f32 %v1208, %v501
      %v1273 = vmul.f32 %v1209, %v501
      %v1274 = vmul.f32 %v1210, %v501
      %v1275 = vmul.f32 %v1211, %v501
      %v1276 = vadd.f32 %v1252, %v1272
      %v1277 = vadd.f32 %v1253, %v1273
      %v1278 = vadd.f32 %v1254, %v1274
      %v1279 = vadd.f32 %v1255, %v1275
      %s1280 = scalar_lea.vmem %s0, 1024
      %v1281 = vld [vmem:[%s1280] sm:$0x7f]
      %v1282 = vld [vmem:[%s1280 + $0x8] sm:$0x7f]
      %v1283 = vld [vmem:[%s1280 + $0x10] sm:$0x7f]
      %v1284 = vld [vmem:[%s1280 + $0x18] sm:$0x7f]
      %v1285 = vld [vmem:[%s1280 + $0x20] sm:$0x7f]
      %v1286 = vld [vmem:[%s1280 + $0x28] sm:$0x7f]
      %v1287 = vmul.f32 %v1281, %v389
      %v1288 = vmul.f32 %v1282, %v389
      %v1289 = vmul.f32 %v1283, %v389
      %v1290 = vmul.f32 %v1284, %v389
      %v1291 = vadd.f32 %v1260, %v1287
      %v1292 = vadd.f32 %v1261, %v1288
      %v1293 = vadd.f32 %v1262, %v1289
      %v1294 = vadd.f32 %v1263, %v1290
      %v1295 = vmul.f32 %v1281, %v451
      %v1296 = vmul.f32 %v1282, %v451
      %v1297 = vmul.f32 %v1283, %v451
      %v1298 = vmul.f32 %v1284, %v451
      %v1299 = vadd.f32 %v1268, %v1295
      %v1300 = vadd.f32 %v1269, %v1296
      %v1301 = vadd.f32 %v1270, %v1297
      %v1302 = vadd.f32 %v1271, %v1298
      %v1303 = vmul.f32 %v1282, %v406
      %v1304 = vmul.f32 %v1283, %v406
      %v1305 = vmul.f32 %v1284, %v406
      %v1306 = vmul.f32 %v1285, %v406
      %v1307 = vadd.f32 %v1291, %v1303
      %v1308 = vadd.f32 %v1292, %v1304
      %v1309 = vadd.f32 %v1293, %v1305
      %v1310 = vadd.f32 %v1294, %v1306
      %v1311 = vmul.f32 %v1282, %v476
      %v1312 = vmul.f32 %v1283, %v476
      %v1313 = vmul.f32 %v1284, %v476
      %v1314 = vmul.f32 %v1285, %v476
      %v1315 = vadd.f32 %v1299, %v1311
      %v1316 = vadd.f32 %v1300, %v1312
      %v1317 = vadd.f32 %v1301, %v1313
      %v1318 = vadd.f32 %v1302, %v1314
      %v1319 = vmul.f32 %v1283, %v423
      %v1320 = vmul.f32 %v1284, %v423
      %v1321 = vmul.f32 %v1285, %v423
      %v1322 = vmul.f32 %v1286, %v423
      %v1323 = vadd.f32 %v1307, %v1319
      %v1324 = vadd.f32 %v1308, %v1320
      %v1325 = vadd.f32 %v1309, %v1321
      %v1326 = vadd.f32 %v1310, %v1322
      %v1327 = vmul.f32 %v1283, %v501
      %v1328 = vmul.f32 %v1284, %v501
      %v1329 = vmul.f32 %v1285, %v501
      %v1330 = vmul.f32 %v1286, %v501
      %v1331 = vadd.f32 %v1315, %v1327
      %v1332 = vadd.f32 %v1316, %v1328
      %v1333 = vadd.f32 %v1317, %v1329
      %v1334 = vadd.f32 %v1318, %v1330
      %s1335 = scalar_lea.vmem %s0, 1264
      %v1336 = vld [vmem:[%s1335] sm:$0x7f]
      %v1337 = vld [vmem:[%s1335 + $0x8] sm:$0x7f]
      %v1338 = vld [vmem:[%s1335 + $0x10] sm:$0x7f]
      %v1339 = vld [vmem:[%s1335 + $0x18] sm:$0x7f]
      %v1340 = vld [vmem:[%s1335 + $0x20] sm:$0x7f]
      %v1341 = vld [vmem:[%s1335 + $0x28] sm:$0x7f]
      %v1342 = vmul.f32 %v1336, %v451
      %v1343 = vmul.f32 %v1337, %v451
      %v1344 = vmul.f32 %v1338, %v451
      %v1345 = vmul.f32 %v1339, %v451
      %v1346 = vadd.f32 %v1323, %v1342
      %v1347 = vadd.f32 %v1324, %v1343
      %v1348 = vadd.f32 %v1325, %v1344
      %v1349 = vadd.f32 %v1326, %v1345
      %v1350 = vmul.f32 %v1337, %v476
      %v1351 = vmul.f32 %v1338, %v476
      %v1352 = vmul.f32 %v1339, %v476
      %v1353 = vmul.f32 %v1340, %v476
      %v1354 = vadd.f32 %v1346, %v1350
      %v1355 = vadd.f32 %v1347, %v1351
      %v1356 = vadd.f32 %v1348, %v1352
      %v1357 = vadd.f32 %v1349, %v1353
      %v1358 = vmul.f32 %v1338, %v501
      %v1359 = vmul.f32 %v1339, %v501
      %v1360 = vmul.f32 %v1340, %v501
      %v1361 = vmul.f32 %v1341, %v501
      %v1362 = vadd.f32 %v1354, %v1358
      %v1363 = vadd.f32 %v1355, %v1359
      %v1364 = vadd.f32 %v1356, %v1360
      %v1365 = vadd.f32 %v1357, %v1361
      %v1366 = vmax.f32 %v1201, %v1276
      %v1367 = vmax.f32 %v1202, %v1277
      %v1368 = vmax.f32 %v1203, %v1278
      %v1369 = vmax.f32 %v1204, %v1279
      %v1370 = vmax.f32 %v1331, %v1362
      %v1371 = vmax.f32 %v1332, %v1363
      %v1372 = vmax.f32 %v1333, %v1364
      %v1373 = vmax.f32 %v1334, %v1365
      %v1374 = vmax.f32 %v1366, %v1370
      %v1375 = vmax.f32 %v1367, %v1371
      %v1376 = vmax.f32 %v1368, %v1372
      %v1377 = vmax.f32 %v1369, %v1373
      %v1378 = vsel %vm683, %v1374, -inf
      %v1379 = vsel %vm683, %v1375, -inf
      %v1380 = vsel %vm683, %v1376, -inf
      %v1381 = vsel %vm683, %v1377, -inf
      %v1382 = vmax.f32 %v1378, %v1379
      %v1383 = vmax.f32 %v1380, %v1381
      %v1384 = vmax.f32 %v1382, %v1383
      %v1385 = vadd.f32 %v1384, %v691
      %v1386 = vmax.f32 %v1385, 0.0
      %s1387 = sadd.s32 24, %s694
      %s1388 = scalar_lea.vmem [#allocation2], %s1387
      %1389 = vst [vmem:[%s1388 + $0x1] sm:$0x3f] %v1386
      %s1390 = sadd.s32 24, %s699
      %s1391 = scalar_lea.vmem [#allocation2], %s1390
      %1392 = vst [vmem:[%s1391] sm:$0x7f] %v1386
      %s1393 = sadd.s32 24, %s704
      %s1394 = scalar_lea.vmem [#allocation2], %s1393
      %1395 = vst [vmem:[%s1394 - $0x1] sm:$0x7e] %v1386
      %s1396 = scalar_lea.vmem %s0, 96
      %v1397 = vld [vmem:[%s1396] sm:$0x7f]
      %v1398 = vld [vmem:[%s1396 + $0x8] sm:$0x7f]
      %v1399 = vld [vmem:[%s1396 + $0x10] sm:$0x7f]
      %v1400 = vld [vmem:[%s1396 + $0x18] sm:$0x7f]
      %v1401 = vld [vmem:[%s1396 + $0x20] sm:$0x7f]
      %v1402 = vld [vmem:[%s1396 + $0x28] sm:$0x7f]
      %v1403 = vmul.f32 %v1397, %v355
      %v1404 = vmul.f32 %v1398, %v355
      %v1405 = vmul.f32 %v1399, %v355
      %v1406 = vmul.f32 %v1400, %v355
      %v1407 = vmul.f32 %v1398, %v360
      %v1408 = vmul.f32 %v1399, %v360
      %v1409 = vmul.f32 %v1400, %v360
      %v1410 = vmul.f32 %v1401, %v360
      %v1411 = vadd.f32 %v1403, %v1407
      %v1412 = vadd.f32 %v1404, %v1408
      %v1413 = vadd.f32 %v1405, %v1409
      %v1414 = vadd.f32 %v1406, %v1410
      %v1415 = vmul.f32 %v1399, %v369
      %v1416 = vmul.f32 %v1400, %v369
      %v1417 = vmul.f32 %v1401, %v369
      %v1418 = vmul.f32 %v1402, %v369
      %v1419 = vadd.f32 %v1411, %v1415
      %v1420 = vadd.f32 %v1412, %v1416
      %v1421 = vadd.f32 %v1413, %v1417
      %v1422 = vadd.f32 %v1414, %v1418
      %s1423 = scalar_lea.vmem %s0, 336
      %v1424 = vld [vmem:[%s1423] sm:$0x7f]
      %v1425 = vld [vmem:[%s1423 + $0x8] sm:$0x7f]
      %v1426 = vld [vmem:[%s1423 + $0x10] sm:$0x7f]
      %v1427 = vld [vmem:[%s1423 + $0x18] sm:$0x7f]
      %v1428 = vld [vmem:[%s1423 + $0x20] sm:$0x7f]
      %v1429 = vld [vmem:[%s1423 + $0x28] sm:$0x7f]
      %v1430 = vmul.f32 %v1424, %v355
      %v1431 = vmul.f32 %v1425, %v355
      %v1432 = vmul.f32 %v1426, %v355
      %v1433 = vmul.f32 %v1427, %v355
      %v1434 = vmul.f32 %v1424, %v389
      %v1435 = vmul.f32 %v1425, %v389
      %v1436 = vmul.f32 %v1426, %v389
      %v1437 = vmul.f32 %v1427, %v389
      %v1438 = vadd.f32 %v1419, %v1434
      %v1439 = vadd.f32 %v1420, %v1435
      %v1440 = vadd.f32 %v1421, %v1436
      %v1441 = vadd.f32 %v1422, %v1437
      %v1442 = vmul.f32 %v1425, %v360
      %v1443 = vmul.f32 %v1426, %v360
      %v1444 = vmul.f32 %v1427, %v360
      %v1445 = vmul.f32 %v1428, %v360
      %v1446 = vadd.f32 %v1430, %v1442
      %v1447 = vadd.f32 %v1431, %v1443
      %v1448 = vadd.f32 %v1432, %v1444
      %v1449 = vadd.f32 %v1433, %v1445
      %v1450 = vmul.f32 %v1425, %v406
      %v1451 = vmul.f32 %v1426, %v406
      %v1452 = vmul.f32 %v1427, %v406
      %v1453 = vmul.f32 %v1428, %v406
      %v1454 = vadd.f32 %v1438, %v1450
      %v1455 = vadd.f32 %v1439, %v1451
      %v1456 = vadd.f32 %v1440, %v1452
      %v1457 = vadd.f32 %v1441, %v1453
      %v1458 = vmul.f32 %v1426, %v369
      %v1459 = vmul.f32 %v1427, %v369
      %v1460 = vmul.f32 %v1428, %v369
      %v1461 = vmul.f32 %v1429, %v369
      %v1462 = vadd.f32 %v1446, %v1458
      %v1463 = vadd.f32 %v1447, %v1459
      %v1464 = vadd.f32 %v1448, %v1460
      %v1465 = vadd.f32 %v1449, %v1461
      %v1466 = vmul.f32 %v1426, %v423
      %v1467 = vmul.f32 %v1427, %v423
      %v1468 = vmul.f32 %v1428, %v423
      %v1469 = vmul.f32 %v1429, %v423
      %v1470 = vadd.f32 %v1454, %v1466
      %v1471 = vadd.f32 %v1455, %v1467
      %v1472 = vadd.f32 %v1456, %v1468
      %v1473 = vadd.f32 %v1457, %v1469
      %s1474 = scalar_lea.vmem %s0, 576
      %v1475 = vld [vmem:[%s1474] sm:$0x7f]
      %v1476 = vld [vmem:[%s1474 + $0x8] sm:$0x7f]
      %v1477 = vld [vmem:[%s1474 + $0x10] sm:$0x7f]
      %v1478 = vld [vmem:[%s1474 + $0x18] sm:$0x7f]
      %v1479 = vld [vmem:[%s1474 + $0x20] sm:$0x7f]
      %v1480 = vld [vmem:[%s1474 + $0x28] sm:$0x7f]
      %v1481 = vmul.f32 %v1475, %v355
      %v1482 = vmul.f32 %v1476, %v355
      %v1483 = vmul.f32 %v1477, %v355
      %v1484 = vmul.f32 %v1478, %v355
      %v1485 = vmul.f32 %v1475, %v389
      %v1486 = vmul.f32 %v1476, %v389
      %v1487 = vmul.f32 %v1477, %v389
      %v1488 = vmul.f32 %v1478, %v389
      %v1489 = vadd.f32 %v1462, %v1485
      %v1490 = vadd.f32 %v1463, %v1486
      %v1491 = vadd.f32 %v1464, %v1487
      %v1492 = vadd.f32 %v1465, %v1488
      %v1493 = vmul.f32 %v1475, %v451
      %v1494 = vmul.f32 %v1476, %v451
      %v1495 = vmul.f32 %v1477, %v451
      %v1496 = vmul.f32 %v1478, %v451
      %v1497 = vadd.f32 %v1470, %v1493
      %v1498 = vadd.f32 %v1471, %v1494
      %v1499 = vadd.f32 %v1472, %v1495
      %v1500 = vadd.f32 %v1473, %v1496
      %v1501 = vmul.f32 %v1476, %v360
      %v1502 = vmul.f32 %v1477, %v360
      %v1503 = vmul.f32 %v1478, %v360
      %v1504 = vmul.f32 %v1479, %v360
      %v1505 = vadd.f32 %v1481, %v1501
      %v1506 = vadd.f32 %v1482, %v1502
      %v1507 = vadd.f32 %v1483, %v1503
      %v1508 = vadd.f32 %v1484, %v1504
      %v1509 = vmul.f32 %v1476, %v406
      %v1510 = vmul.f32 %v1477, %v406
      %v1511 = vmul.f32 %v1478, %v406
      %v1512 = vmul.f32 %v1479, %v406
      %v1513 = vadd.f32 %v1489, %v1509
      %v1514 = vadd.f32 %v1490, %v1510
      %v1515 = vadd.f32 %v1491, %v1511
      %v1516 = vadd.f32 %v1492, %v1512
      %v1517 = vmul.f32 %v1476, %v476
      %v1518 = vmul.f32 %v1477, %v476
      %v1519 = vmul.f32 %v1478, %v476
      %v1520 = vmul.f32 %v1479, %v476
      %v1521 = vadd.f32 %v1497, %v1517
      %v1522 = vadd.f32 %v1498, %v1518
      %v1523 = vadd.f32 %v1499, %v1519
      %v1524 = vadd.f32 %v1500, %v1520
      %v1525 = vmul.f32 %v1477, %v369
      %v1526 = vmul.f32 %v1478, %v369
      %v1527 = vmul.f32 %v1479, %v369
      %v1528 = vmul.f32 %v1480, %v369
      %v1529 = vadd.f32 %v1505, %v1525
      %v1530 = vadd.f32 %v1506, %v1526
      %v1531 = vadd.f32 %v1507, %v1527
      %v1532 = vadd.f32 %v1508, %v1528
      %v1533 = vmul.f32 %v1477, %v423
      %v1534 = vmul.f32 %v1478, %v423
      %v1535 = vmul.f32 %v1479, %v423
      %v1536 = vmul.f32 %v1480, %v423
      %v1537 = vadd.f32 %v1513, %v1533
      %v1538 = vadd.f32 %v1514, %v1534
      %v1539 = vadd.f32 %v1515, %v1535
      %v1540 = vadd.f32 %v1516, %v1536
      %v1541 = vmul.f32 %v1477, %v501
      %v1542 = vmul.f32 %v1478, %v501
      %v1543 = vmul.f32 %v1479, %v501
      %v1544 = vmul.f32 %v1480, %v501
      %v1545 = vadd.f32 %v1521, %v1541
      %v1546 = vadd.f32 %v1522, %v1542
      %v1547 = vadd.f32 %v1523, %v1543
      %v1548 = vadd.f32 %v1524, %v1544
      %s1549 = scalar_lea.vmem %s0, 816
      %v1550 = vld [vmem:[%s1549] sm:$0x7f]
      %v1551 = vld [vmem:[%s1549 + $0x8] sm:$0x7f]
      %v1552 = vld [vmem:[%s1549 + $0x10] sm:$0x7f]
      %v1553 = vld [vmem:[%s1549 + $0x18] sm:$0x7f]
      %v1554 = vld [vmem:[%s1549 + $0x20] sm:$0x7f]
      %v1555 = vld [vmem:[%s1549 + $0x28] sm:$0x7f]
      %v1556 = vmul.f32 %v1550, %v355
      %v1557 = vmul.f32 %v1551, %v355
      %v1558 = vmul.f32 %v1552, %v355
      %v1559 = vmul.f32 %v1553, %v355
      %v1560 = vmul.f32 %v1550, %v389
      %v1561 = vmul.f32 %v1551, %v389
      %v1562 = vmul.f32 %v1552, %v389
      %v1563 = vmul.f32 %v1553, %v389
      %v1564 = vadd.f32 %v1529, %v1560
      %v1565 = vadd.f32 %v1530, %v1561
      %v1566 = vadd.f32 %v1531, %v1562
      %v1567 = vadd.f32 %v1532, %v1563
      %v1568 = vmul.f32 %v1550, %v451
      %v1569 = vmul.f32 %v1551, %v451
      %v1570 = vmul.f32 %v1552, %v451
      %v1571 = vmul.f32 %v1553, %v451
      %v1572 = vadd.f32 %v1537, %v1568
      %v1573 = vadd.f32 %v1538, %v1569
      %v1574 = vadd.f32 %v1539, %v1570
      %v1575 = vadd.f32 %v1540, %v1571
      %v1576 = vmul.f32 %v1551, %v360
      %v1577 = vmul.f32 %v1552, %v360
      %v1578 = vmul.f32 %v1553, %v360
      %v1579 = vmul.f32 %v1554, %v360
      %v1580 = vadd.f32 %v1556, %v1576
      %v1581 = vadd.f32 %v1557, %v1577
      %v1582 = vadd.f32 %v1558, %v1578
      %v1583 = vadd.f32 %v1559, %v1579
      %v1584 = vmul.f32 %v1551, %v406
      %v1585 = vmul.f32 %v1552, %v406
      %v1586 = vmul.f32 %v1553, %v406
      %v1587 = vmul.f32 %v1554, %v406
      %v1588 = vadd.f32 %v1564, %v1584
      %v1589 = vadd.f32 %v1565, %v1585
      %v1590 = vadd.f32 %v1566, %v1586
      %v1591 = vadd.f32 %v1567, %v1587
      %v1592 = vmul.f32 %v1551, %v476
      %v1593 = vmul.f32 %v1552, %v476
      %v1594 = vmul.f32 %v1553, %v476
      %v1595 = vmul.f32 %v1554, %v476
      %v1596 = vadd.f32 %v1572, %v1592
      %v1597 = vadd.f32 %v1573, %v1593
      %v1598 = vadd.f32 %v1574, %v1594
      %v1599 = vadd.f32 %v1575, %v1595
      %v1600 = vmul.f32 %v1552, %v369
      %v1601 = vmul.f32 %v1553, %v369
      %v1602 = vmul.f32 %v1554, %v369
      %v1603 = vmul.f32 %v1555, %v369
      %v1604 = vadd.f32 %v1580, %v1600
      %v1605 = vadd.f32 %v1581, %v1601
      %v1606 = vadd.f32 %v1582, %v1602
      %v1607 = vadd.f32 %v1583, %v1603
      %v1608 = vmul.f32 %v1552, %v423
      %v1609 = vmul.f32 %v1553, %v423
      %v1610 = vmul.f32 %v1554, %v423
      %v1611 = vmul.f32 %v1555, %v423
      %v1612 = vadd.f32 %v1588, %v1608
      %v1613 = vadd.f32 %v1589, %v1609
      %v1614 = vadd.f32 %v1590, %v1610
      %v1615 = vadd.f32 %v1591, %v1611
      %v1616 = vmul.f32 %v1552, %v501
      %v1617 = vmul.f32 %v1553, %v501
      %v1618 = vmul.f32 %v1554, %v501
      %v1619 = vmul.f32 %v1555, %v501
      %v1620 = vadd.f32 %v1596, %v1616
      %v1621 = vadd.f32 %v1597, %v1617
      %v1622 = vadd.f32 %v1598, %v1618
      %v1623 = vadd.f32 %v1599, %v1619
      %s1624 = scalar_lea.vmem %s0, 1056
      %v1625 = vld [vmem:[%s1624] sm:$0x7f]
      %v1626 = vld [vmem:[%s1624 + $0x8] sm:$0x7f]
      %v1627 = vld [vmem:[%s1624 + $0x10] sm:$0x7f]
      %v1628 = vld [vmem:[%s1624 + $0x18] sm:$0x7f]
      %v1629 = vld [vmem:[%s1624 + $0x20] sm:$0x7f]
      %v1630 = vld [vmem:[%s1624 + $0x28] sm:$0x7f]
      %v1631 = vmul.f32 %v1625, %v389
      %v1632 = vmul.f32 %v1626, %v389
      %v1633 = vmul.f32 %v1627, %v389
      %v1634 = vmul.f32 %v1628, %v389
      %v1635 = vadd.f32 %v1604, %v1631
      %v1636 = vadd.f32 %v1605, %v1632
      %v1637 = vadd.f32 %v1606, %v1633
      %v1638 = vadd.f32 %v1607, %v1634
      %v1639 = vmul.f32 %v1625, %v451
      %v1640 = vmul.f32 %v1626, %v451
      %v1641 = vmul.f32 %v1627, %v451
      %v1642 = vmul.f32 %v1628, %v451
      %v1643 = vadd.f32 %v1612, %v1639
      %v1644 = vadd.f32 %v1613, %v1640
      %v1645 = vadd.f32 %v1614, %v1641
      %v1646 = vadd.f32 %v1615, %v1642
      %v1647 = vmul.f32 %v1626, %v406
      %v1648 = vmul.f32 %v1627, %v406
      %v1649 = vmul.f32 %v1628, %v406
      %v1650 = vmul.f32 %v1629, %v406
      %v1651 = vadd.f32 %v1635, %v1647
      %v1652 = vadd.f32 %v1636, %v1648
      %v1653 = vadd.f32 %v1637, %v1649
      %v1654 = vadd.f32 %v1638, %v1650
      %v1655 = vmul.f32 %v1626, %v476
      %v1656 = vmul.f32 %v1627, %v476
      %v1657 = vmul.f32 %v1628, %v476
      %v1658 = vmul.f32 %v1629, %v476
      %v1659 = vadd.f32 %v1643, %v1655
      %v1660 = vadd.f32 %v1644, %v1656
      %v1661 = vadd.f32 %v1645, %v1657
      %v1662 = vadd.f32 %v1646, %v1658
      %v1663 = vmul.f32 %v1627, %v423
      %v1664 = vmul.f32 %v1628, %v423
      %v1665 = vmul.f32 %v1629, %v423
      %v1666 = vmul.f32 %v1630, %v423
      %v1667 = vadd.f32 %v1651, %v1663
      %v1668 = vadd.f32 %v1652, %v1664
      %v1669 = vadd.f32 %v1653, %v1665
      %v1670 = vadd.f32 %v1654, %v1666
      %v1671 = vmul.f32 %v1627, %v501
      %v1672 = vmul.f32 %v1628, %v501
      %v1673 = vmul.f32 %v1629, %v501
      %v1674 = vmul.f32 %v1630, %v501
      %v1675 = vadd.f32 %v1659, %v1671
      %v1676 = vadd.f32 %v1660, %v1672
      %v1677 = vadd.f32 %v1661, %v1673
      %v1678 = vadd.f32 %v1662, %v1674
      %s1679 = scalar_lea.vmem %s0, 1296
      %v1680 = vld [vmem:[%s1679] sm:$0x7f]
      %v1681 = vld [vmem:[%s1679 + $0x8] sm:$0x7f]
      %v1682 = vld [vmem:[%s1679 + $0x10] sm:$0x7f]
      %v1683 = vld [vmem:[%s1679 + $0x18] sm:$0x7f]
      %v1684 = vld [vmem:[%s1679 + $0x20] sm:$0x7f]
      %v1685 = vld [vmem:[%s1679 + $0x28] sm:$0x7f]
      %v1686 = vmul.f32 %v1680, %v451
      %v1687 = vmul.f32 %v1681, %v451
      %v1688 = vmul.f32 %v1682, %v451
      %v1689 = vmul.f32 %v1683, %v451
      %v1690 = vadd.f32 %v1667, %v1686
      %v1691 = vadd.f32 %v1668, %v1687
      %v1692 = vadd.f32 %v1669, %v1688
      %v1693 = vadd.f32 %v1670, %v1689
      %v1694 = vmul.f32 %v1681, %v476
      %v1695 = vmul.f32 %v1682, %v476
      %v1696 = vmul.f32 %v1683, %v476
      %v1697 = vmul.f32 %v1684, %v476
      %v1698 = vadd.f32 %v1690, %v1694
      %v1699 = vadd.f32 %v1691, %v1695
      %v1700 = vadd.f32 %v1692, %v1696
      %v1701 = vadd.f32 %v1693, %v1697
      %v1702 = vmul.f32 %v1682, %v501
      %v1703 = vmul.f32 %v1683, %v501
      %v1704 = vmul.f32 %v1684, %v501
      %v1705 = vmul.f32 %v1685, %v501
      %v1706 = vadd.f32 %v1698, %v1702
      %v1707 = vadd.f32 %v1699, %v1703
      %v1708 = vadd.f32 %v1700, %v1704
      %v1709 = vadd.f32 %v1701, %v1705
      %v1710 = vmax.f32 %v1545, %v1620
      %v1711 = vmax.f32 %v1546, %v1621
      %v1712 = vmax.f32 %v1547, %v1622
      %v1713 = vmax.f32 %v1548, %v1623
      %v1714 = vmax.f32 %v1675, %v1706
      %v1715 = vmax.f32 %v1676, %v1707
      %v1716 = vmax.f32 %v1677, %v1708
      %v1717 = vmax.f32 %v1678, %v1709
      %v1718 = vmax.f32 %v1710, %v1714
      %v1719 = vmax.f32 %v1711, %v1715
      %v1720 = vmax.f32 %v1712, %v1716
      %v1721 = vmax.f32 %v1713, %v1717
      %v1722 = vsel %vm683, %v1718, -inf
      %v1723 = vsel %vm683, %v1719, -inf
      %v1724 = vsel %vm683, %v1720, -inf
      %v1725 = vsel %vm683, %v1721, -inf
      %v1726 = vmax.f32 %v1722, %v1723
      %v1727 = vmax.f32 %v1724, %v1725
      %v1728 = vmax.f32 %v1726, %v1727
      %v1729 = vadd.f32 %v1728, %v691
      %v1730 = vmax.f32 %v1729, 0.0
      %s1731 = sadd.s32 32, %s694
      %s1732 = scalar_lea.vmem [#allocation2], %s1731
      %1733 = vst [vmem:[%s1732 + $0x1] sm:$0x3f] %v1730
      %s1734 = sadd.s32 32, %s699
      %s1735 = scalar_lea.vmem [#allocation2], %s1734
      %1736 = vst [vmem:[%s1735] sm:$0x7f] %v1730
      %s1737 = sadd.s32 32, %s704
      %s1738 = scalar_lea.vmem [#allocation2], %s1737
      %1739 = vst [vmem:[%s1738 - $0x1] sm:$0x7e] %v1730
      %s1740 = scalar_lea.vmem %s0, 128
      %v1741 = vld [vmem:[%s1740] sm:$0x7f]
      %v1742 = vld [vmem:[%s1740 + $0x8] sm:$0x7f]
      %v1743 = vld [vmem:[%s1740 + $0x10] sm:$0x7f]
      %v1744 = vld [vmem:[%s1740 + $0x18] sm:$0x7f]
      %v1745 = vld [vmem:[%s1740 + $0x20] sm:$0x7f]
      %v1746 = vld [vmem:[%s1740 + $0x28] sm:$0x7f]
      %v1747 = vmul.f32 %v1741, %v355
      %v1748 = vmul.f32 %v1742, %v355
      %v1749 = vmul.f32 %v1743, %v355
      %v1750 = vmul.f32 %v1744, %v355
      %v1751 = vmul.f32 %v1742, %v360
      %v1752 = vmul.f32 %v1743, %v360
      %v1753 = vmul.f32 %v1744, %v360
      %v1754 = vmul.f32 %v1745, %v360
      %v1755 = vadd.f32 %v1747, %v1751
      %v1756 = vadd.f32 %v1748, %v1752
      %v1757 = vadd.f32 %v1749, %v1753
      %v1758 = vadd.f32 %v1750, %v1754
      %v1759 = vmul.f32 %v1743, %v369
      %v1760 = vmul.f32 %v1744, %v369
      %v1761 = vmul.f32 %v1745, %v369
      %v1762 = vmul.f32 %v1746, %v369
      %v1763 = vadd.f32 %v1755, %v1759
      %v1764 = vadd.f32 %v1756, %v1760
      %v1765 = vadd.f32 %v1757, %v1761
      %v1766 = vadd.f32 %v1758, %v1762
      %s1767 = scalar_lea.vmem %s0, 368
      %v1768 = vld [vmem:[%s1767] sm:$0x7f]
      %v1769 = vld [vmem:[%s1767 + $0x8] sm:$0x7f]
      %v1770 = vld [vmem:[%s1767 + $0x10] sm:$0x7f]
      %v1771 = vld [vmem:[%s1767 + $0x18] sm:$0x7f]
      %v1772 = vld [vmem:[%s1767 + $0x20] sm:$0x7f]
      %v1773 = vld [vmem:[%s1767 + $0x28] sm:$0x7f]
      %v1774 = vmul.f32 %v1768, %v355
      %v1775 = vmul.f32 %v1769, %v355
      %v1776 = vmul.f32 %v1770, %v355
      %v1777 = vmul.f32 %v1771, %v355
      %v1778 = vmul.f32 %v1768, %v389
      %v1779 = vmul.f32 %v1769, %v389
      %v1780 = vmul.f32 %v1770, %v389
      %v1781 = vmul.f32 %v1771, %v389
      %v1782 = vadd.f32 %v1763, %v1778
      %v1783 = vadd.f32 %v1764, %v1779
      %v1784 = vadd.f32 %v1765, %v1780
      %v1785 = vadd.f32 %v1766, %v1781
      %v1786 = vmul.f32 %v1769, %v360
      %v1787 = vmul.f32 %v1770, %v360
      %v1788 = vmul.f32 %v1771, %v360
      %v1789 = vmul.f32 %v1772, %v360
      %v1790 = vadd.f32 %v1774, %v1786
      %v1791 = vadd.f32 %v1775, %v1787
      %v1792 = vadd.f32 %v1776, %v1788
      %v1793 = vadd.f32 %v1777, %v1789
      %v1794 = vmul.f32 %v1769, %v406
      %v1795 = vmul.f32 %v1770, %v406
      %v1796 = vmul.f32 %v1771, %v406
      %v1797 = vmul.f32 %v1772, %v406
      %v1798 = vadd.f32 %v1782, %v1794
      %v1799 = vadd.f32 %v1783, %v1795
      %v1800 = vadd.f32 %v1784, %v1796
      %v1801 = vadd.f32 %v1785, %v1797
      %v1802 = vmul.f32 %v1770, %v369
      %v1803 = vmul.f32 %v1771, %v369
      %v1804 = vmul.f32 %v1772, %v369
      %v1805 = vmul.f32 %v1773, %v369
      %v1806 = vadd.f32 %v1790, %v1802
      %v1807 = vadd.f32 %v1791, %v1803
      %v1808 = vadd.f32 %v1792, %v1804
      %v1809 = vadd.f32 %v1793, %v1805
      %v1810 = vmul.f32 %v1770, %v423
      %v1811 = vmul.f32 %v1771, %v423
      %v1812 = vmul.f32 %v1772, %v423
      %v1813 = vmul.f32 %v1773, %v423
      %v1814 = vadd.f32 %v1798, %v1810
      %v1815 = vadd.f32 %v1799, %v1811
      %v1816 = vadd.f32 %v1800, %v1812
      %v1817 = vadd.f32 %v1801, %v1813
      %s1818 = scalar_lea.vmem %s0, 608
      %v1819 = vld [vmem:[%s1818] sm:$0x7f]
      %v1820 = vld [vmem:[%s1818 + $0x8] sm:$0x7f]
      %v1821 = vld [vmem:[%s1818 + $0x10] sm:$0x7f]
      %v1822 = vld [vmem:[%s1818 + $0x18] sm:$0x7f]
      %v1823 = vld [vmem:[%s1818 + $0x20] sm:$0x7f]
      %v1824 = vld [vmem:[%s1818 + $0x28] sm:$0x7f]
      %v1825 = vmul.f32 %v1819, %v355
      %v1826 = vmul.f32 %v1820, %v355
      %v1827 = vmul.f32 %v1821, %v355
      %v1828 = vmul.f32 %v1822, %v355
      %v1829 = vmul.f32 %v1819, %v389
      %v1830 = vmul.f32 %v1820, %v389
      %v1831 = vmul.f32 %v1821, %v389
      %v1832 = vmul.f32 %v1822, %v389
      %v1833 = vadd.f32 %v1806, %v1829
      %v1834 = vadd.f32 %v1807, %v1830
      %v1835 = vadd.f32 %v1808, %v1831
      %v1836 = vadd.f32 %v1809, %v1832
      %v1837 = vmul.f32 %v1819, %v451
      %v1838 = vmul.f32 %v1820, %v451
      %v1839 = vmul.f32 %v1821, %v451
      %v1840 = vmul.f32 %v1822, %v451
      %v1841 = vadd.f32 %v1814, %v1837
      %v1842 = vadd.f32 %v1815, %v1838
      %v1843 = vadd.f32 %v1816, %v1839
      %v1844 = vadd.f32 %v1817, %v1840
      %v1845 = vmul.f32 %v1820, %v360
      %v1846 = vmul.f32 %v1821, %v360
      %v1847 = vmul.f32 %v1822, %v360
      %v1848 = vmul.f32 %v1823, %v360
      %v1849 = vadd.f32 %v1825, %v1845
      %v1850 = vadd.f32 %v1826, %v1846
      %v1851 = vadd.f32 %v1827, %v1847
      %v1852 = vadd.f32 %v1828, %v1848
      %v1853 = vmul.f32 %v1820, %v406
      %v1854 = vmul.f32 %v1821, %v406
      %v1855 = vmul.f32 %v1822, %v406
      %v1856 = vmul.f32 %v1823, %v406
      %v1857 = vadd.f32 %v1833, %v1853
      %v1858 = vadd.f32 %v1834, %v1854
      %v1859 = vadd.f32 %v1835, %v1855
      %v1860 = vadd.f32 %v1836, %v1856
      %v1861 = vmul.f32 %v1820, %v476
      %v1862 = vmul.f32 %v1821, %v476
      %v1863 = vmul.f32 %v1822, %v476
      %v1864 = vmul.f32 %v1823, %v476
      %v1865 = vadd.f32 %v1841, %v1861
      %v1866 = vadd.f32 %v1842, %v1862
      %v1867 = vadd.f32 %v1843, %v1863
      %v1868 = vadd.f32 %v1844, %v1864
      %v1869 = vmul.f32 %v1821, %v369
      %v1870 = vmul.f32 %v1822, %v369
      %v1871 = vmul.f32 %v1823, %v369
      %v1872 = vmul.f32 %v1824, %v369
      %v1873 = vadd.f32 %v1849, %v1869
      %v1874 = vadd.f32 %v1850, %v1870
      %v1875 = vadd.f32 %v1851, %v1871
      %v1876 = vadd.f32 %v1852, %v1872
      %v1877 = vmul.f32 %v1821, %v423
      %v1878 = vmul.f32 %v1822, %v423
      %v1879 = vmul.f32 %v1823, %v423
      %v1880 = vmul.f32 %v1824, %v423
      %v1881 = vadd.f32 %v1857, %v1877
      %v1882 = vadd.f32 %v1858, %v1878
      %v1883 = vadd.f32 %v1859, %v1879
      %v1884 = vadd.f32 %v1860, %v1880
      %v1885 = vmul.f32 %v1821, %v501
      %v1886 = vmul.f32 %v1822, %v501
      %v1887 = vmul.f32 %v1823, %v501
      %v1888 = vmul.f32 %v1824, %v501
      %v1889 = vadd.f32 %v1865, %v1885
      %v1890 = vadd.f32 %v1866, %v1886
      %v1891 = vadd.f32 %v1867, %v1887
      %v1892 = vadd.f32 %v1868, %v1888
      %s1893 = scalar_lea.vmem %s0, 848
      %v1894 = vld [vmem:[%s1893] sm:$0x7f]
      %v1895 = vld [vmem:[%s1893 + $0x8] sm:$0x7f]
      %v1896 = vld [vmem:[%s1893 + $0x10] sm:$0x7f]
      %v1897 = vld [vmem:[%s1893 + $0x18] sm:$0x7f]
      %v1898 = vld [vmem:[%s1893 + $0x20] sm:$0x7f]
      %v1899 = vld [vmem:[%s1893 + $0x28] sm:$0x7f]
      %v1900 = vmul.f32 %v1894, %v355
      %v1901 = vmul.f32 %v1895, %v355
      %v1902 = vmul.f32 %v1896, %v355
      %v1903 = vmul.f32 %v1897, %v355
      %v1904 = vmul.f32 %v1894, %v389
      %v1905 = vmul.f32 %v1895, %v389
      %v1906 = vmul.f32 %v1896, %v389
      %v1907 = vmul.f32 %v1897, %v389
      %v1908 = vadd.f32 %v1873, %v1904
      %v1909 = vadd.f32 %v1874, %v1905
      %v1910 = vadd.f32 %v1875, %v1906
      %v1911 = vadd.f32 %v1876, %v1907
      %v1912 = vmul.f32 %v1894, %v451
      %v1913 = vmul.f32 %v1895, %v451
      %v1914 = vmul.f32 %v1896, %v451
      %v1915 = vmul.f32 %v1897, %v451
      %v1916 = vadd.f32 %v1881, %v1912
      %v1917 = vadd.f32 %v1882, %v1913
      %v1918 = vadd.f32 %v1883, %v1914
      %v1919 = vadd.f32 %v1884, %v1915
      %v1920 = vmul.f32 %v1895, %v360
      %v1921 = vmul.f32 %v1896, %v360
      %v1922 = vmul.f32 %v1897, %v360
      %v1923 = vmul.f32 %v1898, %v360
      %v1924 = vadd.f32 %v1900, %v1920
      %v1925 = vadd.f32 %v1901, %v1921
      %v1926 = vadd.f32 %v1902, %v1922
      %v1927 = vadd.f32 %v1903, %v1923
      %v1928 = vmul.f32 %v1895, %v406
      %v1929 = vmul.f32 %v1896, %v406
      %v1930 = vmul.f32 %v1897, %v406
      %v1931 = vmul.f32 %v1898, %v406
      %v1932 = vadd.f32 %v1908, %v1928
      %v1933 = vadd.f32 %v1909, %v1929
      %v1934 = vadd.f32 %v1910, %v1930
      %v1935 = vadd.f32 %v1911, %v1931
      %v1936 = vmul.f32 %v1895, %v476
      %v1937 = vmul.f32 %v1896, %v476
      %v1938 = vmul.f32 %v1897, %v476
      %v1939 = vmul.f32 %v1898, %v476
      %v1940 = vadd.f32 %v1916, %v1936
      %v1941 = vadd.f32 %v1917, %v1937
      %v1942 = vadd.f32 %v1918, %v1938
      %v1943 = vadd.f32 %v1919, %v1939
      %v1944 = vmul.f32 %v1896, %v369
      %v1945 = vmul.f32 %v1897, %v369
      %v1946 = vmul.f32 %v1898, %v369
      %v1947 = vmul.f32 %v1899, %v369
      %v1948 = vadd.f32 %v1924, %v1944
      %v1949 = vadd.f32 %v1925, %v1945
      %v1950 = vadd.f32 %v1926, %v1946
      %v1951 = vadd.f32 %v1927, %v1947
      %v1952 = vmul.f32 %v1896, %v423
      %v1953 = vmul.f32 %v1897, %v423
      %v1954 = vmul.f32 %v1898, %v423
      %v1955 = vmul.f32 %v1899, %v423
      %v1956 = vadd.f32 %v1932, %v1952
      %v1957 = vadd.f32 %v1933, %v1953
      %v1958 = vadd.f32 %v1934, %v1954
      %v1959 = vadd.f32 %v1935, %v1955
      %v1960 = vmul.f32 %v1896, %v501
      %v1961 = vmul.f32 %v1897, %v501
      %v1962 = vmul.f32 %v1898, %v501
      %v1963 = vmul.f32 %v1899, %v501
      %v1964 = vadd.f32 %v1940, %v1960
      %v1965 = vadd.f32 %v1941, %v1961
      %v1966 = vadd.f32 %v1942, %v1962
      %v1967 = vadd.f32 %v1943, %v1963
      %s1968 = scalar_lea.vmem %s0, 1088
      %v1969 = vld [vmem:[%s1968] sm:$0x7f]
      %v1970 = vld [vmem:[%s1968 + $0x8] sm:$0x7f]
      %v1971 = vld [vmem:[%s1968 + $0x10] sm:$0x7f]
      %v1972 = vld [vmem:[%s1968 + $0x18] sm:$0x7f]
      %v1973 = vld [vmem:[%s1968 + $0x20] sm:$0x7f]
      %v1974 = vld [vmem:[%s1968 + $0x28] sm:$0x7f]
      %v1975 = vmul.f32 %v1969, %v389
      %v1976 = vmul.f32 %v1970, %v389
      %v1977 = vmul.f32 %v1971, %v389
      %v1978 = vmul.f32 %v1972, %v389
      %v1979 = vadd.f32 %v1948, %v1975
      %v1980 = vadd.f32 %v1949, %v1976
      %v1981 = vadd.f32 %v1950, %v1977
      %v1982 = vadd.f32 %v1951, %v1978
      %v1983 = vmul.f32 %v1969, %v451
      %v1984 = vmul.f32 %v1970, %v451
      %v1985 = vmul.f32 %v1971, %v451
      %v1986 = vmul.f32 %v1972, %v451
      %v1987 = vadd.f32 %v1956, %v1983
      %v1988 = vadd.f32 %v1957, %v1984
      %v1989 = vadd.f32 %v1958, %v1985
      %v1990 = vadd.f32 %v1959, %v1986
      %v1991 = vmul.f32 %v1970, %v406
      %v1992 = vmul.f32 %v1971, %v406
      %v1993 = vmul.f32 %v1972, %v406
      %v1994 = vmul.f32 %v1973, %v406
      %v1995 = vadd.f32 %v1979, %v1991
      %v1996 = vadd.f32 %v1980, %v1992
      %v1997 = vadd.f32 %v1981, %v1993
      %v1998 = vadd.f32 %v1982, %v1994
      %v1999 = vmul.f32 %v1970, %v476
      %v2000 = vmul.f32 %v1971, %v476
      %v2001 = vmul.f32 %v1972, %v476
      %v2002 = vmul.f32 %v1973, %v476
      %v2003 = vadd.f32 %v1987, %v1999
      %v2004 = vadd.f32 %v1988, %v2000
      %v2005 = vadd.f32 %v1989, %v2001
      %v2006 = vadd.f32 %v1990, %v2002
      %v2007 = vmul.f32 %v1971, %v423
      %v2008 = vmul.f32 %v1972, %v423
      %v2009 = vmul.f32 %v1973, %v423
      %v2010 = vmul.f32 %v1974, %v423
      %v2011 = vadd.f32 %v1995, %v2007
      %v2012 = vadd.f32 %v1996, %v2008
      %v2013 = vadd.f32 %v1997, %v2009
      %v2014 = vadd.f32 %v1998, %v2010
      %v2015 = vmul.f32 %v1971, %v501
      %v2016 = vmul.f32 %v1972, %v501
      %v2017 = vmul.f32 %v1973, %v501
      %v2018 = vmul.f32 %v1974, %v501
      %v2019 = vadd.f32 %v2003, %v2015
      %v2020 = vadd.f32 %v2004, %v2016
      %v2021 = vadd.f32 %v2005, %v2017
      %v2022 = vadd.f32 %v2006, %v2018
      %s2023 = scalar_lea.vmem %s0, 1328
      %v2024 = vld [vmem:[%s2023] sm:$0x7f]
      %v2025 = vld [vmem:[%s2023 + $0x8] sm:$0x7f]
      %v2026 = vld [vmem:[%s2023 + $0x10] sm:$0x7f]
      %v2027 = vld [vmem:[%s2023 + $0x18] sm:$0x7f]
      %v2028 = vld [vmem:[%s2023 + $0x20] sm:$0x7f]
      %v2029 = vld [vmem:[%s2023 + $0x28] sm:$0x7f]
      %v2030 = vmul.f32 %v2024, %v451
      %v2031 = vmul.f32 %v2025, %v451
      %v2032 = vmul.f32 %v2026, %v451
      %v2033 = vmul.f32 %v2027, %v451
      %v2034 = vadd.f32 %v2011, %v2030
      %v2035 = vadd.f32 %v2012, %v2031
      %v2036 = vadd.f32 %v2013, %v2032
      %v2037 = vadd.f32 %v2014, %v2033
      %v2038 = vmul.f32 %v2025, %v476
      %v2039 = vmul.f32 %v2026, %v476
      %v2040 = vmul.f32 %v2027, %v476
      %v2041 = vmul.f32 %v2028, %v476
      %v2042 = vadd.f32 %v2034, %v2038
      %v2043 = vadd.f32 %v2035, %v2039
      %v2044 = vadd.f32 %v2036, %v2040
      %v2045 = vadd.f32 %v2037, %v2041
      %v2046 = vmul.f32 %v2026, %v501
      %v2047 = vmul.f32 %v2027, %v501
      %v2048 = vmul.f32 %v2028, %v501
      %v2049 = vmul.f32 %v2029, %v501
      %v2050 = vadd.f32 %v2042, %v2046
      %v2051 = vadd.f32 %v2043, %v2047
      %v2052 = vadd.f32 %v2044, %v2048
      %v2053 = vadd.f32 %v2045, %v2049
      %v2054 = vmax.f32 %v1889, %v1964
      %v2055 = vmax.f32 %v1890, %v1965
      %v2056 = vmax.f32 %v1891, %v1966
      %v2057 = vmax.f32 %v1892, %v1967
      %v2058 = vmax.f32 %v2019, %v2050
      %v2059 = vmax.f32 %v2020, %v2051
      %v2060 = vmax.f32 %v2021, %v2052
      %v2061 = vmax.f32 %v2022, %v2053
      %v2062 = vmax.f32 %v2054, %v2058
      %v2063 = vmax.f32 %v2055, %v2059
      %v2064 = vmax.f32 %v2056, %v2060
      %v2065 = vmax.f32 %v2057, %v2061
      %v2066 = vsel %vm683, %v2062, -inf
      %v2067 = vsel %vm683, %v2063, -inf
      %v2068 = vsel %vm683, %v2064, -inf
      %v2069 = vsel %vm683, %v2065, -inf
      %v2070 = vmax.f32 %v2066, %v2067
      %v2071 = vmax.f32 %v2068, %v2069
      %v2072 = vmax.f32 %v2070, %v2071
      %v2073 = vadd.f32 %v2072, %v691
      %v2074 = vmax.f32 %v2073, 0.0
      %s2075 = sadd.s32 40, %s694
      %s2076 = scalar_lea.vmem [#allocation2], %s2075
      %2077 = vst [vmem:[%s2076 + $0x1] sm:$0x3f] %v2074
      %s2078 = sadd.s32 40, %s699
      %s2079 = scalar_lea.vmem [#allocation2], %s2078
      %2080 = vst [vmem:[%s2079] sm:$0x7f] %v2074
      %s2081 = sadd.s32 40, %s704
      %s2082 = scalar_lea.vmem [#allocation2], %s2081
      %2083 = vst [vmem:[%s2082 - $0x1] sm:$0x7e] %v2074
      %s2084 = scalar_lea.vmem %s0, 160
      %v2085 = vld [vmem:[%s2084] sm:$0x7f]
      %v2086 = vld [vmem:[%s2084 + $0x8] sm:$0x7f]
      %v2087 = vld [vmem:[%s2084 + $0x10] sm:$0x7f]
      %v2088 = vld [vmem:[%s2084 + $0x18] sm:$0x7f]
      %v2089 = vld [vmem:[%s2084 + $0x20] sm:$0x7f]
      %v2090 = vld [vmem:[%s2084 + $0x28] sm:$0x7f]
      %v2091 = vmul.f32 %v2085, %v355
      %v2092 = vmul.f32 %v2086, %v355
      %v2093 = vmul.f32 %v2087, %v355
      %v2094 = vmul.f32 %v2088, %v355
      %v2095 = vmul.f32 %v2086, %v360
      %v2096 = vmul.f32 %v2087, %v360
      %v2097 = vmul.f32 %v2088, %v360
      %v2098 = vmul.f32 %v2089, %v360
      %v2099 = vadd.f32 %v2091, %v2095
      %v2100 = vadd.f32 %v2092, %v2096
      %v2101 = vadd.f32 %v2093, %v2097
      %v2102 = vadd.f32 %v2094, %v2098
      %v2103 = vmul.f32 %v2087, %v369
      %v2104 = vmul.f32 %v2088, %v369
      %v2105 = vmul.f32 %v2089, %v369
      %v2106 = vmul.f32 %v2090, %v369
      %v2107 = vadd.f32 %v2099, %v2103
      %v2108 = vadd.f32 %v2100, %v2104
      %v2109 = vadd.f32 %v2101, %v2105
      %v2110 = vadd.f32 %v2102, %v2106
      %s2111 = scalar_lea.vmem %s0, 400
      %v2112 = vld [vmem:[%s2111] sm:$0x7f]
      %v2113 = vld [vmem:[%s2111 + $0x8] sm:$0x7f]
      %v2114 = vld [vmem:[%s2111 + $0x10] sm:$0x7f]
      %v2115 = vld [vmem:[%s2111 + $0x18] sm:$0x7f]
      %v2116 = vld [vmem:[%s2111 + $0x20] sm:$0x7f]
      %v2117 = vld [vmem:[%s2111 + $0x28] sm:$0x7f]
      %v2118 = vmul.f32 %v2112, %v355
      %v2119 = vmul.f32 %v2113, %v355
      %v2120 = vmul.f32 %v2114, %v355
      %v2121 = vmul.f32 %v2115, %v355
      %v2122 = vmul.f32 %v2112, %v389
      %v2123 = vmul.f32 %v2113, %v389
      %v2124 = vmul.f32 %v2114, %v389
      %v2125 = vmul.f32 %v2115, %v389
      %v2126 = vadd.f32 %v2107, %v2122
      %v2127 = vadd.f32 %v2108, %v2123
      %v2128 = vadd.f32 %v2109, %v2124
      %v2129 = vadd.f32 %v2110, %v2125
      %v2130 = vmul.f32 %v2113, %v360
      %v2131 = vmul.f32 %v2114, %v360
      %v2132 = vmul.f32 %v2115, %v360
      %v2133 = vmul.f32 %v2116, %v360
      %v2134 = vadd.f32 %v2118, %v2130
      %v2135 = vadd.f32 %v2119, %v2131
      %v2136 = vadd.f32 %v2120, %v2132
      %v2137 = vadd.f32 %v2121, %v2133
      %v2138 = vmul.f32 %v2113, %v406
      %v2139 = vmul.f32 %v2114, %v406
      %v2140 = vmul.f32 %v2115, %v406
      %v2141 = vmul.f32 %v2116, %v406
      %v2142 = vadd.f32 %v2126, %v2138
      %v2143 = vadd.f32 %v2127, %v2139
      %v2144 = vadd.f32 %v2128, %v2140
      %v2145 = vadd.f32 %v2129, %v2141
      %v2146 = vmul.f32 %v2114, %v369
      %v2147 = vmul.f32 %v2115, %v369
      %v2148 = vmul.f32 %v2116, %v369
      %v2149 = vmul.f32 %v2117, %v369
      %v2150 = vadd.f32 %v2134, %v2146
      %v2151 = vadd.f32 %v2135, %v2147
      %v2152 = vadd.f32 %v2136, %v2148
      %v2153 = vadd.f32 %v2137, %v2149
      %v2154 = vmul.f32 %v2114, %v423
      %v2155 = vmul.f32 %v2115, %v423
      %v2156 = vmul.f32 %v2116, %v423
      %v2157 = vmul.f32 %v2117, %v423
      %v2158 = vadd.f32 %v2142, %v2154
      %v2159 = vadd.f32 %v2143, %v2155
      %v2160 = vadd.f32 %v2144, %v2156
      %v2161 = vadd.f32 %v2145, %v2157
      %s2162 = scalar_lea.vmem %s0, 640
      %v2163 = vld [vmem:[%s2162] sm:$0x7f]
      %v2164 = vld [vmem:[%s2162 + $0x8] sm:$0x7f]
      %v2165 = vld [vmem:[%s2162 + $0x10] sm:$0x7f]
      %v2166 = vld [vmem:[%s2162 + $0x18] sm:$0x7f]
      %v2167 = vld [vmem:[%s2162 + $0x20] sm:$0x7f]
      %v2168 = vld [vmem:[%s2162 + $0x28] sm:$0x7f]
      %v2169 = vmul.f32 %v2163, %v355
      %v2170 = vmul.f32 %v2164, %v355
      %v2171 = vmul.f32 %v2165, %v355
      %v2172 = vmul.f32 %v2166, %v355
      %v2173 = vmul.f32 %v2163, %v389
      %v2174 = vmul.f32 %v2164, %v389
      %v2175 = vmul.f32 %v2165, %v389
      %v2176 = vmul.f32 %v2166, %v389
      %v2177 = vadd.f32 %v2150, %v2173
      %v2178 = vadd.f32 %v2151, %v2174
      %v2179 = vadd.f32 %v2152, %v2175
      %v2180 = vadd.f32 %v2153, %v2176
      %v2181 = vmul.f32 %v2163, %v451
      %v2182 = vmul.f32 %v2164, %v451
      %v2183 = vmul.f32 %v2165, %v451
      %v2184 = vmul.f32 %v2166, %v451
      %v2185 = vadd.f32 %v2158, %v2181
      %v2186 = vadd.f32 %v2159, %v2182
      %v2187 = vadd.f32 %v2160, %v2183
      %v2188 = vadd.f32 %v2161, %v2184
      %v2189 = vmul.f32 %v2164, %v360
      %v2190 = vmul.f32 %v2165, %v360
      %v2191 = vmul.f32 %v2166, %v360
      %v2192 = vmul.f32 %v2167, %v360
      %v2193 = vadd.f32 %v2169, %v2189
      %v2194 = vadd.f32 %v2170, %v2190
      %v2195 = vadd.f32 %v2171, %v2191
      %v2196 = vadd.f32 %v2172, %v2192
      %v2197 = vmul.f32 %v2164, %v406
      %v2198 = vmul.f32 %v2165, %v406
      %v2199 = vmul.f32 %v2166, %v406
      %v2200 = vmul.f32 %v2167, %v406
      %v2201 = vadd.f32 %v2177, %v2197
      %v2202 = vadd.f32 %v2178, %v2198
      %v2203 = vadd.f32 %v2179, %v2199
      %v2204 = vadd.f32 %v2180, %v2200
      %v2205 = vmul.f32 %v2164, %v476
      %v2206 = vmul.f32 %v2165, %v476
      %v2207 = vmul.f32 %v2166, %v476
      %v2208 = vmul.f32 %v2167, %v476
      %v2209 = vadd.f32 %v2185, %v2205
      %v2210 = vadd.f32 %v2186, %v2206
      %v2211 = vadd.f32 %v2187, %v2207
      %v2212 = vadd.f32 %v2188, %v2208
      %v2213 = vmul.f32 %v2165, %v369
      %v2214 = vmul.f32 %v2166, %v369
      %v2215 = vmul.f32 %v2167, %v369
      %v2216 = vmul.f32 %v2168, %v369
      %v2217 = vadd.f32 %v2193, %v2213
      %v2218 = vadd.f32 %v2194, %v2214
      %v2219 = vadd.f32 %v2195, %v2215
      %v2220 = vadd.f32 %v2196, %v2216
      %v2221 = vmul.f32 %v2165, %v423
      %v2222 = vmul.f32 %v2166, %v423
      %v2223 = vmul.f32 %v2167, %v423
      %v2224 = vmul.f32 %v2168, %v423
      %v2225 = vadd.f32 %v2201, %v2221
      %v2226 = vadd.f32 %v2202, %v2222
      %v2227 = vadd.f32 %v2203, %v2223
      %v2228 = vadd.f32 %v2204, %v2224
      %v2229 = vmul.f32 %v2165, %v501
      %v2230 = vmul.f32 %v2166, %v501
      %v2231 = vmul.f32 %v2167, %v501
      %v2232 = vmul.f32 %v2168, %v501
      %v2233 = vadd.f32 %v2209, %v2229
      %v2234 = vadd.f32 %v2210, %v2230
      %v2235 = vadd.f32 %v2211, %v2231
      %v2236 = vadd.f32 %v2212, %v2232
      %s2237 = scalar_lea.vmem %s0, 880
      %v2238 = vld [vmem:[%s2237] sm:$0x7f]
      %v2239 = vld [vmem:[%s2237 + $0x8] sm:$0x7f]
      %v2240 = vld [vmem:[%s2237 + $0x10] sm:$0x7f]
      %v2241 = vld [vmem:[%s2237 + $0x18] sm:$0x7f]
      %v2242 = vld [vmem:[%s2237 + $0x20] sm:$0x7f]
      %v2243 = vld [vmem:[%s2237 + $0x28] sm:$0x7f]
      %v2244 = vmul.f32 %v2238, %v355
      %v2245 = vmul.f32 %v2239, %v355
      %v2246 = vmul.f32 %v2240, %v355
      %v2247 = vmul.f32 %v2241, %v355
      %v2248 = vmul.f32 %v2238, %v389
      %v2249 = vmul.f32 %v2239, %v389
      %v2250 = vmul.f32 %v2240, %v389
      %v2251 = vmul.f32 %v2241, %v389
      %v2252 = vadd.f32 %v2217, %v2248
      %v2253 = vadd.f32 %v2218, %v2249
      %v2254 = vadd.f32 %v2219, %v2250
      %v2255 = vadd.f32 %v2220, %v2251
      %v2256 = vmul.f32 %v2238, %v451
      %v2257 = vmul.f32 %v2239, %v451
      %v2258 = vmul.f32 %v2240, %v451
      %v2259 = vmul.f32 %v2241, %v451
      %v2260 = vadd.f32 %v2225, %v2256
      %v2261 = vadd.f32 %v2226, %v2257
      %v2262 = vadd.f32 %v2227, %v2258
      %v2263 = vadd.f32 %v2228, %v2259
      %v2264 = vmul.f32 %v2239, %v360
      %v2265 = vmul.f32 %v2240, %v360
      %v2266 = vmul.f32 %v2241, %v360
      %v2267 = vmul.f32 %v2242, %v360
      %v2268 = vadd.f32 %v2244, %v2264
      %v2269 = vadd.f32 %v2245, %v2265
      %v2270 = vadd.f32 %v2246, %v2266
      %v2271 = vadd.f32 %v2247, %v2267
      %v2272 = vmul.f32 %v2239, %v406
      %v2273 = vmul.f32 %v2240, %v406
      %v2274 = vmul.f32 %v2241, %v406
      %v2275 = vmul.f32 %v2242, %v406
      %v2276 = vadd.f32 %v2252, %v2272
      %v2277 = vadd.f32 %v2253, %v2273
      %v2278 = vadd.f32 %v2254, %v2274
      %v2279 = vadd.f32 %v2255, %v2275
      %v2280 = vmul.f32 %v2239, %v476
      %v2281 = vmul.f32 %v2240, %v476
      %v2282 = vmul.f32 %v2241, %v476
      %v2283 = vmul.f32 %v2242, %v476
      %v2284 = vadd.f32 %v2260, %v2280
      %v2285 = vadd.f32 %v2261, %v2281
      %v2286 = vadd.f32 %v2262, %v2282
      %v2287 = vadd.f32 %v2263, %v2283
      %v2288 = vmul.f32 %v2240, %v369
      %v2289 = vmul.f32 %v2241, %v369
      %v2290 = vmul.f32 %v2242, %v369
      %v2291 = vmul.f32 %v2243, %v369
      %v2292 = vadd.f32 %v2268, %v2288
      %v2293 = vadd.f32 %v2269, %v2289
      %v2294 = vadd.f32 %v2270, %v2290
      %v2295 = vadd.f32 %v2271, %v2291
      %v2296 = vmul.f32 %v2240, %v423
      %v2297 = vmul.f32 %v2241, %v423
      %v2298 = vmul.f32 %v2242, %v423
      %v2299 = vmul.f32 %v2243, %v423
      %v2300 = vadd.f32 %v2276, %v2296
      %v2301 = vadd.f32 %v2277, %v2297
      %v2302 = vadd.f32 %v2278, %v2298
      %v2303 = vadd.f32 %v2279, %v2299
      %v2304 = vmul.f32 %v2240, %v501
      %v2305 = vmul.f32 %v2241, %v501
      %v2306 = vmul.f32 %v2242, %v501
      %v2307 = vmul.f32 %v2243, %v501
      %v2308 = vadd.f32 %v2284, %v2304
      %v2309 = vadd.f32 %v2285, %v2305
      %v2310 = vadd.f32 %v2286, %v2306
      %v2311 = vadd.f32 %v2287, %v2307
      %s2312 = scalar_lea.vmem %s0, 1120
      %v2313 = vld [vmem:[%s2312] sm:$0x7f]
      %v2314 = vld [vmem:[%s2312 + $0x8] sm:$0x7f]
      %v2315 = vld [vmem:[%s2312 + $0x10] sm:$0x7f]
      %v2316 = vld [vmem:[%s2312 + $0x18] sm:$0x7f]
      %v2317 = vld [vmem:[%s2312 + $0x20] sm:$0x7f]
      %v2318 = vld [vmem:[%s2312 + $0x28] sm:$0x7f]
      %v2319 = vmul.f32 %v2313, %v389
      %v2320 = vmul.f32 %v2314, %v389
      %v2321 = vmul.f32 %v2315, %v389
      %v2322 = vmul.f32 %v2316, %v389
      %v2323 = vadd.f32 %v2292, %v2319
      %v2324 = vadd.f32 %v2293, %v2320
      %v2325 = vadd.f32 %v2294, %v2321
      %v2326 = vadd.f32 %v2295, %v2322
      %v2327 = vmul.f32 %v2313, %v451
      %v2328 = vmul.f32 %v2314, %v451
      %v2329 = vmul.f32 %v2315, %v451
      %v2330 = vmul.f32 %v2316, %v451
      %v2331 = vadd.f32 %v2300, %v2327
      %v2332 = vadd.f32 %v2301, %v2328
      %v2333 = vadd.f32 %v2302, %v2329
      %v2334 = vadd.f32 %v2303, %v2330
      %v2335 = vmul.f32 %v2314, %v406
      %v2336 = vmul.f32 %v2315, %v406
      %v2337 = vmul.f32 %v2316, %v406
      %v2338 = vmul.f32 %v2317, %v406
      %v2339 = vadd.f32 %v2323, %v2335
      %v2340 = vadd.f32 %v2324, %v2336
      %v2341 = vadd.f32 %v2325, %v2337
      %v2342 = vadd.f32 %v2326, %v2338
      %v2343 = vmul.f32 %v2314, %v476
      %v2344 = vmul.f32 %v2315, %v476
      %v2345 = vmul.f32 %v2316, %v476
      %v2346 = vmul.f32 %v2317, %v476
      %v2347 = vadd.f32 %v2331, %v2343
      %v2348 = vadd.f32 %v2332, %v2344
      %v2349 = vadd.f32 %v2333, %v2345
      %v2350 = vadd.f32 %v2334, %v2346
      %v2351 = vmul.f32 %v2315, %v423
      %v2352 = vmul.f32 %v2316, %v423
      %v2353 = vmul.f32 %v2317, %v423
      %v2354 = vmul.f32 %v2318, %v423
      %v2355 = vadd.f32 %v2339, %v2351
      %v2356 = vadd.f32 %v2340, %v2352
      %v2357 = vadd.f32 %v2341, %v2353
      %v2358 = vadd.f32 %v2342, %v2354
      %v2359 = vmul.f32 %v2315, %v501
      %v2360 = vmul.f32 %v2316, %v501
      %v2361 = vmul.f32 %v2317, %v501
      %v2362 = vmul.f32 %v2318, %v501
      %v2363 = vadd.f32 %v2347, %v2359
      %v2364 = vadd.f32 %v2348, %v2360
      %v2365 = vadd.f32 %v2349, %v2361
      %v2366 = vadd.f32 %v2350, %v2362
      %s2367 = scalar_lea.vmem %s0, 1360
      %v2368 = vld [vmem:[%s2367] sm:$0x7f]
      %v2369 = vld [vmem:[%s2367 + $0x8] sm:$0x7f]
      %v2370 = vld [vmem:[%s2367 + $0x10] sm:$0x7f]
      %v2371 = vld [vmem:[%s2367 + $0x18] sm:$0x7f]
      %v2372 = vld [vmem:[%s2367 + $0x20] sm:$0x7f]
      %v2373 = vld [vmem:[%s2367 + $0x28] sm:$0x7f]
      %v2374 = vmul.f32 %v2368, %v451
      %v2375 = vmul.f32 %v2369, %v451
      %v2376 = vmul.f32 %v2370, %v451
      %v2377 = vmul.f32 %v2371, %v451
      %v2378 = vadd.f32 %v2355, %v2374
      %v2379 = vadd.f32 %v2356, %v2375
      %v2380 = vadd.f32 %v2357, %v2376
      %v2381 = vadd.f32 %v2358, %v2377
      %v2382 = vmul.f32 %v2369, %v476
      %v2383 = vmul.f32 %v2370, %v476
      %v2384 = vmul.f32 %v2371, %v476
      %v2385 = vmul.f32 %v2372, %v476
      %v2386 = vadd.f32 %v2378, %v2382
      %v2387 = vadd.f32 %v2379, %v2383
      %v2388 = vadd.f32 %v2380, %v2384
      %v2389 = vadd.f32 %v2381, %v2385
      %v2390 = vmul.f32 %v2370, %v501
      %v2391 = vmul.f32 %v2371, %v501
      %v2392 = vmul.f32 %v2372, %v501
      %v2393 = vmul.f32 %v2373, %v501
      %v2394 = vadd.f32 %v2386, %v2390
      %v2395 = vadd.f32 %v2387, %v2391
      %v2396 = vadd.f32 %v2388, %v2392
      %v2397 = vadd.f32 %v2389, %v2393
      %v2398 = vmax.f32 %v2233, %v2308
      %v2399 = vmax.f32 %v2234, %v2309
      %v2400 = vmax.f32 %v2235, %v2310
      %v2401 = vmax.f32 %v2236, %v2311
      %v2402 = vmax.f32 %v2363, %v2394
      %v2403 = vmax.f32 %v2364, %v2395
      %v2404 = vmax.f32 %v2365, %v2396
      %v2405 = vmax.f32 %v2366, %v2397
      %v2406 = vmax.f32 %v2398, %v2402
      %v2407 = vmax.f32 %v2399, %v2403
      %v2408 = vmax.f32 %v2400, %v2404
      %v2409 = vmax.f32 %v2401, %v2405
      %v2410 = vsel %vm683, %v2406, -inf
      %v2411 = vsel %vm683, %v2407, -inf
      %v2412 = vsel %vm683, %v2408, -inf
      %v2413 = vsel %vm683, %v2409, -inf
      %v2414 = vmax.f32 %v2410, %v2411
      %v2415 = vmax.f32 %v2412, %v2413
      %v2416 = vmax.f32 %v2414, %v2415
      %v2417 = vadd.f32 %v2416, %v691
      %v2418 = vmax.f32 %v2417, 0.0
      %s2419 = sadd.s32 48, %s694
      %s2420 = scalar_lea.vmem [#allocation2], %s2419
      %2421 = vst [vmem:[%s2420 + $0x1] sm:$0x3f] %v2418
      %s2422 = sadd.s32 48, %s699
      %s2423 = scalar_lea.vmem [#allocation2], %s2422
      %2424 = vst [vmem:[%s2423] sm:$0x7f] %v2418
      %s2425 = sadd.s32 48, %s704
      %s2426 = scalar_lea.vmem [#allocation2], %s2425
      %2427 = vst [vmem:[%s2426 - $0x1] sm:$0x7e] %v2418
      %s2428 = scalar_lea.vmem %s0, 192
      %v2429 = vld [vmem:[%s2428] sm:$0x7f]
      %v2430 = vld [vmem:[%s2428 + $0x8] sm:$0x7f]
      %v2431 = vld [vmem:[%s2428 + $0x10] sm:$0x7f]
      %v2432 = vld [vmem:[%s2428 + $0x18] sm:$0x7f]
      %v2433 = vld [vmem:[%s2428 + $0x20] sm:$0x7f]
      %v2434 = vld [vmem:[%s2428 + $0x28] sm:$0x7f]
      %v2435 = vmul.f32 %v2429, %v355
      %v2436 = vmul.f32 %v2430, %v355
      %v2437 = vmul.f32 %v2431, %v355
      %v2438 = vmul.f32 %v2432, %v355
      %v2439 = vmul.f32 %v2430, %v360
      %v2440 = vmul.f32 %v2431, %v360
      %v2441 = vmul.f32 %v2432, %v360
      %v2442 = vmul.f32 %v2433, %v360
      %v2443 = vadd.f32 %v2435, %v2439
      %v2444 = vadd.f32 %v2436, %v2440
      %v2445 = vadd.f32 %v2437, %v2441
      %v2446 = vadd.f32 %v2438, %v2442
      %v2447 = vmul.f32 %v2431, %v369
      %v2448 = vmul.f32 %v2432, %v369
      %v2449 = vmul.f32 %v2433, %v369
      %v2450 = vmul.f32 %v2434, %v369
      %v2451 = vadd.f32 %v2443, %v2447
      %v2452 = vadd.f32 %v2444, %v2448
      %v2453 = vadd.f32 %v2445, %v2449
      %v2454 = vadd.f32 %v2446, %v2450
      %s2455 = scalar_lea.vmem %s0, 432
      %v2456 = vld [vmem:[%s2455] sm:$0x7f]
      %v2457 = vld [vmem:[%s2455 + $0x8] sm:$0x7f]
      %v2458 = vld [vmem:[%s2455 + $0x10] sm:$0x7f]
      %v2459 = vld [vmem:[%s2455 + $0x18] sm:$0x7f]
      %v2460 = vld [vmem:[%s2455 + $0x20] sm:$0x7f]
      %v2461 = vld [vmem:[%s2455 + $0x28] sm:$0x7f]
      %v2462 = vmul.f32 %v2456, %v355
      %v2463 = vmul.f32 %v2457, %v355
      %v2464 = vmul.f32 %v2458, %v355
      %v2465 = vmul.f32 %v2459, %v355
      %v2466 = vmul.f32 %v2456, %v389
      %v2467 = vmul.f32 %v2457, %v389
      %v2468 = vmul.f32 %v2458, %v389
      %v2469 = vmul.f32 %v2459, %v389
      %v2470 = vadd.f32 %v2451, %v2466
      %v2471 = vadd.f32 %v2452, %v2467
      %v2472 = vadd.f32 %v2453, %v2468
      %v2473 = vadd.f32 %v2454, %v2469
      %v2474 = vmul.f32 %v2457, %v360
      %v2475 = vmul.f32 %v2458, %v360
      %v2476 = vmul.f32 %v2459, %v360
      %v2477 = vmul.f32 %v2460, %v360
      %v2478 = vadd.f32 %v2462, %v2474
      %v2479 = vadd.f32 %v2463, %v2475
      %v2480 = vadd.f32 %v2464, %v2476
      %v2481 = vadd.f32 %v2465, %v2477
      %v2482 = vmul.f32 %v2457, %v406
      %v2483 = vmul.f32 %v2458, %v406
      %v2484 = vmul.f32 %v2459, %v406
      %v2485 = vmul.f32 %v2460, %v406
      %v2486 = vadd.f32 %v2470, %v2482
      %v2487 = vadd.f32 %v2471, %v2483
      %v2488 = vadd.f32 %v2472, %v2484
      %v2489 = vadd.f32 %v2473, %v2485
      %v2490 = vmul.f32 %v2458, %v369
      %v2491 = vmul.f32 %v2459, %v369
      %v2492 = vmul.f32 %v2460, %v369
      %v2493 = vmul.f32 %v2461, %v369
      %v2494 = vadd.f32 %v2478, %v2490
      %v2495 = vadd.f32 %v2479, %v2491
      %v2496 = vadd.f32 %v2480, %v2492
      %v2497 = vadd.f32 %v2481, %v2493
      %v2498 = vmul.f32 %v2458, %v423
      %v2499 = vmul.f32 %v2459, %v423
      %v2500 = vmul.f32 %v2460, %v423
      %v2501 = vmul.f32 %v2461, %v423
      %v2502 = vadd.f32 %v2486, %v2498
      %v2503 = vadd.f32 %v2487, %v2499
      %v2504 = vadd.f32 %v2488, %v2500
      %v2505 = vadd.f32 %v2489, %v2501
      %s2506 = scalar_lea.vmem %s0, 672
      %v2507 = vld [vmem:[%s2506] sm:$0x7f]
      %v2508 = vld [vmem:[%s2506 + $0x8] sm:$0x7f]
      %v2509 = vld [vmem:[%s2506 + $0x10] sm:$0x7f]
      %v2510 = vld [vmem:[%s2506 + $0x18] sm:$0x7f]
      %v2511 = vld [vmem:[%s2506 + $0x20] sm:$0x7f]
      %v2512 = vld [vmem:[%s2506 + $0x28] sm:$0x7f]
      %v2513 = vmul.f32 %v2507, %v355
      %v2514 = vmul.f32 %v2508, %v355
      %v2515 = vmul.f32 %v2509, %v355
      %v2516 = vmul.f32 %v2510, %v355
      %v2517 = vmul.f32 %v2507, %v389
      %v2518 = vmul.f32 %v2508, %v389
      %v2519 = vmul.f32 %v2509, %v389
      %v2520 = vmul.f32 %v2510, %v389
      %v2521 = vadd.f32 %v2494, %v2517
      %v2522 = vadd.f32 %v2495, %v2518
      %v2523 = vadd.f32 %v2496, %v2519
      %v2524 = vadd.f32 %v2497, %v2520
      %v2525 = vmul.f32 %v2507, %v451
      %v2526 = vmul.f32 %v2508, %v451
      %v2527 = vmul.f32 %v2509, %v451
      %v2528 = vmul.f32 %v2510, %v451
      %v2529 = vadd.f32 %v2502, %v2525
      %v2530 = vadd.f32 %v2503, %v2526
      %v2531 = vadd.f32 %v2504, %v2527
      %v2532 = vadd.f32 %v2505, %v2528
      %v2533 = vmul.f32 %v2508, %v360
      %v2534 = vmul.f32 %v2509, %v360
      %v2535 = vmul.f32 %v2510, %v360
      %v2536 = vmul.f32 %v2511, %v360
      %v2537 = vadd.f32 %v2513, %v2533
      %v2538 = vadd.f32 %v2514, %v2534
      %v2539 = vadd.f32 %v2515, %v2535
      %v2540 = vadd.f32 %v2516, %v2536
      %v2541 = vmul.f32 %v2508, %v406
      %v2542 = vmul.f32 %v2509, %v406
      %v2543 = vmul.f32 %v2510, %v406
      %v2544 = vmul.f32 %v2511, %v406
      %v2545 = vadd.f32 %v2521, %v2541
      %v2546 = vadd.f32 %v2522, %v2542
      %v2547 = vadd.f32 %v2523, %v2543
      %v2548 = vadd.f32 %v2524, %v2544
      %v2549 = vmul.f32 %v2508, %v476
      %v2550 = vmul.f32 %v2509, %v476
      %v2551 = vmul.f32 %v2510, %v476
      %v2552 = vmul.f32 %v2511, %v476
      %v2553 = vadd.f32 %v2529, %v2549
      %v2554 = vadd.f32 %v2530, %v2550
      %v2555 = vadd.f32 %v2531, %v2551
      %v2556 = vadd.f32 %v2532, %v2552
      %v2557 = vmul.f32 %v2509, %v369
      %v2558 = vmul.f32 %v2510, %v369
      %v2559 = vmul.f32 %v2511, %v369
      %v2560 = vmul.f32 %v2512, %v369
      %v2561 = vadd.f32 %v2537, %v2557
      %v2562 = vadd.f32 %v2538, %v2558
      %v2563 = vadd.f32 %v2539, %v2559
      %v2564 = vadd.f32 %v2540, %v2560
      %v2565 = vmul.f32 %v2509, %v423
      %v2566 = vmul.f32 %v2510, %v423
      %v2567 = vmul.f32 %v2511, %v423
      %v2568 = vmul.f32 %v2512, %v423
      %v2569 = vadd.f32 %v2545, %v2565
      %v2570 = vadd.f32 %v2546, %v2566
      %v2571 = vadd.f32 %v2547, %v2567
      %v2572 = vadd.f32 %v2548, %v2568
      %v2573 = vmul.f32 %v2509, %v501
      %v2574 = vmul.f32 %v2510, %v501
      %v2575 = vmul.f32 %v2511, %v501
      %v2576 = vmul.f32 %v2512, %v501
      %v2577 = vadd.f32 %v2553, %v2573
      %v2578 = vadd.f32 %v2554, %v2574
      %v2579 = vadd.f32 %v2555, %v2575
      %v2580 = vadd.f32 %v2556, %v2576
      %s2581 = scalar_lea.vmem %s0, 912
      %v2582 = vld [vmem:[%s2581] sm:$0x7f]
      %v2583 = vld [vmem:[%s2581 + $0x8] sm:$0x7f]
      %v2584 = vld [vmem:[%s2581 + $0x10] sm:$0x7f]
      %v2585 = vld [vmem:[%s2581 + $0x18] sm:$0x7f]
      %v2586 = vld [vmem:[%s2581 + $0x20] sm:$0x7f]
      %v2587 = vld [vmem:[%s2581 + $0x28] sm:$0x7f]
      %v2588 = vmul.f32 %v2582, %v355
      %v2589 = vmul.f32 %v2583, %v355
      %v2590 = vmul.f32 %v2584, %v355
      %v2591 = vmul.f32 %v2585, %v355
      %v2592 = vmul.f32 %v2582, %v389
      %v2593 = vmul.f32 %v2583, %v389
      %v2594 = vmul.f32 %v2584, %v389
      %v2595 = vmul.f32 %v2585, %v389
      %v2596 = vadd.f32 %v2561, %v2592
      %v2597 = vadd.f32 %v2562, %v2593
      %v2598 = vadd.f32 %v2563, %v2594
      %v2599 = vadd.f32 %v2564, %v2595
      %v2600 = vmul.f32 %v2582, %v451
      %v2601 = vmul.f32 %v2583, %v451
      %v2602 = vmul.f32 %v2584, %v451
      %v2603 = vmul.f32 %v2585, %v451
      %v2604 = vadd.f32 %v2569, %v2600
      %v2605 = vadd.f32 %v2570, %v2601
      %v2606 = vadd.f32 %v2571, %v2602
      %v2607 = vadd.f32 %v2572, %v2603
      %v2608 = vmul.f32 %v2583, %v360
      %v2609 = vmul.f32 %v2584, %v360
      %v2610 = vmul.f32 %v2585, %v360
      %v2611 = vmul.f32 %v2586, %v360
      %v2612 = vadd.f32 %v2588, %v2608
      %v2613 = vadd.f32 %v2589, %v2609
      %v2614 = vadd.f32 %v2590, %v2610
      %v2615 = vadd.f32 %v2591, %v2611
      %v2616 = vmul.f32 %v2583, %v406
      %v2617 = vmul.f32 %v2584, %v406
      %v2618 = vmul.f32 %v2585, %v406
      %v2619 = vmul.f32 %v2586, %v406
      %v2620 = vadd.f32 %v2596, %v2616
      %v2621 = vadd.f32 %v2597, %v2617
      %v2622 = vadd.f32 %v2598, %v2618
      %v2623 = vadd.f32 %v2599, %v2619
      %v2624 = vmul.f32 %v2583, %v476
      %v2625 = vmul.f32 %v2584, %v476
      %v2626 = vmul.f32 %v2585, %v476
      %v2627 = vmul.f32 %v2586, %v476
      %v2628 = vadd.f32 %v2604, %v2624
      %v2629 = vadd.f32 %v2605, %v2625
      %v2630 = vadd.f32 %v2606, %v2626
      %v2631 = vadd.f32 %v2607, %v2627
      %v2632 = vmul.f32 %v2584, %v369
      %v2633 = vmul.f32 %v2585, %v369
      %v2634 = vmul.f32 %v2586, %v369
      %v2635 = vmul.f32 %v2587, %v369
      %v2636 = vadd.f32 %v2612, %v2632
      %v2637 = vadd.f32 %v2613, %v2633
      %v2638 = vadd.f32 %v2614, %v2634
      %v2639 = vadd.f32 %v2615, %v2635
      %v2640 = vmul.f32 %v2584, %v423
      %v2641 = vmul.f32 %v2585, %v423
      %v2642 = vmul.f32 %v2586, %v423
      %v2643 = vmul.f32 %v2587, %v423
      %v2644 = vadd.f32 %v2620, %v2640
      %v2645 = vadd.f32 %v2621, %v2641
      %v2646 = vadd.f32 %v2622, %v2642
      %v2647 = vadd.f32 %v2623, %v2643
      %v2648 = vmul.f32 %v2584, %v501
      %v2649 = vmul.f32 %v2585, %v501
      %v2650 = vmul.f32 %v2586, %v501
      %v2651 = vmul.f32 %v2587, %v501
      %v2652 = vadd.f32 %v2628, %v2648
      %v2653 = vadd.f32 %v2629, %v2649
      %v2654 = vadd.f32 %v2630, %v2650
      %v2655 = vadd.f32 %v2631, %v2651
      %s2656 = scalar_lea.vmem %s0, 1152
      %v2657 = vld [vmem:[%s2656] sm:$0x7f]
      %v2658 = vld [vmem:[%s2656 + $0x8] sm:$0x7f]
      %v2659 = vld [vmem:[%s2656 + $0x10] sm:$0x7f]
      %v2660 = vld [vmem:[%s2656 + $0x18] sm:$0x7f]
      %v2661 = vld [vmem:[%s2656 + $0x20] sm:$0x7f]
      %v2662 = vld [vmem:[%s2656 + $0x28] sm:$0x7f]
      %v2663 = vmul.f32 %v2657, %v389
      %v2664 = vmul.f32 %v2658, %v389
      %v2665 = vmul.f32 %v2659, %v389
      %v2666 = vmul.f32 %v2660, %v389
      %v2667 = vadd.f32 %v2636, %v2663
      %v2668 = vadd.f32 %v2637, %v2664
      %v2669 = vadd.f32 %v2638, %v2665
      %v2670 = vadd.f32 %v2639, %v2666
      %v2671 = vmul.f32 %v2657, %v451
      %v2672 = vmul.f32 %v2658, %v451
      %v2673 = vmul.f32 %v2659, %v451
      %v2674 = vmul.f32 %v2660, %v451
      %v2675 = vadd.f32 %v2644, %v2671
      %v2676 = vadd.f32 %v2645, %v2672
      %v2677 = vadd.f32 %v2646, %v2673
      %v2678 = vadd.f32 %v2647, %v2674
      %v2679 = vmul.f32 %v2658, %v406
      %v2680 = vmul.f32 %v2659, %v406
      %v2681 = vmul.f32 %v2660, %v406
      %v2682 = vmul.f32 %v2661, %v406
      %v2683 = vadd.f32 %v2667, %v2679
      %v2684 = vadd.f32 %v2668, %v2680
      %v2685 = vadd.f32 %v2669, %v2681
      %v2686 = vadd.f32 %v2670, %v2682
      %v2687 = vmul.f32 %v2658, %v476
      %v2688 = vmul.f32 %v2659, %v476
      %v2689 = vmul.f32 %v2660, %v476
      %v2690 = vmul.f32 %v2661, %v476
      %v2691 = vadd.f32 %v2675, %v2687
      %v2692 = vadd.f32 %v2676, %v2688
      %v2693 = vadd.f32 %v2677, %v2689
      %v2694 = vadd.f32 %v2678, %v2690
      %v2695 = vmul.f32 %v2659, %v423
      %v2696 = vmul.f32 %v2660, %v423
      %v2697 = vmul.f32 %v2661, %v423
      %v2698 = vmul.f32 %v2662, %v423
      %v2699 = vadd.f32 %v2683, %v2695
      %v2700 = vadd.f32 %v2684, %v2696
      %v2701 = vadd.f32 %v2685, %v2697
      %v2702 = vadd.f32 %v2686, %v2698
      %v2703 = vmul.f32 %v2659, %v501
      %v2704 = vmul.f32 %v2660, %v501
      %v2705 = vmul.f32 %v2661, %v501
      %v2706 = vmul.f32 %v2662, %v501
      %v2707 = vadd.f32 %v2691, %v2703
      %v2708 = vadd.f32 %v2692, %v2704
      %v2709 = vadd.f32 %v2693, %v2705
      %v2710 = vadd.f32 %v2694, %v2706
      %s2711 = scalar_lea.vmem %s0, 1392
      %v2712 = vld [vmem:[%s2711] sm:$0x7f]
      %v2713 = vld [vmem:[%s2711 + $0x8] sm:$0x7f]
      %v2714 = vld [vmem:[%s2711 + $0x10] sm:$0x7f]
      %v2715 = vld [vmem:[%s2711 + $0x18] sm:$0x7f]
      %v2716 = vld [vmem:[%s2711 + $0x20] sm:$0x7f]
      %v2717 = vld [vmem:[%s2711 + $0x28] sm:$0x7f]
      %v2718 = vmul.f32 %v2712, %v451
      %v2719 = vmul.f32 %v2713, %v451
      %v2720 = vmul.f32 %v2714, %v451
      %v2721 = vmul.f32 %v2715, %v451
      %v2722 = vadd.f32 %v2699, %v2718
      %v2723 = vadd.f32 %v2700, %v2719
      %v2724 = vadd.f32 %v2701, %v2720
      %v2725 = vadd.f32 %v2702, %v2721
      %v2726 = vmul.f32 %v2713, %v476
      %v2727 = vmul.f32 %v2714, %v476
      %v2728 = vmul.f32 %v2715, %v476
      %v2729 = vmul.f32 %v2716, %v476
      %v2730 = vadd.f32 %v2722, %v2726
      %v2731 = vadd.f32 %v2723, %v2727
      %v2732 = vadd.f32 %v2724, %v2728
      %v2733 = vadd.f32 %v2725, %v2729
      %v2734 = vmul.f32 %v2714, %v501
      %v2735 = vmul.f32 %v2715, %v501
      %v2736 = vmul.f32 %v2716, %v501
      %v2737 = vmul.f32 %v2717, %v501
      %v2738 = vadd.f32 %v2730, %v2734
      %v2739 = vadd.f32 %v2731, %v2735
      %v2740 = vadd.f32 %v2732, %v2736
      %v2741 = vadd.f32 %v2733, %v2737
      %v2742 = vmax.f32 %v2577, %v2652
      %v2743 = vmax.f32 %v2578, %v2653
      %v2744 = vmax.f32 %v2579, %v2654
      %v2745 = vmax.f32 %v2580, %v2655
      %v2746 = vmax.f32 %v2707, %v2738
      %v2747 = vmax.f32 %v2708, %v2739
      %v2748 = vmax.f32 %v2709, %v2740
      %v2749 = vmax.f32 %v2710, %v2741
      %v2750 = vmax.f32 %v2742, %v2746
      %v2751 = vmax.f32 %v2743, %v2747
      %v2752 = vmax.f32 %v2744, %v2748
      %v2753 = vmax.f32 %v2745, %v2749
      %v2754 = vsel %vm683, %v2750, -inf
      %v2755 = vsel %vm683, %v2751, -inf
      %v2756 = vsel %vm683, %v2752, -inf
      %v2757 = vsel %vm683, %v2753, -inf
      %v2758 = vmax.f32 %v2754, %v2755
      %v2759 = vmax.f32 %v2756, %v2757
      %v2760 = vmax.f32 %v2758, %v2759
      %v2761 = vadd.f32 %v2760, %v691
      %v2762 = vmax.f32 %v2761, 0.0
      %s2763 = sadd.s32 56, %s694
      %s2764 = scalar_lea.vmem [#allocation2], %s2763
      %2765 = vst [vmem:[%s2764 + $0x1] sm:$0x3f] %v2762
      %s2766 = sadd.s32 56, %s699
      %s2767 = scalar_lea.vmem [#allocation2], %s2766
      %2768 = vst [vmem:[%s2767] sm:$0x7f] %v2762
      %s2769 = sadd.s32 56, %s704
      %s2770 = scalar_lea.vmem [#allocation2], %s2769
      %2771 = vst [vmem:[%s2770 - $0x1] sm:$0x7e] %v2762
    $region58: #{tpu_custom_call.1} parent=1 // loop_footer
      %s329 = sadd.s32 1, %s325
    $region59: #{tpu_custom_call.1} parent=1 // loop_footer_branch
      %324 = sbr.rel target = $region55
    $region60: #{tpu_custom_call.1} parent=1 // loop_exit
      _
    loop: start=0, step=1, limit=20
    $region61: #{tpu_custom_call.1} parent=1 // loop_pre_header
      _
    $region62: #{tpu_custom_call.1} parent=1 // loop_header
      %s2773 = sphi 0, %s2777
      %p2774 = scmp.ge.s32.totalorder %s2773, 20
    $region63: #{tpu_custom_call.1} parent=1 // loop_header_branch
      %2776 = sbr.rel (%p2774) target = $region67
    $region64: #{tpu_custom_call.1} parent=1 // loop_body
      %s2778 = sld [smem:[#allocation10 + %s2773]]
      %v2779 = vld [vmem:[#allocation2] sm:$0x7f]
      %v2780 = vld [vmem:[#allocation2 + $0x8] sm:$0x7f]
      %v2781 = vld [vmem:[#allocation2 + $0x10] sm:$0x7f]
      %v2782 = vld [vmem:[#allocation2 + $0x18] sm:$0x7f]
      %v2783 = vld [vmem:[#allocation2 + $0x20] sm:$0x7f]
      %v2784 = vld [vmem:[#allocation2 + $0x28] sm:$0x7f]
      %v2785 = vld [vmem:[#allocation2 + $0x30] sm:$0x7f]
      %v2786 = vld [vmem:[#allocation2 + $0x38] sm:$0x7f]
      %v2787 = vld [vmem:[#allocation2 + $0x40] sm:$0x7f]
      %s2788 = smul.u32 %s2773, 128
      %s2789 = sld [smem:[#allocation9 + %s2788]]
      %v2790 = vstv %s2789
      %v2791 = vmul.f32 %v2779, %v2790
      %v2792 = vmul.f32 %v2780, %v2790
      %v2793 = vmul.f32 %v2781, %v2790
      %v2794 = vmul.f32 %v2782, %v2790
      %v2795 = vmul.f32 %v2783, %v2790
      %v2796 = vmul.f32 %v2784, %v2790
      %v2797 = vmul.f32 %v2785, %v2790
      %s2798 = sadd.s32 %s2788, 30
      %s2799 = sld [smem:[#allocation9 + %s2798]]
      %v2800 = vstv %s2799
      %v2801 = vmul.f32 %v2780, %v2800
      %v2802 = vmul.f32 %v2781, %v2800
      %v2803 = vmul.f32 %v2782, %v2800
      %v2804 = vmul.f32 %v2783, %v2800
      %v2805 = vmul.f32 %v2784, %v2800
      %v2806 = vmul.f32 %v2785, %v2800
      %v2807 = vmul.f32 %v2786, %v2800
      %s2808 = sadd.s32 %s2788, 60
      %s2809 = sld [smem:[#allocation9 + %s2808]]
      %v2810 = vstv %s2809
      %v2811 = vmul.f32 %v2781, %v2810
      %v2812 = vmul.f32 %v2782, %v2810
      %v2813 = vmul.f32 %v2783, %v2810
      %v2814 = vmul.f32 %v2784, %v2810
      %v2815 = vmul.f32 %v2785, %v2810
      %v2816 = vmul.f32 %v2786, %v2810
      %v2817 = vmul.f32 %v2787, %v2810
      %v2818 = vld [vmem:[%s108] sm:$0x7f]
      %v2819 = vld [vmem:[%s108 + $0x8] sm:$0x7f]
      %v2820 = vld [vmem:[%s108 + $0x10] sm:$0x7f]
      %v2821 = vld [vmem:[%s108 + $0x18] sm:$0x7f]
      %v2822 = vld [vmem:[%s108 + $0x20] sm:$0x7f]
      %v2823 = vld [vmem:[%s108 + $0x28] sm:$0x7f]
      %v2824 = vld [vmem:[%s108 + $0x30] sm:$0x7f]
      %v2825 = vld [vmem:[%s108 + $0x38] sm:$0x7f]
      %v2826 = vld [vmem:[%s108 + $0x40] sm:$0x7f]
      %s2827 = sadd.s32 %s2788, 1
      %s2828 = sld [smem:[#allocation9 + %s2827]]
      %v2829 = vstv %s2828
      %v2830 = vmul.f32 %v2818, %v2829
      %v2831 = vmul.f32 %v2819, %v2829
      %v2832 = vmul.f32 %v2820, %v2829
      %v2833 = vmul.f32 %v2821, %v2829
      %v2834 = vmul.f32 %v2822, %v2829
      %v2835 = vmul.f32 %v2823, %v2829
      %v2836 = vmul.f32 %v2824, %v2829
      %v2837 = vadd.f32 %v2791, %v2830
      %v2838 = vadd.f32 %v2792, %v2831
      %v2839 = vadd.f32 %v2793, %v2832
      %v2840 = vadd.f32 %v2794, %v2833
      %v2841 = vadd.f32 %v2795, %v2834
      %v2842 = vadd.f32 %v2796, %v2835
      %v2843 = vadd.f32 %v2797, %v2836
      %s2844 = sadd.s32 %s2788, 31
      %s2845 = sld [smem:[#allocation9 + %s2844]]
      %v2846 = vstv %s2845
      %v2847 = vmul.f32 %v2819, %v2846
      %v2848 = vmul.f32 %v2820, %v2846
      %v2849 = vmul.f32 %v2821, %v2846
      %v2850 = vmul.f32 %v2822, %v2846
      %v2851 = vmul.f32 %v2823, %v2846
      %v2852 = vmul.f32 %v2824, %v2846
      %v2853 = vmul.f32 %v2825, %v2846
      %v2854 = vadd.f32 %v2801, %v2847
      %v2855 = vadd.f32 %v2802, %v2848
      %v2856 = vadd.f32 %v2803, %v2849
      %v2857 = vadd.f32 %v2804, %v2850
      %v2858 = vadd.f32 %v2805, %v2851
      %v2859 = vadd.f32 %v2806, %v2852
      %v2860 = vadd.f32 %v2807, %v2853
      %s2861 = sadd.s32 %s2788, 61
      %s2862 = sld [smem:[#allocation9 + %s2861]]
      %v2863 = vstv %s2862
      %v2864 = vmul.f32 %v2820, %v2863
      %v2865 = vmul.f32 %v2821, %v2863
      %v2866 = vmul.f32 %v2822, %v2863
      %v2867 = vmul.f32 %v2823, %v2863
      %v2868 = vmul.f32 %v2824, %v2863
      %v2869 = vmul.f32 %v2825, %v2863
      %v2870 = vmul.f32 %v2826, %v2863
      %v2871 = vadd.f32 %v2811, %v2864
      %v2872 = vadd.f32 %v2812, %v2865
      %v2873 = vadd.f32 %v2813, %v2866
      %v2874 = vadd.f32 %v2814, %v2867
      %v2875 = vadd.f32 %v2815, %v2868
      %v2876 = vadd.f32 %v2816, %v2869
      %v2877 = vadd.f32 %v2817, %v2870
      %v2878 = vld [vmem:[%s132] sm:$0x7f]
      %v2879 = vld [vmem:[%s132 + $0x8] sm:$0x7f]
      %v2880 = vld [vmem:[%s132 + $0x10] sm:$0x7f]
      %v2881 = vld [vmem:[%s132 + $0x18] sm:$0x7f]
      %v2882 = vld [vmem:[%s132 + $0x20] sm:$0x7f]
      %v2883 = vld [vmem:[%s132 + $0x28] sm:$0x7f]
      %v2884 = vld [vmem:[%s132 + $0x30] sm:$0x7f]
      %v2885 = vld [vmem:[%s132 + $0x38] sm:$0x7f]
      %v2886 = vld [vmem:[%s132 + $0x40] sm:$0x7f]
      %s2887 = sadd.s32 %s2788, 2
      %s2888 = sld [smem:[#allocation9 + %s2887]]
      %v2889 = vstv %s2888
      %v2890 = vmul.f32 %v2878, %v2889
      %v2891 = vmul.f32 %v2879, %v2889
      %v2892 = vmul.f32 %v2880, %v2889
      %v2893 = vmul.f32 %v2881, %v2889
      %v2894 = vmul.f32 %v2882, %v2889
      %v2895 = vmul.f32 %v2883, %v2889
      %v2896 = vmul.f32 %v2884, %v2889
      %v2897 = vadd.f32 %v2837, %v2890
      %v2898 = vadd.f32 %v2838, %v2891
      %v2899 = vadd.f32 %v2839, %v2892
      %v2900 = vadd.f32 %v2840, %v2893
      %v2901 = vadd.f32 %v2841, %v2894
      %v2902 = vadd.f32 %v2842, %v2895
      %v2903 = vadd.f32 %v2843, %v2896
      %s2904 = sadd.s32 %s2788, 32
      %s2905 = sld [smem:[#allocation9 + %s2904]]
      %v2906 = vstv %s2905
      %v2907 = vmul.f32 %v2879, %v2906
      %v2908 = vmul.f32 %v2880, %v2906
      %v2909 = vmul.f32 %v2881, %v2906
      %v2910 = vmul.f32 %v2882, %v2906
      %v2911 = vmul.f32 %v2883, %v2906
      %v2912 = vmul.f32 %v2884, %v2906
      %v2913 = vmul.f32 %v2885, %v2906
      %v2914 = vadd.f32 %v2854, %v2907
      %v2915 = vadd.f32 %v2855, %v2908
      %v2916 = vadd.f32 %v2856, %v2909
      %v2917 = vadd.f32 %v2857, %v2910
      %v2918 = vadd.f32 %v2858, %v2911
      %v2919 = vadd.f32 %v2859, %v2912
      %v2920 = vadd.f32 %v2860, %v2913
      %s2921 = sadd.s32 %s2788, 62
      %s2922 = sld [smem:[#allocation9 + %s2921]]
      %v2923 = vstv %s2922
      %v2924 = vmul.f32 %v2880, %v2923
      %v2925 = vmul.f32 %v2881, %v2923
      %v2926 = vmul.f32 %v2882, %v2923
      %v2927 = vmul.f32 %v2883, %v2923
      %v2928 = vmul.f32 %v2884, %v2923
      %v2929 = vmul.f32 %v2885, %v2923
      %v2930 = vmul.f32 %v2886, %v2923
      %v2931 = vadd.f32 %v2871, %v2924
      %v2932 = vadd.f32 %v2872, %v2925
      %v2933 = vadd.f32 %v2873, %v2926
      %v2934 = vadd.f32 %v2874, %v2927
      %v2935 = vadd.f32 %v2875, %v2928
      %v2936 = vadd.f32 %v2876, %v2929
      %v2937 = vadd.f32 %v2877, %v2930
      %v2938 = vld [vmem:[%s156] sm:$0x7f]
      %v2939 = vld [vmem:[%s156 + $0x8] sm:$0x7f]
      %v2940 = vld [vmem:[%s156 + $0x10] sm:$0x7f]
      %v2941 = vld [vmem:[%s156 + $0x18] sm:$0x7f]
      %v2942 = vld [vmem:[%s156 + $0x20] sm:$0x7f]
      %v2943 = vld [vmem:[%s156 + $0x28] sm:$0x7f]
      %v2944 = vld [vmem:[%s156 + $0x30] sm:$0x7f]
      %v2945 = vld [vmem:[%s156 + $0x38] sm:$0x7f]
      %v2946 = vld [vmem:[%s156 + $0x40] sm:$0x7f]
      %s2947 = sadd.s32 %s2788, 3
      %s2948 = sld [smem:[#allocation9 + %s2947]]
      %v2949 = vstv %s2948
      %v2950 = vmul.f32 %v2938, %v2949
      %v2951 = vmul.f32 %v2939, %v2949
      %v2952 = vmul.f32 %v2940, %v2949
      %v2953 = vmul.f32 %v2941, %v2949
      %v2954 = vmul.f32 %v2942, %v2949
      %v2955 = vmul.f32 %v2943, %v2949
      %v2956 = vmul.f32 %v2944, %v2949
      %v2957 = vadd.f32 %v2897, %v2950
      %v2958 = vadd.f32 %v2898, %v2951
      %v2959 = vadd.f32 %v2899, %v2952
      %v2960 = vadd.f32 %v2900, %v2953
      %v2961 = vadd.f32 %v2901, %v2954
      %v2962 = vadd.f32 %v2902, %v2955
      %v2963 = vadd.f32 %v2903, %v2956
      %s2964 = sadd.s32 %s2788, 33
      %s2965 = sld [smem:[#allocation9 + %s2964]]
      %v2966 = vstv %s2965
      %v2967 = vmul.f32 %v2939, %v2966
      %v2968 = vmul.f32 %v2940, %v2966
      %v2969 = vmul.f32 %v2941, %v2966
      %v2970 = vmul.f32 %v2942, %v2966
      %v2971 = vmul.f32 %v2943, %v2966
      %v2972 = vmul.f32 %v2944, %v2966
      %v2973 = vmul.f32 %v2945, %v2966
      %v2974 = vadd.f32 %v2914, %v2967
      %v2975 = vadd.f32 %v2915, %v2968
      %v2976 = vadd.f32 %v2916, %v2969
      %v2977 = vadd.f32 %v2917, %v2970
      %v2978 = vadd.f32 %v2918, %v2971
      %v2979 = vadd.f32 %v2919, %v2972
      %v2980 = vadd.f32 %v2920, %v2973
      %s2981 = sadd.s32 %s2788, 63
      %s2982 = sld [smem:[#allocation9 + %s2981]]
      %v2983 = vstv %s2982
      %v2984 = vmul.f32 %v2940, %v2983
      %v2985 = vmul.f32 %v2941, %v2983
      %v2986 = vmul.f32 %v2942, %v2983
      %v2987 = vmul.f32 %v2943, %v2983
      %v2988 = vmul.f32 %v2944, %v2983
      %v2989 = vmul.f32 %v2945, %v2983
      %v2990 = vmul.f32 %v2946, %v2983
      %v2991 = vadd.f32 %v2931, %v2984
      %v2992 = vadd.f32 %v2932, %v2985
      %v2993 = vadd.f32 %v2933, %v2986
      %v2994 = vadd.f32 %v2934, %v2987
      %v2995 = vadd.f32 %v2935, %v2988
      %v2996 = vadd.f32 %v2936, %v2989
      %v2997 = vadd.f32 %v2937, %v2990
      %v2998 = vld [vmem:[%s180] sm:$0x7f]
      %v2999 = vld [vmem:[%s180 + $0x8] sm:$0x7f]
      %v3000 = vld [vmem:[%s180 + $0x10] sm:$0x7f]
      %v3001 = vld [vmem:[%s180 + $0x18] sm:$0x7f]
      %v3002 = vld [vmem:[%s180 + $0x20] sm:$0x7f]
      %v3003 = vld [vmem:[%s180 + $0x28] sm:$0x7f]
      %v3004 = vld [vmem:[%s180 + $0x30] sm:$0x7f]
      %v3005 = vld [vmem:[%s180 + $0x38] sm:$0x7f]
      %v3006 = vld [vmem:[%s180 + $0x40] sm:$0x7f]
      %s3007 = sadd.s32 %s2788, 4
      %s3008 = sld [smem:[#allocation9 + %s3007]]
      %v3009 = vstv %s3008
      %v3010 = vmul.f32 %v2998, %v3009
      %v3011 = vmul.f32 %v2999, %v3009
      %v3012 = vmul.f32 %v3000, %v3009
      %v3013 = vmul.f32 %v3001, %v3009
      %v3014 = vmul.f32 %v3002, %v3009
      %v3015 = vmul.f32 %v3003, %v3009
      %v3016 = vmul.f32 %v3004, %v3009
      %v3017 = vadd.f32 %v2957, %v3010
      %v3018 = vadd.f32 %v2958, %v3011
      %v3019 = vadd.f32 %v2959, %v3012
      %v3020 = vadd.f32 %v2960, %v3013
      %v3021 = vadd.f32 %v2961, %v3014
      %v3022 = vadd.f32 %v2962, %v3015
      %v3023 = vadd.f32 %v2963, %v3016
      %s3024 = sadd.s32 %s2788, 34
      %s3025 = sld [smem:[#allocation9 + %s3024]]
      %v3026 = vstv %s3025
      %v3027 = vmul.f32 %v2999, %v3026
      %v3028 = vmul.f32 %v3000, %v3026
      %v3029 = vmul.f32 %v3001, %v3026
      %v3030 = vmul.f32 %v3002, %v3026
      %v3031 = vmul.f32 %v3003, %v3026
      %v3032 = vmul.f32 %v3004, %v3026
      %v3033 = vmul.f32 %v3005, %v3026
      %v3034 = vadd.f32 %v2974, %v3027
      %v3035 = vadd.f32 %v2975, %v3028
      %v3036 = vadd.f32 %v2976, %v3029
      %v3037 = vadd.f32 %v2977, %v3030
      %v3038 = vadd.f32 %v2978, %v3031
      %v3039 = vadd.f32 %v2979, %v3032
      %v3040 = vadd.f32 %v2980, %v3033
      %s3041 = sadd.s32 %s2788, 64
      %s3042 = sld [smem:[#allocation9 + %s3041]]
      %v3043 = vstv %s3042
      %v3044 = vmul.f32 %v3000, %v3043
      %v3045 = vmul.f32 %v3001, %v3043
      %v3046 = vmul.f32 %v3002, %v3043
      %v3047 = vmul.f32 %v3003, %v3043
      %v3048 = vmul.f32 %v3004, %v3043
      %v3049 = vmul.f32 %v3005, %v3043
      %v3050 = vmul.f32 %v3006, %v3043
      %v3051 = vadd.f32 %v2991, %v3044
      %v3052 = vadd.f32 %v2992, %v3045
      %v3053 = vadd.f32 %v2993, %v3046
      %v3054 = vadd.f32 %v2994, %v3047
      %v3055 = vadd.f32 %v2995, %v3048
      %v3056 = vadd.f32 %v2996, %v3049
      %v3057 = vadd.f32 %v2997, %v3050
      %v3058 = vld [vmem:[%s204] sm:$0x7f]
      %v3059 = vld [vmem:[%s204 + $0x8] sm:$0x7f]
      %v3060 = vld [vmem:[%s204 + $0x10] sm:$0x7f]
      %v3061 = vld [vmem:[%s204 + $0x18] sm:$0x7f]
      %v3062 = vld [vmem:[%s204 + $0x20] sm:$0x7f]
      %v3063 = vld [vmem:[%s204 + $0x28] sm:$0x7f]
      %v3064 = vld [vmem:[%s204 + $0x30] sm:$0x7f]
      %v3065 = vld [vmem:[%s204 + $0x38] sm:$0x7f]
      %v3066 = vld [vmem:[%s204 + $0x40] sm:$0x7f]
      %s3067 = sadd.s32 %s2788, 5
      %s3068 = sld [smem:[#allocation9 + %s3067]]
      %v3069 = vstv %s3068
      %v3070 = vmul.f32 %v3058, %v3069
      %v3071 = vmul.f32 %v3059, %v3069
      %v3072 = vmul.f32 %v3060, %v3069
      %v3073 = vmul.f32 %v3061, %v3069
      %v3074 = vmul.f32 %v3062, %v3069
      %v3075 = vmul.f32 %v3063, %v3069
      %v3076 = vmul.f32 %v3064, %v3069
      %v3077 = vadd.f32 %v3017, %v3070
      %v3078 = vadd.f32 %v3018, %v3071
      %v3079 = vadd.f32 %v3019, %v3072
      %v3080 = vadd.f32 %v3020, %v3073
      %v3081 = vadd.f32 %v3021, %v3074
      %v3082 = vadd.f32 %v3022, %v3075
      %v3083 = vadd.f32 %v3023, %v3076
      %s3084 = sadd.s32 %s2788, 35
      %s3085 = sld [smem:[#allocation9 + %s3084]]
      %v3086 = vstv %s3085
      %v3087 = vmul.f32 %v3059, %v3086
      %v3088 = vmul.f32 %v3060, %v3086
      %v3089 = vmul.f32 %v3061, %v3086
      %v3090 = vmul.f32 %v3062, %v3086
      %v3091 = vmul.f32 %v3063, %v3086
      %v3092 = vmul.f32 %v3064, %v3086
      %v3093 = vmul.f32 %v3065, %v3086
      %v3094 = vadd.f32 %v3034, %v3087
      %v3095 = vadd.f32 %v3035, %v3088
      %v3096 = vadd.f32 %v3036, %v3089
      %v3097 = vadd.f32 %v3037, %v3090
      %v3098 = vadd.f32 %v3038, %v3091
      %v3099 = vadd.f32 %v3039, %v3092
      %v3100 = vadd.f32 %v3040, %v3093
      %s3101 = sadd.s32 %s2788, 65
      %s3102 = sld [smem:[#allocation9 + %s3101]]
      %v3103 = vstv %s3102
      %v3104 = vmul.f32 %v3060, %v3103
      %v3105 = vmul.f32 %v3061, %v3103
      %v3106 = vmul.f32 %v3062, %v3103
      %v3107 = vmul.f32 %v3063, %v3103
      %v3108 = vmul.f32 %v3064, %v3103
      %v3109 = vmul.f32 %v3065, %v3103
      %v3110 = vmul.f32 %v3066, %v3103
      %v3111 = vadd.f32 %v3051, %v3104
      %v3112 = vadd.f32 %v3052, %v3105
      %v3113 = vadd.f32 %v3053, %v3106
      %v3114 = vadd.f32 %v3054, %v3107
      %v3115 = vadd.f32 %v3055, %v3108
      %v3116 = vadd.f32 %v3056, %v3109
      %v3117 = vadd.f32 %v3057, %v3110
      %v3118 = vld [vmem:[%s228] sm:$0x7f]
      %v3119 = vld [vmem:[%s228 + $0x8] sm:$0x7f]
      %v3120 = vld [vmem:[%s228 + $0x10] sm:$0x7f]
      %v3121 = vld [vmem:[%s228 + $0x18] sm:$0x7f]
      %v3122 = vld [vmem:[%s228 + $0x20] sm:$0x7f]
      %v3123 = vld [vmem:[%s228 + $0x28] sm:$0x7f]
      %v3124 = vld [vmem:[%s228 + $0x30] sm:$0x7f]
      %v3125 = vld [vmem:[%s228 + $0x38] sm:$0x7f]
      %v3126 = vld [vmem:[%s228 + $0x40] sm:$0x7f]
      %s3127 = sadd.s32 %s2788, 6
      %s3128 = sld [smem:[#allocation9 + %s3127]]
      %v3129 = vstv %s3128
      %v3130 = vmul.f32 %v3118, %v3129
      %v3131 = vmul.f32 %v3119, %v3129
      %v3132 = vmul.f32 %v3120, %v3129
      %v3133 = vmul.f32 %v3121, %v3129
      %v3134 = vmul.f32 %v3122, %v3129
      %v3135 = vmul.f32 %v3123, %v3129
      %v3136 = vmul.f32 %v3124, %v3129
      %v3137 = vadd.f32 %v3077, %v3130
      %v3138 = vadd.f32 %v3078, %v3131
      %v3139 = vadd.f32 %v3079, %v3132
      %v3140 = vadd.f32 %v3080, %v3133
      %v3141 = vadd.f32 %v3081, %v3134
      %v3142 = vadd.f32 %v3082, %v3135
      %v3143 = vadd.f32 %v3083, %v3136
      %s3144 = sadd.s32 %s2788, 36
      %s3145 = sld [smem:[#allocation9 + %s3144]]
      %v3146 = vstv %s3145
      %v3147 = vmul.f32 %v3119, %v3146
      %v3148 = vmul.f32 %v3120, %v3146
      %v3149 = vmul.f32 %v3121, %v3146
      %v3150 = vmul.f32 %v3122, %v3146
      %v3151 = vmul.f32 %v3123, %v3146
      %v3152 = vmul.f32 %v3124, %v3146
      %v3153 = vmul.f32 %v3125, %v3146
      %v3154 = vadd.f32 %v3094, %v3147
      %v3155 = vadd.f32 %v3095, %v3148
      %v3156 = vadd.f32 %v3096, %v3149
      %v3157 = vadd.f32 %v3097, %v3150
      %v3158 = vadd.f32 %v3098, %v3151
      %v3159 = vadd.f32 %v3099, %v3152
      %v3160 = vadd.f32 %v3100, %v3153
      %s3161 = sadd.s32 %s2788, 66
      %s3162 = sld [smem:[#allocation9 + %s3161]]
      %v3163 = vstv %s3162
      %v3164 = vmul.f32 %v3120, %v3163
      %v3165 = vmul.f32 %v3121, %v3163
      %v3166 = vmul.f32 %v3122, %v3163
      %v3167 = vmul.f32 %v3123, %v3163
      %v3168 = vmul.f32 %v3124, %v3163
      %v3169 = vmul.f32 %v3125, %v3163
      %v3170 = vmul.f32 %v3126, %v3163
      %v3171 = vadd.f32 %v3111, %v3164
      %v3172 = vadd.f32 %v3112, %v3165
      %v3173 = vadd.f32 %v3113, %v3166
      %v3174 = vadd.f32 %v3114, %v3167
      %v3175 = vadd.f32 %v3115, %v3168
      %v3176 = vadd.f32 %v3116, %v3169
      %v3177 = vadd.f32 %v3117, %v3170
      %v3178 = vld [vmem:[%s252] sm:$0x7f]
      %v3179 = vld [vmem:[%s252 + $0x8] sm:$0x7f]
      %v3180 = vld [vmem:[%s252 + $0x10] sm:$0x7f]
      %v3181 = vld [vmem:[%s252 + $0x18] sm:$0x7f]
      %v3182 = vld [vmem:[%s252 + $0x20] sm:$0x7f]
      %v3183 = vld [vmem:[%s252 + $0x28] sm:$0x7f]
      %v3184 = vld [vmem:[%s252 + $0x30] sm:$0x7f]
      %v3185 = vld [vmem:[%s252 + $0x38] sm:$0x7f]
      %v3186 = vld [vmem:[%s252 + $0x40] sm:$0x7f]
      %s3187 = sadd.s32 %s2788, 7
      %s3188 = sld [smem:[#allocation9 + %s3187]]
      %v3189 = vstv %s3188
      %v3190 = vmul.f32 %v3178, %v3189
      %v3191 = vmul.f32 %v3179, %v3189
      %v3192 = vmul.f32 %v3180, %v3189
      %v3193 = vmul.f32 %v3181, %v3189
      %v3194 = vmul.f32 %v3182, %v3189
      %v3195 = vmul.f32 %v3183, %v3189
      %v3196 = vmul.f32 %v3184, %v3189
      %v3197 = vadd.f32 %v3137, %v3190
      %v3198 = vadd.f32 %v3138, %v3191
      %v3199 = vadd.f32 %v3139, %v3192
      %v3200 = vadd.f32 %v3140, %v3193
      %v3201 = vadd.f32 %v3141, %v3194
      %v3202 = vadd.f32 %v3142, %v3195
      %v3203 = vadd.f32 %v3143, %v3196
      %s3204 = sadd.s32 %s2788, 37
      %s3205 = sld [smem:[#allocation9 + %s3204]]
      %v3206 = vstv %s3205
      %v3207 = vmul.f32 %v3179, %v3206
      %v3208 = vmul.f32 %v3180, %v3206
      %v3209 = vmul.f32 %v3181, %v3206
      %v3210 = vmul.f32 %v3182, %v3206
      %v3211 = vmul.f32 %v3183, %v3206
      %v3212 = vmul.f32 %v3184, %v3206
      %v3213 = vmul.f32 %v3185, %v3206
      %v3214 = vadd.f32 %v3154, %v3207
      %v3215 = vadd.f32 %v3155, %v3208
      %v3216 = vadd.f32 %v3156, %v3209
      %v3217 = vadd.f32 %v3157, %v3210
      %v3218 = vadd.f32 %v3158, %v3211
      %v3219 = vadd.f32 %v3159, %v3212
      %v3220 = vadd.f32 %v3160, %v3213
      %s3221 = sadd.s32 %s2788, 67
      %s3222 = sld [smem:[#allocation9 + %s3221]]
      %v3223 = vstv %s3222
      %v3224 = vmul.f32 %v3180, %v3223
      %v3225 = vmul.f32 %v3181, %v3223
      %v3226 = vmul.f32 %v3182, %v3223
      %v3227 = vmul.f32 %v3183, %v3223
      %v3228 = vmul.f32 %v3184, %v3223
      %v3229 = vmul.f32 %v3185, %v3223
      %v3230 = vmul.f32 %v3186, %v3223
      %v3231 = vadd.f32 %v3171, %v3224
      %v3232 = vadd.f32 %v3172, %v3225
      %v3233 = vadd.f32 %v3173, %v3226
      %v3234 = vadd.f32 %v3174, %v3227
      %v3235 = vadd.f32 %v3175, %v3228
      %v3236 = vadd.f32 %v3176, %v3229
      %v3237 = vadd.f32 %v3177, %v3230
      %v3238 = vld [vmem:[%s276] sm:$0x7f]
      %v3239 = vld [vmem:[%s276 + $0x8] sm:$0x7f]
      %v3240 = vld [vmem:[%s276 + $0x10] sm:$0x7f]
      %v3241 = vld [vmem:[%s276 + $0x18] sm:$0x7f]
      %v3242 = vld [vmem:[%s276 + $0x20] sm:$0x7f]
      %v3243 = vld [vmem:[%s276 + $0x28] sm:$0x7f]
      %v3244 = vld [vmem:[%s276 + $0x30] sm:$0x7f]
      %v3245 = vld [vmem:[%s276 + $0x38] sm:$0x7f]
      %v3246 = vld [vmem:[%s276 + $0x40] sm:$0x7f]
      %s3247 = sadd.s32 %s2788, 8
      %s3248 = sld [smem:[#allocation9 + %s3247]]
      %v3249 = vstv %s3248
      %v3250 = vmul.f32 %v3238, %v3249
      %v3251 = vmul.f32 %v3239, %v3249
      %v3252 = vmul.f32 %v3240, %v3249
      %v3253 = vmul.f32 %v3241, %v3249
      %v3254 = vmul.f32 %v3242, %v3249
      %v3255 = vmul.f32 %v3243, %v3249
      %v3256 = vmul.f32 %v3244, %v3249
      %v3257 = vadd.f32 %v3197, %v3250
      %v3258 = vadd.f32 %v3198, %v3251
      %v3259 = vadd.f32 %v3199, %v3252
      %v3260 = vadd.f32 %v3200, %v3253
      %v3261 = vadd.f32 %v3201, %v3254
      %v3262 = vadd.f32 %v3202, %v3255
      %v3263 = vadd.f32 %v3203, %v3256
      %s3264 = sadd.s32 %s2788, 38
      %s3265 = sld [smem:[#allocation9 + %s3264]]
      %v3266 = vstv %s3265
      %v3267 = vmul.f32 %v3239, %v3266
      %v3268 = vmul.f32 %v3240, %v3266
      %v3269 = vmul.f32 %v3241, %v3266
      %v3270 = vmul.f32 %v3242, %v3266
      %v3271 = vmul.f32 %v3243, %v3266
      %v3272 = vmul.f32 %v3244, %v3266
      %v3273 = vmul.f32 %v3245, %v3266
      %v3274 = vadd.f32 %v3214, %v3267
      %v3275 = vadd.f32 %v3215, %v3268
      %v3276 = vadd.f32 %v3216, %v3269
      %v3277 = vadd.f32 %v3217, %v3270
      %v3278 = vadd.f32 %v3218, %v3271
      %v3279 = vadd.f32 %v3219, %v3272
      %v3280 = vadd.f32 %v3220, %v3273
      %s3281 = sadd.s32 %s2788, 68
      %s3282 = sld [smem:[#allocation9 + %s3281]]
      %v3283 = vstv %s3282
      %v3284 = vmul.f32 %v3240, %v3283
      %v3285 = vmul.f32 %v3241, %v3283
      %v3286 = vmul.f32 %v3242, %v3283
      %v3287 = vmul.f32 %v3243, %v3283
      %v3288 = vmul.f32 %v3244, %v3283
      %v3289 = vmul.f32 %v3245, %v3283
      %v3290 = vmul.f32 %v3246, %v3283
      %v3291 = vadd.f32 %v3231, %v3284
      %v3292 = vadd.f32 %v3232, %v3285
      %v3293 = vadd.f32 %v3233, %v3286
      %v3294 = vadd.f32 %v3234, %v3287
      %v3295 = vadd.f32 %v3235, %v3288
      %v3296 = vadd.f32 %v3236, %v3289
      %v3297 = vadd.f32 %v3237, %v3290
      %v3298 = vld [vmem:[%s300] sm:$0x7f]
      %v3299 = vld [vmem:[%s300 + $0x8] sm:$0x7f]
      %v3300 = vld [vmem:[%s300 + $0x10] sm:$0x7f]
      %v3301 = vld [vmem:[%s300 + $0x18] sm:$0x7f]
      %v3302 = vld [vmem:[%s300 + $0x20] sm:$0x7f]
      %v3303 = vld [vmem:[%s300 + $0x28] sm:$0x7f]
      %v3304 = vld [vmem:[%s300 + $0x30] sm:$0x7f]
      %v3305 = vld [vmem:[%s300 + $0x38] sm:$0x7f]
      %v3306 = vld [vmem:[%s300 + $0x40] sm:$0x7f]
      %s3307 = sadd.s32 %s2788, 9
      %s3308 = sld [smem:[#allocation9 + %s3307]]
      %v3309 = vstv %s3308
      %v3310 = vmul.f32 %v3298, %v3309
      %v3311 = vmul.f32 %v3299, %v3309
      %v3312 = vmul.f32 %v3300, %v3309
      %v3313 = vmul.f32 %v3301, %v3309
      %v3314 = vmul.f32 %v3302, %v3309
      %v3315 = vmul.f32 %v3303, %v3309
      %v3316 = vmul.f32 %v3304, %v3309
      %v3317 = vadd.f32 %v3257, %v3310
      %v3318 = vadd.f32 %v3258, %v3311
      %v3319 = vadd.f32 %v3259, %v3312
      %v3320 = vadd.f32 %v3260, %v3313
      %v3321 = vadd.f32 %v3261, %v3314
      %v3322 = vadd.f32 %v3262, %v3315
      %v3323 = vadd.f32 %v3263, %v3316
      %s3324 = sadd.s32 %s2788, 39
      %s3325 = sld [smem:[#allocation9 + %s3324]]
      %v3326 = vstv %s3325
      %v3327 = vmul.f32 %v3299, %v3326
      %v3328 = vmul.f32 %v3300, %v3326
      %v3329 = vmul.f32 %v3301, %v3326
      %v3330 = vmul.f32 %v3302, %v3326
      %v3331 = vmul.f32 %v3303, %v3326
      %v3332 = vmul.f32 %v3304, %v3326
      %v3333 = vmul.f32 %v3305, %v3326
      %v3334 = vadd.f32 %v3274, %v3327
      %v3335 = vadd.f32 %v3275, %v3328
      %v3336 = vadd.f32 %v3276, %v3329
      %v3337 = vadd.f32 %v3277, %v3330
      %v3338 = vadd.f32 %v3278, %v3331
      %v3339 = vadd.f32 %v3279, %v3332
      %v3340 = vadd.f32 %v3280, %v3333
      %s3341 = sadd.s32 %s2788, 69
      %s3342 = sld [smem:[#allocation9 + %s3341]]
      %v3343 = vstv %s3342
      %v3344 = vmul.f32 %v3300, %v3343
      %v3345 = vmul.f32 %v3301, %v3343
      %v3346 = vmul.f32 %v3302, %v3343
      %v3347 = vmul.f32 %v3303, %v3343
      %v3348 = vmul.f32 %v3304, %v3343
      %v3349 = vmul.f32 %v3305, %v3343
      %v3350 = vmul.f32 %v3306, %v3343
      %v3351 = vadd.f32 %v3291, %v3344
      %v3352 = vadd.f32 %v3292, %v3345
      %v3353 = vadd.f32 %v3293, %v3346
      %v3354 = vadd.f32 %v3294, %v3347
      %v3355 = vadd.f32 %v3295, %v3348
      %v3356 = vadd.f32 %v3296, %v3349
      %v3357 = vadd.f32 %v3297, %v3350
      %v3358 = vld [vmem:[%s104] sm:$0x7f]
      %v3359 = vld [vmem:[%s104 + $0x8] sm:$0x7f]
      %v3360 = vld [vmem:[%s104 + $0x10] sm:$0x7f]
      %v3361 = vld [vmem:[%s104 + $0x18] sm:$0x7f]
      %v3362 = vld [vmem:[%s104 + $0x20] sm:$0x7f]
      %v3363 = vld [vmem:[%s104 + $0x28] sm:$0x7f]
      %v3364 = vld [vmem:[%s104 + $0x30] sm:$0x7f]
      %v3365 = vld [vmem:[%s104 + $0x38] sm:$0x7f]
      %v3366 = vld [vmem:[%s104 + $0x40] sm:$0x7f]
      %s3367 = sadd.s32 %s2788, 10
      %s3368 = sld [smem:[#allocation9 + %s3367]]
      %v3369 = vstv %s3368
      %v3370 = vmul.f32 %v3358, %v3369
      %v3371 = vmul.f32 %v3359, %v3369
      %v3372 = vmul.f32 %v3360, %v3369
      %v3373 = vmul.f32 %v3361, %v3369
      %v3374 = vmul.f32 %v3362, %v3369
      %v3375 = vmul.f32 %v3363, %v3369
      %v3376 = vmul.f32 %v3364, %v3369
      %v3377 = vadd.f32 %v3317, %v3370
      %v3378 = vadd.f32 %v3318, %v3371
      %v3379 = vadd.f32 %v3319, %v3372
      %v3380 = vadd.f32 %v3320, %v3373
      %v3381 = vadd.f32 %v3321, %v3374
      %v3382 = vadd.f32 %v3322, %v3375
      %v3383 = vadd.f32 %v3323, %v3376
      %s3384 = sadd.s32 %s2788, 40
      %s3385 = sld [smem:[#allocation9 + %s3384]]
      %v3386 = vstv %s3385
      %v3387 = vmul.f32 %v3359, %v3386
      %v3388 = vmul.f32 %v3360, %v3386
      %v3389 = vmul.f32 %v3361, %v3386
      %v3390 = vmul.f32 %v3362, %v3386
      %v3391 = vmul.f32 %v3363, %v3386
      %v3392 = vmul.f32 %v3364, %v3386
      %v3393 = vmul.f32 %v3365, %v3386
      %v3394 = vadd.f32 %v3334, %v3387
      %v3395 = vadd.f32 %v3335, %v3388
      %v3396 = vadd.f32 %v3336, %v3389
      %v3397 = vadd.f32 %v3337, %v3390
      %v3398 = vadd.f32 %v3338, %v3391
      %v3399 = vadd.f32 %v3339, %v3392
      %v3400 = vadd.f32 %v3340, %v3393
      %s3401 = sadd.s32 %s2788, 70
      %s3402 = sld [smem:[#allocation9 + %s3401]]
      %v3403 = vstv %s3402
      %v3404 = vmul.f32 %v3360, %v3403
      %v3405 = vmul.f32 %v3361, %v3403
      %v3406 = vmul.f32 %v3362, %v3403
      %v3407 = vmul.f32 %v3363, %v3403
      %v3408 = vmul.f32 %v3364, %v3403
      %v3409 = vmul.f32 %v3365, %v3403
      %v3410 = vmul.f32 %v3366, %v3403
      %v3411 = vadd.f32 %v3351, %v3404
      %v3412 = vadd.f32 %v3352, %v3405
      %v3413 = vadd.f32 %v3353, %v3406
      %v3414 = vadd.f32 %v3354, %v3407
      %v3415 = vadd.f32 %v3355, %v3408
      %v3416 = vadd.f32 %v3356, %v3409
      %v3417 = vadd.f32 %v3357, %v3410
      %v3418 = vld [vmem:[%s128] sm:$0x7f]
      %v3419 = vld [vmem:[%s128 + $0x8] sm:$0x7f]
      %v3420 = vld [vmem:[%s128 + $0x10] sm:$0x7f]
      %v3421 = vld [vmem:[%s128 + $0x18] sm:$0x7f]
      %v3422 = vld [vmem:[%s128 + $0x20] sm:$0x7f]
      %v3423 = vld [vmem:[%s128 + $0x28] sm:$0x7f]
      %v3424 = vld [vmem:[%s128 + $0x30] sm:$0x7f]
      %v3425 = vld [vmem:[%s128 + $0x38] sm:$0x7f]
      %v3426 = vld [vmem:[%s128 + $0x40] sm:$0x7f]
      %s3427 = sadd.s32 %s2788, 11
      %s3428 = sld [smem:[#allocation9 + %s3427]]
      %v3429 = vstv %s3428
      %v3430 = vmul.f32 %v3418, %v3429
      %v3431 = vmul.f32 %v3419, %v3429
      %v3432 = vmul.f32 %v3420, %v3429
      %v3433 = vmul.f32 %v3421, %v3429
      %v3434 = vmul.f32 %v3422, %v3429
      %v3435 = vmul.f32 %v3423, %v3429
      %v3436 = vmul.f32 %v3424, %v3429
      %v3437 = vadd.f32 %v3377, %v3430
      %v3438 = vadd.f32 %v3378, %v3431
      %v3439 = vadd.f32 %v3379, %v3432
      %v3440 = vadd.f32 %v3380, %v3433
      %v3441 = vadd.f32 %v3381, %v3434
      %v3442 = vadd.f32 %v3382, %v3435
      %v3443 = vadd.f32 %v3383, %v3436
      %s3444 = sadd.s32 %s2788, 41
      %s3445 = sld [smem:[#allocation9 + %s3444]]
      %v3446 = vstv %s3445
      %v3447 = vmul.f32 %v3419, %v3446
      %v3448 = vmul.f32 %v3420, %v3446
      %v3449 = vmul.f32 %v3421, %v3446
      %v3450 = vmul.f32 %v3422, %v3446
      %v3451 = vmul.f32 %v3423, %v3446
      %v3452 = vmul.f32 %v3424, %v3446
      %v3453 = vmul.f32 %v3425, %v3446
      %v3454 = vadd.f32 %v3394, %v3447
      %v3455 = vadd.f32 %v3395, %v3448
      %v3456 = vadd.f32 %v3396, %v3449
      %v3457 = vadd.f32 %v3397, %v3450
      %v3458 = vadd.f32 %v3398, %v3451
      %v3459 = vadd.f32 %v3399, %v3452
      %v3460 = vadd.f32 %v3400, %v3453
      %s3461 = sadd.s32 %s2788, 71
      %s3462 = sld [smem:[#allocation9 + %s3461]]
      %v3463 = vstv %s3462
      %v3464 = vmul.f32 %v3420, %v3463
      %v3465 = vmul.f32 %v3421, %v3463
      %v3466 = vmul.f32 %v3422, %v3463
      %v3467 = vmul.f32 %v3423, %v3463
      %v3468 = vmul.f32 %v3424, %v3463
      %v3469 = vmul.f32 %v3425, %v3463
      %v3470 = vmul.f32 %v3426, %v3463
      %v3471 = vadd.f32 %v3411, %v3464
      %v3472 = vadd.f32 %v3412, %v3465
      %v3473 = vadd.f32 %v3413, %v3466
      %v3474 = vadd.f32 %v3414, %v3467
      %v3475 = vadd.f32 %v3415, %v3468
      %v3476 = vadd.f32 %v3416, %v3469
      %v3477 = vadd.f32 %v3417, %v3470
      %v3478 = vld [vmem:[%s152] sm:$0x7f]
      %v3479 = vld [vmem:[%s152 + $0x8] sm:$0x7f]
      %v3480 = vld [vmem:[%s152 + $0x10] sm:$0x7f]
      %v3481 = vld [vmem:[%s152 + $0x18] sm:$0x7f]
      %v3482 = vld [vmem:[%s152 + $0x20] sm:$0x7f]
      %v3483 = vld [vmem:[%s152 + $0x28] sm:$0x7f]
      %v3484 = vld [vmem:[%s152 + $0x30] sm:$0x7f]
      %v3485 = vld [vmem:[%s152 + $0x38] sm:$0x7f]
      %v3486 = vld [vmem:[%s152 + $0x40] sm:$0x7f]
      %s3487 = sadd.s32 %s2788, 12
      %s3488 = sld [smem:[#allocation9 + %s3487]]
      %v3489 = vstv %s3488
      %v3490 = vmul.f32 %v3478, %v3489
      %v3491 = vmul.f32 %v3479, %v3489
      %v3492 = vmul.f32 %v3480, %v3489
      %v3493 = vmul.f32 %v3481, %v3489
      %v3494 = vmul.f32 %v3482, %v3489
      %v3495 = vmul.f32 %v3483, %v3489
      %v3496 = vmul.f32 %v3484, %v3489
      %v3497 = vadd.f32 %v3437, %v3490
      %v3498 = vadd.f32 %v3438, %v3491
      %v3499 = vadd.f32 %v3439, %v3492
      %v3500 = vadd.f32 %v3440, %v3493
      %v3501 = vadd.f32 %v3441, %v3494
      %v3502 = vadd.f32 %v3442, %v3495
      %v3503 = vadd.f32 %v3443, %v3496
      %s3504 = sadd.s32 %s2788, 42
      %s3505 = sld [smem:[#allocation9 + %s3504]]
      %v3506 = vstv %s3505
      %v3507 = vmul.f32 %v3479, %v3506
      %v3508 = vmul.f32 %v3480, %v3506
      %v3509 = vmul.f32 %v3481, %v3506
      %v3510 = vmul.f32 %v3482, %v3506
      %v3511 = vmul.f32 %v3483, %v3506
      %v3512 = vmul.f32 %v3484, %v3506
      %v3513 = vmul.f32 %v3485, %v3506
      %v3514 = vadd.f32 %v3454, %v3507
      %v3515 = vadd.f32 %v3455, %v3508
      %v3516 = vadd.f32 %v3456, %v3509
      %v3517 = vadd.f32 %v3457, %v3510
      %v3518 = vadd.f32 %v3458, %v3511
      %v3519 = vadd.f32 %v3459, %v3512
      %v3520 = vadd.f32 %v3460, %v3513
      %s3521 = sadd.s32 %s2788, 72
      %s3522 = sld [smem:[#allocation9 + %s3521]]
      %v3523 = vstv %s3522
      %v3524 = vmul.f32 %v3480, %v3523
      %v3525 = vmul.f32 %v3481, %v3523
      %v3526 = vmul.f32 %v3482, %v3523
      %v3527 = vmul.f32 %v3483, %v3523
      %v3528 = vmul.f32 %v3484, %v3523
      %v3529 = vmul.f32 %v3485, %v3523
      %v3530 = vmul.f32 %v3486, %v3523
      %v3531 = vadd.f32 %v3471, %v3524
      %v3532 = vadd.f32 %v3472, %v3525
      %v3533 = vadd.f32 %v3473, %v3526
      %v3534 = vadd.f32 %v3474, %v3527
      %v3535 = vadd.f32 %v3475, %v3528
      %v3536 = vadd.f32 %v3476, %v3529
      %v3537 = vadd.f32 %v3477, %v3530
      %v3538 = vld [vmem:[%s176] sm:$0x7f]
      %v3539 = vld [vmem:[%s176 + $0x8] sm:$0x7f]
      %v3540 = vld [vmem:[%s176 + $0x10] sm:$0x7f]
      %v3541 = vld [vmem:[%s176 + $0x18] sm:$0x7f]
      %v3542 = vld [vmem:[%s176 + $0x20] sm:$0x7f]
      %v3543 = vld [vmem:[%s176 + $0x28] sm:$0x7f]
      %v3544 = vld [vmem:[%s176 + $0x30] sm:$0x7f]
      %v3545 = vld [vmem:[%s176 + $0x38] sm:$0x7f]
      %v3546 = vld [vmem:[%s176 + $0x40] sm:$0x7f]
      %s3547 = sadd.s32 %s2788, 13
      %s3548 = sld [smem:[#allocation9 + %s3547]]
      %v3549 = vstv %s3548
      %v3550 = vmul.f32 %v3538, %v3549
      %v3551 = vmul.f32 %v3539, %v3549
      %v3552 = vmul.f32 %v3540, %v3549
      %v3553 = vmul.f32 %v3541, %v3549
      %v3554 = vmul.f32 %v3542, %v3549
      %v3555 = vmul.f32 %v3543, %v3549
      %v3556 = vmul.f32 %v3544, %v3549
      %v3557 = vadd.f32 %v3497, %v3550
      %v3558 = vadd.f32 %v3498, %v3551
      %v3559 = vadd.f32 %v3499, %v3552
      %v3560 = vadd.f32 %v3500, %v3553
      %v3561 = vadd.f32 %v3501, %v3554
      %v3562 = vadd.f32 %v3502, %v3555
      %v3563 = vadd.f32 %v3503, %v3556
      %s3564 = sadd.s32 %s2788, 43
      %s3565 = sld [smem:[#allocation9 + %s3564]]
      %v3566 = vstv %s3565
      %v3567 = vmul.f32 %v3539, %v3566
      %v3568 = vmul.f32 %v3540, %v3566
      %v3569 = vmul.f32 %v3541, %v3566
      %v3570 = vmul.f32 %v3542, %v3566
      %v3571 = vmul.f32 %v3543, %v3566
      %v3572 = vmul.f32 %v3544, %v3566
      %v3573 = vmul.f32 %v3545, %v3566
      %v3574 = vadd.f32 %v3514, %v3567
      %v3575 = vadd.f32 %v3515, %v3568
      %v3576 = vadd.f32 %v3516, %v3569
      %v3577 = vadd.f32 %v3517, %v3570
      %v3578 = vadd.f32 %v3518, %v3571
      %v3579 = vadd.f32 %v3519, %v3572
      %v3580 = vadd.f32 %v3520, %v3573
      %s3581 = sadd.s32 %s2788, 73
      %s3582 = sld [smem:[#allocation9 + %s3581]]
      %v3583 = vstv %s3582
      %v3584 = vmul.f32 %v3540, %v3583
      %v3585 = vmul.f32 %v3541, %v3583
      %v3586 = vmul.f32 %v3542, %v3583
      %v3587 = vmul.f32 %v3543, %v3583
      %v3588 = vmul.f32 %v3544, %v3583
      %v3589 = vmul.f32 %v3545, %v3583
      %v3590 = vmul.f32 %v3546, %v3583
      %v3591 = vadd.f32 %v3531, %v3584
      %v3592 = vadd.f32 %v3532, %v3585
      %v3593 = vadd.f32 %v3533, %v3586
      %v3594 = vadd.f32 %v3534, %v3587
      %v3595 = vadd.f32 %v3535, %v3588
      %v3596 = vadd.f32 %v3536, %v3589
      %v3597 = vadd.f32 %v3537, %v3590
      %v3598 = vld [vmem:[%s200] sm:$0x7f]
      %v3599 = vld [vmem:[%s200 + $0x8] sm:$0x7f]
      %v3600 = vld [vmem:[%s200 + $0x10] sm:$0x7f]
      %v3601 = vld [vmem:[%s200 + $0x18] sm:$0x7f]
      %v3602 = vld [vmem:[%s200 + $0x20] sm:$0x7f]
      %v3603 = vld [vmem:[%s200 + $0x28] sm:$0x7f]
      %v3604 = vld [vmem:[%s200 + $0x30] sm:$0x7f]
      %v3605 = vld [vmem:[%s200 + $0x38] sm:$0x7f]
      %v3606 = vld [vmem:[%s200 + $0x40] sm:$0x7f]
      %s3607 = sadd.s32 %s2788, 14
      %s3608 = sld [smem:[#allocation9 + %s3607]]
      %v3609 = vstv %s3608
      %v3610 = vmul.f32 %v3598, %v3609
      %v3611 = vmul.f32 %v3599, %v3609
      %v3612 = vmul.f32 %v3600, %v3609
      %v3613 = vmul.f32 %v3601, %v3609
      %v3614 = vmul.f32 %v3602, %v3609
      %v3615 = vmul.f32 %v3603, %v3609
      %v3616 = vmul.f32 %v3604, %v3609
      %v3617 = vadd.f32 %v3557, %v3610
      %v3618 = vadd.f32 %v3558, %v3611
      %v3619 = vadd.f32 %v3559, %v3612
      %v3620 = vadd.f32 %v3560, %v3613
      %v3621 = vadd.f32 %v3561, %v3614
      %v3622 = vadd.f32 %v3562, %v3615
      %v3623 = vadd.f32 %v3563, %v3616
      %s3624 = sadd.s32 %s2788, 44
      %s3625 = sld [smem:[#allocation9 + %s3624]]
      %v3626 = vstv %s3625
      %v3627 = vmul.f32 %v3599, %v3626
      %v3628 = vmul.f32 %v3600, %v3626
      %v3629 = vmul.f32 %v3601, %v3626
      %v3630 = vmul.f32 %v3602, %v3626
      %v3631 = vmul.f32 %v3603, %v3626
      %v3632 = vmul.f32 %v3604, %v3626
      %v3633 = vmul.f32 %v3605, %v3626
      %v3634 = vadd.f32 %v3574, %v3627
      %v3635 = vadd.f32 %v3575, %v3628
      %v3636 = vadd.f32 %v3576, %v3629
      %v3637 = vadd.f32 %v3577, %v3630
      %v3638 = vadd.f32 %v3578, %v3631
      %v3639 = vadd.f32 %v3579, %v3632
      %v3640 = vadd.f32 %v3580, %v3633
      %s3641 = sadd.s32 %s2788, 74
      %s3642 = sld [smem:[#allocation9 + %s3641]]
      %v3643 = vstv %s3642
      %v3644 = vmul.f32 %v3600, %v3643
      %v3645 = vmul.f32 %v3601, %v3643
      %v3646 = vmul.f32 %v3602, %v3643
      %v3647 = vmul.f32 %v3603, %v3643
      %v3648 = vmul.f32 %v3604, %v3643
      %v3649 = vmul.f32 %v3605, %v3643
      %v3650 = vmul.f32 %v3606, %v3643
      %v3651 = vadd.f32 %v3591, %v3644
      %v3652 = vadd.f32 %v3592, %v3645
      %v3653 = vadd.f32 %v3593, %v3646
      %v3654 = vadd.f32 %v3594, %v3647
      %v3655 = vadd.f32 %v3595, %v3648
      %v3656 = vadd.f32 %v3596, %v3649
      %v3657 = vadd.f32 %v3597, %v3650
      %v3658 = vld [vmem:[%s224] sm:$0x7f]
      %v3659 = vld [vmem:[%s224 + $0x8] sm:$0x7f]
      %v3660 = vld [vmem:[%s224 + $0x10] sm:$0x7f]
      %v3661 = vld [vmem:[%s224 + $0x18] sm:$0x7f]
      %v3662 = vld [vmem:[%s224 + $0x20] sm:$0x7f]
      %v3663 = vld [vmem:[%s224 + $0x28] sm:$0x7f]
      %v3664 = vld [vmem:[%s224 + $0x30] sm:$0x7f]
      %v3665 = vld [vmem:[%s224 + $0x38] sm:$0x7f]
      %v3666 = vld [vmem:[%s224 + $0x40] sm:$0x7f]
      %s3667 = sadd.s32 %s2788, 15
      %s3668 = sld [smem:[#allocation9 + %s3667]]
      %v3669 = vstv %s3668
      %v3670 = vmul.f32 %v3658, %v3669
      %v3671 = vmul.f32 %v3659, %v3669
      %v3672 = vmul.f32 %v3660, %v3669
      %v3673 = vmul.f32 %v3661, %v3669
      %v3674 = vmul.f32 %v3662, %v3669
      %v3675 = vmul.f32 %v3663, %v3669
      %v3676 = vmul.f32 %v3664, %v3669
      %v3677 = vadd.f32 %v3617, %v3670
      %v3678 = vadd.f32 %v3618, %v3671
      %v3679 = vadd.f32 %v3619, %v3672
      %v3680 = vadd.f32 %v3620, %v3673
      %v3681 = vadd.f32 %v3621, %v3674
      %v3682 = vadd.f32 %v3622, %v3675
      %v3683 = vadd.f32 %v3623, %v3676
      %s3684 = sadd.s32 %s2788, 45
      %s3685 = sld [smem:[#allocation9 + %s3684]]
      %v3686 = vstv %s3685
      %v3687 = vmul.f32 %v3659, %v3686
      %v3688 = vmul.f32 %v3660, %v3686
      %v3689 = vmul.f32 %v3661, %v3686
      %v3690 = vmul.f32 %v3662, %v3686
      %v3691 = vmul.f32 %v3663, %v3686
      %v3692 = vmul.f32 %v3664, %v3686
      %v3693 = vmul.f32 %v3665, %v3686
      %v3694 = vadd.f32 %v3634, %v3687
      %v3695 = vadd.f32 %v3635, %v3688
      %v3696 = vadd.f32 %v3636, %v3689
      %v3697 = vadd.f32 %v3637, %v3690
      %v3698 = vadd.f32 %v3638, %v3691
      %v3699 = vadd.f32 %v3639, %v3692
      %v3700 = vadd.f32 %v3640, %v3693
      %s3701 = sadd.s32 %s2788, 75
      %s3702 = sld [smem:[#allocation9 + %s3701]]
      %v3703 = vstv %s3702
      %v3704 = vmul.f32 %v3660, %v3703
      %v3705 = vmul.f32 %v3661, %v3703
      %v3706 = vmul.f32 %v3662, %v3703
      %v3707 = vmul.f32 %v3663, %v3703
      %v3708 = vmul.f32 %v3664, %v3703
      %v3709 = vmul.f32 %v3665, %v3703
      %v3710 = vmul.f32 %v3666, %v3703
      %v3711 = vadd.f32 %v3651, %v3704
      %v3712 = vadd.f32 %v3652, %v3705
      %v3713 = vadd.f32 %v3653, %v3706
      %v3714 = vadd.f32 %v3654, %v3707
      %v3715 = vadd.f32 %v3655, %v3708
      %v3716 = vadd.f32 %v3656, %v3709
      %v3717 = vadd.f32 %v3657, %v3710
      %v3718 = vld [vmem:[%s248] sm:$0x7f]
      %v3719 = vld [vmem:[%s248 + $0x8] sm:$0x7f]
      %v3720 = vld [vmem:[%s248 + $0x10] sm:$0x7f]
      %v3721 = vld [vmem:[%s248 + $0x18] sm:$0x7f]
      %v3722 = vld [vmem:[%s248 + $0x20] sm:$0x7f]
      %v3723 = vld [vmem:[%s248 + $0x28] sm:$0x7f]
      %v3724 = vld [vmem:[%s248 + $0x30] sm:$0x7f]
      %v3725 = vld [vmem:[%s248 + $0x38] sm:$0x7f]
      %v3726 = vld [vmem:[%s248 + $0x40] sm:$0x7f]
      %s3727 = sadd.s32 %s2788, 16
      %s3728 = sld [smem:[#allocation9 + %s3727]]
      %v3729 = vstv %s3728
      %v3730 = vmul.f32 %v3718, %v3729
      %v3731 = vmul.f32 %v3719, %v3729
      %v3732 = vmul.f32 %v3720, %v3729
      %v3733 = vmul.f32 %v3721, %v3729
      %v3734 = vmul.f32 %v3722, %v3729
      %v3735 = vmul.f32 %v3723, %v3729
      %v3736 = vmul.f32 %v3724, %v3729
      %v3737 = vadd.f32 %v3677, %v3730
      %v3738 = vadd.f32 %v3678, %v3731
      %v3739 = vadd.f32 %v3679, %v3732
      %v3740 = vadd.f32 %v3680, %v3733
      %v3741 = vadd.f32 %v3681, %v3734
      %v3742 = vadd.f32 %v3682, %v3735
      %v3743 = vadd.f32 %v3683, %v3736
      %s3744 = sadd.s32 %s2788, 46
      %s3745 = sld [smem:[#allocation9 + %s3744]]
      %v3746 = vstv %s3745
      %v3747 = vmul.f32 %v3719, %v3746
      %v3748 = vmul.f32 %v3720, %v3746
      %v3749 = vmul.f32 %v3721, %v3746
      %v3750 = vmul.f32 %v3722, %v3746
      %v3751 = vmul.f32 %v3723, %v3746
      %v3752 = vmul.f32 %v3724, %v3746
      %v3753 = vmul.f32 %v3725, %v3746
      %v3754 = vadd.f32 %v3694, %v3747
      %v3755 = vadd.f32 %v3695, %v3748
      %v3756 = vadd.f32 %v3696, %v3749
      %v3757 = vadd.f32 %v3697, %v3750
      %v3758 = vadd.f32 %v3698, %v3751
      %v3759 = vadd.f32 %v3699, %v3752
      %v3760 = vadd.f32 %v3700, %v3753
      %s3761 = sadd.s32 %s2788, 76
      %s3762 = sld [smem:[#allocation9 + %s3761]]
      %v3763 = vstv %s3762
      %v3764 = vmul.f32 %v3720, %v3763
      %v3765 = vmul.f32 %v3721, %v3763
      %v3766 = vmul.f32 %v3722, %v3763
      %v3767 = vmul.f32 %v3723, %v3763
      %v3768 = vmul.f32 %v3724, %v3763
      %v3769 = vmul.f32 %v3725, %v3763
      %v3770 = vmul.f32 %v3726, %v3763
      %v3771 = vadd.f32 %v3711, %v3764
      %v3772 = vadd.f32 %v3712, %v3765
      %v3773 = vadd.f32 %v3713, %v3766
      %v3774 = vadd.f32 %v3714, %v3767
      %v3775 = vadd.f32 %v3715, %v3768
      %v3776 = vadd.f32 %v3716, %v3769
      %v3777 = vadd.f32 %v3717, %v3770
      %v3778 = vld [vmem:[%s272] sm:$0x7f]
      %v3779 = vld [vmem:[%s272 + $0x8] sm:$0x7f]
      %v3780 = vld [vmem:[%s272 + $0x10] sm:$0x7f]
      %v3781 = vld [vmem:[%s272 + $0x18] sm:$0x7f]
      %v3782 = vld [vmem:[%s272 + $0x20] sm:$0x7f]
      %v3783 = vld [vmem:[%s272 + $0x28] sm:$0x7f]
      %v3784 = vld [vmem:[%s272 + $0x30] sm:$0x7f]
      %v3785 = vld [vmem:[%s272 + $0x38] sm:$0x7f]
      %v3786 = vld [vmem:[%s272 + $0x40] sm:$0x7f]
      %s3787 = sadd.s32 %s2788, 17
      %s3788 = sld [smem:[#allocation9 + %s3787]]
      %v3789 = vstv %s3788
      %v3790 = vmul.f32 %v3778, %v3789
      %v3791 = vmul.f32 %v3779, %v3789
      %v3792 = vmul.f32 %v3780, %v3789
      %v3793 = vmul.f32 %v3781, %v3789
      %v3794 = vmul.f32 %v3782, %v3789
      %v3795 = vmul.f32 %v3783, %v3789
      %v3796 = vmul.f32 %v3784, %v3789
      %v3797 = vadd.f32 %v3737, %v3790
      %v3798 = vadd.f32 %v3738, %v3791
      %v3799 = vadd.f32 %v3739, %v3792
      %v3800 = vadd.f32 %v3740, %v3793
      %v3801 = vadd.f32 %v3741, %v3794
      %v3802 = vadd.f32 %v3742, %v3795
      %v3803 = vadd.f32 %v3743, %v3796
      %s3804 = sadd.s32 %s2788, 47
      %s3805 = sld [smem:[#allocation9 + %s3804]]
      %v3806 = vstv %s3805
      %v3807 = vmul.f32 %v3779, %v3806
      %v3808 = vmul.f32 %v3780, %v3806
      %v3809 = vmul.f32 %v3781, %v3806
      %v3810 = vmul.f32 %v3782, %v3806
      %v3811 = vmul.f32 %v3783, %v3806
      %v3812 = vmul.f32 %v3784, %v3806
      %v3813 = vmul.f32 %v3785, %v3806
      %v3814 = vadd.f32 %v3754, %v3807
      %v3815 = vadd.f32 %v3755, %v3808
      %v3816 = vadd.f32 %v3756, %v3809
      %v3817 = vadd.f32 %v3757, %v3810
      %v3818 = vadd.f32 %v3758, %v3811
      %v3819 = vadd.f32 %v3759, %v3812
      %v3820 = vadd.f32 %v3760, %v3813
      %s3821 = sadd.s32 %s2788, 77
      %s3822 = sld [smem:[#allocation9 + %s3821]]
      %v3823 = vstv %s3822
      %v3824 = vmul.f32 %v3780, %v3823
      %v3825 = vmul.f32 %v3781, %v3823
      %v3826 = vmul.f32 %v3782, %v3823
      %v3827 = vmul.f32 %v3783, %v3823
      %v3828 = vmul.f32 %v3784, %v3823
      %v3829 = vmul.f32 %v3785, %v3823
      %v3830 = vmul.f32 %v3786, %v3823
      %v3831 = vadd.f32 %v3771, %v3824
      %v3832 = vadd.f32 %v3772, %v3825
      %v3833 = vadd.f32 %v3773, %v3826
      %v3834 = vadd.f32 %v3774, %v3827
      %v3835 = vadd.f32 %v3775, %v3828
      %v3836 = vadd.f32 %v3776, %v3829
      %v3837 = vadd.f32 %v3777, %v3830
      %v3838 = vld [vmem:[%s296] sm:$0x7f]
      %v3839 = vld [vmem:[%s296 + $0x8] sm:$0x7f]
      %v3840 = vld [vmem:[%s296 + $0x10] sm:$0x7f]
      %v3841 = vld [vmem:[%s296 + $0x18] sm:$0x7f]
      %v3842 = vld [vmem:[%s296 + $0x20] sm:$0x7f]
      %v3843 = vld [vmem:[%s296 + $0x28] sm:$0x7f]
      %v3844 = vld [vmem:[%s296 + $0x30] sm:$0x7f]
      %v3845 = vld [vmem:[%s296 + $0x38] sm:$0x7f]
      %v3846 = vld [vmem:[%s296 + $0x40] sm:$0x7f]
      %s3847 = sadd.s32 %s2788, 18
      %s3848 = sld [smem:[#allocation9 + %s3847]]
      %v3849 = vstv %s3848
      %v3850 = vmul.f32 %v3838, %v3849
      %v3851 = vmul.f32 %v3839, %v3849
      %v3852 = vmul.f32 %v3840, %v3849
      %v3853 = vmul.f32 %v3841, %v3849
      %v3854 = vmul.f32 %v3842, %v3849
      %v3855 = vmul.f32 %v3843, %v3849
      %v3856 = vmul.f32 %v3844, %v3849
      %v3857 = vadd.f32 %v3797, %v3850
      %v3858 = vadd.f32 %v3798, %v3851
      %v3859 = vadd.f32 %v3799, %v3852
      %v3860 = vadd.f32 %v3800, %v3853
      %v3861 = vadd.f32 %v3801, %v3854
      %v3862 = vadd.f32 %v3802, %v3855
      %v3863 = vadd.f32 %v3803, %v3856
      %s3864 = sadd.s32 %s2788, 48
      %s3865 = sld [smem:[#allocation9 + %s3864]]
      %v3866 = vstv %s3865
      %v3867 = vmul.f32 %v3839, %v3866
      %v3868 = vmul.f32 %v3840, %v3866
      %v3869 = vmul.f32 %v3841, %v3866
      %v3870 = vmul.f32 %v3842, %v3866
      %v3871 = vmul.f32 %v3843, %v3866
      %v3872 = vmul.f32 %v3844, %v3866
      %v3873 = vmul.f32 %v3845, %v3866
      %v3874 = vadd.f32 %v3814, %v3867
      %v3875 = vadd.f32 %v3815, %v3868
      %v3876 = vadd.f32 %v3816, %v3869
      %v3877 = vadd.f32 %v3817, %v3870
      %v3878 = vadd.f32 %v3818, %v3871
      %v3879 = vadd.f32 %v3819, %v3872
      %v3880 = vadd.f32 %v3820, %v3873
      %s3881 = sadd.s32 %s2788, 78
      %s3882 = sld [smem:[#allocation9 + %s3881]]
      %v3883 = vstv %s3882
      %v3884 = vmul.f32 %v3840, %v3883
      %v3885 = vmul.f32 %v3841, %v3883
      %v3886 = vmul.f32 %v3842, %v3883
      %v3887 = vmul.f32 %v3843, %v3883
      %v3888 = vmul.f32 %v3844, %v3883
      %v3889 = vmul.f32 %v3845, %v3883
      %v3890 = vmul.f32 %v3846, %v3883
      %v3891 = vadd.f32 %v3831, %v3884
      %v3892 = vadd.f32 %v3832, %v3885
      %v3893 = vadd.f32 %v3833, %v3886
      %v3894 = vadd.f32 %v3834, %v3887
      %v3895 = vadd.f32 %v3835, %v3888
      %v3896 = vadd.f32 %v3836, %v3889
      %v3897 = vadd.f32 %v3837, %v3890
      %v3898 = vld [vmem:[%s320] sm:$0x7f]
      %v3899 = vld [vmem:[%s320 + $0x8] sm:$0x7f]
      %v3900 = vld [vmem:[%s320 + $0x10] sm:$0x7f]
      %v3901 = vld [vmem:[%s320 + $0x18] sm:$0x7f]
      %v3902 = vld [vmem:[%s320 + $0x20] sm:$0x7f]
      %v3903 = vld [vmem:[%s320 + $0x28] sm:$0x7f]
      %v3904 = vld [vmem:[%s320 + $0x30] sm:$0x7f]
      %v3905 = vld [vmem:[%s320 + $0x38] sm:$0x7f]
      %v3906 = vld [vmem:[%s320 + $0x40] sm:$0x7f]
      %s3907 = sadd.s32 %s2788, 19
      %s3908 = sld [smem:[#allocation9 + %s3907]]
      %v3909 = vstv %s3908
      %v3910 = vmul.f32 %v3898, %v3909
      %v3911 = vmul.f32 %v3899, %v3909
      %v3912 = vmul.f32 %v3900, %v3909
      %v3913 = vmul.f32 %v3901, %v3909
      %v3914 = vmul.f32 %v3902, %v3909
      %v3915 = vmul.f32 %v3903, %v3909
      %v3916 = vmul.f32 %v3904, %v3909
      %v3917 = vadd.f32 %v3857, %v3910
      %v3918 = vadd.f32 %v3858, %v3911
      %v3919 = vadd.f32 %v3859, %v3912
      %v3920 = vadd.f32 %v3860, %v3913
      %v3921 = vadd.f32 %v3861, %v3914
      %v3922 = vadd.f32 %v3862, %v3915
      %v3923 = vadd.f32 %v3863, %v3916
      %s3924 = sadd.s32 %s2788, 49
      %s3925 = sld [smem:[#allocation9 + %s3924]]
      %v3926 = vstv %s3925
      %v3927 = vmul.f32 %v3899, %v3926
      %v3928 = vmul.f32 %v3900, %v3926
      %v3929 = vmul.f32 %v3901, %v3926
      %v3930 = vmul.f32 %v3902, %v3926
      %v3931 = vmul.f32 %v3903, %v3926
      %v3932 = vmul.f32 %v3904, %v3926
      %v3933 = vmul.f32 %v3905, %v3926
      %v3934 = vadd.f32 %v3874, %v3927
      %v3935 = vadd.f32 %v3875, %v3928
      %v3936 = vadd.f32 %v3876, %v3929
      %v3937 = vadd.f32 %v3877, %v3930
      %v3938 = vadd.f32 %v3878, %v3931
      %v3939 = vadd.f32 %v3879, %v3932
      %v3940 = vadd.f32 %v3880, %v3933
      %s3941 = sadd.s32 %s2788, 79
      %s3942 = sld [smem:[#allocation9 + %s3941]]
      %v3943 = vstv %s3942
      %v3944 = vmul.f32 %v3900, %v3943
      %v3945 = vmul.f32 %v3901, %v3943
      %v3946 = vmul.f32 %v3902, %v3943
      %v3947 = vmul.f32 %v3903, %v3943
      %v3948 = vmul.f32 %v3904, %v3943
      %v3949 = vmul.f32 %v3905, %v3943
      %v3950 = vmul.f32 %v3906, %v3943
      %v3951 = vadd.f32 %v3891, %v3944
      %v3952 = vadd.f32 %v3892, %v3945
      %v3953 = vadd.f32 %v3893, %v3946
      %v3954 = vadd.f32 %v3894, %v3947
      %v3955 = vadd.f32 %v3895, %v3948
      %v3956 = vadd.f32 %v3896, %v3949
      %v3957 = vadd.f32 %v3897, %v3950
      %v3958 = vld [vmem:[%s94] sm:$0x7f]
      %v3959 = vld [vmem:[%s94 + $0x8] sm:$0x7f]
      %v3960 = vld [vmem:[%s94 + $0x10] sm:$0x7f]
      %v3961 = vld [vmem:[%s94 + $0x18] sm:$0x7f]
      %v3962 = vld [vmem:[%s94 + $0x20] sm:$0x7f]
      %v3963 = vld [vmem:[%s94 + $0x28] sm:$0x7f]
      %v3964 = vld [vmem:[%s94 + $0x30] sm:$0x7f]
      %v3965 = vld [vmem:[%s94 + $0x38] sm:$0x7f]
      %v3966 = vld [vmem:[%s94 + $0x40] sm:$0x7f]
      %s3967 = sadd.s32 %s2788, 20
      %s3968 = sld [smem:[#allocation9 + %s3967]]
      %v3969 = vstv %s3968
      %v3970 = vmul.f32 %v3958, %v3969
      %v3971 = vmul.f32 %v3959, %v3969
      %v3972 = vmul.f32 %v3960, %v3969
      %v3973 = vmul.f32 %v3961, %v3969
      %v3974 = vmul.f32 %v3962, %v3969
      %v3975 = vmul.f32 %v3963, %v3969
      %v3976 = vmul.f32 %v3964, %v3969
      %v3977 = vadd.f32 %v3917, %v3970
      %v3978 = vadd.f32 %v3918, %v3971
      %v3979 = vadd.f32 %v3919, %v3972
      %v3980 = vadd.f32 %v3920, %v3973
      %v3981 = vadd.f32 %v3921, %v3974
      %v3982 = vadd.f32 %v3922, %v3975
      %v3983 = vadd.f32 %v3923, %v3976
      %s3984 = sadd.s32 %s2788, 50
      %s3985 = sld [smem:[#allocation9 + %s3984]]
      %v3986 = vstv %s3985
      %v3987 = vmul.f32 %v3959, %v3986
      %v3988 = vmul.f32 %v3960, %v3986
      %v3989 = vmul.f32 %v3961, %v3986
      %v3990 = vmul.f32 %v3962, %v3986
      %v3991 = vmul.f32 %v3963, %v3986
      %v3992 = vmul.f32 %v3964, %v3986
      %v3993 = vmul.f32 %v3965, %v3986
      %v3994 = vadd.f32 %v3934, %v3987
      %v3995 = vadd.f32 %v3935, %v3988
      %v3996 = vadd.f32 %v3936, %v3989
      %v3997 = vadd.f32 %v3937, %v3990
      %v3998 = vadd.f32 %v3938, %v3991
      %v3999 = vadd.f32 %v3939, %v3992
      %v4000 = vadd.f32 %v3940, %v3993
      %s4001 = sadd.s32 %s2788, 80
      %s4002 = sld [smem:[#allocation9 + %s4001]]
      %v4003 = vstv %s4002
      %v4004 = vmul.f32 %v3960, %v4003
      %v4005 = vmul.f32 %v3961, %v4003
      %v4006 = vmul.f32 %v3962, %v4003
      %v4007 = vmul.f32 %v3963, %v4003
      %v4008 = vmul.f32 %v3964, %v4003
      %v4009 = vmul.f32 %v3965, %v4003
      %v4010 = vmul.f32 %v3966, %v4003
      %v4011 = vadd.f32 %v3951, %v4004
      %v4012 = vadd.f32 %v3952, %v4005
      %v4013 = vadd.f32 %v3953, %v4006
      %v4014 = vadd.f32 %v3954, %v4007
      %v4015 = vadd.f32 %v3955, %v4008
      %v4016 = vadd.f32 %v3956, %v4009
      %v4017 = vadd.f32 %v3957, %v4010
      %v4018 = vld [vmem:[%s118] sm:$0x7f]
      %v4019 = vld [vmem:[%s118 + $0x8] sm:$0x7f]
      %v4020 = vld [vmem:[%s118 + $0x10] sm:$0x7f]
      %v4021 = vld [vmem:[%s118 + $0x18] sm:$0x7f]
      %v4022 = vld [vmem:[%s118 + $0x20] sm:$0x7f]
      %v4023 = vld [vmem:[%s118 + $0x28] sm:$0x7f]
      %v4024 = vld [vmem:[%s118 + $0x30] sm:$0x7f]
      %v4025 = vld [vmem:[%s118 + $0x38] sm:$0x7f]
      %v4026 = vld [vmem:[%s118 + $0x40] sm:$0x7f]
      %s4027 = sadd.s32 %s2788, 21
      %s4028 = sld [smem:[#allocation9 + %s4027]]
      %v4029 = vstv %s4028
      %v4030 = vmul.f32 %v4018, %v4029
      %v4031 = vmul.f32 %v4019, %v4029
      %v4032 = vmul.f32 %v4020, %v4029
      %v4033 = vmul.f32 %v4021, %v4029
      %v4034 = vmul.f32 %v4022, %v4029
      %v4035 = vmul.f32 %v4023, %v4029
      %v4036 = vmul.f32 %v4024, %v4029
      %v4037 = vadd.f32 %v3977, %v4030
      %v4038 = vadd.f32 %v3978, %v4031
      %v4039 = vadd.f32 %v3979, %v4032
      %v4040 = vadd.f32 %v3980, %v4033
      %v4041 = vadd.f32 %v3981, %v4034
      %v4042 = vadd.f32 %v3982, %v4035
      %v4043 = vadd.f32 %v3983, %v4036
      %s4044 = sadd.s32 %s2788, 51
      %s4045 = sld [smem:[#allocation9 + %s4044]]
      %v4046 = vstv %s4045
      %v4047 = vmul.f32 %v4019, %v4046
      %v4048 = vmul.f32 %v4020, %v4046
      %v4049 = vmul.f32 %v4021, %v4046
      %v4050 = vmul.f32 %v4022, %v4046
      %v4051 = vmul.f32 %v4023, %v4046
      %v4052 = vmul.f32 %v4024, %v4046
      %v4053 = vmul.f32 %v4025, %v4046
      %v4054 = vadd.f32 %v3994, %v4047
      %v4055 = vadd.f32 %v3995, %v4048
      %v4056 = vadd.f32 %v3996, %v4049
      %v4057 = vadd.f32 %v3997, %v4050
      %v4058 = vadd.f32 %v3998, %v4051
      %v4059 = vadd.f32 %v3999, %v4052
      %v4060 = vadd.f32 %v4000, %v4053
      %s4061 = sadd.s32 %s2788, 81
      %s4062 = sld [smem:[#allocation9 + %s4061]]
      %v4063 = vstv %s4062
      %v4064 = vmul.f32 %v4020, %v4063
      %v4065 = vmul.f32 %v4021, %v4063
      %v4066 = vmul.f32 %v4022, %v4063
      %v4067 = vmul.f32 %v4023, %v4063
      %v4068 = vmul.f32 %v4024, %v4063
      %v4069 = vmul.f32 %v4025, %v4063
      %v4070 = vmul.f32 %v4026, %v4063
      %v4071 = vadd.f32 %v4011, %v4064
      %v4072 = vadd.f32 %v4012, %v4065
      %v4073 = vadd.f32 %v4013, %v4066
      %v4074 = vadd.f32 %v4014, %v4067
      %v4075 = vadd.f32 %v4015, %v4068
      %v4076 = vadd.f32 %v4016, %v4069
      %v4077 = vadd.f32 %v4017, %v4070
      %v4078 = vld [vmem:[%s142] sm:$0x7f]
      %v4079 = vld [vmem:[%s142 + $0x8] sm:$0x7f]
      %v4080 = vld [vmem:[%s142 + $0x10] sm:$0x7f]
      %v4081 = vld [vmem:[%s142 + $0x18] sm:$0x7f]
      %v4082 = vld [vmem:[%s142 + $0x20] sm:$0x7f]
      %v4083 = vld [vmem:[%s142 + $0x28] sm:$0x7f]
      %v4084 = vld [vmem:[%s142 + $0x30] sm:$0x7f]
      %v4085 = vld [vmem:[%s142 + $0x38] sm:$0x7f]
      %v4086 = vld [vmem:[%s142 + $0x40] sm:$0x7f]
      %s4087 = sadd.s32 %s2788, 22
      %s4088 = sld [smem:[#allocation9 + %s4087]]
      %v4089 = vstv %s4088
      %v4090 = vmul.f32 %v4078, %v4089
      %v4091 = vmul.f32 %v4079, %v4089
      %v4092 = vmul.f32 %v4080, %v4089
      %v4093 = vmul.f32 %v4081, %v4089
      %v4094 = vmul.f32 %v4082, %v4089
      %v4095 = vmul.f32 %v4083, %v4089
      %v4096 = vmul.f32 %v4084, %v4089
      %v4097 = vadd.f32 %v4037, %v4090
      %v4098 = vadd.f32 %v4038, %v4091
      %v4099 = vadd.f32 %v4039, %v4092
      %v4100 = vadd.f32 %v4040, %v4093
      %v4101 = vadd.f32 %v4041, %v4094
      %v4102 = vadd.f32 %v4042, %v4095
      %v4103 = vadd.f32 %v4043, %v4096
      %s4104 = sadd.s32 %s2788, 52
      %s4105 = sld [smem:[#allocation9 + %s4104]]
      %v4106 = vstv %s4105
      %v4107 = vmul.f32 %v4079, %v4106
      %v4108 = vmul.f32 %v4080, %v4106
      %v4109 = vmul.f32 %v4081, %v4106
      %v4110 = vmul.f32 %v4082, %v4106
      %v4111 = vmul.f32 %v4083, %v4106
      %v4112 = vmul.f32 %v4084, %v4106
      %v4113 = vmul.f32 %v4085, %v4106
      %v4114 = vadd.f32 %v4054, %v4107
      %v4115 = vadd.f32 %v4055, %v4108
      %v4116 = vadd.f32 %v4056, %v4109
      %v4117 = vadd.f32 %v4057, %v4110
      %v4118 = vadd.f32 %v4058, %v4111
      %v4119 = vadd.f32 %v4059, %v4112
      %v4120 = vadd.f32 %v4060, %v4113
      %s4121 = sadd.s32 %s2788, 82
      %s4122 = sld [smem:[#allocation9 + %s4121]]
      %v4123 = vstv %s4122
      %v4124 = vmul.f32 %v4080, %v4123
      %v4125 = vmul.f32 %v4081, %v4123
      %v4126 = vmul.f32 %v4082, %v4123
      %v4127 = vmul.f32 %v4083, %v4123
      %v4128 = vmul.f32 %v4084, %v4123
      %v4129 = vmul.f32 %v4085, %v4123
      %v4130 = vmul.f32 %v4086, %v4123
      %v4131 = vadd.f32 %v4071, %v4124
      %v4132 = vadd.f32 %v4072, %v4125
      %v4133 = vadd.f32 %v4073, %v4126
      %v4134 = vadd.f32 %v4074, %v4127
      %v4135 = vadd.f32 %v4075, %v4128
      %v4136 = vadd.f32 %v4076, %v4129
      %v4137 = vadd.f32 %v4077, %v4130
      %v4138 = vld [vmem:[%s166] sm:$0x7f]
      %v4139 = vld [vmem:[%s166 + $0x8] sm:$0x7f]
      %v4140 = vld [vmem:[%s166 + $0x10] sm:$0x7f]
      %v4141 = vld [vmem:[%s166 + $0x18] sm:$0x7f]
      %v4142 = vld [vmem:[%s166 + $0x20] sm:$0x7f]
      %v4143 = vld [vmem:[%s166 + $0x28] sm:$0x7f]
      %v4144 = vld [vmem:[%s166 + $0x30] sm:$0x7f]
      %v4145 = vld [vmem:[%s166 + $0x38] sm:$0x7f]
      %v4146 = vld [vmem:[%s166 + $0x40] sm:$0x7f]
      %s4147 = sadd.s32 %s2788, 23
      %s4148 = sld [smem:[#allocation9 + %s4147]]
      %v4149 = vstv %s4148
      %v4150 = vmul.f32 %v4138, %v4149
      %v4151 = vmul.f32 %v4139, %v4149
      %v4152 = vmul.f32 %v4140, %v4149
      %v4153 = vmul.f32 %v4141, %v4149
      %v4154 = vmul.f32 %v4142, %v4149
      %v4155 = vmul.f32 %v4143, %v4149
      %v4156 = vmul.f32 %v4144, %v4149
      %v4157 = vadd.f32 %v4097, %v4150
      %v4158 = vadd.f32 %v4098, %v4151
      %v4159 = vadd.f32 %v4099, %v4152
      %v4160 = vadd.f32 %v4100, %v4153
      %v4161 = vadd.f32 %v4101, %v4154
      %v4162 = vadd.f32 %v4102, %v4155
      %v4163 = vadd.f32 %v4103, %v4156
      %s4164 = sadd.s32 %s2788, 53
      %s4165 = sld [smem:[#allocation9 + %s4164]]
      %v4166 = vstv %s4165
      %v4167 = vmul.f32 %v4139, %v4166
      %v4168 = vmul.f32 %v4140, %v4166
      %v4169 = vmul.f32 %v4141, %v4166
      %v4170 = vmul.f32 %v4142, %v4166
      %v4171 = vmul.f32 %v4143, %v4166
      %v4172 = vmul.f32 %v4144, %v4166
      %v4173 = vmul.f32 %v4145, %v4166
      %v4174 = vadd.f32 %v4114, %v4167
      %v4175 = vadd.f32 %v4115, %v4168
      %v4176 = vadd.f32 %v4116, %v4169
      %v4177 = vadd.f32 %v4117, %v4170
      %v4178 = vadd.f32 %v4118, %v4171
      %v4179 = vadd.f32 %v4119, %v4172
      %v4180 = vadd.f32 %v4120, %v4173
      %s4181 = sadd.s32 %s2788, 83
      %s4182 = sld [smem:[#allocation9 + %s4181]]
      %v4183 = vstv %s4182
      %v4184 = vmul.f32 %v4140, %v4183
      %v4185 = vmul.f32 %v4141, %v4183
      %v4186 = vmul.f32 %v4142, %v4183
      %v4187 = vmul.f32 %v4143, %v4183
      %v4188 = vmul.f32 %v4144, %v4183
      %v4189 = vmul.f32 %v4145, %v4183
      %v4190 = vmul.f32 %v4146, %v4183
      %v4191 = vadd.f32 %v4131, %v4184
      %v4192 = vadd.f32 %v4132, %v4185
      %v4193 = vadd.f32 %v4133, %v4186
      %v4194 = vadd.f32 %v4134, %v4187
      %v4195 = vadd.f32 %v4135, %v4188
      %v4196 = vadd.f32 %v4136, %v4189
      %v4197 = vadd.f32 %v4137, %v4190
      %v4198 = vld [vmem:[%s190] sm:$0x7f]
      %v4199 = vld [vmem:[%s190 + $0x8] sm:$0x7f]
      %v4200 = vld [vmem:[%s190 + $0x10] sm:$0x7f]
      %v4201 = vld [vmem:[%s190 + $0x18] sm:$0x7f]
      %v4202 = vld [vmem:[%s190 + $0x20] sm:$0x7f]
      %v4203 = vld [vmem:[%s190 + $0x28] sm:$0x7f]
      %v4204 = vld [vmem:[%s190 + $0x30] sm:$0x7f]
      %v4205 = vld [vmem:[%s190 + $0x38] sm:$0x7f]
      %v4206 = vld [vmem:[%s190 + $0x40] sm:$0x7f]
      %s4207 = sadd.s32 %s2788, 24
      %s4208 = sld [smem:[#allocation9 + %s4207]]
      %v4209 = vstv %s4208
      %v4210 = vmul.f32 %v4198, %v4209
      %v4211 = vmul.f32 %v4199, %v4209
      %v4212 = vmul.f32 %v4200, %v4209
      %v4213 = vmul.f32 %v4201, %v4209
      %v4214 = vmul.f32 %v4202, %v4209
      %v4215 = vmul.f32 %v4203, %v4209
      %v4216 = vmul.f32 %v4204, %v4209
      %v4217 = vadd.f32 %v4157, %v4210
      %v4218 = vadd.f32 %v4158, %v4211
      %v4219 = vadd.f32 %v4159, %v4212
      %v4220 = vadd.f32 %v4160, %v4213
      %v4221 = vadd.f32 %v4161, %v4214
      %v4222 = vadd.f32 %v4162, %v4215
      %v4223 = vadd.f32 %v4163, %v4216
      %s4224 = sadd.s32 %s2788, 54
      %s4225 = sld [smem:[#allocation9 + %s4224]]
      %v4226 = vstv %s4225
      %v4227 = vmul.f32 %v4199, %v4226
      %v4228 = vmul.f32 %v4200, %v4226
      %v4229 = vmul.f32 %v4201, %v4226
      %v4230 = vmul.f32 %v4202, %v4226
      %v4231 = vmul.f32 %v4203, %v4226
      %v4232 = vmul.f32 %v4204, %v4226
      %v4233 = vmul.f32 %v4205, %v4226
      %v4234 = vadd.f32 %v4174, %v4227
      %v4235 = vadd.f32 %v4175, %v4228
      %v4236 = vadd.f32 %v4176, %v4229
      %v4237 = vadd.f32 %v4177, %v4230
      %v4238 = vadd.f32 %v4178, %v4231
      %v4239 = vadd.f32 %v4179, %v4232
      %v4240 = vadd.f32 %v4180, %v4233
      %s4241 = sadd.s32 %s2788, 84
      %s4242 = sld [smem:[#allocation9 + %s4241]]
      %v4243 = vstv %s4242
      %v4244 = vmul.f32 %v4200, %v4243
      %v4245 = vmul.f32 %v4201, %v4243
      %v4246 = vmul.f32 %v4202, %v4243
      %v4247 = vmul.f32 %v4203, %v4243
      %v4248 = vmul.f32 %v4204, %v4243
      %v4249 = vmul.f32 %v4205, %v4243
      %v4250 = vmul.f32 %v4206, %v4243
      %v4251 = vadd.f32 %v4191, %v4244
      %v4252 = vadd.f32 %v4192, %v4245
      %v4253 = vadd.f32 %v4193, %v4246
      %v4254 = vadd.f32 %v4194, %v4247
      %v4255 = vadd.f32 %v4195, %v4248
      %v4256 = vadd.f32 %v4196, %v4249
      %v4257 = vadd.f32 %v4197, %v4250
      %v4258 = vld [vmem:[%s214] sm:$0x7f]
      %v4259 = vld [vmem:[%s214 + $0x8] sm:$0x7f]
      %v4260 = vld [vmem:[%s214 + $0x10] sm:$0x7f]
      %v4261 = vld [vmem:[%s214 + $0x18] sm:$0x7f]
      %v4262 = vld [vmem:[%s214 + $0x20] sm:$0x7f]
      %v4263 = vld [vmem:[%s214 + $0x28] sm:$0x7f]
      %v4264 = vld [vmem:[%s214 + $0x30] sm:$0x7f]
      %v4265 = vld [vmem:[%s214 + $0x38] sm:$0x7f]
      %v4266 = vld [vmem:[%s214 + $0x40] sm:$0x7f]
      %s4267 = sadd.s32 %s2788, 25
      %s4268 = sld [smem:[#allocation9 + %s4267]]
      %v4269 = vstv %s4268
      %v4270 = vmul.f32 %v4258, %v4269
      %v4271 = vmul.f32 %v4259, %v4269
      %v4272 = vmul.f32 %v4260, %v4269
      %v4273 = vmul.f32 %v4261, %v4269
      %v4274 = vmul.f32 %v4262, %v4269
      %v4275 = vmul.f32 %v4263, %v4269
      %v4276 = vmul.f32 %v4264, %v4269
      %v4277 = vadd.f32 %v4217, %v4270
      %v4278 = vadd.f32 %v4218, %v4271
      %v4279 = vadd.f32 %v4219, %v4272
      %v4280 = vadd.f32 %v4220, %v4273
      %v4281 = vadd.f32 %v4221, %v4274
      %v4282 = vadd.f32 %v4222, %v4275
      %v4283 = vadd.f32 %v4223, %v4276
      %s4284 = sadd.s32 %s2788, 55
      %s4285 = sld [smem:[#allocation9 + %s4284]]
      %v4286 = vstv %s4285
      %v4287 = vmul.f32 %v4259, %v4286
      %v4288 = vmul.f32 %v4260, %v4286
      %v4289 = vmul.f32 %v4261, %v4286
      %v4290 = vmul.f32 %v4262, %v4286
      %v4291 = vmul.f32 %v4263, %v4286
      %v4292 = vmul.f32 %v4264, %v4286
      %v4293 = vmul.f32 %v4265, %v4286
      %v4294 = vadd.f32 %v4234, %v4287
      %v4295 = vadd.f32 %v4235, %v4288
      %v4296 = vadd.f32 %v4236, %v4289
      %v4297 = vadd.f32 %v4237, %v4290
      %v4298 = vadd.f32 %v4238, %v4291
      %v4299 = vadd.f32 %v4239, %v4292
      %v4300 = vadd.f32 %v4240, %v4293
      %s4301 = sadd.s32 %s2788, 85
      %s4302 = sld [smem:[#allocation9 + %s4301]]
      %v4303 = vstv %s4302
      %v4304 = vmul.f32 %v4260, %v4303
      %v4305 = vmul.f32 %v4261, %v4303
      %v4306 = vmul.f32 %v4262, %v4303
      %v4307 = vmul.f32 %v4263, %v4303
      %v4308 = vmul.f32 %v4264, %v4303
      %v4309 = vmul.f32 %v4265, %v4303
      %v4310 = vmul.f32 %v4266, %v4303
      %v4311 = vadd.f32 %v4251, %v4304
      %v4312 = vadd.f32 %v4252, %v4305
      %v4313 = vadd.f32 %v4253, %v4306
      %v4314 = vadd.f32 %v4254, %v4307
      %v4315 = vadd.f32 %v4255, %v4308
      %v4316 = vadd.f32 %v4256, %v4309
      %v4317 = vadd.f32 %v4257, %v4310
      %v4318 = vld [vmem:[%s238] sm:$0x7f]
      %v4319 = vld [vmem:[%s238 + $0x8] sm:$0x7f]
      %v4320 = vld [vmem:[%s238 + $0x10] sm:$0x7f]
      %v4321 = vld [vmem:[%s238 + $0x18] sm:$0x7f]
      %v4322 = vld [vmem:[%s238 + $0x20] sm:$0x7f]
      %v4323 = vld [vmem:[%s238 + $0x28] sm:$0x7f]
      %v4324 = vld [vmem:[%s238 + $0x30] sm:$0x7f]
      %v4325 = vld [vmem:[%s238 + $0x38] sm:$0x7f]
      %v4326 = vld [vmem:[%s238 + $0x40] sm:$0x7f]
      %s4327 = sadd.s32 %s2788, 26
      %s4328 = sld [smem:[#allocation9 + %s4327]]
      %v4329 = vstv %s4328
      %v4330 = vmul.f32 %v4318, %v4329
      %v4331 = vmul.f32 %v4319, %v4329
      %v4332 = vmul.f32 %v4320, %v4329
      %v4333 = vmul.f32 %v4321, %v4329
      %v4334 = vmul.f32 %v4322, %v4329
      %v4335 = vmul.f32 %v4323, %v4329
      %v4336 = vmul.f32 %v4324, %v4329
      %v4337 = vadd.f32 %v4277, %v4330
      %v4338 = vadd.f32 %v4278, %v4331
      %v4339 = vadd.f32 %v4279, %v4332
      %v4340 = vadd.f32 %v4280, %v4333
      %v4341 = vadd.f32 %v4281, %v4334
      %v4342 = vadd.f32 %v4282, %v4335
      %v4343 = vadd.f32 %v4283, %v4336
      %s4344 = sadd.s32 %s2788, 56
      %s4345 = sld [smem:[#allocation9 + %s4344]]
      %v4346 = vstv %s4345
      %v4347 = vmul.f32 %v4319, %v4346
      %v4348 = vmul.f32 %v4320, %v4346
      %v4349 = vmul.f32 %v4321, %v4346
      %v4350 = vmul.f32 %v4322, %v4346
      %v4351 = vmul.f32 %v4323, %v4346
      %v4352 = vmul.f32 %v4324, %v4346
      %v4353 = vmul.f32 %v4325, %v4346
      %v4354 = vadd.f32 %v4294, %v4347
      %v4355 = vadd.f32 %v4295, %v4348
      %v4356 = vadd.f32 %v4296, %v4349
      %v4357 = vadd.f32 %v4297, %v4350
      %v4358 = vadd.f32 %v4298, %v4351
      %v4359 = vadd.f32 %v4299, %v4352
      %v4360 = vadd.f32 %v4300, %v4353
      %s4361 = sadd.s32 %s2788, 86
      %s4362 = sld [smem:[#allocation9 + %s4361]]
      %v4363 = vstv %s4362
      %v4364 = vmul.f32 %v4320, %v4363
      %v4365 = vmul.f32 %v4321, %v4363
      %v4366 = vmul.f32 %v4322, %v4363
      %v4367 = vmul.f32 %v4323, %v4363
      %v4368 = vmul.f32 %v4324, %v4363
      %v4369 = vmul.f32 %v4325, %v4363
      %v4370 = vmul.f32 %v4326, %v4363
      %v4371 = vadd.f32 %v4311, %v4364
      %v4372 = vadd.f32 %v4312, %v4365
      %v4373 = vadd.f32 %v4313, %v4366
      %v4374 = vadd.f32 %v4314, %v4367
      %v4375 = vadd.f32 %v4315, %v4368
      %v4376 = vadd.f32 %v4316, %v4369
      %v4377 = vadd.f32 %v4317, %v4370
      %v4378 = vld [vmem:[%s262] sm:$0x7f]
      %v4379 = vld [vmem:[%s262 + $0x8] sm:$0x7f]
      %v4380 = vld [vmem:[%s262 + $0x10] sm:$0x7f]
      %v4381 = vld [vmem:[%s262 + $0x18] sm:$0x7f]
      %v4382 = vld [vmem:[%s262 + $0x20] sm:$0x7f]
      %v4383 = vld [vmem:[%s262 + $0x28] sm:$0x7f]
      %v4384 = vld [vmem:[%s262 + $0x30] sm:$0x7f]
      %v4385 = vld [vmem:[%s262 + $0x38] sm:$0x7f]
      %v4386 = vld [vmem:[%s262 + $0x40] sm:$0x7f]
      %s4387 = sadd.s32 %s2788, 27
      %s4388 = sld [smem:[#allocation9 + %s4387]]
      %v4389 = vstv %s4388
      %v4390 = vmul.f32 %v4378, %v4389
      %v4391 = vmul.f32 %v4379, %v4389
      %v4392 = vmul.f32 %v4380, %v4389
      %v4393 = vmul.f32 %v4381, %v4389
      %v4394 = vmul.f32 %v4382, %v4389
      %v4395 = vmul.f32 %v4383, %v4389
      %v4396 = vmul.f32 %v4384, %v4389
      %v4397 = vadd.f32 %v4337, %v4390
      %v4398 = vadd.f32 %v4338, %v4391
      %v4399 = vadd.f32 %v4339, %v4392
      %v4400 = vadd.f32 %v4340, %v4393
      %v4401 = vadd.f32 %v4341, %v4394
      %v4402 = vadd.f32 %v4342, %v4395
      %v4403 = vadd.f32 %v4343, %v4396
      %s4404 = sadd.s32 %s2788, 57
      %s4405 = sld [smem:[#allocation9 + %s4404]]
      %v4406 = vstv %s4405
      %v4407 = vmul.f32 %v4379, %v4406
      %v4408 = vmul.f32 %v4380, %v4406
      %v4409 = vmul.f32 %v4381, %v4406
      %v4410 = vmul.f32 %v4382, %v4406
      %v4411 = vmul.f32 %v4383, %v4406
      %v4412 = vmul.f32 %v4384, %v4406
      %v4413 = vmul.f32 %v4385, %v4406
      %v4414 = vadd.f32 %v4354, %v4407
      %v4415 = vadd.f32 %v4355, %v4408
      %v4416 = vadd.f32 %v4356, %v4409
      %v4417 = vadd.f32 %v4357, %v4410
      %v4418 = vadd.f32 %v4358, %v4411
      %v4419 = vadd.f32 %v4359, %v4412
      %v4420 = vadd.f32 %v4360, %v4413
      %s4421 = sadd.s32 %s2788, 87
      %s4422 = sld [smem:[#allocation9 + %s4421]]
      %v4423 = vstv %s4422
      %v4424 = vmul.f32 %v4380, %v4423
      %v4425 = vmul.f32 %v4381, %v4423
      %v4426 = vmul.f32 %v4382, %v4423
      %v4427 = vmul.f32 %v4383, %v4423
      %v4428 = vmul.f32 %v4384, %v4423
      %v4429 = vmul.f32 %v4385, %v4423
      %v4430 = vmul.f32 %v4386, %v4423
      %v4431 = vadd.f32 %v4371, %v4424
      %v4432 = vadd.f32 %v4372, %v4425
      %v4433 = vadd.f32 %v4373, %v4426
      %v4434 = vadd.f32 %v4374, %v4427
      %v4435 = vadd.f32 %v4375, %v4428
      %v4436 = vadd.f32 %v4376, %v4429
      %v4437 = vadd.f32 %v4377, %v4430
      %v4438 = vld [vmem:[%s286] sm:$0x7f]
      %v4439 = vld [vmem:[%s286 + $0x8] sm:$0x7f]
      %v4440 = vld [vmem:[%s286 + $0x10] sm:$0x7f]
      %v4441 = vld [vmem:[%s286 + $0x18] sm:$0x7f]
      %v4442 = vld [vmem:[%s286 + $0x20] sm:$0x7f]
      %v4443 = vld [vmem:[%s286 + $0x28] sm:$0x7f]
      %v4444 = vld [vmem:[%s286 + $0x30] sm:$0x7f]
      %v4445 = vld [vmem:[%s286 + $0x38] sm:$0x7f]
      %v4446 = vld [vmem:[%s286 + $0x40] sm:$0x7f]
      %s4447 = sadd.s32 %s2788, 28
      %s4448 = sld [smem:[#allocation9 + %s4447]]
      %v4449 = vstv %s4448
      %v4450 = vmul.f32 %v4438, %v4449
      %v4451 = vmul.f32 %v4439, %v4449
      %v4452 = vmul.f32 %v4440, %v4449
      %v4453 = vmul.f32 %v4441, %v4449
      %v4454 = vmul.f32 %v4442, %v4449
      %v4455 = vmul.f32 %v4443, %v4449
      %v4456 = vmul.f32 %v4444, %v4449
      %v4457 = vadd.f32 %v4397, %v4450
      %v4458 = vadd.f32 %v4398, %v4451
      %v4459 = vadd.f32 %v4399, %v4452
      %v4460 = vadd.f32 %v4400, %v4453
      %v4461 = vadd.f32 %v4401, %v4454
      %v4462 = vadd.f32 %v4402, %v4455
      %v4463 = vadd.f32 %v4403, %v4456
      %s4464 = sadd.s32 %s2788, 58
      %s4465 = sld [smem:[#allocation9 + %s4464]]
      %v4466 = vstv %s4465
      %v4467 = vmul.f32 %v4439, %v4466
      %v4468 = vmul.f32 %v4440, %v4466
      %v4469 = vmul.f32 %v4441, %v4466
      %v4470 = vmul.f32 %v4442, %v4466
      %v4471 = vmul.f32 %v4443, %v4466
      %v4472 = vmul.f32 %v4444, %v4466
      %v4473 = vmul.f32 %v4445, %v4466
      %v4474 = vadd.f32 %v4414, %v4467
      %v4475 = vadd.f32 %v4415, %v4468
      %v4476 = vadd.f32 %v4416, %v4469
      %v4477 = vadd.f32 %v4417, %v4470
      %v4478 = vadd.f32 %v4418, %v4471
      %v4479 = vadd.f32 %v4419, %v4472
      %v4480 = vadd.f32 %v4420, %v4473
      %s4481 = sadd.s32 %s2788, 88
      %s4482 = sld [smem:[#allocation9 + %s4481]]
      %v4483 = vstv %s4482
      %v4484 = vmul.f32 %v4440, %v4483
      %v4485 = vmul.f32 %v4441, %v4483
      %v4486 = vmul.f32 %v4442, %v4483
      %v4487 = vmul.f32 %v4443, %v4483
      %v4488 = vmul.f32 %v4444, %v4483
      %v4489 = vmul.f32 %v4445, %v4483
      %v4490 = vmul.f32 %v4446, %v4483
      %v4491 = vadd.f32 %v4431, %v4484
      %v4492 = vadd.f32 %v4432, %v4485
      %v4493 = vadd.f32 %v4433, %v4486
      %v4494 = vadd.f32 %v4434, %v4487
      %v4495 = vadd.f32 %v4435, %v4488
      %v4496 = vadd.f32 %v4436, %v4489
      %v4497 = vadd.f32 %v4437, %v4490
      %v4498 = vld [vmem:[%s310] sm:$0x7f]
      %v4499 = vld [vmem:[%s310 + $0x8] sm:$0x7f]
      %v4500 = vld [vmem:[%s310 + $0x10] sm:$0x7f]
      %v4501 = vld [vmem:[%s310 + $0x18] sm:$0x7f]
      %v4502 = vld [vmem:[%s310 + $0x20] sm:$0x7f]
      %v4503 = vld [vmem:[%s310 + $0x28] sm:$0x7f]
      %v4504 = vld [vmem:[%s310 + $0x30] sm:$0x7f]
      %v4505 = vld [vmem:[%s310 + $0x38] sm:$0x7f]
      %v4506 = vld [vmem:[%s310 + $0x40] sm:$0x7f]
      %s4507 = sadd.s32 %s2788, 29
      %s4508 = sld [smem:[#allocation9 + %s4507]]
      %v4509 = vstv %s4508
      %v4510 = vmul.f32 %v4498, %v4509
      %v4511 = vmul.f32 %v4499, %v4509
      %v4512 = vmul.f32 %v4500, %v4509
      %v4513 = vmul.f32 %v4501, %v4509
      %v4514 = vmul.f32 %v4502, %v4509
      %v4515 = vmul.f32 %v4503, %v4509
      %v4516 = vmul.f32 %v4504, %v4509
      %v4517 = vadd.f32 %v4457, %v4510
      %v4518 = vadd.f32 %v4458, %v4511
      %v4519 = vadd.f32 %v4459, %v4512
      %v4520 = vadd.f32 %v4460, %v4513
      %v4521 = vadd.f32 %v4461, %v4514
      %v4522 = vadd.f32 %v4462, %v4515
      %v4523 = vadd.f32 %v4463, %v4516
      %s4524 = sadd.s32 %s2788, 59
      %s4525 = sld [smem:[#allocation9 + %s4524]]
      %v4526 = vstv %s4525
      %v4527 = vmul.f32 %v4499, %v4526
      %v4528 = vmul.f32 %v4500, %v4526
      %v4529 = vmul.f32 %v4501, %v4526
      %v4530 = vmul.f32 %v4502, %v4526
      %v4531 = vmul.f32 %v4503, %v4526
      %v4532 = vmul.f32 %v4504, %v4526
      %v4533 = vmul.f32 %v4505, %v4526
      %v4534 = vadd.f32 %v4474, %v4527
      %v4535 = vadd.f32 %v4475, %v4528
      %v4536 = vadd.f32 %v4476, %v4529
      %v4537 = vadd.f32 %v4477, %v4530
      %v4538 = vadd.f32 %v4478, %v4531
      %v4539 = vadd.f32 %v4479, %v4532
      %v4540 = vadd.f32 %v4480, %v4533
      %s4541 = sadd.s32 %s2788, 89
      %s4542 = sld [smem:[#allocation9 + %s4541]]
      %v4543 = vstv %s4542
      %v4544 = vmul.f32 %v4500, %v4543
      %v4545 = vmul.f32 %v4501, %v4543
      %v4546 = vmul.f32 %v4502, %v4543
      %v4547 = vmul.f32 %v4503, %v4543
      %v4548 = vmul.f32 %v4504, %v4543
      %v4549 = vmul.f32 %v4505, %v4543
      %v4550 = vmul.f32 %v4506, %v4543
      %v4551 = vadd.f32 %v4491, %v4544
      %v4552 = vadd.f32 %v4492, %v4545
      %v4553 = vadd.f32 %v4493, %v4546
      %v4554 = vadd.f32 %v4494, %v4547
      %v4555 = vadd.f32 %v4495, %v4548
      %v4556 = vadd.f32 %v4496, %v4549
      %v4557 = vadd.f32 %v4497, %v4550
      %v4558 = vadd.f32 %v4517, %v4534
      %v4559 = vadd.f32 %v4518, %v4535
      %v4560 = vadd.f32 %v4519, %v4536
      %v4561 = vadd.f32 %v4520, %v4537
      %v4562 = vadd.f32 %v4521, %v4538
      %v4563 = vadd.f32 %v4522, %v4539
      %v4564 = vadd.f32 %v4523, %v4540
      %v4565 = vadd.f32 %v4558, %v4551
      %v4566 = vadd.f32 %v4559, %v4552
      %v4567 = vadd.f32 %v4560, %v4553
      %v4568 = vadd.f32 %v4561, %v4554
      %v4569 = vadd.f32 %v4562, %v4555
      %v4570 = vadd.f32 %v4563, %v4556
      %v4571 = vadd.f32 %v4564, %v4557
      %vm4572 = vcmask 1046528
      %v4573 = vsel %vm4572, %v4565, -inf
      %v4574 = vsel %vm4572, %v4566, -inf
      %v4575 = vsel %vm4572, %v4567, -inf
      %v4576 = vsel %vm4572, %v4568, -inf
      %v4577 = vsel %vm4572, %v4569, -inf
      %v4578 = vmax.f32 %v4573, %v4577
      %v4579 = vsel %vm4572, %v4570, -inf
      %v4580 = vmax.f32 %v4574, %v4579
      %v4581 = vsel %vm4572, %v4571, -inf
      %v4582 = vmax.f32 %v4575, %v4581
      %v4583 = vmax.f32 %v4578, %v4580
      %v4584 = vmax.f32 %v4582, %v4576
      %v4585 = vmax.f32 %v4583, %v4584
      %v4586 = vsel %vm4572, %v4585, -inf
      %v4587 = vrot.slane %v4586, 4
      %v4588 = vmax.f32 %v4586, %v4587
      %v4589 = vrot.slane %v4588, 2
      %v4590 = vmax.f32 %v4588, %v4589
      %v4591 = vrot.slane %v4590, 1
      %v4592 = vmax.f32 %v4590, %v4591
      %v4593 = vstv %s2778
      %v4594 = vadd.f32 %v4592, %v4593
      %v4595 = vmax.f32 %v4594, 0.0
      %s4596 = scalar_lea.vmem [#allocation3], %s2773
      %4597 = vst [vmem:[%s4596] sm:$0x1] %v4595
    $region65: #{tpu_custom_call.1} parent=1 // loop_footer
      %s2777 = sadd.s32 1, %s2773
    $region66: #{tpu_custom_call.1} parent=1 // loop_footer_branch
      %2772 = sbr.rel target = $region62
    $region67: #{tpu_custom_call.1} parent=1 // loop_exit
      _
    %v4598 = vld [vmem:[#allocation3] sm:$0xff]
    %v4599 = vld [vmem:[#allocation3 + $0x8] sm:$0xff]
    %v4600 = vld [vmem:[#allocation3 + $0x10] sm:$0xf]
    %v4601 = vld [vmem:[%s5] sm:$0xff]
    %v4602 = vld [vmem:[%s5 + $0x8] sm:$0xff]
    %v4603 = vld [vmem:[%s5 + $0x10] sm:$0xf]
    %v4604 = vld [vmem:[%s6] sm:$0xff]
    %v4605 = vld [vmem:[%s6 + $0x8] sm:$0xff]
    %v4606 = vld [vmem:[%s6 + $0x10] sm:$0xf]
    %4608 = vset.pattern.permute.xlu0 0
    %4609 = vperm.xlu0 %4608, %v4604
    %v4610 = vpop.permute.xlu0 %4609
    %4613 = vset.pattern.permute.xlu0 0
    %4614 = vperm.xlu0 %4613, %v4605
    %v4615 = vpop.permute.xlu0 %4614
    %4618 = vset.pattern.permute.xlu0 0
    %4619 = vperm.xlu0 %4618, %v4606
    %v4620 = vpop.permute.xlu0 %4619
    %vm4622 = vcmask 162816
    %v4624 = vsel %vm4622, %v4601, 0
    %v4627 = vsel %vm4622, %v4602, 0
    %v4630 = vsel %vm4622, %v4603, 0
    %vm4632 = vcmask 1043456
    %v4634 = vsel %vm4632, %v4600, 0
    %4636 = vmatprep.subr.mxu0 0.0
    %4637 = vmatpush1.msra.mxu0 %v4598
    %4638 = vmatprep.subr.mxu0 0.0
    %4639 = vmatpush1.msra.mxu0 %v4599
    %4640 = vmatprep.subr.mxu0 0.0
    %4641 = vmatpush1.msra.mxu0 %v4634
    %4642 = vmatprep.subr.mxu0 0.0
    %4643 = vmatpush1.msra.mxu0 0.0
    %4644 = vmatprep.subr.mxu0 0.0
    %4645 = vmatpush1.msra.mxu0 0.0
    %4646 = vmatprep.subr.mxu0 0.0
    %4647 = vmatpush1.msra.mxu0 0.0
    %4648 = vmatprep.subr.mxu0 0.0
    %4649 = vmatpush1.msra.mxu0 0.0
    %4650 = vmatprep.subr.mxu0 0.0
    %4651 = vmatpush1.msra.mxu0 0.0
    %4652 = vmatprep.subr.mxu0 0.0
    %4653 = vmatpush1.msra.mxu0 0.0
    %4654 = vmatprep.subr.mxu0 0.0
    %4655 = vmatpush1.msra.mxu0 0.0
    %4656 = vmatprep.subr.mxu0 0.0
    %4657 = vmatpush1.msra.mxu0 0.0
    %4658 = vmatprep.subr.mxu0 0.0
    %4659 = vmatpush1.msra.mxu0 0.0
    %4660 = vmatprep.subr.mxu0 0.0
    %4661 = vmatpush1.msra.mxu0 0.0
    %4662 = vmatprep.subr.mxu0 0.0
    %4663 = vmatpush1.msra.mxu0 0.0
    %4664 = vmatprep.subr.mxu0 0.0
    %4665 = vmatpush1.msra.mxu0 0.0
    %4666 = vmatprep.subr.mxu0 0.0
    %4667 = vmatpush1.msra.mxu0 0.0
    %4668 = vmatprep.subr.mxu0 0.0
    %4669 = vmatpush1.msra.mxu0 0.0
    %4670 = vmatprep.subr.mxu0 0.0
    %4671 = vmatpush1.msra.mxu0 0.0
    %4672 = vmatprep.subr.mxu0 0.0
    %4673 = vmatpush1.msra.mxu0 0.0
    %4674 = vmatprep.subr.mxu0 0.0
    %4675 = vmatpush1.msra.mxu0 0.0
    %4676 = vmatprep.subr.mxu0 0.0
    %4677 = vmatpush1.msra.mxu0 0.0
    %4678 = vmatprep.subr.mxu0 0.0
    %4679 = vmatpush1.msra.mxu0 0.0
    %4680 = vmatprep.subr.mxu0 0.0
    %4681 = vmatpush1.msra.mxu0 0.0
    %4682 = vmatprep.subr.mxu0 0.0
    %4683 = vmatpush1.msra.mxu0 0.0
    %4684 = vmatprep.subr.mxu0 0.0
    %4685 = vmatpush1.msra.mxu0 0.0
    %4686 = vmatprep.subr.mxu0 0.0
    %4687 = vmatpush1.msra.mxu0 0.0
    %4688 = vmatprep.subr.mxu0 0.0
    %4689 = vmatpush1.msra.mxu0 0.0
    %4690 = vmatprep.subr.mxu0 0.0
    %4691 = vmatpush1.msra.mxu0 0.0
    %4692 = vmatprep.subr.mxu0 0.0
    %4693 = vmatpush1.msra.mxu0 0.0
    %4694 = vmatprep.subr.mxu0 0.0
    %4695 = vmatpush1.msra.mxu0 0.0
    %4696 = vmatprep.subr.mxu0 0.0
    %4697 = vmatpush1.msra.mxu0 0.0
    %4698 = vmatprep.subr.mxu0 0.0
    %4699 = vmatpush1.msra.mxu0 0.0
    %4700 = vmatprep.mubr.f32.mxu0 0.0
    %4701 = vmatmul.mubr.f32.gmra.mrb[0].mxu0 %v4624
    %v4702 = vpop.f32.mrb[0].mxu0
    %v4703 = vadd.f32 %v4610, %v4702
    %v4704 = vpop.f32.mrb[0].mxu0
    %4705 = vmatprep.mubr.f32.mxu0 0.0
    %4706 = vmatmul.mubr.f32.gmra.mrb[0].mxu0 %v4627
    %v4707 = vpop.f32.mrb[0].mxu0
    %v4708 = vadd.f32 %v4615, %v4707
    %v4709 = vpop.f32.mrb[0].mxu0
    %4710 = vmatprep.mubr.f32.mxu0 0.0
    %4711 = vmatmul.mubr.f32.gmra.mrb[0].mxu0 %v4630
    %v4712 = vpop.f32.mrb[0].mxu0
    %v4713 = vadd.f32 %v4620, %v4712
    %v4714 = vpop.f32.mrb[0].mxu0
    %4715 = vdwg.mxu0
    %v4716 = vmax.f32 %v4703, 0.0
    %v4717 = vmax.f32 %v4708, 0.0
    %v4718 = vmax.f32 %v4713, 0.0
    %v4719 = vld [vmem:[%s7] sm:$0xff]
    %v4720 = vld [vmem:[%s7 + $0x8] sm:$0x3]
    %v4721 = vld [vmem:[%s8] sm:$0xff]
    %v4722 = vld [vmem:[%s8 + $0x8] sm:$0x3]
    %4724 = vset.pattern.permute.xlu0 0
    %4725 = vperm.xlu0 %4724, %v4721
    %v4726 = vpop.permute.xlu0 %4725
    %4729 = vset.pattern.permute.xlu0 0
    %4730 = vperm.xlu0 %4729, %v4722
    %v4731 = vpop.permute.xlu0 %4730
    %v4734 = vsel %vm4622, %v4719, 0
    %v4737 = vsel %vm4622, %v4720, 0
    %v4740 = vsel %vm4632, %v4718, 0
    %4742 = vmatprep.subr.mxu0 0.0
    %4743 = vmatpush1.msra.mxu0 %v4716
    %4744 = vmatprep.subr.mxu0 0.0
    %4745 = vmatpush1.msra.mxu0 %v4717
    %4746 = vmatprep.subr.mxu0 0.0
    %4747 = vmatpush1.msra.mxu0 %v4740
    %4748 = vmatprep.subr.mxu0 0.0
    %4749 = vmatpush1.msra.mxu0 0.0
    %4750 = vmatprep.subr.mxu0 0.0
    %4751 = vmatpush1.msra.mxu0 0.0
    %4752 = vmatprep.subr.mxu0 0.0
    %4753 = vmatpush1.msra.mxu0 0.0
    %4754 = vmatprep.subr.mxu0 0.0
    %4755 = vmatpush1.msra.mxu0 0.0
    %4756 = vmatprep.subr.mxu0 0.0
    %4757 = vmatpush1.msra.mxu0 0.0
    %4758 = vmatprep.subr.mxu0 0.0
    %4759 = vmatpush1.msra.mxu0 0.0
    %4760 = vmatprep.subr.mxu0 0.0
    %4761 = vmatpush1.msra.mxu0 0.0
    %4762 = vmatprep.subr.mxu0 0.0
    %4763 = vmatpush1.msra.mxu0 0.0
    %4764 = vmatprep.subr.mxu0 0.0
    %4765 = vmatpush1.msra.mxu0 0.0
    %4766 = vmatprep.subr.mxu0 0.0
    %4767 = vmatpush1.msra.mxu0 0.0
    %4768 = vmatprep.subr.mxu0 0.0
    %4769 = vmatpush1.msra.mxu0 0.0
    %4770 = vmatprep.subr.mxu0 0.0
    %4771 = vmatpush1.msra.mxu0 0.0
    %4772 = vmatprep.subr.mxu0 0.0
    %4773 = vmatpush1.msra.mxu0 0.0
    %4774 = vmatprep.subr.mxu0 0.0
    %4775 = vmatpush1.msra.mxu0 0.0
    %4776 = vmatprep.subr.mxu0 0.0
    %4777 = vmatpush1.msra.mxu0 0.0
    %4778 = vmatprep.subr.mxu0 0.0
    %4779 = vmatpush1.msra.mxu0 0.0
    %4780 = vmatprep.subr.mxu0 0.0
    %4781 = vmatpush1.msra.mxu0 0.0
    %4782 = vmatprep.subr.mxu0 0.0
    %4783 = vmatpush1.msra.mxu0 0.0
    %4784 = vmatprep.subr.mxu0 0.0
    %4785 = vmatpush1.msra.mxu0 0.0
    %4786 = vmatprep.subr.mxu0 0.0
    %4787 = vmatpush1.msra.mxu0 0.0
    %4788 = vmatprep.subr.mxu0 0.0
    %4789 = vmatpush1.msra.mxu0 0.0
    %4790 = vmatprep.subr.mxu0 0.0
    %4791 = vmatpush1.msra.mxu0 0.0
    %4792 = vmatprep.subr.mxu0 0.0
    %4793 = vmatpush1.msra.mxu0 0.0
    %4794 = vmatprep.subr.mxu0 0.0
    %4795 = vmatpush1.msra.mxu0 0.0
    %4796 = vmatprep.subr.mxu0 0.0
    %4797 = vmatpush1.msra.mxu0 0.0
    %4798 = vmatprep.subr.mxu0 0.0
    %4799 = vmatpush1.msra.mxu0 0.0
    %4800 = vmatprep.subr.mxu0 0.0
    %4801 = vmatpush1.msra.mxu0 0.0
    %4802 = vmatprep.subr.mxu0 0.0
    %4803 = vmatpush1.msra.mxu0 0.0
    %4804 = vmatprep.subr.mxu0 0.0
    %4805 = vmatpush1.msra.mxu0 0.0
    %4806 = vmatprep.mubr.f32.mxu0 0.0
    %4807 = vmatmul.mubr.f32.gmra.mrb[0].mxu0 %v4734
    %v4808 = vpop.f32.mrb[0].mxu0
    %v4809 = vadd.f32 %v4726, %v4808
    %v4810 = vpop.f32.mrb[0].mxu0
    %4811 = vmatprep.mubr.f32.mxu0 0.0
    %4812 = vmatmul.mubr.f32.gmra.mrb[0].mxu0 %v4737
    %v4813 = vpop.f32.mrb[0].mxu0
    %v4814 = vadd.f32 %v4731, %v4813
    %v4815 = vpop.f32.mrb[0].mxu0
    %4816 = vdwg.mxu0
    %vm4817 = vcmask 1041408
    %v4818 = vsel %vm4817, %v4814, -inf
    %v4819 = vmax.f32 %v4809, %v4818
    %v4820 = vrot.slane %v4819, 4
    %v4821 = vmax.f32 %v4819, %v4820
    %v4822 = vrot.slane %v4821, 2
    %v4823 = vmax.f32 %v4821, %v4822
    %v4824 = vrot.slane %v4823, 1
    %v4825 = vmax.f32 %v4823, %v4824
    %v4826 = vsub.f32 %v4809, %v4825
    %v4827 = vsub.f32 %v4814, %v4825
    %v4828 = vmul.f32 %v4826, 1.442695
    %v4829 = vpow.pop %v4828
    %v4830 = vmul.f32 %v4827, 1.442695
    %v4831 = vpow.pop %v4830
    %v4832 = vsel %vm4817, %v4831, 0.0
    %v4833 = vadd.f32 %v4829, %v4832
    %v4834 = vrot.slane %v4833, 4
    %v4835 = vadd.f32 %v4833, %v4834
    %v4836 = vrot.slane %v4835, 2
    %v4837 = vadd.f32 %v4835, %v4836
    %v4838 = vrot.slane %v4837, 1
    %v4839 = vadd.f32 %v4837, %v4838
    %v4840 = vlog2.pop %v4839
    %v4841 = vmul.f32 %v4840, 0.6931472
    %v4842 = vsub.f32 %v4826, %v4841
    %v4843 = vsub.f32 %v4827, %v4841
    %4844 = vst [vmem:[#allocation12] sm:$0xff] %v4842
    %4845 = vst [vmem:[#allocation12 + $0x8] sm:$0x3] %v4843
    // Predicated region
    $region68: #{tpu_custom_call.1} parent=1 // pred_check
      _
    $region69: #{tpu_custom_call.1} parent=1 // pred_check_branch
      %4847 = sbr.rel (0) target = $region71
    $region70: #{tpu_custom_call.1} parent=1 // pred_region
      %s4849 = ssub.s32 256, 256
      %4850 = vsyncadd [#allocation5], %s4849
      %s4851 = sshll.u32 [#allocation12], 4
      %s4852 = int_to_ptr.vmem [resolvable:$true] %s4851
      %4857 = dma.vmem_to_hbm [thread:$0]  %s4852, 256, %s9, [#allocation5], 128, 128, 8
    $region71: #{tpu_custom_call.1} parent=1 // pred_fallthru
      _
    // Predicated region
    $region72: #{tpu_custom_call.1} parent=1 // pred_check
      _
    $region73: #{tpu_custom_call.1} parent=1 // pred_check_branch
      %4859 = sbr.rel (0) target = $region75
    $region74: #{tpu_custom_call.1} parent=1 // pred_region
      %4860 = dma.done [#allocation5], 256
    $region75: #{tpu_custom_call.1} parent=1 // pred_fallthru
      _
    %4861 = vsyncpa [#allocation5], 1
    %4862 = vsyncpa [#allocation6], 1
    %4863 = vsyncpa [#allocation8], 1
    %4864 = vsyncpa [#allocation11], 1

</llo_original>
